<compile_context>
chip_gen: v7x
topology: tpu7x:2x2x1
jax: 0.10.0
libtpu: 0.0.40
codegen_flags: <defaults>
</compile_context>

<pallas_src>
import functools
import numpy as np
import jax
import jax.numpy as jnp
from jax.experimental import pallas as pl
from jax.experimental.pallas import tpu as pltpu

# ---- small problem sizes (original: hidden=512, vocab=output_lang.n_words) ----
HIDDEN = 32          # hidden_dim
IN_VOCAB = 16        # encoder (input language) vocab size
OUT_VOCAB = 16       # decoder output_size
OUT_PAD = 128        # out projection padded to a full lane width (unmasked stores)
MAX_LENGTH = 5       # attention window (MAX_LENGTH in the module)
INPUT_LENGTH = 5     # encoder source length (<= MAX_LENGTH)
TARGET_LENGTH = 5    # decoder target length
BATCH = 1            # tutorial decoder operates on batch 1
SOS_TOKEN = 0


def seq2seq_kernel(
    # scalars (SMEM)
    in_tok_ref, dec_in_ref,
    # encoder
    enc_emb_ref, enc_wih_ref, enc_bih_ref,
    enc_whh_r_ref, enc_whh_z_ref, enc_whh_n_ref,
    enc_bhh_r_ref, enc_bhh_z_ref, enc_bhh_n_ref,
    # decoder
    dec_emb_ref, attn_we_ref, attn_wh_ref, attn_b_ref,
    comb_we_ref, comb_wa_ref, comb_b_ref,
    dec_wih_r_ref, dec_wih_z_ref, dec_wih_n_ref,
    dec_bih_r_ref, dec_bih_z_ref, dec_bih_n_ref,
    dec_whh_r_ref, dec_whh_z_ref, dec_whh_n_ref,
    dec_bhh_r_ref, dec_bhh_z_ref, dec_bhh_n_ref,
    out_w_ref, out_b_ref,
    # output
    outputs_ref):
    H = HIDDEN
    f32 = jnp.float32
    dot = functools.partial(jnp.dot, preferred_element_type=jnp.float32)

    # ---- hoist loop-invariant weight loads out of the recurrences ----
    enc_whh_r = enc_whh_r_ref[...]; enc_whh_z = enc_whh_z_ref[...]; enc_whh_n = enc_whh_n_ref[...]
    enc_bhh_r = enc_bhh_r_ref[...]; enc_bhh_z = enc_bhh_z_ref[...]; enc_bhh_n = enc_bhh_n_ref[...]
    attn_wh = attn_wh_ref[...]
    comb_wa = comb_wa_ref[...]
    dec_wih_r = dec_wih_r_ref[...]; dec_wih_z = dec_wih_z_ref[...]; dec_wih_n = dec_wih_n_ref[...]
    dec_bih_r = dec_bih_r_ref[...]; dec_bih_z = dec_bih_z_ref[...]; dec_bih_n = dec_bih_n_ref[...]
    dec_whh_r = dec_whh_r_ref[...]; dec_whh_z = dec_whh_z_ref[...]; dec_whh_n = dec_whh_n_ref[...]
    dec_bhh_r = dec_bhh_r_ref[...]; dec_bhh_z = dec_bhh_z_ref[...]; dec_bhh_n = dec_bhh_n_ref[...]
    out_w = out_w_ref[...]; out_b = out_b_ref[...]

    # ---------------- encoder: hoisted token-dependent input path ----------------
    # gather source embeddings into one (L, H) matrix and run a single batched
    # matmul for the input-gate projections (fills sublanes, off the critical path)
    src_emb = jnp.concatenate(
        [enc_emb_ref[pl.ds(in_tok_ref[ei], 1), :] for ei in range(INPUT_LENGTH)],
        axis=0)                                                     # (L, H)
    enc_gx = dot(src_emb, enc_wih_ref[...]) + enc_bih_ref[...]      # (L, 3H)
    enc_gx_r = enc_gx[:, 0:H]                                       # sliced once, not per step
    enc_gx_z = enc_gx[:, H:2 * H]
    enc_gx_n = enc_gx[:, 2 * H:3 * H]

    # ---------------- encoder recurrence ----------------
    h = jnp.zeros((1, H), f32)                                      # encoder.initHidden()
    enc_rows = []
    for ei in range(INPUT_LENGTH):
        gh_r = dot(h, enc_whh_r) + enc_bhh_r
        gh_z = dot(h, enc_whh_z) + enc_bhh_z
        gh_n = dot(h, enc_whh_n) + enc_bhh_n
        r = jax.nn.sigmoid(enc_gx_r[ei:ei + 1, :] + gh_r)
        z = jax.nn.sigmoid(enc_gx_z[ei:ei + 1, :] + gh_z)
        n = jnp.tanh(enc_gx_n[ei:ei + 1, :] + r * gh_n)
        h = (1.0 - z) * n + z * h
        enc_rows.append(h)                                          # encoder_outputs[ei] = output[0,0]

    if INPUT_LENGTH < MAX_LENGTH:                                   # zero padding to MAX_LENGTH
        enc_rows.append(jnp.zeros((MAX_LENGTH - INPUT_LENGTH, H), f32))
    enc_outs = jnp.concatenate(enc_rows, axis=0)                    # (MAX_LENGTH, H), kept as a value

    # ---------------- decoder: hoisted teacher-forcing input path ----------------
    # decoder inputs are known up front (SOS + tgt[:-1]); gather all embeddings and
    # precompute the emb halves of attn / attn_combine as batched matmuls.
    dec_embs = jnp.concatenate(
        [dec_emb_ref[pl.ds(dec_in_ref[t], 1), :] for t in range(TARGET_LENGTH)],
        axis=0)                                                     # (T, H), dropout == identity
    attn_emb = dot(dec_embs, attn_we_ref[...]) + attn_b_ref[...]    # (T, MAX_LENGTH)
    comb_emb = dot(dec_embs, comb_we_ref[...]) + comb_b_ref[...]    # (T, H)

    # ---------------- decoder recurrence ----------------
    for t in range(TARGET_LENGTH):
        # attn_weights = softmax(attn(cat(emb, h)))  (concat-free split-weight form)
        a_logit = attn_emb[t:t + 1, :] + dot(h, attn_wh)            # (1, MAX_LENGTH)
        a_shift = a_logit - jnp.max(a_logit, axis=1, keepdims=True)
        a_exp = jnp.exp(a_shift)
        inv = pl.reciprocal(jnp.sum(a_exp, axis=1, keepdims=True), approx=True)
        attn_w = a_exp * inv                                        # (1, MAX_LENGTH)

        # attn_applied = bmm(attn_weights, encoder_outputs)
        applied = dot(attn_w, enc_outs)                             # (1, H)

        # attn_combine(cat(emb, applied)) + relu  (concat-free)
        gru_in = jnp.maximum(comb_emb[t:t + 1, :] + dot(applied, comb_wa), 0.0)

        # decoder GRU cell — per-gate weights, no lane-offset gate slicing
        gi_r = dot(gru_in, dec_wih_r) + dec_bih_r
        gi_z = dot(gru_in, dec_wih_z) + dec_bih_z
        gi_n = dot(gru_in, dec_wih_n) + dec_bih_n
        gh_r = dot(h, dec_whh_r) + dec_bhh_r
        gh_z = dot(h, dec_whh_z) + dec_bhh_z
        gh_n = dot(h, dec_whh_n) + dec_bhh_n
        r = jax.nn.sigmoid(gi_r + gh_r)
        z = jax.nn.sigmoid(gi_z + gh_z)
        n = jnp.tanh(gi_n + r * gh_n)
        h = (1.0 - z) * n + z * h

        # out Linear + log_softmax (out_w/out_b padded to 128 lanes, padded bias
        # = -1e30 so padded lanes never affect max / sum; full-width store)
        logits = dot(h, out_w) + out_b                              # (1, OUT_PAD)
        m = jnp.max(logits, axis=1, keepdims=True)
        lse = jnp.log(jnp.sum(jnp.exp(logits - m), axis=1, keepdims=True)) + m
        outputs_ref[pl.ds(t, 1), :] = logits - lse                  # outputs[t] = decoder_output


def _split_params_for_kernel(params):
    """Host-side weight re-layout: per-gate GRU matrices, concat-free attn/combine
    splits, and a 128-lane-padded output projection."""
    (enc_emb, enc_wih, enc_whh, enc_bih, enc_bhh,
     dec_emb, attn_w, attn_b, comb_w, comb_b,
     dec_wih, dec_whh, dec_bih, dec_bhh, out_w, out_b) = params
    H = HIDDEN

    def g3(w):  # (H, 3H) -> 3 x (H, H), PyTorch gate order r, z, n
        return w[:, :H], w[:, H:2 * H], w[:, 2 * H:]

    def b3(b):  # (1, 3H) -> 3 x (1, H)
        return b[:, :H], b[:, H:2 * H], b[:, 2 * H:]

    enc_whh_r, enc_whh_z, enc_whh_n = g3(enc_whh)
    enc_bhh_r, enc_bhh_z, enc_bhh_n = b3(enc_bhh)
    dec_wih_r, dec_wih_z, dec_wih_n = g3(dec_wih)
    dec_bih_r, dec_bih_z, dec_bih_n = b3(dec_bih)
    dec_whh_r, dec_whh_z, dec_whh_n = g3(dec_whh)
    dec_bhh_r, dec_bhh_z, dec_bhh_n = b3(dec_bhh)

    attn_we, attn_wh = attn_w[:H], attn_w[H:]      # cat1 @ W == emb @ top + h @ bottom
    comb_we, comb_wa = comb_w[:H], comb_w[H:]      # cat2 @ W == emb @ top + applied @ bottom

    out_w_pad = jnp.zeros((H, OUT_PAD), jnp.float32).at[:, :OUT_VOCAB].set(out_w)
    out_b_pad = jnp.full((1, OUT_PAD), -1e30, jnp.float32).at[:, :OUT_VOCAB].set(out_b)

    return (enc_emb, enc_wih, enc_bih,
            enc_whh_r, enc_whh_z, enc_whh_n, enc_bhh_r, enc_bhh_z, enc_bhh_n,
            dec_emb, attn_we, attn_wh, attn_b, comb_we, comb_wa, comb_b,
            dec_wih_r, dec_wih_z, dec_wih_n, dec_bih_r, dec_bih_z, dec_bih_n,
            dec_whh_r, dec_whh_z, dec_whh_n, dec_bhh_r, dec_bhh_z, dec_bhh_n,
            out_w_pad, out_b_pad)


def seq2seq_forward(params, input_tokens, target_tokens):
    kparams = _split_params_for_kernel(params)
    # teacher forcing: decoder input at step t is SOS for t=0, target[t-1] otherwise
    dec_in = jnp.concatenate(
        [jnp.array([SOS_TOKEN], jnp.int32),
         target_tokens[:TARGET_LENGTH - 1].astype(jnp.int32)])

    smem = lambda: pl.BlockSpec(memory_space=pltpu.MemorySpace.SMEM)
    vmem = lambda: pl.BlockSpec(memory_space=pltpu.MemorySpace.VMEM)
    in_specs = [smem(), smem()] + [vmem() for _ in range(len(kparams))]

    out = pl.pallas_call(
        seq2seq_kernel,
        out_shape=jax.ShapeDtypeStruct((TARGET_LENGTH, OUT_PAD), jnp.float32),
        in_specs=in_specs,
        out_specs=pl.BlockSpec(memory_space=pltpu.MemorySpace.VMEM),
        # toy sizes fit trivially; at production sizes (H=512, vocab~2.8k) raise this
        # so all weights stay VMEM-resident (esp. v5e's 16 MiB scoped default).
        compiler_params=pltpu.CompilerParams(vmem_limit_bytes=32 * 1024 * 1024),
    )(input_tokens.astype(jnp.int32), dec_in, *kparams)

    # drop lane padding; match PyTorch: outputs is (target_length, batch, vocab)
    return out[:, :OUT_VOCAB].reshape(TARGET_LENGTH, BATCH, OUT_VOCAB)


def reference_forward(params, input_tokens, target_tokens):
    """Pure-JAX reference mirroring the PyTorch forward (original weight layout)."""
    (enc_emb, enc_wih_t, enc_whh_t, enc_bih, enc_bhh,
     dec_emb, attn_w_t, attn_b, comb_w_t, comb_b,
     dec_wih_t, dec_whh_t, dec_bih, dec_bhh, out_w_t, out_b) = params
    H = HIDDEN

    def gru(x, h, wih_t, whh_t, bih, bhh):
        gx = x @ wih_t + bih
        gh = h @ whh_t + bhh
        r = jax.nn.sigmoid(gx[:, :H] + gh[:, :H])
        z = jax.nn.sigmoid(gx[:, H:2 * H] + gh[:, H:2 * H])
        n = jnp.tanh(gx[:, 2 * H:] + r * gh[:, 2 * H:])
        return (1 - z) * n + z * h

    enc_outs = jnp.zeros((MAX_LENGTH, H), jnp.float32)
    h = jnp.zeros((1, H), jnp.float32)
    for ei in range(INPUT_LENGTH):
        x = enc_emb[input_tokens[ei]][None, :]
        h = gru(x, h, enc_wih_t, enc_whh_t, enc_bih, enc_bhh)
        enc_outs = enc_outs.at[ei].set(h[0])

    outs = []
    tok = SOS_TOKEN
    for t in range(TARGET_LENGTH):
        emb = dec_emb[tok][None, :]
        cat1 = jnp.concatenate([emb, h], axis=1)
        aw = jax.nn.softmax(cat1 @ attn_w_t + attn_b, axis=1)
        applied = aw @ enc_outs
        cat2 = jnp.concatenate([emb, applied], axis=1)
        gi = jax.nn.relu(cat2 @ comb_w_t + comb_b)
        h = gru(gi, h, dec_wih_t, dec_whh_t, dec_bih, dec_bhh)
        logits = h @ out_w_t + out_b
        outs.append(jax.nn.log_softmax(logits, axis=1))
        tok = target_tokens[t]
    return jnp.stack(outs, axis=0)   # (T, 1, V)


def init_params(key):
    H, ML = HIDDEN, MAX_LENGTH
    ks = jax.random.split(key, 16)
    u = lambda k, shape, s: jax.random.uniform(k, shape, jnp.float32, -s, s)
    sH = 1.0 / np.sqrt(H)
    params = (
        u(ks[0], (IN_VOCAB, H), 1.0),        # encoder embedding
        u(ks[1], (H, 3 * H), sH),            # encoder GRU W_ih^T
        u(ks[2], (H, 3 * H), sH),            # encoder GRU W_hh^T
        u(ks[3], (1, 3 * H), sH),            # encoder GRU b_ih
        u(ks[4], (1, 3 * H), sH),            # encoder GRU b_hh
        u(ks[5], (OUT_VOCAB, H), 1.0),       # decoder embedding
        u(ks[6], (2 * H, ML), sH),           # attn weight^T
        u(ks[7], (1, ML), sH),               # attn bias
        u(ks[8], (2 * H, H), sH),            # attn_combine weight^T
        u(ks[9], (1, H), sH),                # attn_combine bias
        u(ks[10], (H, 3 * H), sH),           # decoder GRU W_ih^T
        u(ks[11], (H, 3 * H), sH),           # decoder GRU W_hh^T
        u(ks[12], (1, 3 * H), sH),           # decoder GRU b_ih
        u(ks[13], (1, 3 * H), sH),           # decoder GRU b_hh
        u(ks[14], (H, OUT_VOCAB), sH),       # out weight^T
        u(ks[15], (1, OUT_VOCAB), sH),       # out bias
    )
    return params


if __name__ == "__main__":
    key = jax.random.PRNGKey(0)
    kp, ki, kt = jax.random.split(key, 3)

    params = init_params(kp)

    # PyTorch-style inputs: input_tensor (input_length, 1), output_lang (target_length, 1)
    input_tensor = jax.random.randint(ki, (INPUT_LENGTH, 1), 0, IN_VOCAB, jnp.int32)
    target_tensor = jax.random.randint(kt, (TARGET_LENGTH, 1), 0, OUT_VOCAB, jnp.int32)

    in_tok = input_tensor.reshape(-1)     # glue: flatten token ids for SMEM
    tgt_tok = target_tensor.reshape(-1)

    out = seq2seq_forward(params, in_tok, tgt_tok)
    out = jax.block_until_ready(out)

    ref = reference_forward(params, np.asarray(in_tok), np.asarray(tgt_tok))
    np.testing.assert_allclose(np.asarray(out), np.asarray(ref), rtol=5e-3, atol=5e-3)

    print("KERNEL_OK")
</pallas_src>

<mosaic_0001>
module attributes {stable_mosaic.version = 11 : i64} {
  func.func @seq2seq_kernel(%arg0: memref<5xi32, #tpu.memory_space<smem>>, %arg1: memref<5xi32, #tpu.memory_space<smem>>, %arg2: memref<16x32xf32, #tpu.memory_space<vmem>>, %arg3: memref<32x96xf32, #tpu.memory_space<vmem>>, %arg4: memref<1x96xf32, #tpu.memory_space<vmem>>, %arg5: memref<32x32xf32, #tpu.memory_space<vmem>>, %arg6: memref<32x32xf32, #tpu.memory_space<vmem>>, %arg7: memref<32x32xf32, #tpu.memory_space<vmem>>, %arg8: memref<1x32xf32, #tpu.memory_space<vmem>>, %arg9: memref<1x32xf32, #tpu.memory_space<vmem>>, %arg10: memref<1x32xf32, #tpu.memory_space<vmem>>, %arg11: memref<16x32xf32, #tpu.memory_space<vmem>>, %arg12: memref<32x5xf32, #tpu.memory_space<vmem>>, %arg13: memref<32x5xf32, #tpu.memory_space<vmem>>, %arg14: memref<1x5xf32, #tpu.memory_space<vmem>>, %arg15: memref<32x32xf32, #tpu.memory_space<vmem>>, %arg16: memref<32x32xf32, #tpu.memory_space<vmem>>, %arg17: memref<1x32xf32, #tpu.memory_space<vmem>>, %arg18: memref<32x32xf32, #tpu.memory_space<vmem>>, %arg19: memref<32x32xf32, #tpu.memory_space<vmem>>, %arg20: memref<32x32xf32, #tpu.memory_space<vmem>>, %arg21: memref<1x32xf32, #tpu.memory_space<vmem>>, %arg22: memref<1x32xf32, #tpu.memory_space<vmem>>, %arg23: memref<1x32xf32, #tpu.memory_space<vmem>>, %arg24: memref<32x32xf32, #tpu.memory_space<vmem>>, %arg25: memref<32x32xf32, #tpu.memory_space<vmem>>, %arg26: memref<32x32xf32, #tpu.memory_space<vmem>>, %arg27: memref<1x32xf32, #tpu.memory_space<vmem>>, %arg28: memref<1x32xf32, #tpu.memory_space<vmem>>, %arg29: memref<1x32xf32, #tpu.memory_space<vmem>>, %arg30: memref<32x128xf32, #tpu.memory_space<vmem>>, %arg31: memref<1x128xf32, #tpu.memory_space<vmem>>, %arg32: memref<5x128xf32, #tpu.memory_space<vmem>>) attributes {dimension_semantics = [], scalar_prefetch = 0 : i64, scratch_operands = 0 : i64, tpu.core_type = #tpu.core_type<tc>} {
    %c0 = arith.constant 0 : index
    %c0_0 = arith.constant 0 : index
    %0 = vector.load %arg5[%c0, %c0_0] : memref<32x32xf32, #tpu.memory_space<vmem>>, vector<32x32xf32>
    %c0_1 = arith.constant 0 : index
    %c0_2 = arith.constant 0 : index
    %1 = vector.load %arg6[%c0_1, %c0_2] : memref<32x32xf32, #tpu.memory_space<vmem>>, vector<32x32xf32>
    %c0_3 = arith.constant 0 : index
    %c0_4 = arith.constant 0 : index
    %2 = vector.load %arg7[%c0_3, %c0_4] : memref<32x32xf32, #tpu.memory_space<vmem>>, vector<32x32xf32>
    %c0_5 = arith.constant 0 : index
    %c0_6 = arith.constant 0 : index
    %3 = vector.load %arg8[%c0_5, %c0_6] : memref<1x32xf32, #tpu.memory_space<vmem>>, vector<1x32xf32>
    %c0_7 = arith.constant 0 : index
    %c0_8 = arith.constant 0 : index
    %4 = vector.load %arg9[%c0_7, %c0_8] : memref<1x32xf32, #tpu.memory_space<vmem>>, vector<1x32xf32>
    %c0_9 = arith.constant 0 : index
    %c0_10 = arith.constant 0 : index
    %5 = vector.load %arg10[%c0_9, %c0_10] : memref<1x32xf32, #tpu.memory_space<vmem>>, vector<1x32xf32>
    %c0_11 = arith.constant 0 : index
    %c0_12 = arith.constant 0 : index
    %6 = vector.load %arg13[%c0_11, %c0_12] : memref<32x5xf32, #tpu.memory_space<vmem>>, vector<32x5xf32>
    %c0_13 = arith.constant 0 : index
    %c0_14 = arith.constant 0 : index
    %7 = vector.load %arg16[%c0_13, %c0_14] : memref<32x32xf32, #tpu.memory_space<vmem>>, vector<32x32xf32>
    %c0_15 = arith.constant 0 : index
    %c0_16 = arith.constant 0 : index
    %8 = vector.load %arg18[%c0_15, %c0_16] : memref<32x32xf32, #tpu.memory_space<vmem>>, vector<32x32xf32>
    %c0_17 = arith.constant 0 : index
    %c0_18 = arith.constant 0 : index
    %9 = vector.load %arg19[%c0_17, %c0_18] : memref<32x32xf32, #tpu.memory_space<vmem>>, vector<32x32xf32>
    %c0_19 = arith.constant 0 : index
    %c0_20 = arith.constant 0 : index
    %10 = vector.load %arg20[%c0_19, %c0_20] : memref<32x32xf32, #tpu.memory_space<vmem>>, vector<32x32xf32>
    %c0_21 = arith.constant 0 : index
    %c0_22 = arith.constant 0 : index
    %11 = vector.load %arg21[%c0_21, %c0_22] : memref<1x32xf32, #tpu.memory_space<vmem>>, vector<1x32xf32>
    %c0_23 = arith.constant 0 : index
    %c0_24 = arith.constant 0 : index
    %12 = vector.load %arg22[%c0_23, %c0_24] : memref<1x32xf32, #tpu.memory_space<vmem>>, vector<1x32xf32>
    %c0_25 = arith.constant 0 : index
    %c0_26 = arith.constant 0 : index
    %13 = vector.load %arg23[%c0_25, %c0_26] : memref<1x32xf32, #tpu.memory_space<vmem>>, vector<1x32xf32>
    %c0_27 = arith.constant 0 : index
    %c0_28 = arith.constant 0 : index
    %14 = vector.load %arg24[%c0_27, %c0_28] : memref<32x32xf32, #tpu.memory_space<vmem>>, vector<32x32xf32>
    %c0_29 = arith.constant 0 : index
    %c0_30 = arith.constant 0 : index
    %15 = vector.load %arg25[%c0_29, %c0_30] : memref<32x32xf32, #tpu.memory_space<vmem>>, vector<32x32xf32>
    %c0_31 = arith.constant 0 : index
    %c0_32 = arith.constant 0 : index
    %16 = vector.load %arg26[%c0_31, %c0_32] : memref<32x32xf32, #tpu.memory_space<vmem>>, vector<32x32xf32>
    %c0_33 = arith.constant 0 : index
    %c0_34 = arith.constant 0 : index
    %17 = vector.load %arg27[%c0_33, %c0_34] : memref<1x32xf32, #tpu.memory_space<vmem>>, vector<1x32xf32>
    %c0_35 = arith.constant 0 : index
    %c0_36 = arith.constant 0 : index
    %18 = vector.load %arg28[%c0_35, %c0_36] : memref<1x32xf32, #tpu.memory_space<vmem>>, vector<1x32xf32>
    %c0_37 = arith.constant 0 : index
    %c0_38 = arith.constant 0 : index
    %19 = vector.load %arg29[%c0_37, %c0_38] : memref<1x32xf32, #tpu.memory_space<vmem>>, vector<1x32xf32>
    %c0_39 = arith.constant 0 : index
    %c0_40 = arith.constant 0 : index
    %20 = vector.load %arg30[%c0_39, %c0_40] : memref<32x128xf32, #tpu.memory_space<vmem>>, vector<32x128xf32>
    %c0_41 = arith.constant 0 : index
    %c0_42 = arith.constant 0 : index
    %21 = vector.load %arg31[%c0_41, %c0_42] : memref<1x128xf32, #tpu.memory_space<vmem>>, vector<1x128xf32>
    %c0_43 = arith.constant 0 : index
    %22 = memref.load %arg0[%c0_43] : memref<5xi32, #tpu.memory_space<smem>>
    %23 = arith.index_cast %22 : i32 to index
    %c0_44 = arith.constant 0 : index
    %24 = vector.load %arg2[%23, %c0_44] : memref<16x32xf32, #tpu.memory_space<vmem>>, vector<1x32xf32>
    %c1 = arith.constant 1 : index
    %25 = memref.load %arg0[%c1] : memref<5xi32, #tpu.memory_space<smem>>
    %26 = arith.index_cast %25 : i32 to index
    %c0_45 = arith.constant 0 : index
    %27 = vector.load %arg2[%26, %c0_45] : memref<16x32xf32, #tpu.memory_space<vmem>>, vector<1x32xf32>
    %c2 = arith.constant 2 : index
    %28 = memref.load %arg0[%c2] : memref<5xi32, #tpu.memory_space<smem>>
    %29 = arith.index_cast %28 : i32 to index
    %c0_46 = arith.constant 0 : index
    %30 = vector.load %arg2[%29, %c0_46] : memref<16x32xf32, #tpu.memory_space<vmem>>, vector<1x32xf32>
    %c3 = arith.constant 3 : index
    %31 = memref.load %arg0[%c3] : memref<5xi32, #tpu.memory_space<smem>>
    %32 = arith.index_cast %31 : i32 to index
    %c0_47 = arith.constant 0 : index
    %33 = vector.load %arg2[%32, %c0_47] : memref<16x32xf32, #tpu.memory_space<vmem>>, vector<1x32xf32>
    %c4 = arith.constant 4 : index
    %34 = memref.load %arg0[%c4] : memref<5xi32, #tpu.memory_space<smem>>
    %35 = arith.index_cast %34 : i32 to index
    %c0_48 = arith.constant 0 : index
    %36 = vector.load %arg2[%35, %c0_48] : memref<16x32xf32, #tpu.memory_space<vmem>>, vector<1x32xf32>
    %37 = tpu.concatenate %24, %27, %30, %33, %36 in 0 : vector<1x32xf32>, vector<1x32xf32>, vector<1x32xf32>, vector<1x32xf32>, vector<1x32xf32> -> vector<5x32xf32>
    %c0_49 = arith.constant 0 : index
    %c0_50 = arith.constant 0 : index
    %38 = vector.load %arg3[%c0_49, %c0_50] : memref<32x96xf32, #tpu.memory_space<vmem>>, vector<32x96xf32>
    %cst = arith.constant dense<0.000000e+00> : vector<5x96xf32>
    %39 = tpu.matmul %37, %38, %cst {dimension_numbers = #tpu.dot_dimension_numbers<[1], [0], [0], [1], [0, 0, 1, 1], [], []>} : vector<5x32xf32>, vector<32x96xf32>, vector<5x96xf32> -> vector<5x96xf32>
    %c0_51 = arith.constant 0 : index
    %c0_52 = arith.constant 0 : index
    %40 = vector.load %arg4[%c0_51, %c0_52] : memref<1x96xf32, #tpu.memory_space<vmem>>, vector<1x96xf32>
    %41 = vector.broadcast %40 : vector<1x96xf32> to vector<5x96xf32>
    %42 = arith.addf %39, %41 : vector<5x96xf32>
    %43 = vector.extract_strided_slice %42 {offsets = [0, 0], sizes = [5, 32], strides = [1, 1]} : vector<5x96xf32> to vector<5x32xf32>
    %44 = vector.extract_strided_slice %42 {offsets = [0, 32], sizes = [5, 32], strides = [1, 1]} : vector<5x96xf32> to vector<5x32xf32>
    %45 = vector.extract_strided_slice %42 {offsets = [0, 64], sizes = [5, 32], strides = [1, 1]} : vector<5x96xf32> to vector<5x32xf32>
    %cst_53 = arith.constant 0.000000e+00 : f32
    %46 = vector.broadcast %cst_53 : f32 to vector<1x32xf32>
    %cst_54 = arith.constant dense<0.000000e+00> : vector<1x32xf32>
    %47 = tpu.matmul %46, %0, %cst_54 {dimension_numbers = #tpu.dot_dimension_numbers<[1], [0], [0], [1], [0, 0, 1, 1], [], []>} : vector<1x32xf32>, vector<32x32xf32>, vector<1x32xf32> -> vector<1x32xf32>
    %48 = arith.addf %47, %3 : vector<1x32xf32>
    %cst_55 = arith.constant dense<0.000000e+00> : vector<1x32xf32>
    %49 = tpu.matmul %46, %1, %cst_55 {dimension_numbers = #tpu.dot_dimension_numbers<[1], [0], [0], [1], [0, 0, 1, 1], [], []>} : vector<1x32xf32>, vector<32x32xf32>, vector<1x32xf32> -> vector<1x32xf32>
    %50 = arith.addf %49, %4 : vector<1x32xf32>
    %cst_56 = arith.constant dense<0.000000e+00> : vector<1x32xf32>
    %51 = tpu.matmul %46, %2, %cst_56 {dimension_numbers = #tpu.dot_dimension_numbers<[1], [0], [0], [1], [0, 0, 1, 1], [], []>} : vector<1x32xf32>, vector<32x32xf32>, vector<1x32xf32> -> vector<1x32xf32>
    %52 = arith.addf %51, %5 : vector<1x32xf32>
    %53 = vector.extract_strided_slice %43 {offsets = [0, 0], sizes = [1, 32], strides = [1, 1]} : vector<5x32xf32> to vector<1x32xf32>
    %54 = arith.addf %53, %48 : vector<1x32xf32>
    %55 = arith.negf %54 : vector<1x32xf32>
    %56 = math.exp %55 : vector<1x32xf32>
    %cst_57 = arith.constant 1.000000e+00 : f32
    %57 = vector.broadcast %cst_57 : f32 to vector<1x32xf32>
    %58 = arith.addf %57, %56 : vector<1x32xf32>
    %59 = arith.divf %57, %58 : vector<1x32xf32>
    %60 = vector.extract_strided_slice %44 {offsets = [0, 0], sizes = [1, 32], strides = [1, 1]} : vector<5x32xf32> to vector<1x32xf32>
    %61 = arith.addf %60, %50 : vector<1x32xf32>
    %62 = arith.negf %61 : vector<1x32xf32>
    %63 = math.exp %62 : vector<1x32xf32>
    %cst_58 = arith.constant 1.000000e+00 : f32
    %64 = vector.broadcast %cst_58 : f32 to vector<1x32xf32>
    %65 = arith.addf %64, %63 : vector<1x32xf32>
    %66 = arith.divf %64, %65 : vector<1x32xf32>
    %67 = vector.extract_strided_slice %45 {offsets = [0, 0], sizes = [1, 32], strides = [1, 1]} : vector<5x32xf32> to vector<1x32xf32>
    %68 = arith.mulf %59, %52 : vector<1x32xf32>
    %69 = arith.addf %67, %68 : vector<1x32xf32>
    %70 = math.tanh %69 : vector<1x32xf32>
    %cst_59 = arith.constant 1.000000e+00 : f32
    %71 = vector.broadcast %cst_59 : f32 to vector<1x32xf32>
    %72 = arith.subf %71, %66 : vector<1x32xf32>
    %73 = arith.mulf %72, %70 : vector<1x32xf32>
    %74 = arith.mulf %66, %46 : vector<1x32xf32>
    %75 = arith.addf %73, %74 : vector<1x32xf32>
    %cst_60 = arith.constant dense<0.000000e+00> : vector<1x32xf32>
    %76 = tpu.matmul %75, %0, %cst_60 {dimension_numbers = #tpu.dot_dimension_numbers<[1], [0], [0], [1], [0, 0, 1, 1], [], []>} : vector<1x32xf32>, vector<32x32xf32>, vector<1x32xf32> -> vector<1x32xf32>
    %77 = arith.addf %76, %3 : vector<1x32xf32>
    %cst_61 = arith.constant dense<0.000000e+00> : vector<1x32xf32>
    %78 = tpu.matmul %75, %1, %cst_61 {dimension_numbers = #tpu.dot_dimension_numbers<[1], [0], [0], [1], [0, 0, 1, 1], [], []>} : vector<1x32xf32>, vector<32x32xf32>, vector<1x32xf32> -> vector<1x32xf32>
    %79 = arith.addf %78, %4 : vector<1x32xf32>
    %cst_62 = arith.constant dense<0.000000e+00> : vector<1x32xf32>
    %80 = tpu.matmul %75, %2, %cst_62 {dimension_numbers = #tpu.dot_dimension_numbers<[1], [0], [0], [1], [0, 0, 1, 1], [], []>} : vector<1x32xf32>, vector<32x32xf32>, vector<1x32xf32> -> vector<1x32xf32>
    %81 = arith.addf %80, %5 : vector<1x32xf32>
    %82 = vector.extract_strided_slice %43 {offsets = [1, 0], sizes = [1, 32], strides = [1, 1]} : vector<5x32xf32> to vector<1x32xf32>
    %83 = arith.addf %82, %77 : vector<1x32xf32>
    %84 = arith.negf %83 : vector<1x32xf32>
    %85 = math.exp %84 : vector<1x32xf32>
    %cst_63 = arith.constant 1.000000e+00 : f32
    %86 = vector.broadcast %cst_63 : f32 to vector<1x32xf32>
    %87 = arith.addf %86, %85 : vector<1x32xf32>
    %88 = arith.divf %86, %87 : vector<1x32xf32>
    %89 = vector.extract_strided_slice %44 {offsets = [1, 0], sizes = [1, 32], strides = [1, 1]} : vector<5x32xf32> to vector<1x32xf32>
    %90 = arith.addf %89, %79 : vector<1x32xf32>
    %91 = arith.negf %90 : vector<1x32xf32>
    %92 = math.exp %91 : vector<1x32xf32>
    %cst_64 = arith.constant 1.000000e+00 : f32
    %93 = vector.broadcast %cst_64 : f32 to vector<1x32xf32>
    %94 = arith.addf %93, %92 : vector<1x32xf32>
    %95 = arith.divf %93, %94 : vector<1x32xf32>
    %96 = vector.extract_strided_slice %45 {offsets = [1, 0], sizes = [1, 32], strides = [1, 1]} : vector<5x32xf32> to vector<1x32xf32>
    %97 = arith.mulf %88, %81 : vector<1x32xf32>
    %98 = arith.addf %96, %97 : vector<1x32xf32>
    %99 = math.tanh %98 : vector<1x32xf32>
    %cst_65 = arith.constant 1.000000e+00 : f32
    %100 = vector.broadcast %cst_65 : f32 to vector<1x32xf32>
    %101 = arith.subf %100, %95 : vector<1x32xf32>
    %102 = arith.mulf %101, %99 : vector<1x32xf32>
    %103 = arith.mulf %95, %75 : vector<1x32xf32>
    %104 = arith.addf %102, %103 : vector<1x32xf32>
    %cst_66 = arith.constant dense<0.000000e+00> : vector<1x32xf32>
    %105 = tpu.matmul %104, %0, %cst_66 {dimension_numbers = #tpu.dot_dimension_numbers<[1], [0], [0], [1], [0, 0, 1, 1], [], []>} : vector<1x32xf32>, vector<32x32xf32>, vector<1x32xf32> -> vector<1x32xf32>
    %106 = arith.addf %105, %3 : vector<1x32xf32>
    %cst_67 = arith.constant dense<0.000000e+00> : vector<1x32xf32>
    %107 = tpu.matmul %104, %1, %cst_67 {dimension_numbers = #tpu.dot_dimension_numbers<[1], [0], [0], [1], [0, 0, 1, 1], [], []>} : vector<1x32xf32>, vector<32x32xf32>, vector<1x32xf32> -> vector<1x32xf32>
    %108 = arith.addf %107, %4 : vector<1x32xf32>
    %cst_68 = arith.constant dense<0.000000e+00> : vector<1x32xf32>
    %109 = tpu.matmul %104, %2, %cst_68 {dimension_numbers = #tpu.dot_dimension_numbers<[1], [0], [0], [1], [0, 0, 1, 1], [], []>} : vector<1x32xf32>, vector<32x32xf32>, vector<1x32xf32> -> vector<1x32xf32>
    %110 = arith.addf %109, %5 : vector<1x32xf32>
    %111 = vector.extract_strided_slice %43 {offsets = [2, 0], sizes = [1, 32], strides = [1, 1]} : vector<5x32xf32> to vector<1x32xf32>
    %112 = arith.addf %111, %106 : vector<1x32xf32>
    %113 = arith.negf %112 : vector<1x32xf32>
    %114 = math.exp %113 : vector<1x32xf32>
    %cst_69 = arith.constant 1.000000e+00 : f32
    %115 = vector.broadcast %cst_69 : f32 to vector<1x32xf32>
    %116 = arith.addf %115, %114 : vector<1x32xf32>
    %117 = arith.divf %115, %116 : vector<1x32xf32>
    %118 = vector.extract_strided_slice %44 {offsets = [2, 0], sizes = [1, 32], strides = [1, 1]} : vector<5x32xf32> to vector<1x32xf32>
    %119 = arith.addf %118, %108 : vector<1x32xf32>
    %120 = arith.negf %119 : vector<1x32xf32>
    %121 = math.exp %120 : vector<1x32xf32>
    %cst_70 = arith.constant 1.000000e+00 : f32
    %122 = vector.broadcast %cst_70 : f32 to vector<1x32xf32>
    %123 = arith.addf %122, %121 : vector<1x32xf32>
    %124 = arith.divf %122, %123 : vector<1x32xf32>
    %125 = vector.extract_strided_slice %45 {offsets = [2, 0], sizes = [1, 32], strides = [1, 1]} : vector<5x32xf32> to vector<1x32xf32>
    %126 = arith.mulf %117, %110 : vector<1x32xf32>
    %127 = arith.addf %125, %126 : vector<1x32xf32>
    %128 = math.tanh %127 : vector<1x32xf32>
    %cst_71 = arith.constant 1.000000e+00 : f32
    %129 = vector.broadcast %cst_71 : f32 to vector<1x32xf32>
    %130 = arith.subf %129, %124 : vector<1x32xf32>
    %131 = arith.mulf %130, %128 : vector<1x32xf32>
    %132 = arith.mulf %124, %104 : vector<1x32xf32>
    %133 = arith.addf %131, %132 : vector<1x32xf32>
    %cst_72 = arith.constant dense<0.000000e+00> : vector<1x32xf32>
    %134 = tpu.matmul %133, %0, %cst_72 {dimension_numbers = #tpu.dot_dimension_numbers<[1], [0], [0], [1], [0, 0, 1, 1], [], []>} : vector<1x32xf32>, vector<32x32xf32>, vector<1x32xf32> -> vector<1x32xf32>
    %135 = arith.addf %134, %3 : vector<1x32xf32>
    %cst_73 = arith.constant dense<0.000000e+00> : vector<1x32xf32>
    %136 = tpu.matmul %133, %1, %cst_73 {dimension_numbers = #tpu.dot_dimension_numbers<[1], [0], [0], [1], [0, 0, 1, 1], [], []>} : vector<1x32xf32>, vector<32x32xf32>, vector<1x32xf32> -> vector<1x32xf32>
    %137 = arith.addf %136, %4 : vector<1x32xf32>
    %cst_74 = arith.constant dense<0.000000e+00> : vector<1x32xf32>
    %138 = tpu.matmul %133, %2, %cst_74 {dimension_numbers = #tpu.dot_dimension_numbers<[1], [0], [0], [1], [0, 0, 1, 1], [], []>} : vector<1x32xf32>, vector<32x32xf32>, vector<1x32xf32> -> vector<1x32xf32>
    %139 = arith.addf %138, %5 : vector<1x32xf32>
    %140 = vector.extract_strided_slice %43 {offsets = [3, 0], sizes = [1, 32], strides = [1, 1]} : vector<5x32xf32> to vector<1x32xf32>
    %141 = arith.addf %140, %135 : vector<1x32xf32>
    %142 = arith.negf %141 : vector<1x32xf32>
    %143 = math.exp %142 : vector<1x32xf32>
    %cst_75 = arith.constant 1.000000e+00 : f32
    %144 = vector.broadcast %cst_75 : f32 to vector<1x32xf32>
    %145 = arith.addf %144, %143 : vector<1x32xf32>
    %146 = arith.divf %144, %145 : vector<1x32xf32>
    %147 = vector.extract_strided_slice %44 {offsets = [3, 0], sizes = [1, 32], strides = [1, 1]} : vector<5x32xf32> to vector<1x32xf32>
    %148 = arith.addf %147, %137 : vector<1x32xf32>
    %149 = arith.negf %148 : vector<1x32xf32>
    %150 = math.exp %149 : vector<1x32xf32>
    %cst_76 = arith.constant 1.000000e+00 : f32
    %151 = vector.broadcast %cst_76 : f32 to vector<1x32xf32>
    %152 = arith.addf %151, %150 : vector<1x32xf32>
    %153 = arith.divf %151, %152 : vector<1x32xf32>
    %154 = vector.extract_strided_slice %45 {offsets = [3, 0], sizes = [1, 32], strides = [1, 1]} : vector<5x32xf32> to vector<1x32xf32>
    %155 = arith.mulf %146, %139 : vector<1x32xf32>
    %156 = arith.addf %154, %155 : vector<1x32xf32>
    %157 = math.tanh %156 : vector<1x32xf32>
    %cst_77 = arith.constant 1.000000e+00 : f32
    %158 = vector.broadcast %cst_77 : f32 to vector<1x32xf32>
    %159 = arith.subf %158, %153 : vector<1x32xf32>
    %160 = arith.mulf %159, %157 : vector<1x32xf32>
    %161 = arith.mulf %153, %133 : vector<1x32xf32>
    %162 = arith.addf %160, %161 : vector<1x32xf32>
    %cst_78 = arith.constant dense<0.000000e+00> : vector<1x32xf32>
    %163 = tpu.matmul %162, %0, %cst_78 {dimension_numbers = #tpu.dot_dimension_numbers<[1], [0], [0], [1], [0, 0, 1, 1], [], []>} : vector<1x32xf32>, vector<32x32xf32>, vector<1x32xf32> -> vector<1x32xf32>
    %164 = arith.addf %163, %3 : vector<1x32xf32>
    %cst_79 = arith.constant dense<0.000000e+00> : vector<1x32xf32>
    %165 = tpu.matmul %162, %1, %cst_79 {dimension_numbers = #tpu.dot_dimension_numbers<[1], [0], [0], [1], [0, 0, 1, 1], [], []>} : vector<1x32xf32>, vector<32x32xf32>, vector<1x32xf32> -> vector<1x32xf32>
    %166 = arith.addf %165, %4 : vector<1x32xf32>
    %cst_80 = arith.constant dense<0.000000e+00> : vector<1x32xf32>
    %167 = tpu.matmul %162, %2, %cst_80 {dimension_numbers = #tpu.dot_dimension_numbers<[1], [0], [0], [1], [0, 0, 1, 1], [], []>} : vector<1x32xf32>, vector<32x32xf32>, vector<1x32xf32> -> vector<1x32xf32>
    %168 = arith.addf %167, %5 : vector<1x32xf32>
    %169 = vector.extract_strided_slice %43 {offsets = [4, 0], sizes = [1, 32], strides = [1, 1]} : vector<5x32xf32> to vector<1x32xf32>
    %170 = arith.addf %169, %164 : vector<1x32xf32>
    %171 = arith.negf %170 : vector<1x32xf32>
    %172 = math.exp %171 : vector<1x32xf32>
    %cst_81 = arith.constant 1.000000e+00 : f32
    %173 = vector.broadcast %cst_81 : f32 to vector<1x32xf32>
    %174 = arith.addf %173, %172 : vector<1x32xf32>
    %175 = arith.divf %173, %174 : vector<1x32xf32>
    %176 = vector.extract_strided_slice %44 {offsets = [4, 0], sizes = [1, 32], strides = [1, 1]} : vector<5x32xf32> to vector<1x32xf32>
    %177 = arith.addf %176, %166 : vector<1x32xf32>
    %178 = arith.negf %177 : vector<1x32xf32>
    %179 = math.exp %178 : vector<1x32xf32>
    %cst_82 = arith.constant 1.000000e+00 : f32
    %180 = vector.broadcast %cst_82 : f32 to vector<1x32xf32>
    %181 = arith.addf %180, %179 : vector<1x32xf32>
    %182 = arith.divf %180, %181 : vector<1x32xf32>
    %183 = vector.extract_strided_slice %45 {offsets = [4, 0], sizes = [1, 32], strides = [1, 1]} : vector<5x32xf32> to vector<1x32xf32>
    %184 = arith.mulf %175, %168 : vector<1x32xf32>
    %185 = arith.addf %183, %184 : vector<1x32xf32>
    %186 = math.tanh %185 : vector<1x32xf32>
    %cst_83 = arith.constant 1.000000e+00 : f32
    %187 = vector.broadcast %cst_83 : f32 to vector<1x32xf32>
    %188 = arith.subf %187, %182 : vector<1x32xf32>
    %189 = arith.mulf %188, %186 : vector<1x32xf32>
    %190 = arith.mulf %182, %162 : vector<1x32xf32>
    %191 = arith.addf %189, %190 : vector<1x32xf32>
    %192 = tpu.concatenate %75, %104, %133, %162, %191 in 0 : vector<1x32xf32>, vector<1x32xf32>, vector<1x32xf32>, vector<1x32xf32>, vector<1x32xf32> -> vector<5x32xf32>
    %c0_84 = arith.constant 0 : index
    %193 = memref.load %arg1[%c0_84] : memref<5xi32, #tpu.memory_space<smem>>
    %194 = arith.index_cast %193 : i32 to index
    %c0_85 = arith.constant 0 : index
    %195 = vector.load %arg11[%194, %c0_85] : memref<16x32xf32, #tpu.memory_space<vmem>>, vector<1x32xf32>
    %c1_86 = arith.constant 1 : index
    %196 = memref.load %arg1[%c1_86] : memref<5xi32, #tpu.memory_space<smem>>
    %197 = arith.index_cast %196 : i32 to index
    %c0_87 = arith.constant 0 : index
    %198 = vector.load %arg11[%197, %c0_87] : memref<16x32xf32, #tpu.memory_space<vmem>>, vector<1x32xf32>
    %c2_88 = arith.constant 2 : index
    %199 = memref.load %arg1[%c2_88] : memref<5xi32, #tpu.memory_space<smem>>
    %200 = arith.index_cast %199 : i32 to index
    %c0_89 = arith.constant 0 : index
    %201 = vector.load %arg11[%200, %c0_89] : memref<16x32xf32, #tpu.memory_space<vmem>>, vector<1x32xf32>
    %c3_90 = arith.constant 3 : index
    %202 = memref.load %arg1[%c3_90] : memref<5xi32, #tpu.memory_space<smem>>
    %203 = arith.index_cast %202 : i32 to index
    %c0_91 = arith.constant 0 : index
    %204 = vector.load %arg11[%203, %c0_91] : memref<16x32xf32, #tpu.memory_space<vmem>>, vector<1x32xf32>
    %c4_92 = arith.constant 4 : index
    %205 = memref.load %arg1[%c4_92] : memref<5xi32, #tpu.memory_space<smem>>
    %206 = arith.index_cast %205 : i32 to index
    %c0_93 = arith.constant 0 : index
    %207 = vector.load %arg11[%206, %c0_93] : memref<16x32xf32, #tpu.memory_space<vmem>>, vector<1x32xf32>
    %208 = tpu.concatenate %195, %198, %201, %204, %207 in 0 : vector<1x32xf32>, vector<1x32xf32>, vector<1x32xf32>, vector<1x32xf32>, vector<1x32xf32> -> vector<5x32xf32>
    %c0_94 = arith.constant 0 : index
    %c0_95 = arith.constant 0 : index
    %209 = vector.load %arg12[%c0_94, %c0_95] : memref<32x5xf32, #tpu.memory_space<vmem>>, vector<32x5xf32>
    %cst_96 = arith.constant dense<0.000000e+00> : vector<5x5xf32>
    %210 = tpu.matmul %208, %209, %cst_96 {dimension_numbers = #tpu.dot_dimension_numbers<[1], [0], [0], [1], [0, 0, 1, 1], [], []>} : vector<5x32xf32>, vector<32x5xf32>, vector<5x5xf32> -> vector<5x5xf32>
    %c0_97 = arith.constant 0 : index
    %c0_98 = arith.constant 0 : index
    %211 = vector.load %arg14[%c0_97, %c0_98] : memref<1x5xf32, #tpu.memory_space<vmem>>, vector<1x5xf32>
    %212 = vector.broadcast %211 : vector<1x5xf32> to vector<5x5xf32>
    %213 = arith.addf %210, %212 : vector<5x5xf32>
    %c0_99 = arith.constant 0 : index
    %c0_100 = arith.constant 0 : index
    %214 = vector.load %arg15[%c0_99, %c0_100] : memref<32x32xf32, #tpu.memory_space<vmem>>, vector<32x32xf32>
    %cst_101 = arith.constant dense<0.000000e+00> : vector<5x32xf32>
    %215 = tpu.matmul %208, %214, %cst_101 {dimension_numbers = #tpu.dot_dimension_numbers<[1], [0], [0], [1], [0, 0, 1, 1], [], []>} : vector<5x32xf32>, vector<32x32xf32>, vector<5x32xf32> -> vector<5x32xf32>
    %c0_102 = arith.constant 0 : index
    %c0_103 = arith.constant 0 : index
    %216 = vector.load %arg17[%c0_102, %c0_103] : memref<1x32xf32, #tpu.memory_space<vmem>>, vector<1x32xf32>
    %217 = vector.broadcast %216 : vector<1x32xf32> to vector<5x32xf32>
    %218 = arith.addf %215, %217 : vector<5x32xf32>
    %219 = vector.extract_strided_slice %213 {offsets = [0, 0], sizes = [1, 5], strides = [1, 1]} : vector<5x5xf32> to vector<1x5xf32>
    %cst_104 = arith.constant dense<0.000000e+00> : vector<1x5xf32>
    %220 = tpu.matmul %191, %6, %cst_104 {dimension_numbers = #tpu.dot_dimension_numbers<[1], [0], [0], [1], [0, 0, 1, 1], [], []>} : vector<1x32xf32>, vector<32x5xf32>, vector<1x5xf32> -> vector<1x5xf32>
    %221 = arith.addf %219, %220 : vector<1x5xf32>
    %cst_105 = arith.constant dense<0xFF800000> : vector<1xf32>
    %222 = vector.multi_reduction <maximumf>, %221, %cst_105 [1] : vector<1x5xf32> to vector<1xf32>
    %223 = vector.shape_cast %222 : vector<1xf32> to vector<1x1xf32>
    %224 = vector.broadcast %223 : vector<1x1xf32> to vector<1x5xf32>
    %225 = arith.subf %221, %224 : vector<1x5xf32>
    %226 = math.exp %225 : vector<1x5xf32>
    %cst_106 = arith.constant dense<0.000000e+00> : vector<1xf32>
    %227 = vector.multi_reduction <add>, %226, %cst_106 [1] : vector<1x5xf32> to vector<1xf32>
    %228 = vector.shape_cast %227 : vector<1xf32> to vector<1x1xf32>
    %229 = tpu.reciprocal %228 {approx = true} : vector<1x1xf32> -> vector<1x1xf32>
    %230 = vector.broadcast %229 : vector<1x1xf32> to vector<1x5xf32>
    %231 = arith.mulf %226, %230 : vector<1x5xf32>
    %cst_107 = arith.constant dense<0.000000e+00> : vector<1x32xf32>
    %232 = tpu.matmul %231, %192, %cst_107 {dimension_numbers = #tpu.dot_dimension_numbers<[1], [0], [0], [1], [0, 0, 1, 1], [], []>} : vector<1x5xf32>, vector<5x32xf32>, vector<1x32xf32> -> vector<1x32xf32>
    %233 = vector.extract_strided_slice %218 {offsets = [0, 0], sizes = [1, 32], strides = [1, 1]} : vector<5x32xf32> to vector<1x32xf32>
    %cst_108 = arith.constant dense<0.000000e+00> : vector<1x32xf32>
    %234 = tpu.matmul %232, %7, %cst_108 {dimension_numbers = #tpu.dot_dimension_numbers<[1], [0], [0], [1], [0, 0, 1, 1], [], []>} : vector<1x32xf32>, vector<32x32xf32>, vector<1x32xf32> -> vector<1x32xf32>
    %235 = arith.addf %233, %234 : vector<1x32xf32>
    %cst_109 = arith.constant 0.000000e+00 : f32
    %236 = vector.broadcast %cst_109 : f32 to vector<1x32xf32>
    %237 = arith.maximumf %235, %236 : vector<1x32xf32>
    %cst_110 = arith.constant dense<0.000000e+00> : vector<1x32xf32>
    %238 = tpu.matmul %237, %8, %cst_110 {dimension_numbers = #tpu.dot_dimension_numbers<[1], [0], [0], [1], [0, 0, 1, 1], [], []>} : vector<1x32xf32>, vector<32x32xf32>, vector<1x32xf32> -> vector<1x32xf32>
    %239 = arith.addf %238, %11 : vector<1x32xf32>
    %cst_111 = arith.constant dense<0.000000e+00> : vector<1x32xf32>
    %240 = tpu.matmul %237, %9, %cst_111 {dimension_numbers = #tpu.dot_dimension_numbers<[1], [0], [0], [1], [0, 0, 1, 1], [], []>} : vector<1x32xf32>, vector<32x32xf32>, vector<1x32xf32> -> vector<1x32xf32>
    %241 = arith.addf %240, %12 : vector<1x32xf32>
    %cst_112 = arith.constant dense<0.000000e+00> : vector<1x32xf32>
    %242 = tpu.matmul %237, %10, %cst_112 {dimension_numbers = #tpu.dot_dimension_numbers<[1], [0], [0], [1], [0, 0, 1, 1], [], []>} : vector<1x32xf32>, vector<32x32xf32>, vector<1x32xf32> -> vector<1x32xf32>
    %243 = arith.addf %242, %13 : vector<1x32xf32>
    %cst_113 = arith.constant dense<0.000000e+00> : vector<1x32xf32>
    %244 = tpu.matmul %191, %14, %cst_113 {dimension_numbers = #tpu.dot_dimension_numbers<[1], [0], [0], [1], [0, 0, 1, 1], [], []>} : vector<1x32xf32>, vector<32x32xf32>, vector<1x32xf32> -> vector<1x32xf32>
    %245 = arith.addf %244, %17 : vector<1x32xf32>
    %cst_114 = arith.constant dense<0.000000e+00> : vector<1x32xf32>
    %246 = tpu.matmul %191, %15, %cst_114 {dimension_numbers = #tpu.dot_dimension_numbers<[1], [0], [0], [1], [0, 0, 1, 1], [], []>} : vector<1x32xf32>, vector<32x32xf32>, vector<1x32xf32> -> vector<1x32xf32>
    %247 = arith.addf %246, %18 : vector<1x32xf32>
    %cst_115 = arith.constant dense<0.000000e+00> : vector<1x32xf32>
    %248 = tpu.matmul %191, %16, %cst_115 {dimension_numbers = #tpu.dot_dimension_numbers<[1], [0], [0], [1], [0, 0, 1, 1], [], []>} : vector<1x32xf32>, vector<32x32xf32>, vector<1x32xf32> -> vector<1x32xf32>
    %249 = arith.addf %248, %19 : vector<1x32xf32>
    %250 = arith.addf %239, %245 : vector<1x32xf32>
    %251 = arith.negf %250 : vector<1x32xf32>
    %252 = math.exp %251 : vector<1x32xf32>
    %cst_116 = arith.constant 1.000000e+00 : f32
    %253 = vector.broadcast %cst_116 : f32 to vector<1x32xf32>
    %254 = arith.addf %253, %252 : vector<1x32xf32>
    %255 = arith.divf %253, %254 : vector<1x32xf32>
    %256 = arith.addf %241, %247 : vector<1x32xf32>
    %257 = arith.negf %256 : vector<1x32xf32>
    %258 = math.exp %257 : vector<1x32xf32>
    %cst_117 = arith.constant 1.000000e+00 : f32
    %259 = vector.broadcast %cst_117 : f32 to vector<1x32xf32>
    %260 = arith.addf %259, %258 : vector<1x32xf32>
    %261 = arith.divf %259, %260 : vector<1x32xf32>
    %262 = arith.mulf %255, %249 : vector<1x32xf32>
    %263 = arith.addf %243, %262 : vector<1x32xf32>
    %264 = math.tanh %263 : vector<1x32xf32>
    %cst_118 = arith.constant 1.000000e+00 : f32
    %265 = vector.broadcast %cst_118 : f32 to vector<1x32xf32>
    %266 = arith.subf %265, %261 : vector<1x32xf32>
    %267 = arith.mulf %266, %264 : vector<1x32xf32>
    %268 = arith.mulf %261, %191 : vector<1x32xf32>
    %269 = arith.addf %267, %268 : vector<1x32xf32>
    %cst_119 = arith.constant dense<0.000000e+00> : vector<1x128xf32>
    %270 = tpu.matmul %269, %20, %cst_119 {dimension_numbers = #tpu.dot_dimension_numbers<[1], [0], [0], [1], [0, 0, 1, 1], [], []>} : vector<1x32xf32>, vector<32x128xf32>, vector<1x128xf32> -> vector<1x128xf32>
    %271 = arith.addf %270, %21 : vector<1x128xf32>
    %cst_120 = arith.constant dense<0xFF800000> : vector<1xf32>
    %272 = vector.multi_reduction <maximumf>, %271, %cst_120 [1] : vector<1x128xf32> to vector<1xf32>
    %273 = vector.shape_cast %272 : vector<1xf32> to vector<1x1xf32>
    %274 = vector.broadcast %273 : vector<1x1xf32> to vector<1x128xf32>
    %275 = arith.subf %271, %274 : vector<1x128xf32>
    %276 = math.exp %275 : vector<1x128xf32>
    %cst_121 = arith.constant dense<0.000000e+00> : vector<1xf32>
    %277 = vector.multi_reduction <add>, %276, %cst_121 [1] : vector<1x128xf32> to vector<1xf32>
    %278 = vector.shape_cast %277 : vector<1xf32> to vector<1x1xf32>
    %279 = math.log %278 : vector<1x1xf32>
    %280 = arith.addf %279, %273 : vector<1x1xf32>
    %281 = vector.broadcast %280 : vector<1x1xf32> to vector<1x128xf32>
    %282 = arith.subf %271, %281 : vector<1x128xf32>
    %c0_122 = arith.constant 0 : index
    %c0_123 = arith.constant 0 : index
    %283 = vector.load %arg32[%c0_122, %c0_123] : memref<5x128xf32, #tpu.memory_space<vmem>>, vector<1x128xf32>
    tpu.vector_store %arg32[%c0_122, %c0_123], %282 {strides = array<i32>} : memref<5x128xf32, #tpu.memory_space<vmem>>, vector<1x128xf32>,
    %284 = vector.extract_strided_slice %213 {offsets = [1, 0], sizes = [1, 5], strides = [1, 1]} : vector<5x5xf32> to vector<1x5xf32>
    %cst_124 = arith.constant dense<0.000000e+00> : vector<1x5xf32>
    %285 = tpu.matmul %269, %6, %cst_124 {dimension_numbers = #tpu.dot_dimension_numbers<[1], [0], [0], [1], [0, 0, 1, 1], [], []>} : vector<1x32xf32>, vector<32x5xf32>, vector<1x5xf32> -> vector<1x5xf32>
    %286 = arith.addf %284, %285 : vector<1x5xf32>
    %cst_125 = arith.constant dense<0xFF800000> : vector<1xf32>
    %287 = vector.multi_reduction <maximumf>, %286, %cst_125 [1] : vector<1x5xf32> to vector<1xf32>
    %288 = vector.shape_cast %287 : vector<1xf32> to vector<1x1xf32>
    %289 = vector.broadcast %288 : vector<1x1xf32> to vector<1x5xf32>
    %290 = arith.subf %286, %289 : vector<1x5xf32>
    %291 = math.exp %290 : vector<1x5xf32>
    %cst_126 = arith.constant dense<0.000000e+00> : vector<1xf32>
    %292 = vector.multi_reduction <add>, %291, %cst_126 [1] : vector<1x5xf32> to vector<1xf32>
    %293 = vector.shape_cast %292 : vector<1xf32> to vector<1x1xf32>
    %294 = tpu.reciprocal %293 {approx = true} : vector<1x1xf32> -> vector<1x1xf32>
    %295 = vector.broadcast %294 : vector<1x1xf32> to vector<1x5xf32>
    %296 = arith.mulf %291, %295 : vector<1x5xf32>
    %cst_127 = arith.constant dense<0.000000e+00> : vector<1x32xf32>
    %297 = tpu.matmul %296, %192, %cst_127 {dimension_numbers = #tpu.dot_dimension_numbers<[1], [0], [0], [1], [0, 0, 1, 1], [], []>} : vector<1x5xf32>, vector<5x32xf32>, vector<1x32xf32> -> vector<1x32xf32>
    %298 = vector.extract_strided_slice %218 {offsets = [1, 0], sizes = [1, 32], strides = [1, 1]} : vector<5x32xf32> to vector<1x32xf32>
    %cst_128 = arith.constant dense<0.000000e+00> : vector<1x32xf32>
    %299 = tpu.matmul %297, %7, %cst_128 {dimension_numbers = #tpu.dot_dimension_numbers<[1], [0], [0], [1], [0, 0, 1, 1], [], []>} : vector<1x32xf32>, vector<32x32xf32>, vector<1x32xf32> -> vector<1x32xf32>
    %300 = arith.addf %298, %299 : vector<1x32xf32>
    %cst_129 = arith.constant 0.000000e+00 : f32
    %301 = vector.broadcast %cst_129 : f32 to vector<1x32xf32>
    %302 = arith.maximumf %300, %301 : vector<1x32xf32>
    %cst_130 = arith.constant dense<0.000000e+00> : vector<1x32xf32>
    %303 = tpu.matmul %302, %8, %cst_130 {dimension_numbers = #tpu.dot_dimension_numbers<[1], [0], [0], [1], [0, 0, 1, 1], [], []>} : vector<1x32xf32>, vector<32x32xf32>, vector<1x32xf32> -> vector<1x32xf32>
    %304 = arith.addf %303, %11 : vector<1x32xf32>
    %cst_131 = arith.constant dense<0.000000e+00> : vector<1x32xf32>
    %305 = tpu.matmul %302, %9, %cst_131 {dimension_numbers = #tpu.dot_dimension_numbers<[1], [0], [0], [1], [0, 0, 1, 1], [], []>} : vector<1x32xf32>, vector<32x32xf32>, vector<1x32xf32> -> vector<1x32xf32>
    %306 = arith.addf %305, %12 : vector<1x32xf32>
    %cst_132 = arith.constant dense<0.000000e+00> : vector<1x32xf32>
    %307 = tpu.matmul %302, %10, %cst_132 {dimension_numbers = #tpu.dot_dimension_numbers<[1], [0], [0], [1], [0, 0, 1, 1], [], []>} : vector<1x32xf32>, vector<32x32xf32>, vector<1x32xf32> -> vector<1x32xf32>
    %308 = arith.addf %307, %13 : vector<1x32xf32>
    %cst_133 = arith.constant dense<0.000000e+00> : vector<1x32xf32>
    %309 = tpu.matmul %269, %14, %cst_133 {dimension_numbers = #tpu.dot_dimension_numbers<[1], [0], [0], [1], [0, 0, 1, 1], [], []>} : vector<1x32xf32>, vector<32x32xf32>, vector<1x32xf32> -> vector<1x32xf32>
    %310 = arith.addf %309, %17 : vector<1x32xf32>
    %cst_134 = arith.constant dense<0.000000e+00> : vector<1x32xf32>
    %311 = tpu.matmul %269, %15, %cst_134 {dimension_numbers = #tpu.dot_dimension_numbers<[1], [0], [0], [1], [0, 0, 1, 1], [], []>} : vector<1x32xf32>, vector<32x32xf32>, vector<1x32xf32> -> vector<1x32xf32>
    %312 = arith.addf %311, %18 : vector<1x32xf32>
    %cst_135 = arith.constant dense<0.000000e+00> : vector<1x32xf32>
    %313 = tpu.matmul %269, %16, %cst_135 {dimension_numbers = #tpu.dot_dimension_numbers<[1], [0], [0], [1], [0, 0, 1, 1], [], []>} : vector<1x32xf32>, vector<32x32xf32>, vector<1x32xf32> -> vector<1x32xf32>
    %314 = arith.addf %313, %19 : vector<1x32xf32>
    %315 = arith.addf %304, %310 : vector<1x32xf32>
    %316 = arith.negf %315 : vector<1x32xf32>
    %317 = math.exp %316 : vector<1x32xf32>
    %cst_136 = arith.constant 1.000000e+00 : f32
    %318 = vector.broadcast %cst_136 : f32 to vector<1x32xf32>
    %319 = arith.addf %318, %317 : vector<1x32xf32>
    %320 = arith.divf %318, %319 : vector<1x32xf32>
    %321 = arith.addf %306, %312 : vector<1x32xf32>
    %322 = arith.negf %321 : vector<1x32xf32>
    %323 = math.exp %322 : vector<1x32xf32>
    %cst_137 = arith.constant 1.000000e+00 : f32
    %324 = vector.broadcast %cst_137 : f32 to vector<1x32xf32>
    %325 = arith.addf %324, %323 : vector<1x32xf32>
    %326 = arith.divf %324, %325 : vector<1x32xf32>
    %327 = arith.mulf %320, %314 : vector<1x32xf32>
    %328 = arith.addf %308, %327 : vector<1x32xf32>
    %329 = math.tanh %328 : vector<1x32xf32>
    %cst_138 = arith.constant 1.000000e+00 : f32
    %330 = vector.broadcast %cst_138 : f32 to vector<1x32xf32>
    %331 = arith.subf %330, %326 : vector<1x32xf32>
    %332 = arith.mulf %331, %329 : vector<1x32xf32>
    %333 = arith.mulf %326, %269 : vector<1x32xf32>
    %334 = arith.addf %332, %333 : vector<1x32xf32>
    %cst_139 = arith.constant dense<0.000000e+00> : vector<1x128xf32>
    %335 = tpu.matmul %334, %20, %cst_139 {dimension_numbers = #tpu.dot_dimension_numbers<[1], [0], [0], [1], [0, 0, 1, 1], [], []>} : vector<1x32xf32>, vector<32x128xf32>, vector<1x128xf32> -> vector<1x128xf32>
    %336 = arith.addf %335, %21 : vector<1x128xf32>
    %cst_140 = arith.constant dense<0xFF800000> : vector<1xf32>
    %337 = vector.multi_reduction <maximumf>, %336, %cst_140 [1] : vector<1x128xf32> to vector<1xf32>
    %338 = vector.shape_cast %337 : vector<1xf32> to vector<1x1xf32>
    %339 = vector.broadcast %338 : vector<1x1xf32> to vector<1x128xf32>
    %340 = arith.subf %336, %339 : vector<1x128xf32>
    %341 = math.exp %340 : vector<1x128xf32>
    %cst_141 = arith.constant dense<0.000000e+00> : vector<1xf32>
    %342 = vector.multi_reduction <add>, %341, %cst_141 [1] : vector<1x128xf32> to vector<1xf32>
    %343 = vector.shape_cast %342 : vector<1xf32> to vector<1x1xf32>
    %344 = math.log %343 : vector<1x1xf32>
    %345 = arith.addf %344, %338 : vector<1x1xf32>
    %346 = vector.broadcast %345 : vector<1x1xf32> to vector<1x128xf32>
    %347 = arith.subf %336, %346 : vector<1x128xf32>
    %c1_142 = arith.constant 1 : index
    %c0_143 = arith.constant 0 : index
    %348 = vector.load %arg32[%c1_142, %c0_143] : memref<5x128xf32, #tpu.memory_space<vmem>>, vector<1x128xf32>
    tpu.vector_store %arg32[%c1_142, %c0_143], %347 {strides = array<i32>} : memref<5x128xf32, #tpu.memory_space<vmem>>, vector<1x128xf32>,
    %349 = vector.extract_strided_slice %213 {offsets = [2, 0], sizes = [1, 5], strides = [1, 1]} : vector<5x5xf32> to vector<1x5xf32>
    %cst_144 = arith.constant dense<0.000000e+00> : vector<1x5xf32>
    %350 = tpu.matmul %334, %6, %cst_144 {dimension_numbers = #tpu.dot_dimension_numbers<[1], [0], [0], [1], [0, 0, 1, 1], [], []>} : vector<1x32xf32>, vector<32x5xf32>, vector<1x5xf32> -> vector<1x5xf32>
    %351 = arith.addf %349, %350 : vector<1x5xf32>
    %cst_145 = arith.constant dense<0xFF800000> : vector<1xf32>
    %352 = vector.multi_reduction <maximumf>, %351, %cst_145 [1] : vector<1x5xf32> to vector<1xf32>
    %353 = vector.shape_cast %352 : vector<1xf32> to vector<1x1xf32>
    %354 = vector.broadcast %353 : vector<1x1xf32> to vector<1x5xf32>
    %355 = arith.subf %351, %354 : vector<1x5xf32>
    %356 = math.exp %355 : vector<1x5xf32>
    %cst_146 = arith.constant dense<0.000000e+00> : vector<1xf32>
    %357 = vector.multi_reduction <add>, %356, %cst_146 [1] : vector<1x5xf32> to vector<1xf32>
    %358 = vector.shape_cast %357 : vector<1xf32> to vector<1x1xf32>
    %359 = tpu.reciprocal %358 {approx = true} : vector<1x1xf32> -> vector<1x1xf32>
    %360 = vector.broadcast %359 : vector<1x1xf32> to vector<1x5xf32>
    %361 = arith.mulf %356, %360 : vector<1x5xf32>
    %cst_147 = arith.constant dense<0.000000e+00> : vector<1x32xf32>
    %362 = tpu.matmul %361, %192, %cst_147 {dimension_numbers = #tpu.dot_dimension_numbers<[1], [0], [0], [1], [0, 0, 1, 1], [], []>} : vector<1x5xf32>, vector<5x32xf32>, vector<1x32xf32> -> vector<1x32xf32>
    %363 = vector.extract_strided_slice %218 {offsets = [2, 0], sizes = [1, 32], strides = [1, 1]} : vector<5x32xf32> to vector<1x32xf32>
    %cst_148 = arith.constant dense<0.000000e+00> : vector<1x32xf32>
    %364 = tpu.matmul %362, %7, %cst_148 {dimension_numbers = #tpu.dot_dimension_numbers<[1], [0], [0], [1], [0, 0, 1, 1], [], []>} : vector<1x32xf32>, vector<32x32xf32>, vector<1x32xf32> -> vector<1x32xf32>
    %365 = arith.addf %363, %364 : vector<1x32xf32>
    %cst_149 = arith.constant 0.000000e+00 : f32
    %366 = vector.broadcast %cst_149 : f32 to vector<1x32xf32>
    %367 = arith.maximumf %365, %366 : vector<1x32xf32>
    %cst_150 = arith.constant dense<0.000000e+00> : vector<1x32xf32>
    %368 = tpu.matmul %367, %8, %cst_150 {dimension_numbers = #tpu.dot_dimension_numbers<[1], [0], [0], [1], [0, 0, 1, 1], [], []>} : vector<1x32xf32>, vector<32x32xf32>, vector<1x32xf32> -> vector<1x32xf32>
    %369 = arith.addf %368, %11 : vector<1x32xf32>
    %cst_151 = arith.constant dense<0.000000e+00> : vector<1x32xf32>
    %370 = tpu.matmul %367, %9, %cst_151 {dimension_numbers = #tpu.dot_dimension_numbers<[1], [0], [0], [1], [0, 0, 1, 1], [], []>} : vector<1x32xf32>, vector<32x32xf32>, vector<1x32xf32> -> vector<1x32xf32>
    %371 = arith.addf %370, %12 : vector<1x32xf32>
    %cst_152 = arith.constant dense<0.000000e+00> : vector<1x32xf32>
    %372 = tpu.matmul %367, %10, %cst_152 {dimension_numbers = #tpu.dot_dimension_numbers<[1], [0], [0], [1], [0, 0, 1, 1], [], []>} : vector<1x32xf32>, vector<32x32xf32>, vector<1x32xf32> -> vector<1x32xf32>
    %373 = arith.addf %372, %13 : vector<1x32xf32>
    %cst_153 = arith.constant dense<0.000000e+00> : vector<1x32xf32>
    %374 = tpu.matmul %334, %14, %cst_153 {dimension_numbers = #tpu.dot_dimension_numbers<[1], [0], [0], [1], [0, 0, 1, 1], [], []>} : vector<1x32xf32>, vector<32x32xf32>, vector<1x32xf32> -> vector<1x32xf32>
    %375 = arith.addf %374, %17 : vector<1x32xf32>
    %cst_154 = arith.constant dense<0.000000e+00> : vector<1x32xf32>
    %376 = tpu.matmul %334, %15, %cst_154 {dimension_numbers = #tpu.dot_dimension_numbers<[1], [0], [0], [1], [0, 0, 1, 1], [], []>} : vector<1x32xf32>, vector<32x32xf32>, vector<1x32xf32> -> vector<1x32xf32>
    %377 = arith.addf %376, %18 : vector<1x32xf32>
    %cst_155 = arith.constant dense<0.000000e+00> : vector<1x32xf32>
    %378 = tpu.matmul %334, %16, %cst_155 {dimension_numbers = #tpu.dot_dimension_numbers<[1], [0], [0], [1], [0, 0, 1, 1], [], []>} : vector<1x32xf32>, vector<32x32xf32>, vector<1x32xf32> -> vector<1x32xf32>
    %379 = arith.addf %378, %19 : vector<1x32xf32>
    %380 = arith.addf %369, %375 : vector<1x32xf32>
    %381 = arith.negf %380 : vector<1x32xf32>
    %382 = math.exp %381 : vector<1x32xf32>
    %cst_156 = arith.constant 1.000000e+00 : f32
    %383 = vector.broadcast %cst_156 : f32 to vector<1x32xf32>
    %384 = arith.addf %383, %382 : vector<1x32xf32>
    %385 = arith.divf %383, %384 : vector<1x32xf32>
    %386 = arith.addf %371, %377 : vector<1x32xf32>
    %387 = arith.negf %386 : vector<1x32xf32>
    %388 = math.exp %387 : vector<1x32xf32>
    %cst_157 = arith.constant 1.000000e+00 : f32
    %389 = vector.broadcast %cst_157 : f32 to vector<1x32xf32>
    %390 = arith.addf %389, %388 : vector<1x32xf32>
    %391 = arith.divf %389, %390 : vector<1x32xf32>
    %392 = arith.mulf %385, %379 : vector<1x32xf32>
    %393 = arith.addf %373, %392 : vector<1x32xf32>
    %394 = math.tanh %393 : vector<1x32xf32>
    %cst_158 = arith.constant 1.000000e+00 : f32
    %395 = vector.broadcast %cst_158 : f32 to vector<1x32xf32>
    %396 = arith.subf %395, %391 : vector<1x32xf32>
    %397 = arith.mulf %396, %394 : vector<1x32xf32>
    %398 = arith.mulf %391, %334 : vector<1x32xf32>
    %399 = arith.addf %397, %398 : vector<1x32xf32>
    %cst_159 = arith.constant dense<0.000000e+00> : vector<1x128xf32>
    %400 = tpu.matmul %399, %20, %cst_159 {dimension_numbers = #tpu.dot_dimension_numbers<[1], [0], [0], [1], [0, 0, 1, 1], [], []>} : vector<1x32xf32>, vector<32x128xf32>, vector<1x128xf32> -> vector<1x128xf32>
    %401 = arith.addf %400, %21 : vector<1x128xf32>
    %cst_160 = arith.constant dense<0xFF800000> : vector<1xf32>
    %402 = vector.multi_reduction <maximumf>, %401, %cst_160 [1] : vector<1x128xf32> to vector<1xf32>
    %403 = vector.shape_cast %402 : vector<1xf32> to vector<1x1xf32>
    %404 = vector.broadcast %403 : vector<1x1xf32> to vector<1x128xf32>
    %405 = arith.subf %401, %404 : vector<1x128xf32>
    %406 = math.exp %405 : vector<1x128xf32>
    %cst_161 = arith.constant dense<0.000000e+00> : vector<1xf32>
    %407 = vector.multi_reduction <add>, %406, %cst_161 [1] : vector<1x128xf32> to vector<1xf32>
    %408 = vector.shape_cast %407 : vector<1xf32> to vector<1x1xf32>
    %409 = math.log %408 : vector<1x1xf32>
    %410 = arith.addf %409, %403 : vector<1x1xf32>
    %411 = vector.broadcast %410 : vector<1x1xf32> to vector<1x128xf32>
    %412 = arith.subf %401, %411 : vector<1x128xf32>
    %c2_162 = arith.constant 2 : index
    %c0_163 = arith.constant 0 : index
    %413 = vector.load %arg32[%c2_162, %c0_163] : memref<5x128xf32, #tpu.memory_space<vmem>>, vector<1x128xf32>
    tpu.vector_store %arg32[%c2_162, %c0_163], %412 {strides = array<i32>} : memref<5x128xf32, #tpu.memory_space<vmem>>, vector<1x128xf32>,
    %414 = vector.extract_strided_slice %213 {offsets = [3, 0], sizes = [1, 5], strides = [1, 1]} : vector<5x5xf32> to vector<1x5xf32>
    %cst_164 = arith.constant dense<0.000000e+00> : vector<1x5xf32>
    %415 = tpu.matmul %399, %6, %cst_164 {dimension_numbers = #tpu.dot_dimension_numbers<[1], [0], [0], [1], [0, 0, 1, 1], [], []>} : vector<1x32xf32>, vector<32x5xf32>, vector<1x5xf32> -> vector<1x5xf32>
    %416 = arith.addf %414, %415 : vector<1x5xf32>
    %cst_165 = arith.constant dense<0xFF800000> : vector<1xf32>
    %417 = vector.multi_reduction <maximumf>, %416, %cst_165 [1] : vector<1x5xf32> to vector<1xf32>
    %418 = vector.shape_cast %417 : vector<1xf32> to vector<1x1xf32>
    %419 = vector.broadcast %418 : vector<1x1xf32> to vector<1x5xf32>
    %420 = arith.subf %416, %419 : vector<1x5xf32>
    %421 = math.exp %420 : vector<1x5xf32>
    %cst_166 = arith.constant dense<0.000000e+00> : vector<1xf32>
    %422 = vector.multi_reduction <add>, %421, %cst_166 [1] : vector<1x5xf32> to vector<1xf32>
    %423 = vector.shape_cast %422 : vector<1xf32> to vector<1x1xf32>
    %424 = tpu.reciprocal %423 {approx = true} : vector<1x1xf32> -> vector<1x1xf32>
    %425 = vector.broadcast %424 : vector<1x1xf32> to vector<1x5xf32>
    %426 = arith.mulf %421, %425 : vector<1x5xf32>
    %cst_167 = arith.constant dense<0.000000e+00> : vector<1x32xf32>
    %427 = tpu.matmul %426, %192, %cst_167 {dimension_numbers = #tpu.dot_dimension_numbers<[1], [0], [0], [1], [0, 0, 1, 1], [], []>} : vector<1x5xf32>, vector<5x32xf32>, vector<1x32xf32> -> vector<1x32xf32>
    %428 = vector.extract_strided_slice %218 {offsets = [3, 0], sizes = [1, 32], strides = [1, 1]} : vector<5x32xf32> to vector<1x32xf32>
    %cst_168 = arith.constant dense<0.000000e+00> : vector<1x32xf32>
    %429 = tpu.matmul %427, %7, %cst_168 {dimension_numbers = #tpu.dot_dimension_numbers<[1], [0], [0], [1], [0, 0, 1, 1], [], []>} : vector<1x32xf32>, vector<32x32xf32>, vector<1x32xf32> -> vector<1x32xf32>
    %430 = arith.addf %428, %429 : vector<1x32xf32>
    %cst_169 = arith.constant 0.000000e+00 : f32
    %431 = vector.broadcast %cst_169 : f32 to vector<1x32xf32>
    %432 = arith.maximumf %430, %431 : vector<1x32xf32>
    %cst_170 = arith.constant dense<0.000000e+00> : vector<1x32xf32>
    %433 = tpu.matmul %432, %8, %cst_170 {dimension_numbers = #tpu.dot_dimension_numbers<[1], [0], [0], [1], [0, 0, 1, 1], [], []>} : vector<1x32xf32>, vector<32x32xf32>, vector<1x32xf32> -> vector<1x32xf32>
    %434 = arith.addf %433, %11 : vector<1x32xf32>
    %cst_171 = arith.constant dense<0.000000e+00> : vector<1x32xf32>
    %435 = tpu.matmul %432, %9, %cst_171 {dimension_numbers = #tpu.dot_dimension_numbers<[1], [0], [0], [1], [0, 0, 1, 1], [], []>} : vector<1x32xf32>, vector<32x32xf32>, vector<1x32xf32> -> vector<1x32xf32>
    %436 = arith.addf %435, %12 : vector<1x32xf32>
    %cst_172 = arith.constant dense<0.000000e+00> : vector<1x32xf32>
    %437 = tpu.matmul %432, %10, %cst_172 {dimension_numbers = #tpu.dot_dimension_numbers<[1], [0], [0], [1], [0, 0, 1, 1], [], []>} : vector<1x32xf32>, vector<32x32xf32>, vector<1x32xf32> -> vector<1x32xf32>
    %438 = arith.addf %437, %13 : vector<1x32xf32>
    %cst_173 = arith.constant dense<0.000000e+00> : vector<1x32xf32>
    %439 = tpu.matmul %399, %14, %cst_173 {dimension_numbers = #tpu.dot_dimension_numbers<[1], [0], [0], [1], [0, 0, 1, 1], [], []>} : vector<1x32xf32>, vector<32x32xf32>, vector<1x32xf32> -> vector<1x32xf32>
    %440 = arith.addf %439, %17 : vector<1x32xf32>
    %cst_174 = arith.constant dense<0.000000e+00> : vector<1x32xf32>
    %441 = tpu.matmul %399, %15, %cst_174 {dimension_numbers = #tpu.dot_dimension_numbers<[1], [0], [0], [1], [0, 0, 1, 1], [], []>} : vector<1x32xf32>, vector<32x32xf32>, vector<1x32xf32> -> vector<1x32xf32>
    %442 = arith.addf %441, %18 : vector<1x32xf32>
    %cst_175 = arith.constant dense<0.000000e+00> : vector<1x32xf32>
    %443 = tpu.matmul %399, %16, %cst_175 {dimension_numbers = #tpu.dot_dimension_numbers<[1], [0], [0], [1], [0, 0, 1, 1], [], []>} : vector<1x32xf32>, vector<32x32xf32>, vector<1x32xf32> -> vector<1x32xf32>
    %444 = arith.addf %443, %19 : vector<1x32xf32>
    %445 = arith.addf %434, %440 : vector<1x32xf32>
    %446 = arith.negf %445 : vector<1x32xf32>
    %447 = math.exp %446 : vector<1x32xf32>
    %cst_176 = arith.constant 1.000000e+00 : f32
    %448 = vector.broadcast %cst_176 : f32 to vector<1x32xf32>
    %449 = arith.addf %448, %447 : vector<1x32xf32>
    %450 = arith.divf %448, %449 : vector<1x32xf32>
    %451 = arith.addf %436, %442 : vector<1x32xf32>
    %452 = arith.negf %451 : vector<1x32xf32>
    %453 = math.exp %452 : vector<1x32xf32>
    %cst_177 = arith.constant 1.000000e+00 : f32
    %454 = vector.broadcast %cst_177 : f32 to vector<1x32xf32>
    %455 = arith.addf %454, %453 : vector<1x32xf32>
    %456 = arith.divf %454, %455 : vector<1x32xf32>
    %457 = arith.mulf %450, %444 : vector<1x32xf32>
    %458 = arith.addf %438, %457 : vector<1x32xf32>
    %459 = math.tanh %458 : vector<1x32xf32>
    %cst_178 = arith.constant 1.000000e+00 : f32
    %460 = vector.broadcast %cst_178 : f32 to vector<1x32xf32>
    %461 = arith.subf %460, %456 : vector<1x32xf32>
    %462 = arith.mulf %461, %459 : vector<1x32xf32>
    %463 = arith.mulf %456, %399 : vector<1x32xf32>
    %464 = arith.addf %462, %463 : vector<1x32xf32>
    %cst_179 = arith.constant dense<0.000000e+00> : vector<1x128xf32>
    %465 = tpu.matmul %464, %20, %cst_179 {dimension_numbers = #tpu.dot_dimension_numbers<[1], [0], [0], [1], [0, 0, 1, 1], [], []>} : vector<1x32xf32>, vector<32x128xf32>, vector<1x128xf32> -> vector<1x128xf32>
    %466 = arith.addf %465, %21 : vector<1x128xf32>
    %cst_180 = arith.constant dense<0xFF800000> : vector<1xf32>
    %467 = vector.multi_reduction <maximumf>, %466, %cst_180 [1] : vector<1x128xf32> to vector<1xf32>
    %468 = vector.shape_cast %467 : vector<1xf32> to vector<1x1xf32>
    %469 = vector.broadcast %468 : vector<1x1xf32> to vector<1x128xf32>
    %470 = arith.subf %466, %469 : vector<1x128xf32>
    %471 = math.exp %470 : vector<1x128xf32>
    %cst_181 = arith.constant dense<0.000000e+00> : vector<1xf32>
    %472 = vector.multi_reduction <add>, %471, %cst_181 [1] : vector<1x128xf32> to vector<1xf32>
    %473 = vector.shape_cast %472 : vector<1xf32> to vector<1x1xf32>
    %474 = math.log %473 : vector<1x1xf32>
    %475 = arith.addf %474, %468 : vector<1x1xf32>
    %476 = vector.broadcast %475 : vector<1x1xf32> to vector<1x128xf32>
    %477 = arith.subf %466, %476 : vector<1x128xf32>
    %c3_182 = arith.constant 3 : index
    %c0_183 = arith.constant 0 : index
    %478 = vector.load %arg32[%c3_182, %c0_183] : memref<5x128xf32, #tpu.memory_space<vmem>>, vector<1x128xf32>
    tpu.vector_store %arg32[%c3_182, %c0_183], %477 {strides = array<i32>} : memref<5x128xf32, #tpu.memory_space<vmem>>, vector<1x128xf32>,
    %479 = vector.extract_strided_slice %213 {offsets = [4, 0], sizes = [1, 5], strides = [1, 1]} : vector<5x5xf32> to vector<1x5xf32>
    %cst_184 = arith.constant dense<0.000000e+00> : vector<1x5xf32>
    %480 = tpu.matmul %464, %6, %cst_184 {dimension_numbers = #tpu.dot_dimension_numbers<[1], [0], [0], [1], [0, 0, 1, 1], [], []>} : vector<1x32xf32>, vector<32x5xf32>, vector<1x5xf32> -> vector<1x5xf32>
    %481 = arith.addf %479, %480 : vector<1x5xf32>
    %cst_185 = arith.constant dense<0xFF800000> : vector<1xf32>
    %482 = vector.multi_reduction <maximumf>, %481, %cst_185 [1] : vector<1x5xf32> to vector<1xf32>
    %483 = vector.shape_cast %482 : vector<1xf32> to vector<1x1xf32>
    %484 = vector.broadcast %483 : vector<1x1xf32> to vector<1x5xf32>
    %485 = arith.subf %481, %484 : vector<1x5xf32>
    %486 = math.exp %485 : vector<1x5xf32>
    %cst_186 = arith.constant dense<0.000000e+00> : vector<1xf32>
    %487 = vector.multi_reduction <add>, %486, %cst_186 [1] : vector<1x5xf32> to vector<1xf32>
    %488 = vector.shape_cast %487 : vector<1xf32> to vector<1x1xf32>
    %489 = tpu.reciprocal %488 {approx = true} : vector<1x1xf32> -> vector<1x1xf32>
    %490 = vector.broadcast %489 : vector<1x1xf32> to vector<1x5xf32>
    %491 = arith.mulf %486, %490 : vector<1x5xf32>
    %cst_187 = arith.constant dense<0.000000e+00> : vector<1x32xf32>
    %492 = tpu.matmul %491, %192, %cst_187 {dimension_numbers = #tpu.dot_dimension_numbers<[1], [0], [0], [1], [0, 0, 1, 1], [], []>} : vector<1x5xf32>, vector<5x32xf32>, vector<1x32xf32> -> vector<1x32xf32>
    %493 = vector.extract_strided_slice %218 {offsets = [4, 0], sizes = [1, 32], strides = [1, 1]} : vector<5x32xf32> to vector<1x32xf32>
    %cst_188 = arith.constant dense<0.000000e+00> : vector<1x32xf32>
    %494 = tpu.matmul %492, %7, %cst_188 {dimension_numbers = #tpu.dot_dimension_numbers<[1], [0], [0], [1], [0, 0, 1, 1], [], []>} : vector<1x32xf32>, vector<32x32xf32>, vector<1x32xf32> -> vector<1x32xf32>
    %495 = arith.addf %493, %494 : vector<1x32xf32>
    %cst_189 = arith.constant 0.000000e+00 : f32
    %496 = vector.broadcast %cst_189 : f32 to vector<1x32xf32>
    %497 = arith.maximumf %495, %496 : vector<1x32xf32>
    %cst_190 = arith.constant dense<0.000000e+00> : vector<1x32xf32>
    %498 = tpu.matmul %497, %8, %cst_190 {dimension_numbers = #tpu.dot_dimension_numbers<[1], [0], [0], [1], [0, 0, 1, 1], [], []>} : vector<1x32xf32>, vector<32x32xf32>, vector<1x32xf32> -> vector<1x32xf32>
    %499 = arith.addf %498, %11 : vector<1x32xf32>
    %cst_191 = arith.constant dense<0.000000e+00> : vector<1x32xf32>
    %500 = tpu.matmul %497, %9, %cst_191 {dimension_numbers = #tpu.dot_dimension_numbers<[1], [0], [0], [1], [0, 0, 1, 1], [], []>} : vector<1x32xf32>, vector<32x32xf32>, vector<1x32xf32> -> vector<1x32xf32>
    %501 = arith.addf %500, %12 : vector<1x32xf32>
    %cst_192 = arith.constant dense<0.000000e+00> : vector<1x32xf32>
    %502 = tpu.matmul %497, %10, %cst_192 {dimension_numbers = #tpu.dot_dimension_numbers<[1], [0], [0], [1], [0, 0, 1, 1], [], []>} : vector<1x32xf32>, vector<32x32xf32>, vector<1x32xf32> -> vector<1x32xf32>
    %503 = arith.addf %502, %13 : vector<1x32xf32>
    %cst_193 = arith.constant dense<0.000000e+00> : vector<1x32xf32>
    %504 = tpu.matmul %464, %14, %cst_193 {dimension_numbers = #tpu.dot_dimension_numbers<[1], [0], [0], [1], [0, 0, 1, 1], [], []>} : vector<1x32xf32>, vector<32x32xf32>, vector<1x32xf32> -> vector<1x32xf32>
    %505 = arith.addf %504, %17 : vector<1x32xf32>
    %cst_194 = arith.constant dense<0.000000e+00> : vector<1x32xf32>
    %506 = tpu.matmul %464, %15, %cst_194 {dimension_numbers = #tpu.dot_dimension_numbers<[1], [0], [0], [1], [0, 0, 1, 1], [], []>} : vector<1x32xf32>, vector<32x32xf32>, vector<1x32xf32> -> vector<1x32xf32>
    %507 = arith.addf %506, %18 : vector<1x32xf32>
    %cst_195 = arith.constant dense<0.000000e+00> : vector<1x32xf32>
    %508 = tpu.matmul %464, %16, %cst_195 {dimension_numbers = #tpu.dot_dimension_numbers<[1], [0], [0], [1], [0, 0, 1, 1], [], []>} : vector<1x32xf32>, vector<32x32xf32>, vector<1x32xf32> -> vector<1x32xf32>
    %509 = arith.addf %508, %19 : vector<1x32xf32>
    %510 = arith.addf %499, %505 : vector<1x32xf32>
    %511 = arith.negf %510 : vector<1x32xf32>
    %512 = math.exp %511 : vector<1x32xf32>
    %cst_196 = arith.constant 1.000000e+00 : f32
    %513 = vector.broadcast %cst_196 : f32 to vector<1x32xf32>
    %514 = arith.addf %513, %512 : vector<1x32xf32>
    %515 = arith.divf %513, %514 : vector<1x32xf32>
    %516 = arith.addf %501, %507 : vector<1x32xf32>
    %517 = arith.negf %516 : vector<1x32xf32>
    %518 = math.exp %517 : vector<1x32xf32>
    %cst_197 = arith.constant 1.000000e+00 : f32
    %519 = vector.broadcast %cst_197 : f32 to vector<1x32xf32>
    %520 = arith.addf %519, %518 : vector<1x32xf32>
    %521 = arith.divf %519, %520 : vector<1x32xf32>
    %522 = arith.mulf %515, %509 : vector<1x32xf32>
    %523 = arith.addf %503, %522 : vector<1x32xf32>
    %524 = math.tanh %523 : vector<1x32xf32>
    %cst_198 = arith.constant 1.000000e+00 : f32
    %525 = vector.broadcast %cst_198 : f32 to vector<1x32xf32>
    %526 = arith.subf %525, %521 : vector<1x32xf32>
    %527 = arith.mulf %526, %524 : vector<1x32xf32>
    %528 = arith.mulf %521, %464 : vector<1x32xf32>
    %529 = arith.addf %527, %528 : vector<1x32xf32>
    %cst_199 = arith.constant dense<0.000000e+00> : vector<1x128xf32>
    %530 = tpu.matmul %529, %20, %cst_199 {dimension_numbers = #tpu.dot_dimension_numbers<[1], [0], [0], [1], [0, 0, 1, 1], [], []>} : vector<1x32xf32>, vector<32x128xf32>, vector<1x128xf32> -> vector<1x128xf32>
    %531 = arith.addf %530, %21 : vector<1x128xf32>
    %cst_200 = arith.constant dense<0xFF800000> : vector<1xf32>
    %532 = vector.multi_reduction <maximumf>, %531, %cst_200 [1] : vector<1x128xf32> to vector<1xf32>
    %533 = vector.shape_cast %532 : vector<1xf32> to vector<1x1xf32>
    %534 = vector.broadcast %533 : vector<1x1xf32> to vector<1x128xf32>
    %535 = arith.subf %531, %534 : vector<1x128xf32>
    %536 = math.exp %535 : vector<1x128xf32>
    %cst_201 = arith.constant dense<0.000000e+00> : vector<1xf32>
    %537 = vector.multi_reduction <add>, %536, %cst_201 [1] : vector<1x128xf32> to vector<1xf32>
    %538 = vector.shape_cast %537 : vector<1xf32> to vector<1x1xf32>
    %539 = math.log %538 : vector<1x1xf32>
    %540 = arith.addf %539, %533 : vector<1x1xf32>
    %541 = vector.broadcast %540 : vector<1x1xf32> to vector<1x128xf32>
    %542 = arith.subf %531, %541 : vector<1x128xf32>
    %c4_202 = arith.constant 4 : index
    %c0_203 = arith.constant 0 : index
    %543 = vector.load %arg32[%c4_202, %c0_203] : memref<5x128xf32, #tpu.memory_space<vmem>>, vector<1x128xf32>
    tpu.vector_store %arg32[%c4_202, %c0_203], %542 {strides = array<i32>} : memref<5x128xf32, #tpu.memory_space<vmem>>, vector<1x128xf32>,
    return
  }
}

</mosaic_0001>

<llo_original>
// kernel: tpu_custom_call.1
$region0: #{tpu_custom_call.1}
  #allocation0 [shape = 'u32[]', space=smem, size = 0x4, offset = 0x4, fixed_abs, tag = 'smem constant byte address 0x4 - core index']
  #allocation1 [shape = 'u32[144,128]{1,0:T(1,128)}', space=vmem, size = 0x12000, scoped, tag = 'internal scratch']
  %s0 = inlined_call_operand.smem [shape: u32[33], index: -1, kind: input, shape index: {}]
  %s1 = sld [smem:[%s0]]
  %s2 = scalar_lea.smem %s0, 1
  %s3 = sld [smem:[%s2]]
  %s4 = scalar_lea.smem %s0, 2
  %s5 = sld [smem:[%s4]]
  %s6 = scalar_lea.smem %s0, 3
  %s7 = sld [smem:[%s6]]
  %s8 = scalar_lea.smem %s0, 4
  %s9 = sld [smem:[%s8]]
  %s10 = scalar_lea.smem %s0, 5
  %s11 = sld [smem:[%s10]]
  %s12 = scalar_lea.smem %s0, 6
  %s13 = sld [smem:[%s12]]
  %s14 = scalar_lea.smem %s0, 7
  %s15 = sld [smem:[%s14]]
  %s16 = scalar_lea.smem %s0, 8
  %s17 = sld [smem:[%s16]]
  %s18 = scalar_lea.smem %s0, 9
  %s19 = sld [smem:[%s18]]
  %s20 = scalar_lea.smem %s0, 10
  %s21 = sld [smem:[%s20]]
  %s22 = scalar_lea.smem %s0, 11
  %s23 = sld [smem:[%s22]]
  %s24 = scalar_lea.smem %s0, 12
  %s25 = sld [smem:[%s24]]
  %s26 = scalar_lea.smem %s0, 13
  %s27 = sld [smem:[%s26]]
  %s28 = scalar_lea.smem %s0, 14
  %s29 = sld [smem:[%s28]]
  %s30 = scalar_lea.smem %s0, 15
  %s31 = sld [smem:[%s30]]
  %s32 = scalar_lea.smem %s0, 16
  %s33 = sld [smem:[%s32]]
  %s34 = scalar_lea.smem %s0, 17
  %s35 = sld [smem:[%s34]]
  %s36 = scalar_lea.smem %s0, 18
  %s37 = sld [smem:[%s36]]
  %s38 = scalar_lea.smem %s0, 19
  %s39 = sld [smem:[%s38]]
  %s40 = scalar_lea.smem %s0, 20
  %s41 = sld [smem:[%s40]]
  %s42 = scalar_lea.smem %s0, 21
  %s43 = sld [smem:[%s42]]
  %s44 = scalar_lea.smem %s0, 22
  %s45 = sld [smem:[%s44]]
  %s46 = scalar_lea.smem %s0, 23
  %s47 = sld [smem:[%s46]]
  %s48 = scalar_lea.smem %s0, 24
  %s49 = sld [smem:[%s48]]
  %s50 = scalar_lea.smem %s0, 25
  %s51 = sld [smem:[%s50]]
  %s52 = scalar_lea.smem %s0, 26
  %s53 = sld [smem:[%s52]]
  %s54 = scalar_lea.smem %s0, 27
  %s55 = sld [smem:[%s54]]
  %s56 = scalar_lea.smem %s0, 28
  %s57 = sld [smem:[%s56]]
  %s58 = scalar_lea.smem %s0, 29
  %s59 = sld [smem:[%s58]]
  %s60 = scalar_lea.smem %s0, 30
  %s61 = sld [smem:[%s60]]
  %s62 = scalar_lea.smem %s0, 31
  %s63 = sld [smem:[%s62]]
  %s64 = scalar_lea.smem %s0, 32
  %s65 = sld [smem:[%s64]]
  %s66 = sld [smem:[#allocation0]]
  $region230: #{tpu_custom_call.1} parent=0
    _
  %s68 = ssub.s32 1, %s66
  %s69 = scalar_select 0, %s68, %s66
  $region1: #{tpu_custom_call.1} parent=0
    #allocation2 [shape = 'u8[512]{0}', space=smem, size = 0x200, scoped, tag = 'input window, operand 0, single buffered']
    #allocation3 [shape = 's32[1]{0}', space=sflag, size = 0x4, scoped, tag = 'scoped memory for tpu_custom_call.1']
    #allocation4 [shape = 's32[1]{0}', space=sflag, size = 0x4, scoped, tag = 'scoped memory for tpu_custom_call.1']
    #allocation5 [shape = 's32[1]{0}', space=sflag, size = 0x4, scoped, tag = 'scoped memory for tpu_custom_call.1']
    #allocation6 [shape = 's32[1]{0}', space=sflag, size = 0x4, scoped, tag = 'scoped memory for tpu_custom_call.1']
    #allocation7 [shape = 'u8[512]{0}', space=smem, size = 0x200, scoped, tag = 'input window, operand 1, single buffered']
    #allocation8 [shape = 'u8[8192]{0}', space=vmem, size = 0x2000, scoped, tag = 'input window, operand 2, single buffered']
    #allocation9 [shape = 'u8[512]{0}', space=vmem, size = 0x400, scoped, tag = 'input window, operand 4, single buffered']
    #allocation10 [shape = 's32[1]{0}', space=sflag, size = 0x4, scoped, tag = 'scoped memory for tpu_custom_call.1']
    #allocation11 [shape = 'u8[16384]{0}', space=vmem, size = 0x4000, scoped, tag = 'input window, operand 7, single buffered']
    #allocation12 [shape = 'u8[512]{0}', space=vmem, size = 0x400, scoped, tag = 'input window, operand 8, single buffered']
    #allocation13 [shape = 's32[1]{0}', space=sflag, size = 0x4, scoped, tag = 'scoped memory for tpu_custom_call.1']
    #allocation14 [shape = 'u8[512]{0}', space=vmem, size = 0x400, scoped, tag = 'input window, operand 9, single buffered']
    #allocation15 [shape = 'u8[512]{0}', space=vmem, size = 0x400, scoped, tag = 'input window, operand 10, single buffered']
    #allocation16 [shape = 's32[1]{0}', space=sflag, size = 0x4, scoped, tag = 'scoped memory for tpu_custom_call.1']
    #allocation17 [shape = 'u8[8192]{0}', space=vmem, size = 0x2000, scoped, tag = 'input window, operand 11, single buffered']
    #allocation18 [shape = 'u8[512]{0}', space=vmem, size = 0x400, scoped, tag = 'input window, operand 14, single buffered']
    #allocation19 [shape = 's32[1]{0}', space=sflag, size = 0x4, scoped, tag = 'scoped memory for tpu_custom_call.1']
    #allocation20 [shape = 'u8[16384]{0}', space=vmem, size = 0x4000, scoped, tag = 'input window, operand 16, single buffered']
    #allocation21 [shape = 'u8[512]{0}', space=vmem, size = 0x400, scoped, tag = 'input window, operand 17, single buffered']
    #allocation22 [shape = 's32[1]{0}', space=sflag, size = 0x4, scoped, tag = 'scoped memory for tpu_custom_call.1']
    #allocation23 [shape = 'u8[16384]{0}', space=vmem, size = 0x4000, scoped, tag = 'input window, operand 18, single buffered']
    #allocation24 [shape = 'u8[16384]{0}', space=vmem, size = 0x4000, scoped, tag = 'input window, operand 19, single buffered']
    #allocation25 [shape = 's32[1]{0}', space=sflag, size = 0x4, scoped, tag = 'scoped memory for tpu_custom_call.1']
    #allocation26 [shape = 'u8[16384]{0}', space=vmem, size = 0x4000, scoped, tag = 'input window, operand 20, single buffered']
    #allocation27 [shape = 'u8[512]{0}', space=vmem, size = 0x400, scoped, tag = 'input window, operand 21, single buffered']
    #allocation28 [shape = 's32[1]{0}', space=sflag, size = 0x4, scoped, tag = 'scoped memory for tpu_custom_call.1']
    #allocation29 [shape = 'u8[512]{0}', space=vmem, size = 0x400, scoped, tag = 'input window, operand 22, single buffered']
    #allocation30 [shape = 'u8[512]{0}', space=vmem, size = 0x400, scoped, tag = 'input window, operand 23, single buffered']
    #allocation31 [shape = 's32[1]{0}', space=sflag, size = 0x4, scoped, tag = 'scoped memory for tpu_custom_call.1']
    #allocation32 [shape = 'u8[16384]{0}', space=vmem, size = 0x4000, scoped, tag = 'input window, operand 25, single buffered']
    #allocation33 [shape = 'u8[16384]{0}', space=vmem, size = 0x4000, scoped, tag = 'input window, operand 26, single buffered']
    #allocation34 [shape = 's32[1]{0}', space=sflag, size = 0x4, scoped, tag = 'scoped memory for tpu_custom_call.1']
    #allocation35 [shape = 'u8[512]{0}', space=vmem, size = 0x400, scoped, tag = 'input window, operand 27, single buffered']
    #allocation36 [shape = 'u8[512]{0}', space=vmem, size = 0x400, scoped, tag = 'input window, operand 28, single buffered']
    #allocation37 [shape = 's32[1]{0}', space=sflag, size = 0x4, scoped, tag = 'scoped memory for tpu_custom_call.1']
    #allocation38 [shape = 'u8[512]{0}', space=vmem, size = 0x400, scoped, tag = 'input window, operand 29, single buffered']
    #allocation39 [shape = 'u8[4096]{0}', space=vmem, size = 0x1000, scoped, tag = 'output window, operand 0, single buffered']
    %70 = vsyncpa [#allocation6], 0
    %71 = vsyncpa [#allocation5], 0
    %72 = vsyncpa [#allocation3], 0
    %73 = vsyncpa [#allocation10], 0
    %74 = vsyncpa [#allocation13], 0
    %75 = vsyncpa [#allocation16], 0
    %76 = vsyncpa [#allocation19], 0
    %77 = vsyncpa [#allocation22], 0
    %78 = vsyncpa [#allocation25], 0
    %79 = vsyncpa [#allocation28], 0
    %80 = vsyncpa [#allocation31], 0
    %81 = vsyncpa [#allocation34], 0
    %82 = vsyncpa [#allocation37], 0
    %83 = vsyncpa [#allocation4], 0
    // Predicated region
    $region2: #{tpu_custom_call.1} parent=1 // pred_check
      _
    $region3: #{tpu_custom_call.1} parent=1 // pred_check_branch
      %85 = sbr.rel (0) target = $region5
    $region4: #{tpu_custom_call.1} parent=1 // pred_region
      %s87 = ssub.s32 16, 16
      %88 = vsyncadd [#allocation6], %s87
      %s90 = sshll.u32 %s1, 4
      %s91 = int_to_ptr.vmem [resolvable:$true] %s90
      %93 = dma.vmem_to_smem %s91, 16, [#allocation2], [#allocation6]
    $region5: #{tpu_custom_call.1} parent=1 // pred_fallthru
      _
    // Predicated region
    $region6: #{tpu_custom_call.1} parent=1 // pred_check
      _
    $region7: #{tpu_custom_call.1} parent=1 // pred_check_branch
      %95 = sbr.rel (0) target = $region9
    $region8: #{tpu_custom_call.1} parent=1 // pred_region
      %s97 = ssub.s32 16, 16
      %98 = vsyncadd [#allocation5], %s97
      %101 = dma.hbm_to_smem %s3, 16, [#allocation7], [#allocation5]
    $region9: #{tpu_custom_call.1} parent=1 // pred_fallthru
      _
    // Predicated region
    $region10: #{tpu_custom_call.1} parent=1 // pred_check
      _
    $region11: #{tpu_custom_call.1} parent=1 // pred_check_branch
      %103 = sbr.rel (0) target = $region13
    $region12: #{tpu_custom_call.1} parent=1 // pred_region
      %s105 = ssub.s32 256, 256
      %106 = vsyncadd [#allocation3], %s105
      %s107 = sshll.u32 [#allocation8], 4
      %s108 = int_to_ptr.vmem [resolvable:$true] %s107
      %113 = dma.hbm_to_vmem [thread:$0]  %s5, 256, %s108, [#allocation3], 128, 128, 8
    $region13: #{tpu_custom_call.1} parent=1 // pred_fallthru
      _
    // Predicated region
    $region14: #{tpu_custom_call.1} parent=1 // pred_check
      _
    $region15: #{tpu_custom_call.1} parent=1 // pred_check_branch
      %115 = sbr.rel (0) target = $region17
    $region16: #{tpu_custom_call.1} parent=1 // pred_region
      _
    $region17: #{tpu_custom_call.1} parent=1 // pred_fallthru
      _
    // Predicated region
    $region18: #{tpu_custom_call.1} parent=1 // pred_check
      _
    $region19: #{tpu_custom_call.1} parent=1 // pred_check_branch
      %117 = sbr.rel (0) target = $region21
    $region20: #{tpu_custom_call.1} parent=1 // pred_region
      %s119 = ssub.s32 16, 16
      %120 = vsyncadd [#allocation10], %s119
      %s122 = sshll.u32 [#allocation9], 4
      %s123 = int_to_ptr.vmem [resolvable:$true] %s122
      %125 = dma.hbm_to_vmem [thread:$0]  %s9, 16, %s123, [#allocation10]
    $region21: #{tpu_custom_call.1} parent=1 // pred_fallthru
      _
    // Predicated region
    $region22: #{tpu_custom_call.1} parent=1 // pred_check
      _
    $region23: #{tpu_custom_call.1} parent=1 // pred_check_branch
      %127 = sbr.rel (0) target = $region25
    $region24: #{tpu_custom_call.1} parent=1 // pred_region
      _
    $region25: #{tpu_custom_call.1} parent=1 // pred_fallthru
      _
    // Predicated region
    $region26: #{tpu_custom_call.1} parent=1 // pred_check
      _
    $region27: #{tpu_custom_call.1} parent=1 // pred_check_branch
      %129 = sbr.rel (0) target = $region29
    $region28: #{tpu_custom_call.1} parent=1 // pred_region
      _
    $region29: #{tpu_custom_call.1} parent=1 // pred_fallthru
      _
    // Predicated region
    $region30: #{tpu_custom_call.1} parent=1 // pred_check
      _
    $region31: #{tpu_custom_call.1} parent=1 // pred_check_branch
      %131 = sbr.rel (0) target = $region33
    $region32: #{tpu_custom_call.1} parent=1 // pred_region
      %s133 = ssub.s32 512, 512
      %134 = vsyncadd [#allocation10], %s133
      %s135 = sshll.u32 [#allocation11], 4
      %s136 = int_to_ptr.vmem [resolvable:$true] %s135
      %141 = dma.hbm_to_vmem [thread:$0]  %s15, 512, %s136, [#allocation10], 128, 128, 8
    $region33: #{tpu_custom_call.1} parent=1 // pred_fallthru
      _
    // Predicated region
    $region34: #{tpu_custom_call.1} parent=1 // pred_check
      _
    $region35: #{tpu_custom_call.1} parent=1 // pred_check_branch
      %143 = sbr.rel (0) target = $region37
    $region36: #{tpu_custom_call.1} parent=1 // pred_region
      %s145 = ssub.s32 16, 16
      %146 = vsyncadd [#allocation13], %s145
      %s148 = sshll.u32 [#allocation12], 4
      %s149 = int_to_ptr.vmem [resolvable:$true] %s148
      %151 = dma.hbm_to_vmem [thread:$0]  %s17, 16, %s149, [#allocation13]
    $region37: #{tpu_custom_call.1} parent=1 // pred_fallthru
      _
    // Predicated region
    $region38: #{tpu_custom_call.1} parent=1 // pred_check
      _
    $region39: #{tpu_custom_call.1} parent=1 // pred_check_branch
      %153 = sbr.rel (0) target = $region41
    $region40: #{tpu_custom_call.1} parent=1 // pred_region
      %s155 = ssub.s32 16, 16
      %156 = vsyncadd [#allocation13], %s155
      %s158 = sshll.u32 [#allocation14], 4
      %s159 = int_to_ptr.vmem [resolvable:$true] %s158
      %161 = dma.hbm_to_vmem [thread:$0]  %s19, 16, %s159, [#allocation13]
    $region41: #{tpu_custom_call.1} parent=1 // pred_fallthru
      _
    // Predicated region
    $region42: #{tpu_custom_call.1} parent=1 // pred_check
      _
    $region43: #{tpu_custom_call.1} parent=1 // pred_check_branch
      %163 = sbr.rel (0) target = $region45
    $region44: #{tpu_custom_call.1} parent=1 // pred_region
      %s165 = ssub.s32 16, 16
      %166 = vsyncadd [#allocation16], %s165
      %s168 = sshll.u32 [#allocation15], 4
      %s169 = int_to_ptr.vmem [resolvable:$true] %s168
      %171 = dma.hbm_to_vmem [thread:$0]  %s21, 16, %s169, [#allocation16]
    $region45: #{tpu_custom_call.1} parent=1 // pred_fallthru
      _
    // Predicated region
    $region46: #{tpu_custom_call.1} parent=1 // pred_check
      _
    $region47: #{tpu_custom_call.1} parent=1 // pred_check_branch
      %173 = sbr.rel (0) target = $region49
    $region48: #{tpu_custom_call.1} parent=1 // pred_region
      %s175 = ssub.s32 256, 256
      %176 = vsyncadd [#allocation16], %s175
      %s177 = sshll.u32 [#allocation17], 4
      %s178 = int_to_ptr.vmem [resolvable:$true] %s177
      %183 = dma.hbm_to_vmem [thread:$0]  %s23, 256, %s178, [#allocation16], 128, 128, 8
    $region49: #{tpu_custom_call.1} parent=1 // pred_fallthru
      _
    // Predicated region
    $region50: #{tpu_custom_call.1} parent=1 // pred_check
      _
    $region51: #{tpu_custom_call.1} parent=1 // pred_check_branch
      %185 = sbr.rel (0) target = $region53
    $region52: #{tpu_custom_call.1} parent=1 // pred_region
      _
    $region53: #{tpu_custom_call.1} parent=1 // pred_fallthru
      _
    // Predicated region
    $region54: #{tpu_custom_call.1} parent=1 // pred_check
      _
    $region55: #{tpu_custom_call.1} parent=1 // pred_check_branch
      %187 = sbr.rel (0) target = $region57
    $region56: #{tpu_custom_call.1} parent=1 // pred_region
      _
    $region57: #{tpu_custom_call.1} parent=1 // pred_fallthru
      _
    // Predicated region
    $region58: #{tpu_custom_call.1} parent=1 // pred_check
      _
    $region59: #{tpu_custom_call.1} parent=1 // pred_check_branch
      %189 = sbr.rel (0) target = $region61
    $region60: #{tpu_custom_call.1} parent=1 // pred_region
      %s191 = ssub.s32 16, 16
      %192 = vsyncadd [#allocation19], %s191
      %s194 = sshll.u32 [#allocation18], 4
      %s195 = int_to_ptr.vmem [resolvable:$true] %s194
      %197 = dma.hbm_to_vmem [thread:$0]  %s29, 16, %s195, [#allocation19]
    $region61: #{tpu_custom_call.1} parent=1 // pred_fallthru
      _
    // Predicated region
    $region62: #{tpu_custom_call.1} parent=1 // pred_check
      _
    $region63: #{tpu_custom_call.1} parent=1 // pred_check_branch
      %199 = sbr.rel (0) target = $region65
    $region64: #{tpu_custom_call.1} parent=1 // pred_region
      _
    $region65: #{tpu_custom_call.1} parent=1 // pred_fallthru
      _
    // Predicated region
    $region66: #{tpu_custom_call.1} parent=1 // pred_check
      _
    $region67: #{tpu_custom_call.1} parent=1 // pred_check_branch
      %201 = sbr.rel (0) target = $region69
    $region68: #{tpu_custom_call.1} parent=1 // pred_region
      %s203 = ssub.s32 512, 512
      %204 = vsyncadd [#allocation19], %s203
      %s205 = sshll.u32 [#allocation20], 4
      %s206 = int_to_ptr.vmem [resolvable:$true] %s205
      %211 = dma.hbm_to_vmem [thread:$0]  %s33, 512, %s206, [#allocation19], 128, 128, 8
    $region69: #{tpu_custom_call.1} parent=1 // pred_fallthru
      _
    // Predicated region
    $region70: #{tpu_custom_call.1} parent=1 // pred_check
      _
    $region71: #{tpu_custom_call.1} parent=1 // pred_check_branch
      %213 = sbr.rel (0) target = $region73
    $region72: #{tpu_custom_call.1} parent=1 // pred_region
      %s215 = ssub.s32 16, 16
      %216 = vsyncadd [#allocation22], %s215
      %s218 = sshll.u32 [#allocation21], 4
      %s219 = int_to_ptr.vmem [resolvable:$true] %s218
      %221 = dma.hbm_to_vmem [thread:$0]  %s35, 16, %s219, [#allocation22]
    $region73: #{tpu_custom_call.1} parent=1 // pred_fallthru
      _
    // Predicated region
    $region74: #{tpu_custom_call.1} parent=1 // pred_check
      _
    $region75: #{tpu_custom_call.1} parent=1 // pred_check_branch
      %223 = sbr.rel (0) target = $region77
    $region76: #{tpu_custom_call.1} parent=1 // pred_region
      %s225 = ssub.s32 512, 512
      %226 = vsyncadd [#allocation22], %s225
      %s227 = sshll.u32 [#allocation23], 4
      %s228 = int_to_ptr.vmem [resolvable:$true] %s227
      %233 = dma.hbm_to_vmem [thread:$0]  %s37, 512, %s228, [#allocation22], 128, 128, 8
    $region77: #{tpu_custom_call.1} parent=1 // pred_fallthru
      _
    // Predicated region
    $region78: #{tpu_custom_call.1} parent=1 // pred_check
      _
    $region79: #{tpu_custom_call.1} parent=1 // pred_check_branch
      %235 = sbr.rel (0) target = $region81
    $region80: #{tpu_custom_call.1} parent=1 // pred_region
      %s237 = ssub.s32 512, 512
      %238 = vsyncadd [#allocation25], %s237
      %s239 = sshll.u32 [#allocation24], 4
      %s240 = int_to_ptr.vmem [resolvable:$true] %s239
      %245 = dma.hbm_to_vmem [thread:$0]  %s39, 512, %s240, [#allocation25], 128, 128, 8
    $region81: #{tpu_custom_call.1} parent=1 // pred_fallthru
      _
    // Predicated region
    $region82: #{tpu_custom_call.1} parent=1 // pred_check
      _
    $region83: #{tpu_custom_call.1} parent=1 // pred_check_branch
      %247 = sbr.rel (0) target = $region85
    $region84: #{tpu_custom_call.1} parent=1 // pred_region
      %s249 = ssub.s32 512, 512
      %250 = vsyncadd [#allocation25], %s249
      %s251 = sshll.u32 [#allocation26], 4
      %s252 = int_to_ptr.vmem [resolvable:$true] %s251
      %257 = dma.hbm_to_vmem [thread:$0]  %s41, 512, %s252, [#allocation25], 128, 128, 8
    $region85: #{tpu_custom_call.1} parent=1 // pred_fallthru
      _
    // Predicated region
    $region86: #{tpu_custom_call.1} parent=1 // pred_check
      _
    $region87: #{tpu_custom_call.1} parent=1 // pred_check_branch
      %259 = sbr.rel (0) target = $region89
    $region88: #{tpu_custom_call.1} parent=1 // pred_region
      %s261 = ssub.s32 16, 16
      %262 = vsyncadd [#allocation28], %s261
      %s264 = sshll.u32 [#allocation27], 4
      %s265 = int_to_ptr.vmem [resolvable:$true] %s264
      %267 = dma.hbm_to_vmem [thread:$0]  %s43, 16, %s265, [#allocation28]
    $region89: #{tpu_custom_call.1} parent=1 // pred_fallthru
      _
    // Predicated region
    $region90: #{tpu_custom_call.1} parent=1 // pred_check
      _
    $region91: #{tpu_custom_call.1} parent=1 // pred_check_branch
      %269 = sbr.rel (0) target = $region93
    $region92: #{tpu_custom_call.1} parent=1 // pred_region
      %s271 = ssub.s32 16, 16
      %272 = vsyncadd [#allocation28], %s271
      %s274 = sshll.u32 [#allocation29], 4
      %s275 = int_to_ptr.vmem [resolvable:$true] %s274
      %277 = dma.hbm_to_vmem [thread:$0]  %s45, 16, %s275, [#allocation28]
    $region93: #{tpu_custom_call.1} parent=1 // pred_fallthru
      _
    // Predicated region
    $region94: #{tpu_custom_call.1} parent=1 // pred_check
      _
    $region95: #{tpu_custom_call.1} parent=1 // pred_check_branch
      %279 = sbr.rel (0) target = $region97
    $region96: #{tpu_custom_call.1} parent=1 // pred_region
      %s281 = ssub.s32 16, 16
      %282 = vsyncadd [#allocation31], %s281
      %s284 = sshll.u32 [#allocation30], 4
      %s285 = int_to_ptr.vmem [resolvable:$true] %s284
      %287 = dma.hbm_to_vmem [thread:$0]  %s47, 16, %s285, [#allocation31]
    $region97: #{tpu_custom_call.1} parent=1 // pred_fallthru
      _
    // Predicated region
    $region98: #{tpu_custom_call.1} parent=1 // pred_check
      _
    $region99: #{tpu_custom_call.1} parent=1 // pred_check_branch
      %289 = sbr.rel (0) target = $region101
    $region100: #{tpu_custom_call.1} parent=1 // pred_region
      _
    $region101: #{tpu_custom_call.1} parent=1 // pred_fallthru
      _
    // Predicated region
    $region102: #{tpu_custom_call.1} parent=1 // pred_check
      _
    $region103: #{tpu_custom_call.1} parent=1 // pred_check_branch
      %291 = sbr.rel (0) target = $region105
    $region104: #{tpu_custom_call.1} parent=1 // pred_region
      %s293 = ssub.s32 512, 512
      %294 = vsyncadd [#allocation31], %s293
      %s295 = sshll.u32 [#allocation32], 4
      %s296 = int_to_ptr.vmem [resolvable:$true] %s295
      %301 = dma.hbm_to_vmem [thread:$0]  %s51, 512, %s296, [#allocation31], 128, 128, 8
    $region105: #{tpu_custom_call.1} parent=1 // pred_fallthru
      _
    // Predicated region
    $region106: #{tpu_custom_call.1} parent=1 // pred_check
      _
    $region107: #{tpu_custom_call.1} parent=1 // pred_check_branch
      %303 = sbr.rel (0) target = $region109
    $region108: #{tpu_custom_call.1} parent=1 // pred_region
      %s305 = ssub.s32 512, 512
      %306 = vsyncadd [#allocation34], %s305
      %s307 = sshll.u32 [#allocation33], 4
      %s308 = int_to_ptr.vmem [resolvable:$true] %s307
      %313 = dma.hbm_to_vmem [thread:$0]  %s53, 512, %s308, [#allocation34], 128, 128, 8
    $region109: #{tpu_custom_call.1} parent=1 // pred_fallthru
      _
    // Predicated region
    $region110: #{tpu_custom_call.1} parent=1 // pred_check
      _
    $region111: #{tpu_custom_call.1} parent=1 // pred_check_branch
      %315 = sbr.rel (0) target = $region113
    $region112: #{tpu_custom_call.1} parent=1 // pred_region
      %s317 = ssub.s32 16, 16
      %318 = vsyncadd [#allocation34], %s317
      %s320 = sshll.u32 [#allocation35], 4
      %s321 = int_to_ptr.vmem [resolvable:$true] %s320
      %323 = dma.hbm_to_vmem [thread:$0]  %s55, 16, %s321, [#allocation34]
    $region113: #{tpu_custom_call.1} parent=1 // pred_fallthru
      _
    // Predicated region
    $region114: #{tpu_custom_call.1} parent=1 // pred_check
      _
    $region115: #{tpu_custom_call.1} parent=1 // pred_check_branch
      %325 = sbr.rel (0) target = $region117
    $region116: #{tpu_custom_call.1} parent=1 // pred_region
      %s327 = ssub.s32 16, 16
      %328 = vsyncadd [#allocation37], %s327
      %s330 = sshll.u32 [#allocation36], 4
      %s331 = int_to_ptr.vmem [resolvable:$true] %s330
      %333 = dma.hbm_to_vmem [thread:$0]  %s57, 16, %s331, [#allocation37]
    $region117: #{tpu_custom_call.1} parent=1 // pred_fallthru
      _
    // Predicated region
    $region118: #{tpu_custom_call.1} parent=1 // pred_check
      _
    $region119: #{tpu_custom_call.1} parent=1 // pred_check_branch
      %335 = sbr.rel (0) target = $region121
    $region120: #{tpu_custom_call.1} parent=1 // pred_region
      %s337 = ssub.s32 16, 16
      %338 = vsyncadd [#allocation37], %s337
      %s340 = sshll.u32 [#allocation38], 4
      %s341 = int_to_ptr.vmem [resolvable:$true] %s340
      %343 = dma.hbm_to_vmem [thread:$0]  %s59, 16, %s341, [#allocation37]
    $region121: #{tpu_custom_call.1} parent=1 // pred_fallthru
      _
    // Predicated region
    $region122: #{tpu_custom_call.1} parent=1 // pred_check
      _
    $region123: #{tpu_custom_call.1} parent=1 // pred_check_branch
      %345 = sbr.rel (0) target = $region125
    $region124: #{tpu_custom_call.1} parent=1 // pred_region
      _
    $region125: #{tpu_custom_call.1} parent=1 // pred_fallthru
      _
    // Predicated region
    $region126: #{tpu_custom_call.1} parent=1 // pred_check
      _
    $region127: #{tpu_custom_call.1} parent=1 // pred_check_branch
      %347 = sbr.rel (0) target = $region129
    $region128: #{tpu_custom_call.1} parent=1 // pred_region
      _
    $region129: #{tpu_custom_call.1} parent=1 // pred_fallthru
      _
    // Predicated region
    $region130: #{tpu_custom_call.1} parent=1 // pred_check
      _
    $region131: #{tpu_custom_call.1} parent=1 // pred_check_branch
      %349 = sbr.rel (0) target = $region133
    $region132: #{tpu_custom_call.1} parent=1 // pred_region
      %350 = dma.done [#allocation6], 16
    $region133: #{tpu_custom_call.1} parent=1 // pred_fallthru
      _
    // Predicated region
    $region134: #{tpu_custom_call.1} parent=1 // pred_check
      _
    $region135: #{tpu_custom_call.1} parent=1 // pred_check_branch
      %352 = sbr.rel (0) target = $region137
    $region136: #{tpu_custom_call.1} parent=1 // pred_region
      %353 = dma.done [#allocation5], 16
    $region137: #{tpu_custom_call.1} parent=1 // pred_fallthru
      _
    // Predicated region
    $region138: #{tpu_custom_call.1} parent=1 // pred_check
      _
    $region139: #{tpu_custom_call.1} parent=1 // pred_check_branch
      %355 = sbr.rel (0) target = $region141
    $region140: #{tpu_custom_call.1} parent=1 // pred_region
      %356 = dma.done [#allocation3], 256
    $region141: #{tpu_custom_call.1} parent=1 // pred_fallthru
      _
    // Predicated region
    $region142: #{tpu_custom_call.1} parent=1 // pred_check
      _
    $region143: #{tpu_custom_call.1} parent=1 // pred_check_branch
      %358 = sbr.rel (0) target = $region145
    $region144: #{tpu_custom_call.1} parent=1 // pred_region
      %359 = dma.done [#allocation10], 16
    $region145: #{tpu_custom_call.1} parent=1 // pred_fallthru
      _
    // Predicated region
    $region146: #{tpu_custom_call.1} parent=1 // pred_check
      _
    $region147: #{tpu_custom_call.1} parent=1 // pred_check_branch
      %361 = sbr.rel (0) target = $region149
    $region148: #{tpu_custom_call.1} parent=1 // pred_region
      %362 = dma.done [#allocation10], 512
    $region149: #{tpu_custom_call.1} parent=1 // pred_fallthru
      _
    // Predicated region
    $region150: #{tpu_custom_call.1} parent=1 // pred_check
      _
    $region151: #{tpu_custom_call.1} parent=1 // pred_check_branch
      %364 = sbr.rel (0) target = $region153
    $region152: #{tpu_custom_call.1} parent=1 // pred_region
      %365 = dma.done [#allocation13], 16
    $region153: #{tpu_custom_call.1} parent=1 // pred_fallthru
      _
    // Predicated region
    $region154: #{tpu_custom_call.1} parent=1 // pred_check
      _
    $region155: #{tpu_custom_call.1} parent=1 // pred_check_branch
      %367 = sbr.rel (0) target = $region157
    $region156: #{tpu_custom_call.1} parent=1 // pred_region
      %368 = dma.done [#allocation13], 16
    $region157: #{tpu_custom_call.1} parent=1 // pred_fallthru
      _
    // Predicated region
    $region158: #{tpu_custom_call.1} parent=1 // pred_check
      _
    $region159: #{tpu_custom_call.1} parent=1 // pred_check_branch
      %370 = sbr.rel (0) target = $region161
    $region160: #{tpu_custom_call.1} parent=1 // pred_region
      %371 = dma.done [#allocation16], 16
    $region161: #{tpu_custom_call.1} parent=1 // pred_fallthru
      _
    // Predicated region
    $region162: #{tpu_custom_call.1} parent=1 // pred_check
      _
    $region163: #{tpu_custom_call.1} parent=1 // pred_check_branch
      %373 = sbr.rel (0) target = $region165
    $region164: #{tpu_custom_call.1} parent=1 // pred_region
      %374 = dma.done [#allocation16], 256
    $region165: #{tpu_custom_call.1} parent=1 // pred_fallthru
      _
    // Predicated region
    $region166: #{tpu_custom_call.1} parent=1 // pred_check
      _
    $region167: #{tpu_custom_call.1} parent=1 // pred_check_branch
      %376 = sbr.rel (0) target = $region169
    $region168: #{tpu_custom_call.1} parent=1 // pred_region
      %377 = dma.done [#allocation19], 16
    $region169: #{tpu_custom_call.1} parent=1 // pred_fallthru
      _
    // Predicated region
    $region170: #{tpu_custom_call.1} parent=1 // pred_check
      _
    $region171: #{tpu_custom_call.1} parent=1 // pred_check_branch
      %379 = sbr.rel (0) target = $region173
    $region172: #{tpu_custom_call.1} parent=1 // pred_region
      %380 = dma.done [#allocation19], 512
    $region173: #{tpu_custom_call.1} parent=1 // pred_fallthru
      _
    // Predicated region
    $region174: #{tpu_custom_call.1} parent=1 // pred_check
      _
    $region175: #{tpu_custom_call.1} parent=1 // pred_check_branch
      %382 = sbr.rel (0) target = $region177
    $region176: #{tpu_custom_call.1} parent=1 // pred_region
      %383 = dma.done [#allocation22], 16
    $region177: #{tpu_custom_call.1} parent=1 // pred_fallthru
      _
    // Predicated region
    $region178: #{tpu_custom_call.1} parent=1 // pred_check
      _
    $region179: #{tpu_custom_call.1} parent=1 // pred_check_branch
      %385 = sbr.rel (0) target = $region181
    $region180: #{tpu_custom_call.1} parent=1 // pred_region
      %386 = dma.done [#allocation22], 512
    $region181: #{tpu_custom_call.1} parent=1 // pred_fallthru
      _
    // Predicated region
    $region182: #{tpu_custom_call.1} parent=1 // pred_check
      _
    $region183: #{tpu_custom_call.1} parent=1 // pred_check_branch
      %388 = sbr.rel (0) target = $region185
    $region184: #{tpu_custom_call.1} parent=1 // pred_region
      %389 = dma.done [#allocation25], 512
    $region185: #{tpu_custom_call.1} parent=1 // pred_fallthru
      _
    // Predicated region
    $region186: #{tpu_custom_call.1} parent=1 // pred_check
      _
    $region187: #{tpu_custom_call.1} parent=1 // pred_check_branch
      %391 = sbr.rel (0) target = $region189
    $region188: #{tpu_custom_call.1} parent=1 // pred_region
      %392 = dma.done [#allocation25], 512
    $region189: #{tpu_custom_call.1} parent=1 // pred_fallthru
      _
    // Predicated region
    $region190: #{tpu_custom_call.1} parent=1 // pred_check
      _
    $region191: #{tpu_custom_call.1} parent=1 // pred_check_branch
      %394 = sbr.rel (0) target = $region193
    $region192: #{tpu_custom_call.1} parent=1 // pred_region
      %395 = dma.done [#allocation28], 16
    $region193: #{tpu_custom_call.1} parent=1 // pred_fallthru
      _
    // Predicated region
    $region194: #{tpu_custom_call.1} parent=1 // pred_check
      _
    $region195: #{tpu_custom_call.1} parent=1 // pred_check_branch
      %397 = sbr.rel (0) target = $region197
    $region196: #{tpu_custom_call.1} parent=1 // pred_region
      %398 = dma.done [#allocation28], 16
    $region197: #{tpu_custom_call.1} parent=1 // pred_fallthru
      _
    // Predicated region
    $region198: #{tpu_custom_call.1} parent=1 // pred_check
      _
    $region199: #{tpu_custom_call.1} parent=1 // pred_check_branch
      %400 = sbr.rel (0) target = $region201
    $region200: #{tpu_custom_call.1} parent=1 // pred_region
      %401 = dma.done [#allocation31], 16
    $region201: #{tpu_custom_call.1} parent=1 // pred_fallthru
      _
    // Predicated region
    $region202: #{tpu_custom_call.1} parent=1 // pred_check
      _
    $region203: #{tpu_custom_call.1} parent=1 // pred_check_branch
      %403 = sbr.rel (0) target = $region205
    $region204: #{tpu_custom_call.1} parent=1 // pred_region
      %404 = dma.done [#allocation31], 512
    $region205: #{tpu_custom_call.1} parent=1 // pred_fallthru
      _
    // Predicated region
    $region206: #{tpu_custom_call.1} parent=1 // pred_check
      _
    $region207: #{tpu_custom_call.1} parent=1 // pred_check_branch
      %406 = sbr.rel (0) target = $region209
    $region208: #{tpu_custom_call.1} parent=1 // pred_region
      %407 = dma.done [#allocation34], 512
    $region209: #{tpu_custom_call.1} parent=1 // pred_fallthru
      _
    // Predicated region
    $region210: #{tpu_custom_call.1} parent=1 // pred_check
      _
    $region211: #{tpu_custom_call.1} parent=1 // pred_check_branch
      %409 = sbr.rel (0) target = $region213
    $region212: #{tpu_custom_call.1} parent=1 // pred_region
      %410 = dma.done [#allocation34], 16
    $region213: #{tpu_custom_call.1} parent=1 // pred_fallthru
      _
    // Predicated region
    $region214: #{tpu_custom_call.1} parent=1 // pred_check
      _
    $region215: #{tpu_custom_call.1} parent=1 // pred_check_branch
      %412 = sbr.rel (0) target = $region217
    $region216: #{tpu_custom_call.1} parent=1 // pred_region
      %413 = dma.done [#allocation37], 16
    $region217: #{tpu_custom_call.1} parent=1 // pred_fallthru
      _
    // Predicated region
    $region218: #{tpu_custom_call.1} parent=1 // pred_check
      _
    $region219: #{tpu_custom_call.1} parent=1 // pred_check_branch
      %415 = sbr.rel (0) target = $region221
    $region220: #{tpu_custom_call.1} parent=1 // pred_region
      %416 = dma.done [#allocation37], 16
    $region221: #{tpu_custom_call.1} parent=1 // pred_fallthru
      _
    %417 = sfence
    %v418 = vld [vmem:[%s11] sm:$0xff]
    %v419 = vld [vmem:[%s11 + $0x8] sm:$0xff]
    %v420 = vld [vmem:[%s11 + $0x10] sm:$0xff]
    %v421 = vld [vmem:[%s11 + $0x18] sm:$0xff]
    %v422 = vld [vmem:[%s13] sm:$0xff]
    %v423 = vld [vmem:[%s13 + $0x8] sm:$0xff]
    %v424 = vld [vmem:[%s13 + $0x10] sm:$0xff]
    %v425 = vld [vmem:[%s13 + $0x18] sm:$0xff]
    %v426 = vld [vmem:[#allocation11] sm:$0xff]
    %v427 = vld [vmem:[#allocation11 + $0x8] sm:$0xff]
    %v428 = vld [vmem:[#allocation11 + $0x10] sm:$0xff]
    %v429 = vld [vmem:[#allocation11 + $0x18] sm:$0xff]
    %v430 = vld [vmem:[#allocation12] sm:$0x1]
    %v431 = vld [vmem:[#allocation14] sm:$0x1]
    %v432 = vld [vmem:[#allocation15] sm:$0x1]
    %v433 = vld [vmem:[%s27] sm:$0xff]
    %v434 = vld [vmem:[%s27 + $0x8] sm:$0xff]
    %v435 = vld [vmem:[%s27 + $0x10] sm:$0xff]
    %v436 = vld [vmem:[%s27 + $0x18] sm:$0xff]
    %v437 = vld [vmem:[#allocation20] sm:$0xff]
    %v438 = vld [vmem:[#allocation20 + $0x8] sm:$0xff]
    %v439 = vld [vmem:[#allocation20 + $0x10] sm:$0xff]
    %v440 = vld [vmem:[#allocation20 + $0x18] sm:$0xff]
    %v441 = vld [vmem:[#allocation23] sm:$0xff]
    %v442 = vld [vmem:[#allocation23 + $0x8] sm:$0xff]
    %v443 = vld [vmem:[#allocation23 + $0x10] sm:$0xff]
    %v444 = vld [vmem:[#allocation23 + $0x18] sm:$0xff]
    %v445 = vld [vmem:[#allocation24] sm:$0xff]
    %v446 = vld [vmem:[#allocation24 + $0x8] sm:$0xff]
    %v447 = vld [vmem:[#allocation24 + $0x10] sm:$0xff]
    %v448 = vld [vmem:[#allocation24 + $0x18] sm:$0xff]
    %v449 = vld [vmem:[#allocation26] sm:$0xff]
    %v450 = vld [vmem:[#allocation26 + $0x8] sm:$0xff]
    %v451 = vld [vmem:[#allocation26 + $0x10] sm:$0xff]
    %v452 = vld [vmem:[#allocation26 + $0x18] sm:$0xff]
    %v453 = vld [vmem:[#allocation27] sm:$0x1]
    %v454 = vld [vmem:[#allocation29] sm:$0x1]
    %v455 = vld [vmem:[#allocation30] sm:$0x1]
    %v456 = vld [vmem:[%s49] sm:$0xff]
    %v457 = vld [vmem:[%s49 + $0x8] sm:$0xff]
    %v458 = vld [vmem:[%s49 + $0x10] sm:$0xff]
    %v459 = vld [vmem:[%s49 + $0x18] sm:$0xff]
    %v460 = vld [vmem:[#allocation32] sm:$0xff]
    %v461 = vld [vmem:[#allocation32 + $0x8] sm:$0xff]
    %v462 = vld [vmem:[#allocation32 + $0x10] sm:$0xff]
    %v463 = vld [vmem:[#allocation32 + $0x18] sm:$0xff]
    %v464 = vld [vmem:[#allocation33] sm:$0xff]
    %v465 = vld [vmem:[#allocation33 + $0x8] sm:$0xff]
    %v466 = vld [vmem:[#allocation33 + $0x10] sm:$0xff]
    %v467 = vld [vmem:[#allocation33 + $0x18] sm:$0xff]
    %v468 = vld [vmem:[#allocation35] sm:$0x1]
    %v469 = vld [vmem:[#allocation36] sm:$0x1]
    %v470 = vld [vmem:[#allocation38] sm:$0x1]
    %v471 = vld [vmem:[%s61] sm:$0xff]
    %v472 = vld [vmem:[%s61 + $0x8] sm:$0xff]
    %v473 = vld [vmem:[%s61 + $0x10] sm:$0xff]
    %v474 = vld [vmem:[%s61 + $0x18] sm:$0xff]
    %v475 = vld [vmem:[%s63] sm:$0x1]
    %s476 = sld [smem:[#allocation2]]
    %s477 = scalar_lea.vmem [#allocation8], %s476
    %v478 = vld [vmem:[%s477] sm:$0x1]
    %s479 = sld [smem:[#allocation2 + $0x1]]
    %s480 = scalar_lea.vmem [#allocation8], %s479
    %v481 = vld [vmem:[%s480] sm:$0x1]
    %s482 = sld [smem:[#allocation2 + $0x2]]
    %s483 = scalar_lea.vmem [#allocation8], %s482
    %v484 = vld [vmem:[%s483] sm:$0x1]
    %s485 = sld [smem:[#allocation2 + $0x3]]
    %s486 = scalar_lea.vmem [#allocation8], %s485
    %v487 = vld [vmem:[%s486] sm:$0x1]
    %s488 = sld [smem:[#allocation2 + $0x4]]
    %s489 = scalar_lea.vmem [#allocation8], %s488
    %v490 = vld [vmem:[%s489] sm:$0x1]
    %v492 = vrot.slane %v481, 7
    %v495 = vrot.slane %v484, 6
    %v498 = vrot.slane %v487, 5
    %v501 = vrot.slane %v490, 4
    %vm503 = vcmask 1040384
    %v504 = vsel %vm503, %v478, %v492
    %vm505 = vcmask 1041408
    %v506 = vsel %vm505, %v504, %v495
    %vm507 = vcmask 1042432
    %v508 = vsel %vm507, %v506, %v498
    %vm509 = vcmask 1043456
    %v510 = vsel %vm509, %v508, %v501
    %v511 = vld [vmem:[%s7] sm:$0xff]
    %v512 = vld [vmem:[%s7 + $0x8] sm:$0xff]
    %v513 = vld [vmem:[%s7 + $0x10] sm:$0xff]
    %v514 = vld [vmem:[%s7 + $0x18] sm:$0xff]
    %v515 = vld [vmem:[#allocation9] sm:$0x1]
    %v517 = vlaneseq
    %v518 = vshrl.u32 %v517, 7
    %v519 = vsub.s32 0, %v518
    %v520 = vrot.slane %v515, %v519
    %vm522 = vcmask 261120
    %v524 = vsel %vm522, %v510, 0
    %526 = vmatprep.subr.mxu0 0.0
    %527 = vmatpush1.msra.mxu0 %v511
    %528 = vmatprep.subr.mxu0 0.0
    %529 = vmatpush1.msra.mxu0 %v512
    %530 = vmatprep.subr.mxu0 0.0
    %531 = vmatpush1.msra.mxu0 %v513
    %532 = vmatprep.subr.mxu0 0.0
    %533 = vmatpush1.msra.mxu0 %v514
    %534 = vmatprep.subr.mxu0 0.0
    %535 = vmatpush1.msra.mxu0 0.0
    %536 = vmatprep.subr.mxu0 0.0
    %537 = vmatpush1.msra.mxu0 0.0
    %538 = vmatprep.subr.mxu0 0.0
    %539 = vmatpush1.msra.mxu0 0.0
    %540 = vmatprep.subr.mxu0 0.0
    %541 = vmatpush1.msra.mxu0 0.0
    %542 = vmatprep.subr.mxu0 0.0
    %543 = vmatpush1.msra.mxu0 0.0
    %544 = vmatprep.subr.mxu0 0.0
    %545 = vmatpush1.msra.mxu0 0.0
    %546 = vmatprep.subr.mxu0 0.0
    %547 = vmatpush1.msra.mxu0 0.0
    %548 = vmatprep.subr.mxu0 0.0
    %549 = vmatpush1.msra.mxu0 0.0
    %550 = vmatprep.subr.mxu0 0.0
    %551 = vmatpush1.msra.mxu0 0.0
    %552 = vmatprep.subr.mxu0 0.0
    %553 = vmatpush1.msra.mxu0 0.0
    %554 = vmatprep.subr.mxu0 0.0
    %555 = vmatpush1.msra.mxu0 0.0
    %556 = vmatprep.subr.mxu0 0.0
    %557 = vmatpush1.msra.mxu0 0.0
    %558 = vmatprep.subr.mxu0 0.0
    %559 = vmatpush1.msra.mxu0 0.0
    %560 = vmatprep.subr.mxu0 0.0
    %561 = vmatpush1.msra.mxu0 0.0
    %562 = vmatprep.subr.mxu0 0.0
    %563 = vmatpush1.msra.mxu0 0.0
    %564 = vmatprep.subr.mxu0 0.0
    %565 = vmatpush1.msra.mxu0 0.0
    %566 = vmatprep.subr.mxu0 0.0
    %567 = vmatpush1.msra.mxu0 0.0
    %568 = vmatprep.subr.mxu0 0.0
    %569 = vmatpush1.msra.mxu0 0.0
    %570 = vmatprep.subr.mxu0 0.0
    %571 = vmatpush1.msra.mxu0 0.0
    %572 = vmatprep.subr.mxu0 0.0
    %573 = vmatpush1.msra.mxu0 0.0
    %574 = vmatprep.subr.mxu0 0.0
    %575 = vmatpush1.msra.mxu0 0.0
    %576 = vmatprep.subr.mxu0 0.0
    %577 = vmatpush1.msra.mxu0 0.0
    %578 = vmatprep.subr.mxu0 0.0
    %579 = vmatpush1.msra.mxu0 0.0
    %580 = vmatprep.subr.mxu0 0.0
    %581 = vmatpush1.msra.mxu0 0.0
    %582 = vmatprep.subr.mxu0 0.0
    %583 = vmatpush1.msra.mxu0 0.0
    %584 = vmatprep.subr.mxu0 0.0
    %585 = vmatpush1.msra.mxu0 0.0
    %586 = vmatprep.subr.mxu0 0.0
    %587 = vmatpush1.msra.mxu0 0.0
    %588 = vmatprep.subr.mxu0 0.0
    %589 = vmatpush1.msra.mxu0 0.0
    %590 = vmatprep.mubr.f32.mxu0 0.0
    %591 = vmatmul.mubr.f32.gmra.mrb[0].mxu0 %v524
    %v592 = vpop.f32.mrb[0].mxu0
    %v593 = vadd.f32 %v520, %v592
    %v594 = vpop.f32.mrb[0].mxu0
    %595 = vdwg.mxu0
    %v597 = vsel %vm522, 0.0, 0
    %599 = vmatprep.subr.mxu0 0.0
    %600 = vmatpush1.msra.mxu0 %v418
    %601 = vmatprep.subr.mxu0 0.0
    %602 = vmatpush1.msra.mxu0 %v419
    %603 = vmatprep.subr.mxu0 0.0
    %604 = vmatpush1.msra.mxu0 %v420
    %605 = vmatprep.subr.mxu0 0.0
    %606 = vmatpush1.msra.mxu0 %v421
    %607 = vmatprep.subr.mxu0 0.0
    %608 = vmatpush1.msra.mxu0 0.0
    %609 = vmatprep.subr.mxu0 0.0
    %610 = vmatpush1.msra.mxu0 0.0
    %611 = vmatprep.subr.mxu0 0.0
    %612 = vmatpush1.msra.mxu0 0.0
    %613 = vmatprep.subr.mxu0 0.0
    %614 = vmatpush1.msra.mxu0 0.0
    %615 = vmatprep.subr.mxu0 0.0
    %616 = vmatpush1.msra.mxu0 0.0
    %617 = vmatprep.subr.mxu0 0.0
    %618 = vmatpush1.msra.mxu0 0.0
    %619 = vmatprep.subr.mxu0 0.0
    %620 = vmatpush1.msra.mxu0 0.0
    %621 = vmatprep.subr.mxu0 0.0
    %622 = vmatpush1.msra.mxu0 0.0
    %623 = vmatprep.subr.mxu0 0.0
    %624 = vmatpush1.msra.mxu0 0.0
    %625 = vmatprep.subr.mxu0 0.0
    %626 = vmatpush1.msra.mxu0 0.0
    %627 = vmatprep.subr.mxu0 0.0
    %628 = vmatpush1.msra.mxu0 0.0
    %629 = vmatprep.subr.mxu0 0.0
    %630 = vmatpush1.msra.mxu0 0.0
    %631 = vmatprep.subr.mxu0 0.0
    %632 = vmatpush1.msra.mxu0 0.0
    %633 = vmatprep.subr.mxu0 0.0
    %634 = vmatpush1.msra.mxu0 0.0
    %635 = vmatprep.subr.mxu0 0.0
    %636 = vmatpush1.msra.mxu0 0.0
    %637 = vmatprep.subr.mxu0 0.0
    %638 = vmatpush1.msra.mxu0 0.0
    %639 = vmatprep.subr.mxu0 0.0
    %640 = vmatpush1.msra.mxu0 0.0
    %641 = vmatprep.subr.mxu0 0.0
    %642 = vmatpush1.msra.mxu0 0.0
    %643 = vmatprep.subr.mxu0 0.0
    %644 = vmatpush1.msra.mxu0 0.0
    %645 = vmatprep.subr.mxu0 0.0
    %646 = vmatpush1.msra.mxu0 0.0
    %647 = vmatprep.subr.mxu0 0.0
    %648 = vmatpush1.msra.mxu0 0.0
    %649 = vmatprep.subr.mxu0 0.0
    %650 = vmatpush1.msra.mxu0 0.0
    %651 = vmatprep.subr.mxu0 0.0
    %652 = vmatpush1.msra.mxu0 0.0
    %653 = vmatprep.subr.mxu0 0.0
    %654 = vmatpush1.msra.mxu0 0.0
    %655 = vmatprep.subr.mxu0 0.0
    %656 = vmatpush1.msra.mxu0 0.0
    %657 = vmatprep.subr.mxu0 0.0
    %658 = vmatpush1.msra.mxu0 0.0
    %659 = vmatprep.subr.mxu0 0.0
    %660 = vmatpush1.msra.mxu0 0.0
    %661 = vmatprep.subr.mxu0 0.0
    %662 = vmatpush1.msra.mxu0 0.0
    %663 = vmatprep.mubr.f32.mxu0 0.0
    %664 = vmatmul.mubr.f32.gmra.mrb[0].mxu0 %v597
    %v665 = vpop.f32.mrb[0].mxu0
    %v666 = vadd.f32 %v430, %v665
    %v667 = vpop.f32.mrb[0].mxu0
    %668 = vdwg.mxu0
    %669 = vmatprep.subr.mxu0 0.0
    %670 = vmatpush1.msra.mxu0 %v422
    %671 = vmatprep.subr.mxu0 0.0
    %672 = vmatpush1.msra.mxu0 %v423
    %673 = vmatprep.subr.mxu0 0.0
    %674 = vmatpush1.msra.mxu0 %v424
    %675 = vmatprep.subr.mxu0 0.0
    %676 = vmatpush1.msra.mxu0 %v425
    %677 = vmatprep.subr.mxu0 0.0
    %678 = vmatpush1.msra.mxu0 0.0
    %679 = vmatprep.subr.mxu0 0.0
    %680 = vmatpush1.msra.mxu0 0.0
    %681 = vmatprep.subr.mxu0 0.0
    %682 = vmatpush1.msra.mxu0 0.0
    %683 = vmatprep.subr.mxu0 0.0
    %684 = vmatpush1.msra.mxu0 0.0
    %685 = vmatprep.subr.mxu0 0.0
    %686 = vmatpush1.msra.mxu0 0.0
    %687 = vmatprep.subr.mxu0 0.0
    %688 = vmatpush1.msra.mxu0 0.0
    %689 = vmatprep.subr.mxu0 0.0
    %690 = vmatpush1.msra.mxu0 0.0
    %691 = vmatprep.subr.mxu0 0.0
    %692 = vmatpush1.msra.mxu0 0.0
    %693 = vmatprep.subr.mxu0 0.0
    %694 = vmatpush1.msra.mxu0 0.0
    %695 = vmatprep.subr.mxu0 0.0
    %696 = vmatpush1.msra.mxu0 0.0
    %697 = vmatprep.subr.mxu0 0.0
    %698 = vmatpush1.msra.mxu0 0.0
    %699 = vmatprep.subr.mxu0 0.0
    %700 = vmatpush1.msra.mxu0 0.0
    %701 = vmatprep.subr.mxu0 0.0
    %702 = vmatpush1.msra.mxu0 0.0
    %703 = vmatprep.subr.mxu0 0.0
    %704 = vmatpush1.msra.mxu0 0.0
    %705 = vmatprep.subr.mxu0 0.0
    %706 = vmatpush1.msra.mxu0 0.0
    %707 = vmatprep.subr.mxu0 0.0
    %708 = vmatpush1.msra.mxu0 0.0
    %709 = vmatprep.subr.mxu0 0.0
    %710 = vmatpush1.msra.mxu0 0.0
    %711 = vmatprep.subr.mxu0 0.0
    %712 = vmatpush1.msra.mxu0 0.0
    %713 = vmatprep.subr.mxu0 0.0
    %714 = vmatpush1.msra.mxu0 0.0
    %715 = vmatprep.subr.mxu0 0.0
    %716 = vmatpush1.msra.mxu0 0.0
    %717 = vmatprep.subr.mxu0 0.0
    %718 = vmatpush1.msra.mxu0 0.0
    %719 = vmatprep.subr.mxu0 0.0
    %720 = vmatpush1.msra.mxu0 0.0
    %721 = vmatprep.subr.mxu0 0.0
    %722 = vmatpush1.msra.mxu0 0.0
    %723 = vmatprep.subr.mxu0 0.0
    %724 = vmatpush1.msra.mxu0 0.0
    %725 = vmatprep.subr.mxu0 0.0
    %726 = vmatpush1.msra.mxu0 0.0
    %727 = vmatprep.subr.mxu0 0.0
    %728 = vmatpush1.msra.mxu0 0.0
    %729 = vmatprep.subr.mxu0 0.0
    %730 = vmatpush1.msra.mxu0 0.0
    %731 = vmatprep.subr.mxu0 0.0
    %732 = vmatpush1.msra.mxu0 0.0
    %733 = vmatprep.mubr.f32.mxu0 0.0
    %734 = vmatmul.mubr.f32.gmra.mrb[0].mxu0 %v597
    %v735 = vpop.f32.mrb[0].mxu0
    %v736 = vadd.f32 %v431, %v735
    %v737 = vpop.f32.mrb[0].mxu0
    %738 = vdwg.mxu0
    %739 = vmatprep.subr.mxu0 0.0
    %740 = vmatpush1.msra.mxu0 %v426
    %741 = vmatprep.subr.mxu0 0.0
    %742 = vmatpush1.msra.mxu0 %v427
    %743 = vmatprep.subr.mxu0 0.0
    %744 = vmatpush1.msra.mxu0 %v428
    %745 = vmatprep.subr.mxu0 0.0
    %746 = vmatpush1.msra.mxu0 %v429
    %747 = vmatprep.subr.mxu0 0.0
    %748 = vmatpush1.msra.mxu0 0.0
    %749 = vmatprep.subr.mxu0 0.0
    %750 = vmatpush1.msra.mxu0 0.0
    %751 = vmatprep.subr.mxu0 0.0
    %752 = vmatpush1.msra.mxu0 0.0
    %753 = vmatprep.subr.mxu0 0.0
    %754 = vmatpush1.msra.mxu0 0.0
    %755 = vmatprep.subr.mxu0 0.0
    %756 = vmatpush1.msra.mxu0 0.0
    %757 = vmatprep.subr.mxu0 0.0
    %758 = vmatpush1.msra.mxu0 0.0
    %759 = vmatprep.subr.mxu0 0.0
    %760 = vmatpush1.msra.mxu0 0.0
    %761 = vmatprep.subr.mxu0 0.0
    %762 = vmatpush1.msra.mxu0 0.0
    %763 = vmatprep.subr.mxu0 0.0
    %764 = vmatpush1.msra.mxu0 0.0
    %765 = vmatprep.subr.mxu0 0.0
    %766 = vmatpush1.msra.mxu0 0.0
    %767 = vmatprep.subr.mxu0 0.0
    %768 = vmatpush1.msra.mxu0 0.0
    %769 = vmatprep.subr.mxu0 0.0
    %770 = vmatpush1.msra.mxu0 0.0
    %771 = vmatprep.subr.mxu0 0.0
    %772 = vmatpush1.msra.mxu0 0.0
    %773 = vmatprep.subr.mxu0 0.0
    %774 = vmatpush1.msra.mxu0 0.0
    %775 = vmatprep.subr.mxu0 0.0
    %776 = vmatpush1.msra.mxu0 0.0
    %777 = vmatprep.subr.mxu0 0.0
    %778 = vmatpush1.msra.mxu0 0.0
    %779 = vmatprep.subr.mxu0 0.0
    %780 = vmatpush1.msra.mxu0 0.0
    %781 = vmatprep.subr.mxu0 0.0
    %782 = vmatpush1.msra.mxu0 0.0
    %783 = vmatprep.subr.mxu0 0.0
    %784 = vmatpush1.msra.mxu0 0.0
    %785 = vmatprep.subr.mxu0 0.0
    %786 = vmatpush1.msra.mxu0 0.0
    %787 = vmatprep.subr.mxu0 0.0
    %788 = vmatpush1.msra.mxu0 0.0
    %789 = vmatprep.subr.mxu0 0.0
    %790 = vmatpush1.msra.mxu0 0.0
    %791 = vmatprep.subr.mxu0 0.0
    %792 = vmatpush1.msra.mxu0 0.0
    %793 = vmatprep.subr.mxu0 0.0
    %794 = vmatpush1.msra.mxu0 0.0
    %795 = vmatprep.subr.mxu0 0.0
    %796 = vmatpush1.msra.mxu0 0.0
    %797 = vmatprep.subr.mxu0 0.0
    %798 = vmatpush1.msra.mxu0 0.0
    %799 = vmatprep.subr.mxu0 0.0
    %800 = vmatpush1.msra.mxu0 0.0
    %801 = vmatprep.subr.mxu0 0.0
    %802 = vmatpush1.msra.mxu0 0.0
    %803 = vmatprep.mubr.f32.mxu0 0.0
    %804 = vmatmul.mubr.f32.gmra.mrb[0].mxu0 %v597
    %v805 = vpop.f32.mrb[0].mxu0
    %v806 = vadd.f32 %v432, %v805
    %v807 = vpop.f32.mrb[0].mxu0
    %808 = vdwg.mxu0
    %v809 = vadd.f32 %v593, %v666
    %v810 = vxor.u32 %v809, 2147483648
    %v811 = vmul.f32 %v810, 1.442695
    %v812 = vpow.pop %v811
    %v813 = vadd.f32 %v812, 1.0
    %v814 = vrcp.pop %v813
    %v815 = vmul.f32 1.0, %v814
    %817 = vrot.lane.b32.xlu0 %v736, 32
    %v818 = vpop.permute.xlu0 %817
    %v820 = vadd.f32 %v593, %v818
    %v821 = vxor.u32 %v820, 2147483648
    %v822 = vmul.f32 %v821, 1.442695
    %v823 = vpow.pop %v822
    %v824 = vadd.f32 %v823, 1.0
    %v825 = vrcp.pop %v824
    %v826 = vmul.f32 1.0, %v825
    %v827 = vmul.f32 %v815, %v806
    %829 = vrot.lane.b32.xlu0 %v827, 64
    %v830 = vpop.permute.xlu0 %829
    %v832 = vadd.f32 %v593, %v830
    %v833 = vtanh.pop %v832
    %v834 = vsub.f32 1.0, %v826
    %836 = vrot.lane.b32.xlu0 %v833, 96
    %v837 = vpop.permute.xlu0 %836
    %v839 = vmul.f32 %v834, %v837
    %v840 = vmul.f32 %v826, 0.0
    %v841 = vadd.f32 %v839, %v840
    %843 = vrot.lane.b32.xlu0 %v841, 96
    %v844 = vpop.permute.xlu0 %843
    %v845 = vsel %vm522, %v844, 0
    %847 = vmatprep.subr.mxu0 0.0
    %848 = vmatpush1.msra.mxu0 %v418
    %849 = vmatprep.subr.mxu0 0.0
    %850 = vmatpush1.msra.mxu0 %v419
    %851 = vmatprep.subr.mxu0 0.0
    %852 = vmatpush1.msra.mxu0 %v420
    %853 = vmatprep.subr.mxu0 0.0
    %854 = vmatpush1.msra.mxu0 %v421
    %855 = vmatprep.subr.mxu0 0.0
    %856 = vmatpush1.msra.mxu0 0.0
    %857 = vmatprep.subr.mxu0 0.0
    %858 = vmatpush1.msra.mxu0 0.0
    %859 = vmatprep.subr.mxu0 0.0
    %860 = vmatpush1.msra.mxu0 0.0
    %861 = vmatprep.subr.mxu0 0.0
    %862 = vmatpush1.msra.mxu0 0.0
    %863 = vmatprep.subr.mxu0 0.0
    %864 = vmatpush1.msra.mxu0 0.0
    %865 = vmatprep.subr.mxu0 0.0
    %866 = vmatpush1.msra.mxu0 0.0
    %867 = vmatprep.subr.mxu0 0.0
    %868 = vmatpush1.msra.mxu0 0.0
    %869 = vmatprep.subr.mxu0 0.0
    %870 = vmatpush1.msra.mxu0 0.0
    %871 = vmatprep.subr.mxu0 0.0
    %872 = vmatpush1.msra.mxu0 0.0
    %873 = vmatprep.subr.mxu0 0.0
    %874 = vmatpush1.msra.mxu0 0.0
    %875 = vmatprep.subr.mxu0 0.0
    %876 = vmatpush1.msra.mxu0 0.0
    %877 = vmatprep.subr.mxu0 0.0
    %878 = vmatpush1.msra.mxu0 0.0
    %879 = vmatprep.subr.mxu0 0.0
    %880 = vmatpush1.msra.mxu0 0.0
    %881 = vmatprep.subr.mxu0 0.0
    %882 = vmatpush1.msra.mxu0 0.0
    %883 = vmatprep.subr.mxu0 0.0
    %884 = vmatpush1.msra.mxu0 0.0
    %885 = vmatprep.subr.mxu0 0.0
    %886 = vmatpush1.msra.mxu0 0.0
    %887 = vmatprep.subr.mxu0 0.0
    %888 = vmatpush1.msra.mxu0 0.0
    %889 = vmatprep.subr.mxu0 0.0
    %890 = vmatpush1.msra.mxu0 0.0
    %891 = vmatprep.subr.mxu0 0.0
    %892 = vmatpush1.msra.mxu0 0.0
    %893 = vmatprep.subr.mxu0 0.0
    %894 = vmatpush1.msra.mxu0 0.0
    %895 = vmatprep.subr.mxu0 0.0
    %896 = vmatpush1.msra.mxu0 0.0
    %897 = vmatprep.subr.mxu0 0.0
    %898 = vmatpush1.msra.mxu0 0.0
    %899 = vmatprep.subr.mxu0 0.0
    %900 = vmatpush1.msra.mxu0 0.0
    %901 = vmatprep.subr.mxu0 0.0
    %902 = vmatpush1.msra.mxu0 0.0
    %903 = vmatprep.subr.mxu0 0.0
    %904 = vmatpush1.msra.mxu0 0.0
    %905 = vmatprep.subr.mxu0 0.0
    %906 = vmatpush1.msra.mxu0 0.0
    %907 = vmatprep.subr.mxu0 0.0
    %908 = vmatpush1.msra.mxu0 0.0
    %909 = vmatprep.subr.mxu0 0.0
    %910 = vmatpush1.msra.mxu0 0.0
    %911 = vmatprep.mubr.f32.mxu0 0.0
    %912 = vmatmul.mubr.f32.gmra.mrb[0].mxu0 %v845
    %v913 = vpop.f32.mrb[0].mxu0
    %v914 = vadd.f32 %v430, %v913
    %v915 = vpop.f32.mrb[0].mxu0
    %916 = vdwg.mxu0
    %917 = vmatprep.subr.mxu0 0.0
    %918 = vmatpush1.msra.mxu0 %v422
    %919 = vmatprep.subr.mxu0 0.0
    %920 = vmatpush1.msra.mxu0 %v423
    %921 = vmatprep.subr.mxu0 0.0
    %922 = vmatpush1.msra.mxu0 %v424
    %923 = vmatprep.subr.mxu0 0.0
    %924 = vmatpush1.msra.mxu0 %v425
    %925 = vmatprep.subr.mxu0 0.0
    %926 = vmatpush1.msra.mxu0 0.0
    %927 = vmatprep.subr.mxu0 0.0
    %928 = vmatpush1.msra.mxu0 0.0
    %929 = vmatprep.subr.mxu0 0.0
    %930 = vmatpush1.msra.mxu0 0.0
    %931 = vmatprep.subr.mxu0 0.0
    %932 = vmatpush1.msra.mxu0 0.0
    %933 = vmatprep.subr.mxu0 0.0
    %934 = vmatpush1.msra.mxu0 0.0
    %935 = vmatprep.subr.mxu0 0.0
    %936 = vmatpush1.msra.mxu0 0.0
    %937 = vmatprep.subr.mxu0 0.0
    %938 = vmatpush1.msra.mxu0 0.0
    %939 = vmatprep.subr.mxu0 0.0
    %940 = vmatpush1.msra.mxu0 0.0
    %941 = vmatprep.subr.mxu0 0.0
    %942 = vmatpush1.msra.mxu0 0.0
    %943 = vmatprep.subr.mxu0 0.0
    %944 = vmatpush1.msra.mxu0 0.0
    %945 = vmatprep.subr.mxu0 0.0
    %946 = vmatpush1.msra.mxu0 0.0
    %947 = vmatprep.subr.mxu0 0.0
    %948 = vmatpush1.msra.mxu0 0.0
    %949 = vmatprep.subr.mxu0 0.0
    %950 = vmatpush1.msra.mxu0 0.0
    %951 = vmatprep.subr.mxu0 0.0
    %952 = vmatpush1.msra.mxu0 0.0
    %953 = vmatprep.subr.mxu0 0.0
    %954 = vmatpush1.msra.mxu0 0.0
    %955 = vmatprep.subr.mxu0 0.0
    %956 = vmatpush1.msra.mxu0 0.0
    %957 = vmatprep.subr.mxu0 0.0
    %958 = vmatpush1.msra.mxu0 0.0
    %959 = vmatprep.subr.mxu0 0.0
    %960 = vmatpush1.msra.mxu0 0.0
    %961 = vmatprep.subr.mxu0 0.0
    %962 = vmatpush1.msra.mxu0 0.0
    %963 = vmatprep.subr.mxu0 0.0
    %964 = vmatpush1.msra.mxu0 0.0
    %965 = vmatprep.subr.mxu0 0.0
    %966 = vmatpush1.msra.mxu0 0.0
    %967 = vmatprep.subr.mxu0 0.0
    %968 = vmatpush1.msra.mxu0 0.0
    %969 = vmatprep.subr.mxu0 0.0
    %970 = vmatpush1.msra.mxu0 0.0
    %971 = vmatprep.subr.mxu0 0.0
    %972 = vmatpush1.msra.mxu0 0.0
    %973 = vmatprep.subr.mxu0 0.0
    %974 = vmatpush1.msra.mxu0 0.0
    %975 = vmatprep.subr.mxu0 0.0
    %976 = vmatpush1.msra.mxu0 0.0
    %977 = vmatprep.subr.mxu0 0.0
    %978 = vmatpush1.msra.mxu0 0.0
    %979 = vmatprep.subr.mxu0 0.0
    %980 = vmatpush1.msra.mxu0 0.0
    %981 = vmatprep.mubr.f32.mxu0 0.0
    %982 = vmatmul.mubr.f32.gmra.mrb[0].mxu0 %v845
    %v983 = vpop.f32.mrb[0].mxu0
    %v984 = vadd.f32 %v431, %v983
    %v985 = vpop.f32.mrb[0].mxu0
    %986 = vdwg.mxu0
    %987 = vmatprep.subr.mxu0 0.0
    %988 = vmatpush1.msra.mxu0 %v426
    %989 = vmatprep.subr.mxu0 0.0
    %990 = vmatpush1.msra.mxu0 %v427
    %991 = vmatprep.subr.mxu0 0.0
    %992 = vmatpush1.msra.mxu0 %v428
    %993 = vmatprep.subr.mxu0 0.0
    %994 = vmatpush1.msra.mxu0 %v429
    %995 = vmatprep.subr.mxu0 0.0
    %996 = vmatpush1.msra.mxu0 0.0
    %997 = vmatprep.subr.mxu0 0.0
    %998 = vmatpush1.msra.mxu0 0.0
    %999 = vmatprep.subr.mxu0 0.0
    %1000 = vmatpush1.msra.mxu0 0.0
    %1001 = vmatprep.subr.mxu0 0.0
    %1002 = vmatpush1.msra.mxu0 0.0
    %1003 = vmatprep.subr.mxu0 0.0
    %1004 = vmatpush1.msra.mxu0 0.0
    %1005 = vmatprep.subr.mxu0 0.0
    %1006 = vmatpush1.msra.mxu0 0.0
    %1007 = vmatprep.subr.mxu0 0.0
    %1008 = vmatpush1.msra.mxu0 0.0
    %1009 = vmatprep.subr.mxu0 0.0
    %1010 = vmatpush1.msra.mxu0 0.0
    %1011 = vmatprep.subr.mxu0 0.0
    %1012 = vmatpush1.msra.mxu0 0.0
    %1013 = vmatprep.subr.mxu0 0.0
    %1014 = vmatpush1.msra.mxu0 0.0
    %1015 = vmatprep.subr.mxu0 0.0
    %1016 = vmatpush1.msra.mxu0 0.0
    %1017 = vmatprep.subr.mxu0 0.0
    %1018 = vmatpush1.msra.mxu0 0.0
    %1019 = vmatprep.subr.mxu0 0.0
    %1020 = vmatpush1.msra.mxu0 0.0
    %1021 = vmatprep.subr.mxu0 0.0
    %1022 = vmatpush1.msra.mxu0 0.0
    %1023 = vmatprep.subr.mxu0 0.0
    %1024 = vmatpush1.msra.mxu0 0.0
    %1025 = vmatprep.subr.mxu0 0.0
    %1026 = vmatpush1.msra.mxu0 0.0
    %1027 = vmatprep.subr.mxu0 0.0
    %1028 = vmatpush1.msra.mxu0 0.0
    %1029 = vmatprep.subr.mxu0 0.0
    %1030 = vmatpush1.msra.mxu0 0.0
    %1031 = vmatprep.subr.mxu0 0.0
    %1032 = vmatpush1.msra.mxu0 0.0
    %1033 = vmatprep.subr.mxu0 0.0
    %1034 = vmatpush1.msra.mxu0 0.0
    %1035 = vmatprep.subr.mxu0 0.0
    %1036 = vmatpush1.msra.mxu0 0.0
    %1037 = vmatprep.subr.mxu0 0.0
    %1038 = vmatpush1.msra.mxu0 0.0
    %1039 = vmatprep.subr.mxu0 0.0
    %1040 = vmatpush1.msra.mxu0 0.0
    %1041 = vmatprep.subr.mxu0 0.0
    %1042 = vmatpush1.msra.mxu0 0.0
    %1043 = vmatprep.subr.mxu0 0.0
    %1044 = vmatpush1.msra.mxu0 0.0
    %1045 = vmatprep.subr.mxu0 0.0
    %1046 = vmatpush1.msra.mxu0 0.0
    %1047 = vmatprep.subr.mxu0 0.0
    %1048 = vmatpush1.msra.mxu0 0.0
    %1049 = vmatprep.subr.mxu0 0.0
    %1050 = vmatpush1.msra.mxu0 0.0
    %1051 = vmatprep.mubr.f32.mxu0 0.0
    %1052 = vmatmul.mubr.f32.gmra.mrb[0].mxu0 %v845
    %v1053 = vpop.f32.mrb[0].mxu0
    %v1054 = vadd.f32 %v432, %v1053
    %v1055 = vpop.f32.mrb[0].mxu0
    %1056 = vdwg.mxu0
    %v1058 = vrot.slane %v914, 7
    %v1060 = vadd.f32 %v593, %v1058
    %v1061 = vxor.u32 %v1060, 2147483648
    %v1062 = vmul.f32 %v1061, 1.442695
    %v1063 = vpow.pop %v1062
    %v1064 = vadd.f32 %v1063, 1.0
    %v1065 = vrcp.pop %v1064
    %v1066 = vmul.f32 1.0, %v1065
    %v1068 = vrot.slane %v984, 7
    %1069 = vrot.lane.b32.xlu0 %v1068, 32
    %v1070 = vpop.permute.xlu0 %1069
    %v1072 = vadd.f32 %v593, %v1070
    %v1073 = vxor.u32 %v1072, 2147483648
    %v1074 = vmul.f32 %v1073, 1.442695
    %v1075 = vpow.pop %v1074
    %v1076 = vadd.f32 %v1075, 1.0
    %v1077 = vrcp.pop %v1076
    %v1078 = vmul.f32 1.0, %v1077
    %v1080 = vrot.slane %v1054, 7
    %v1082 = vmul.f32 %v1066, %v1080
    %1084 = vrot.lane.b32.xlu0 %v1082, 64
    %v1085 = vpop.permute.xlu0 %1084
    %v1087 = vadd.f32 %v593, %v1085
    %v1088 = vtanh.pop %v1087
    %v1089 = vsub.f32 1.0, %v1078
    %1091 = vrot.lane.b32.xlu0 %v1088, 96
    %v1092 = vpop.permute.xlu0 %1091
    %v1094 = vmul.f32 %v1089, %v1092
    %v1095 = vrot.slane %v841, 7
    %v1097 = vmul.f32 %v1078, %v1095
    %v1098 = vadd.f32 %v1094, %v1097
    %v1100 = vrot.slane %v1098, 1
    %1101 = vrot.lane.b32.xlu0 %v1100, 96
    %v1102 = vpop.permute.xlu0 %1101
    %v1103 = vsel %vm522, %v1102, 0
    %1105 = vmatprep.subr.mxu0 0.0
    %1106 = vmatpush1.msra.mxu0 %v418
    %1107 = vmatprep.subr.mxu0 0.0
    %1108 = vmatpush1.msra.mxu0 %v419
    %1109 = vmatprep.subr.mxu0 0.0
    %1110 = vmatpush1.msra.mxu0 %v420
    %1111 = vmatprep.subr.mxu0 0.0
    %1112 = vmatpush1.msra.mxu0 %v421
    %1113 = vmatprep.subr.mxu0 0.0
    %1114 = vmatpush1.msra.mxu0 0.0
    %1115 = vmatprep.subr.mxu0 0.0
    %1116 = vmatpush1.msra.mxu0 0.0
    %1117 = vmatprep.subr.mxu0 0.0
    %1118 = vmatpush1.msra.mxu0 0.0
    %1119 = vmatprep.subr.mxu0 0.0
    %1120 = vmatpush1.msra.mxu0 0.0
    %1121 = vmatprep.subr.mxu0 0.0
    %1122 = vmatpush1.msra.mxu0 0.0
    %1123 = vmatprep.subr.mxu0 0.0
    %1124 = vmatpush1.msra.mxu0 0.0
    %1125 = vmatprep.subr.mxu0 0.0
    %1126 = vmatpush1.msra.mxu0 0.0
    %1127 = vmatprep.subr.mxu0 0.0
    %1128 = vmatpush1.msra.mxu0 0.0
    %1129 = vmatprep.subr.mxu0 0.0
    %1130 = vmatpush1.msra.mxu0 0.0
    %1131 = vmatprep.subr.mxu0 0.0
    %1132 = vmatpush1.msra.mxu0 0.0
    %1133 = vmatprep.subr.mxu0 0.0
    %1134 = vmatpush1.msra.mxu0 0.0
    %1135 = vmatprep.subr.mxu0 0.0
    %1136 = vmatpush1.msra.mxu0 0.0
    %1137 = vmatprep.subr.mxu0 0.0
    %1138 = vmatpush1.msra.mxu0 0.0
    %1139 = vmatprep.subr.mxu0 0.0
    %1140 = vmatpush1.msra.mxu0 0.0
    %1141 = vmatprep.subr.mxu0 0.0
    %1142 = vmatpush1.msra.mxu0 0.0
    %1143 = vmatprep.subr.mxu0 0.0
    %1144 = vmatpush1.msra.mxu0 0.0
    %1145 = vmatprep.subr.mxu0 0.0
    %1146 = vmatpush1.msra.mxu0 0.0
    %1147 = vmatprep.subr.mxu0 0.0
    %1148 = vmatpush1.msra.mxu0 0.0
    %1149 = vmatprep.subr.mxu0 0.0
    %1150 = vmatpush1.msra.mxu0 0.0
    %1151 = vmatprep.subr.mxu0 0.0
    %1152 = vmatpush1.msra.mxu0 0.0
    %1153 = vmatprep.subr.mxu0 0.0
    %1154 = vmatpush1.msra.mxu0 0.0
    %1155 = vmatprep.subr.mxu0 0.0
    %1156 = vmatpush1.msra.mxu0 0.0
    %1157 = vmatprep.subr.mxu0 0.0
    %1158 = vmatpush1.msra.mxu0 0.0
    %1159 = vmatprep.subr.mxu0 0.0
    %1160 = vmatpush1.msra.mxu0 0.0
    %1161 = vmatprep.subr.mxu0 0.0
    %1162 = vmatpush1.msra.mxu0 0.0
    %1163 = vmatprep.subr.mxu0 0.0
    %1164 = vmatpush1.msra.mxu0 0.0
    %1165 = vmatprep.subr.mxu0 0.0
    %1166 = vmatpush1.msra.mxu0 0.0
    %1167 = vmatprep.subr.mxu0 0.0
    %1168 = vmatpush1.msra.mxu0 0.0
    %1169 = vmatprep.mubr.f32.mxu0 0.0
    %1170 = vmatmul.mubr.f32.gmra.mrb[0].mxu0 %v1103
    %v1171 = vpop.f32.mrb[0].mxu0
    %v1172 = vadd.f32 %v430, %v1171
    %v1173 = vpop.f32.mrb[0].mxu0
    %1174 = vdwg.mxu0
    %1175 = vmatprep.subr.mxu0 0.0
    %1176 = vmatpush1.msra.mxu0 %v422
    %1177 = vmatprep.subr.mxu0 0.0
    %1178 = vmatpush1.msra.mxu0 %v423
    %1179 = vmatprep.subr.mxu0 0.0
    %1180 = vmatpush1.msra.mxu0 %v424
    %1181 = vmatprep.subr.mxu0 0.0
    %1182 = vmatpush1.msra.mxu0 %v425
    %1183 = vmatprep.subr.mxu0 0.0
    %1184 = vmatpush1.msra.mxu0 0.0
    %1185 = vmatprep.subr.mxu0 0.0
    %1186 = vmatpush1.msra.mxu0 0.0
    %1187 = vmatprep.subr.mxu0 0.0
    %1188 = vmatpush1.msra.mxu0 0.0
    %1189 = vmatprep.subr.mxu0 0.0
    %1190 = vmatpush1.msra.mxu0 0.0
    %1191 = vmatprep.subr.mxu0 0.0
    %1192 = vmatpush1.msra.mxu0 0.0
    %1193 = vmatprep.subr.mxu0 0.0
    %1194 = vmatpush1.msra.mxu0 0.0
    %1195 = vmatprep.subr.mxu0 0.0
    %1196 = vmatpush1.msra.mxu0 0.0
    %1197 = vmatprep.subr.mxu0 0.0
    %1198 = vmatpush1.msra.mxu0 0.0
    %1199 = vmatprep.subr.mxu0 0.0
    %1200 = vmatpush1.msra.mxu0 0.0
    %1201 = vmatprep.subr.mxu0 0.0
    %1202 = vmatpush1.msra.mxu0 0.0
    %1203 = vmatprep.subr.mxu0 0.0
    %1204 = vmatpush1.msra.mxu0 0.0
    %1205 = vmatprep.subr.mxu0 0.0
    %1206 = vmatpush1.msra.mxu0 0.0
    %1207 = vmatprep.subr.mxu0 0.0
    %1208 = vmatpush1.msra.mxu0 0.0
    %1209 = vmatprep.subr.mxu0 0.0
    %1210 = vmatpush1.msra.mxu0 0.0
    %1211 = vmatprep.subr.mxu0 0.0
    %1212 = vmatpush1.msra.mxu0 0.0
    %1213 = vmatprep.subr.mxu0 0.0
    %1214 = vmatpush1.msra.mxu0 0.0
    %1215 = vmatprep.subr.mxu0 0.0
    %1216 = vmatpush1.msra.mxu0 0.0
    %1217 = vmatprep.subr.mxu0 0.0
    %1218 = vmatpush1.msra.mxu0 0.0
    %1219 = vmatprep.subr.mxu0 0.0
    %1220 = vmatpush1.msra.mxu0 0.0
    %1221 = vmatprep.subr.mxu0 0.0
    %1222 = vmatpush1.msra.mxu0 0.0
    %1223 = vmatprep.subr.mxu0 0.0
    %1224 = vmatpush1.msra.mxu0 0.0
    %1225 = vmatprep.subr.mxu0 0.0
    %1226 = vmatpush1.msra.mxu0 0.0
    %1227 = vmatprep.subr.mxu0 0.0
    %1228 = vmatpush1.msra.mxu0 0.0
    %1229 = vmatprep.subr.mxu0 0.0
    %1230 = vmatpush1.msra.mxu0 0.0
    %1231 = vmatprep.subr.mxu0 0.0
    %1232 = vmatpush1.msra.mxu0 0.0
    %1233 = vmatprep.subr.mxu0 0.0
    %1234 = vmatpush1.msra.mxu0 0.0
    %1235 = vmatprep.subr.mxu0 0.0
    %1236 = vmatpush1.msra.mxu0 0.0
    %1237 = vmatprep.subr.mxu0 0.0
    %1238 = vmatpush1.msra.mxu0 0.0
    %1239 = vmatprep.mubr.f32.mxu0 0.0
    %1240 = vmatmul.mubr.f32.gmra.mrb[0].mxu0 %v1103
    %v1241 = vpop.f32.mrb[0].mxu0
    %v1242 = vadd.f32 %v431, %v1241
    %v1243 = vpop.f32.mrb[0].mxu0
    %1244 = vdwg.mxu0
    %1245 = vmatprep.subr.mxu0 0.0
    %1246 = vmatpush1.msra.mxu0 %v426
    %1247 = vmatprep.subr.mxu0 0.0
    %1248 = vmatpush1.msra.mxu0 %v427
    %1249 = vmatprep.subr.mxu0 0.0
    %1250 = vmatpush1.msra.mxu0 %v428
    %1251 = vmatprep.subr.mxu0 0.0
    %1252 = vmatpush1.msra.mxu0 %v429
    %1253 = vmatprep.subr.mxu0 0.0
    %1254 = vmatpush1.msra.mxu0 0.0
    %1255 = vmatprep.subr.mxu0 0.0
    %1256 = vmatpush1.msra.mxu0 0.0
    %1257 = vmatprep.subr.mxu0 0.0
    %1258 = vmatpush1.msra.mxu0 0.0
    %1259 = vmatprep.subr.mxu0 0.0
    %1260 = vmatpush1.msra.mxu0 0.0
    %1261 = vmatprep.subr.mxu0 0.0
    %1262 = vmatpush1.msra.mxu0 0.0
    %1263 = vmatprep.subr.mxu0 0.0
    %1264 = vmatpush1.msra.mxu0 0.0
    %1265 = vmatprep.subr.mxu0 0.0
    %1266 = vmatpush1.msra.mxu0 0.0
    %1267 = vmatprep.subr.mxu0 0.0
    %1268 = vmatpush1.msra.mxu0 0.0
    %1269 = vmatprep.subr.mxu0 0.0
    %1270 = vmatpush1.msra.mxu0 0.0
    %1271 = vmatprep.subr.mxu0 0.0
    %1272 = vmatpush1.msra.mxu0 0.0
    %1273 = vmatprep.subr.mxu0 0.0
    %1274 = vmatpush1.msra.mxu0 0.0
    %1275 = vmatprep.subr.mxu0 0.0
    %1276 = vmatpush1.msra.mxu0 0.0
    %1277 = vmatprep.subr.mxu0 0.0
    %1278 = vmatpush1.msra.mxu0 0.0
    %1279 = vmatprep.subr.mxu0 0.0
    %1280 = vmatpush1.msra.mxu0 0.0
    %1281 = vmatprep.subr.mxu0 0.0
    %1282 = vmatpush1.msra.mxu0 0.0
    %1283 = vmatprep.subr.mxu0 0.0
    %1284 = vmatpush1.msra.mxu0 0.0
    %1285 = vmatprep.subr.mxu0 0.0
    %1286 = vmatpush1.msra.mxu0 0.0
    %1287 = vmatprep.subr.mxu0 0.0
    %1288 = vmatpush1.msra.mxu0 0.0
    %1289 = vmatprep.subr.mxu0 0.0
    %1290 = vmatpush1.msra.mxu0 0.0
    %1291 = vmatprep.subr.mxu0 0.0
    %1292 = vmatpush1.msra.mxu0 0.0
    %1293 = vmatprep.subr.mxu0 0.0
    %1294 = vmatpush1.msra.mxu0 0.0
    %1295 = vmatprep.subr.mxu0 0.0
    %1296 = vmatpush1.msra.mxu0 0.0
    %1297 = vmatprep.subr.mxu0 0.0
    %1298 = vmatpush1.msra.mxu0 0.0
    %1299 = vmatprep.subr.mxu0 0.0
    %1300 = vmatpush1.msra.mxu0 0.0
    %1301 = vmatprep.subr.mxu0 0.0
    %1302 = vmatpush1.msra.mxu0 0.0
    %1303 = vmatprep.subr.mxu0 0.0
    %1304 = vmatpush1.msra.mxu0 0.0
    %1305 = vmatprep.subr.mxu0 0.0
    %1306 = vmatpush1.msra.mxu0 0.0
    %1307 = vmatprep.subr.mxu0 0.0
    %1308 = vmatpush1.msra.mxu0 0.0
    %1309 = vmatprep.mubr.f32.mxu0 0.0
    %1310 = vmatmul.mubr.f32.gmra.mrb[0].mxu0 %v1103
    %v1311 = vpop.f32.mrb[0].mxu0
    %v1312 = vadd.f32 %v432, %v1311
    %v1313 = vpop.f32.mrb[0].mxu0
    %1314 = vdwg.mxu0
    %v1316 = vrot.slane %v1172, 6
    %v1318 = vadd.f32 %v593, %v1316
    %v1319 = vxor.u32 %v1318, 2147483648
    %v1320 = vmul.f32 %v1319, 1.442695
    %v1321 = vpow.pop %v1320
    %v1322 = vadd.f32 %v1321, 1.0
    %v1323 = vrcp.pop %v1322
    %v1324 = vmul.f32 1.0, %v1323
    %v1326 = vrot.slane %v1242, 6
    %1327 = vrot.lane.b32.xlu0 %v1326, 32
    %v1328 = vpop.permute.xlu0 %1327
    %v1330 = vadd.f32 %v593, %v1328
    %v1331 = vxor.u32 %v1330, 2147483648
    %v1332 = vmul.f32 %v1331, 1.442695
    %v1333 = vpow.pop %v1332
    %v1334 = vadd.f32 %v1333, 1.0
    %v1335 = vrcp.pop %v1334
    %v1336 = vmul.f32 1.0, %v1335
    %v1338 = vrot.slane %v1312, 6
    %v1340 = vmul.f32 %v1324, %v1338
    %1342 = vrot.lane.b32.xlu0 %v1340, 64
    %v1343 = vpop.permute.xlu0 %1342
    %v1345 = vadd.f32 %v593, %v1343
    %v1346 = vtanh.pop %v1345
    %v1347 = vsub.f32 1.0, %v1336
    %1349 = vrot.lane.b32.xlu0 %v1346, 96
    %v1350 = vpop.permute.xlu0 %1349
    %v1352 = vmul.f32 %v1347, %v1350
    %v1353 = vrot.slane %v1098, 7
    %v1355 = vmul.f32 %v1336, %v1353
    %v1356 = vadd.f32 %v1352, %v1355
    %v1358 = vrot.slane %v1356, 2
    %1359 = vrot.lane.b32.xlu0 %v1358, 96
    %v1360 = vpop.permute.xlu0 %1359
    %v1361 = vsel %vm522, %v1360, 0
    %1363 = vmatprep.subr.mxu0 0.0
    %1364 = vmatpush1.msra.mxu0 %v418
    %1365 = vmatprep.subr.mxu0 0.0
    %1366 = vmatpush1.msra.mxu0 %v419
    %1367 = vmatprep.subr.mxu0 0.0
    %1368 = vmatpush1.msra.mxu0 %v420
    %1369 = vmatprep.subr.mxu0 0.0
    %1370 = vmatpush1.msra.mxu0 %v421
    %1371 = vmatprep.subr.mxu0 0.0
    %1372 = vmatpush1.msra.mxu0 0.0
    %1373 = vmatprep.subr.mxu0 0.0
    %1374 = vmatpush1.msra.mxu0 0.0
    %1375 = vmatprep.subr.mxu0 0.0
    %1376 = vmatpush1.msra.mxu0 0.0
    %1377 = vmatprep.subr.mxu0 0.0
    %1378 = vmatpush1.msra.mxu0 0.0
    %1379 = vmatprep.subr.mxu0 0.0
    %1380 = vmatpush1.msra.mxu0 0.0
    %1381 = vmatprep.subr.mxu0 0.0
    %1382 = vmatpush1.msra.mxu0 0.0
    %1383 = vmatprep.subr.mxu0 0.0
    %1384 = vmatpush1.msra.mxu0 0.0
    %1385 = vmatprep.subr.mxu0 0.0
    %1386 = vmatpush1.msra.mxu0 0.0
    %1387 = vmatprep.subr.mxu0 0.0
    %1388 = vmatpush1.msra.mxu0 0.0
    %1389 = vmatprep.subr.mxu0 0.0
    %1390 = vmatpush1.msra.mxu0 0.0
    %1391 = vmatprep.subr.mxu0 0.0
    %1392 = vmatpush1.msra.mxu0 0.0
    %1393 = vmatprep.subr.mxu0 0.0
    %1394 = vmatpush1.msra.mxu0 0.0
    %1395 = vmatprep.subr.mxu0 0.0
    %1396 = vmatpush1.msra.mxu0 0.0
    %1397 = vmatprep.subr.mxu0 0.0
    %1398 = vmatpush1.msra.mxu0 0.0
    %1399 = vmatprep.subr.mxu0 0.0
    %1400 = vmatpush1.msra.mxu0 0.0
    %1401 = vmatprep.subr.mxu0 0.0
    %1402 = vmatpush1.msra.mxu0 0.0
    %1403 = vmatprep.subr.mxu0 0.0
    %1404 = vmatpush1.msra.mxu0 0.0
    %1405 = vmatprep.subr.mxu0 0.0
    %1406 = vmatpush1.msra.mxu0 0.0
    %1407 = vmatprep.subr.mxu0 0.0
    %1408 = vmatpush1.msra.mxu0 0.0
    %1409 = vmatprep.subr.mxu0 0.0
    %1410 = vmatpush1.msra.mxu0 0.0
    %1411 = vmatprep.subr.mxu0 0.0
    %1412 = vmatpush1.msra.mxu0 0.0
    %1413 = vmatprep.subr.mxu0 0.0
    %1414 = vmatpush1.msra.mxu0 0.0
    %1415 = vmatprep.subr.mxu0 0.0
    %1416 = vmatpush1.msra.mxu0 0.0
    %1417 = vmatprep.subr.mxu0 0.0
    %1418 = vmatpush1.msra.mxu0 0.0
    %1419 = vmatprep.subr.mxu0 0.0
    %1420 = vmatpush1.msra.mxu0 0.0
    %1421 = vmatprep.subr.mxu0 0.0
    %1422 = vmatpush1.msra.mxu0 0.0
    %1423 = vmatprep.subr.mxu0 0.0
    %1424 = vmatpush1.msra.mxu0 0.0
    %1425 = vmatprep.subr.mxu0 0.0
    %1426 = vmatpush1.msra.mxu0 0.0
    %1427 = vmatprep.mubr.f32.mxu0 0.0
    %1428 = vmatmul.mubr.f32.gmra.mrb[0].mxu0 %v1361
    %v1429 = vpop.f32.mrb[0].mxu0
    %v1430 = vadd.f32 %v430, %v1429
    %v1431 = vpop.f32.mrb[0].mxu0
    %1432 = vdwg.mxu0
    %1433 = vmatprep.subr.mxu0 0.0
    %1434 = vmatpush1.msra.mxu0 %v422
    %1435 = vmatprep.subr.mxu0 0.0
    %1436 = vmatpush1.msra.mxu0 %v423
    %1437 = vmatprep.subr.mxu0 0.0
    %1438 = vmatpush1.msra.mxu0 %v424
    %1439 = vmatprep.subr.mxu0 0.0
    %1440 = vmatpush1.msra.mxu0 %v425
    %1441 = vmatprep.subr.mxu0 0.0
    %1442 = vmatpush1.msra.mxu0 0.0
    %1443 = vmatprep.subr.mxu0 0.0
    %1444 = vmatpush1.msra.mxu0 0.0
    %1445 = vmatprep.subr.mxu0 0.0
    %1446 = vmatpush1.msra.mxu0 0.0
    %1447 = vmatprep.subr.mxu0 0.0
    %1448 = vmatpush1.msra.mxu0 0.0
    %1449 = vmatprep.subr.mxu0 0.0
    %1450 = vmatpush1.msra.mxu0 0.0
    %1451 = vmatprep.subr.mxu0 0.0
    %1452 = vmatpush1.msra.mxu0 0.0
    %1453 = vmatprep.subr.mxu0 0.0
    %1454 = vmatpush1.msra.mxu0 0.0
    %1455 = vmatprep.subr.mxu0 0.0
    %1456 = vmatpush1.msra.mxu0 0.0
    %1457 = vmatprep.subr.mxu0 0.0
    %1458 = vmatpush1.msra.mxu0 0.0
    %1459 = vmatprep.subr.mxu0 0.0
    %1460 = vmatpush1.msra.mxu0 0.0
    %1461 = vmatprep.subr.mxu0 0.0
    %1462 = vmatpush1.msra.mxu0 0.0
    %1463 = vmatprep.subr.mxu0 0.0
    %1464 = vmatpush1.msra.mxu0 0.0
    %1465 = vmatprep.subr.mxu0 0.0
    %1466 = vmatpush1.msra.mxu0 0.0
    %1467 = vmatprep.subr.mxu0 0.0
    %1468 = vmatpush1.msra.mxu0 0.0
    %1469 = vmatprep.subr.mxu0 0.0
    %1470 = vmatpush1.msra.mxu0 0.0
    %1471 = vmatprep.subr.mxu0 0.0
    %1472 = vmatpush1.msra.mxu0 0.0
    %1473 = vmatprep.subr.mxu0 0.0
    %1474 = vmatpush1.msra.mxu0 0.0
    %1475 = vmatprep.subr.mxu0 0.0
    %1476 = vmatpush1.msra.mxu0 0.0
    %1477 = vmatprep.subr.mxu0 0.0
    %1478 = vmatpush1.msra.mxu0 0.0
    %1479 = vmatprep.subr.mxu0 0.0
    %1480 = vmatpush1.msra.mxu0 0.0
    %1481 = vmatprep.subr.mxu0 0.0
    %1482 = vmatpush1.msra.mxu0 0.0
    %1483 = vmatprep.subr.mxu0 0.0
    %1484 = vmatpush1.msra.mxu0 0.0
    %1485 = vmatprep.subr.mxu0 0.0
    %1486 = vmatpush1.msra.mxu0 0.0
    %1487 = vmatprep.subr.mxu0 0.0
    %1488 = vmatpush1.msra.mxu0 0.0
    %1489 = vmatprep.subr.mxu0 0.0
    %1490 = vmatpush1.msra.mxu0 0.0
    %1491 = vmatprep.subr.mxu0 0.0
    %1492 = vmatpush1.msra.mxu0 0.0
    %1493 = vmatprep.subr.mxu0 0.0
    %1494 = vmatpush1.msra.mxu0 0.0
    %1495 = vmatprep.subr.mxu0 0.0
    %1496 = vmatpush1.msra.mxu0 0.0
    %1497 = vmatprep.mubr.f32.mxu0 0.0
    %1498 = vmatmul.mubr.f32.gmra.mrb[0].mxu0 %v1361
    %v1499 = vpop.f32.mrb[0].mxu0
    %v1500 = vadd.f32 %v431, %v1499
    %v1501 = vpop.f32.mrb[0].mxu0
    %1502 = vdwg.mxu0
    %1503 = vmatprep.subr.mxu0 0.0
    %1504 = vmatpush1.msra.mxu0 %v426
    %1505 = vmatprep.subr.mxu0 0.0
    %1506 = vmatpush1.msra.mxu0 %v427
    %1507 = vmatprep.subr.mxu0 0.0
    %1508 = vmatpush1.msra.mxu0 %v428
    %1509 = vmatprep.subr.mxu0 0.0
    %1510 = vmatpush1.msra.mxu0 %v429
    %1511 = vmatprep.subr.mxu0 0.0
    %1512 = vmatpush1.msra.mxu0 0.0
    %1513 = vmatprep.subr.mxu0 0.0
    %1514 = vmatpush1.msra.mxu0 0.0
    %1515 = vmatprep.subr.mxu0 0.0
    %1516 = vmatpush1.msra.mxu0 0.0
    %1517 = vmatprep.subr.mxu0 0.0
    %1518 = vmatpush1.msra.mxu0 0.0
    %1519 = vmatprep.subr.mxu0 0.0
    %1520 = vmatpush1.msra.mxu0 0.0
    %1521 = vmatprep.subr.mxu0 0.0
    %1522 = vmatpush1.msra.mxu0 0.0
    %1523 = vmatprep.subr.mxu0 0.0
    %1524 = vmatpush1.msra.mxu0 0.0
    %1525 = vmatprep.subr.mxu0 0.0
    %1526 = vmatpush1.msra.mxu0 0.0
    %1527 = vmatprep.subr.mxu0 0.0
    %1528 = vmatpush1.msra.mxu0 0.0
    %1529 = vmatprep.subr.mxu0 0.0
    %1530 = vmatpush1.msra.mxu0 0.0
    %1531 = vmatprep.subr.mxu0 0.0
    %1532 = vmatpush1.msra.mxu0 0.0
    %1533 = vmatprep.subr.mxu0 0.0
    %1534 = vmatpush1.msra.mxu0 0.0
    %1535 = vmatprep.subr.mxu0 0.0
    %1536 = vmatpush1.msra.mxu0 0.0
    %1537 = vmatprep.subr.mxu0 0.0
    %1538 = vmatpush1.msra.mxu0 0.0
    %1539 = vmatprep.subr.mxu0 0.0
    %1540 = vmatpush1.msra.mxu0 0.0
    %1541 = vmatprep.subr.mxu0 0.0
    %1542 = vmatpush1.msra.mxu0 0.0
    %1543 = vmatprep.subr.mxu0 0.0
    %1544 = vmatpush1.msra.mxu0 0.0
    %1545 = vmatprep.subr.mxu0 0.0
    %1546 = vmatpush1.msra.mxu0 0.0
    %1547 = vmatprep.subr.mxu0 0.0
    %1548 = vmatpush1.msra.mxu0 0.0
    %1549 = vmatprep.subr.mxu0 0.0
    %1550 = vmatpush1.msra.mxu0 0.0
    %1551 = vmatprep.subr.mxu0 0.0
    %1552 = vmatpush1.msra.mxu0 0.0
    %1553 = vmatprep.subr.mxu0 0.0
    %1554 = vmatpush1.msra.mxu0 0.0
    %1555 = vmatprep.subr.mxu0 0.0
    %1556 = vmatpush1.msra.mxu0 0.0
    %1557 = vmatprep.subr.mxu0 0.0
    %1558 = vmatpush1.msra.mxu0 0.0
    %1559 = vmatprep.subr.mxu0 0.0
    %1560 = vmatpush1.msra.mxu0 0.0
    %1561 = vmatprep.subr.mxu0 0.0
    %1562 = vmatpush1.msra.mxu0 0.0
    %1563 = vmatprep.subr.mxu0 0.0
    %1564 = vmatpush1.msra.mxu0 0.0
    %1565 = vmatprep.subr.mxu0 0.0
    %1566 = vmatpush1.msra.mxu0 0.0
    %1567 = vmatprep.mubr.f32.mxu0 0.0
    %1568 = vmatmul.mubr.f32.gmra.mrb[0].mxu0 %v1361
    %v1569 = vpop.f32.mrb[0].mxu0
    %v1570 = vadd.f32 %v432, %v1569
    %v1571 = vpop.f32.mrb[0].mxu0
    %1572 = vdwg.mxu0
    %v1574 = vrot.slane %v1430, 5
    %v1576 = vadd.f32 %v593, %v1574
    %v1577 = vxor.u32 %v1576, 2147483648
    %v1578 = vmul.f32 %v1577, 1.442695
    %v1579 = vpow.pop %v1578
    %v1580 = vadd.f32 %v1579, 1.0
    %v1581 = vrcp.pop %v1580
    %v1582 = vmul.f32 1.0, %v1581
    %v1584 = vrot.slane %v1500, 5
    %1585 = vrot.lane.b32.xlu0 %v1584, 32
    %v1586 = vpop.permute.xlu0 %1585
    %v1588 = vadd.f32 %v593, %v1586
    %v1589 = vxor.u32 %v1588, 2147483648
    %v1590 = vmul.f32 %v1589, 1.442695
    %v1591 = vpow.pop %v1590
    %v1592 = vadd.f32 %v1591, 1.0
    %v1593 = vrcp.pop %v1592
    %v1594 = vmul.f32 1.0, %v1593
    %v1596 = vrot.slane %v1570, 5
    %v1598 = vmul.f32 %v1582, %v1596
    %1600 = vrot.lane.b32.xlu0 %v1598, 64
    %v1601 = vpop.permute.xlu0 %1600
    %v1603 = vadd.f32 %v593, %v1601
    %v1604 = vtanh.pop %v1603
    %v1605 = vsub.f32 1.0, %v1594
    %1607 = vrot.lane.b32.xlu0 %v1604, 96
    %v1608 = vpop.permute.xlu0 %1607
    %v1610 = vmul.f32 %v1605, %v1608
    %v1611 = vrot.slane %v1356, 7
    %v1613 = vmul.f32 %v1594, %v1611
    %v1614 = vadd.f32 %v1610, %v1613
    %v1616 = vrot.slane %v1614, 3
    %1617 = vrot.lane.b32.xlu0 %v1616, 96
    %v1618 = vpop.permute.xlu0 %1617
    %v1619 = vsel %vm522, %v1618, 0
    %1621 = vmatprep.subr.mxu0 0.0
    %1622 = vmatpush1.msra.mxu0 %v418
    %1623 = vmatprep.subr.mxu0 0.0
    %1624 = vmatpush1.msra.mxu0 %v419
    %1625 = vmatprep.subr.mxu0 0.0
    %1626 = vmatpush1.msra.mxu0 %v420
    %1627 = vmatprep.subr.mxu0 0.0
    %1628 = vmatpush1.msra.mxu0 %v421
    %1629 = vmatprep.subr.mxu0 0.0
    %1630 = vmatpush1.msra.mxu0 0.0
    %1631 = vmatprep.subr.mxu0 0.0
    %1632 = vmatpush1.msra.mxu0 0.0
    %1633 = vmatprep.subr.mxu0 0.0
    %1634 = vmatpush1.msra.mxu0 0.0
    %1635 = vmatprep.subr.mxu0 0.0
    %1636 = vmatpush1.msra.mxu0 0.0
    %1637 = vmatprep.subr.mxu0 0.0
    %1638 = vmatpush1.msra.mxu0 0.0
    %1639 = vmatprep.subr.mxu0 0.0
    %1640 = vmatpush1.msra.mxu0 0.0
    %1641 = vmatprep.subr.mxu0 0.0
    %1642 = vmatpush1.msra.mxu0 0.0
    %1643 = vmatprep.subr.mxu0 0.0
    %1644 = vmatpush1.msra.mxu0 0.0
    %1645 = vmatprep.subr.mxu0 0.0
    %1646 = vmatpush1.msra.mxu0 0.0
    %1647 = vmatprep.subr.mxu0 0.0
    %1648 = vmatpush1.msra.mxu0 0.0
    %1649 = vmatprep.subr.mxu0 0.0
    %1650 = vmatpush1.msra.mxu0 0.0
    %1651 = vmatprep.subr.mxu0 0.0
    %1652 = vmatpush1.msra.mxu0 0.0
    %1653 = vmatprep.subr.mxu0 0.0
    %1654 = vmatpush1.msra.mxu0 0.0
    %1655 = vmatprep.subr.mxu0 0.0
    %1656 = vmatpush1.msra.mxu0 0.0
    %1657 = vmatprep.subr.mxu0 0.0
    %1658 = vmatpush1.msra.mxu0 0.0
    %1659 = vmatprep.subr.mxu0 0.0
    %1660 = vmatpush1.msra.mxu0 0.0
    %1661 = vmatprep.subr.mxu0 0.0
    %1662 = vmatpush1.msra.mxu0 0.0
    %1663 = vmatprep.subr.mxu0 0.0
    %1664 = vmatpush1.msra.mxu0 0.0
    %1665 = vmatprep.subr.mxu0 0.0
    %1666 = vmatpush1.msra.mxu0 0.0
    %1667 = vmatprep.subr.mxu0 0.0
    %1668 = vmatpush1.msra.mxu0 0.0
    %1669 = vmatprep.subr.mxu0 0.0
    %1670 = vmatpush1.msra.mxu0 0.0
    %1671 = vmatprep.subr.mxu0 0.0
    %1672 = vmatpush1.msra.mxu0 0.0
    %1673 = vmatprep.subr.mxu0 0.0
    %1674 = vmatpush1.msra.mxu0 0.0
    %1675 = vmatprep.subr.mxu0 0.0
    %1676 = vmatpush1.msra.mxu0 0.0
    %1677 = vmatprep.subr.mxu0 0.0
    %1678 = vmatpush1.msra.mxu0 0.0
    %1679 = vmatprep.subr.mxu0 0.0
    %1680 = vmatpush1.msra.mxu0 0.0
    %1681 = vmatprep.subr.mxu0 0.0
    %1682 = vmatpush1.msra.mxu0 0.0
    %1683 = vmatprep.subr.mxu0 0.0
    %1684 = vmatpush1.msra.mxu0 0.0
    %1685 = vmatprep.mubr.f32.mxu0 0.0
    %1686 = vmatmul.mubr.f32.gmra.mrb[0].mxu0 %v1619
    %v1687 = vpop.f32.mrb[0].mxu0
    %v1688 = vadd.f32 %v430, %v1687
    %v1689 = vpop.f32.mrb[0].mxu0
    %1690 = vdwg.mxu0
    %1691 = vmatprep.subr.mxu0 0.0
    %1692 = vmatpush1.msra.mxu0 %v422
    %1693 = vmatprep.subr.mxu0 0.0
    %1694 = vmatpush1.msra.mxu0 %v423
    %1695 = vmatprep.subr.mxu0 0.0
    %1696 = vmatpush1.msra.mxu0 %v424
    %1697 = vmatprep.subr.mxu0 0.0
    %1698 = vmatpush1.msra.mxu0 %v425
    %1699 = vmatprep.subr.mxu0 0.0
    %1700 = vmatpush1.msra.mxu0 0.0
    %1701 = vmatprep.subr.mxu0 0.0
    %1702 = vmatpush1.msra.mxu0 0.0
    %1703 = vmatprep.subr.mxu0 0.0
    %1704 = vmatpush1.msra.mxu0 0.0
    %1705 = vmatprep.subr.mxu0 0.0
    %1706 = vmatpush1.msra.mxu0 0.0
    %1707 = vmatprep.subr.mxu0 0.0
    %1708 = vmatpush1.msra.mxu0 0.0
    %1709 = vmatprep.subr.mxu0 0.0
    %1710 = vmatpush1.msra.mxu0 0.0
    %1711 = vmatprep.subr.mxu0 0.0
    %1712 = vmatpush1.msra.mxu0 0.0
    %1713 = vmatprep.subr.mxu0 0.0
    %1714 = vmatpush1.msra.mxu0 0.0
    %1715 = vmatprep.subr.mxu0 0.0
    %1716 = vmatpush1.msra.mxu0 0.0
    %1717 = vmatprep.subr.mxu0 0.0
    %1718 = vmatpush1.msra.mxu0 0.0
    %1719 = vmatprep.subr.mxu0 0.0
    %1720 = vmatpush1.msra.mxu0 0.0
    %1721 = vmatprep.subr.mxu0 0.0
    %1722 = vmatpush1.msra.mxu0 0.0
    %1723 = vmatprep.subr.mxu0 0.0
    %1724 = vmatpush1.msra.mxu0 0.0
    %1725 = vmatprep.subr.mxu0 0.0
    %1726 = vmatpush1.msra.mxu0 0.0
    %1727 = vmatprep.subr.mxu0 0.0
    %1728 = vmatpush1.msra.mxu0 0.0
    %1729 = vmatprep.subr.mxu0 0.0
    %1730 = vmatpush1.msra.mxu0 0.0
    %1731 = vmatprep.subr.mxu0 0.0
    %1732 = vmatpush1.msra.mxu0 0.0
    %1733 = vmatprep.subr.mxu0 0.0
    %1734 = vmatpush1.msra.mxu0 0.0
    %1735 = vmatprep.subr.mxu0 0.0
    %1736 = vmatpush1.msra.mxu0 0.0
    %1737 = vmatprep.subr.mxu0 0.0
    %1738 = vmatpush1.msra.mxu0 0.0
    %1739 = vmatprep.subr.mxu0 0.0
    %1740 = vmatpush1.msra.mxu0 0.0
    %1741 = vmatprep.subr.mxu0 0.0
    %1742 = vmatpush1.msra.mxu0 0.0
    %1743 = vmatprep.subr.mxu0 0.0
    %1744 = vmatpush1.msra.mxu0 0.0
    %1745 = vmatprep.subr.mxu0 0.0
    %1746 = vmatpush1.msra.mxu0 0.0
    %1747 = vmatprep.subr.mxu0 0.0
    %1748 = vmatpush1.msra.mxu0 0.0
    %1749 = vmatprep.subr.mxu0 0.0
    %1750 = vmatpush1.msra.mxu0 0.0
    %1751 = vmatprep.subr.mxu0 0.0
    %1752 = vmatpush1.msra.mxu0 0.0
    %1753 = vmatprep.subr.mxu0 0.0
    %1754 = vmatpush1.msra.mxu0 0.0
    %1755 = vmatprep.mubr.f32.mxu0 0.0
    %1756 = vmatmul.mubr.f32.gmra.mrb[0].mxu0 %v1619
    %v1757 = vpop.f32.mrb[0].mxu0
    %v1758 = vadd.f32 %v431, %v1757
    %v1759 = vpop.f32.mrb[0].mxu0
    %1760 = vdwg.mxu0
    %1761 = vmatprep.subr.mxu0 0.0
    %1762 = vmatpush1.msra.mxu0 %v426
    %1763 = vmatprep.subr.mxu0 0.0
    %1764 = vmatpush1.msra.mxu0 %v427
    %1765 = vmatprep.subr.mxu0 0.0
    %1766 = vmatpush1.msra.mxu0 %v428
    %1767 = vmatprep.subr.mxu0 0.0
    %1768 = vmatpush1.msra.mxu0 %v429
    %1769 = vmatprep.subr.mxu0 0.0
    %1770 = vmatpush1.msra.mxu0 0.0
    %1771 = vmatprep.subr.mxu0 0.0
    %1772 = vmatpush1.msra.mxu0 0.0
    %1773 = vmatprep.subr.mxu0 0.0
    %1774 = vmatpush1.msra.mxu0 0.0
    %1775 = vmatprep.subr.mxu0 0.0
    %1776 = vmatpush1.msra.mxu0 0.0
    %1777 = vmatprep.subr.mxu0 0.0
    %1778 = vmatpush1.msra.mxu0 0.0
    %1779 = vmatprep.subr.mxu0 0.0
    %1780 = vmatpush1.msra.mxu0 0.0
    %1781 = vmatprep.subr.mxu0 0.0
    %1782 = vmatpush1.msra.mxu0 0.0
    %1783 = vmatprep.subr.mxu0 0.0
    %1784 = vmatpush1.msra.mxu0 0.0
    %1785 = vmatprep.subr.mxu0 0.0
    %1786 = vmatpush1.msra.mxu0 0.0
    %1787 = vmatprep.subr.mxu0 0.0
    %1788 = vmatpush1.msra.mxu0 0.0
    %1789 = vmatprep.subr.mxu0 0.0
    %1790 = vmatpush1.msra.mxu0 0.0
    %1791 = vmatprep.subr.mxu0 0.0
    %1792 = vmatpush1.msra.mxu0 0.0
    %1793 = vmatprep.subr.mxu0 0.0
    %1794 = vmatpush1.msra.mxu0 0.0
    %1795 = vmatprep.subr.mxu0 0.0
    %1796 = vmatpush1.msra.mxu0 0.0
    %1797 = vmatprep.subr.mxu0 0.0
    %1798 = vmatpush1.msra.mxu0 0.0
    %1799 = vmatprep.subr.mxu0 0.0
    %1800 = vmatpush1.msra.mxu0 0.0
    %1801 = vmatprep.subr.mxu0 0.0
    %1802 = vmatpush1.msra.mxu0 0.0
    %1803 = vmatprep.subr.mxu0 0.0
    %1804 = vmatpush1.msra.mxu0 0.0
    %1805 = vmatprep.subr.mxu0 0.0
    %1806 = vmatpush1.msra.mxu0 0.0
    %1807 = vmatprep.subr.mxu0 0.0
    %1808 = vmatpush1.msra.mxu0 0.0
    %1809 = vmatprep.subr.mxu0 0.0
    %1810 = vmatpush1.msra.mxu0 0.0
    %1811 = vmatprep.subr.mxu0 0.0
    %1812 = vmatpush1.msra.mxu0 0.0
    %1813 = vmatprep.subr.mxu0 0.0
    %1814 = vmatpush1.msra.mxu0 0.0
    %1815 = vmatprep.subr.mxu0 0.0
    %1816 = vmatpush1.msra.mxu0 0.0
    %1817 = vmatprep.subr.mxu0 0.0
    %1818 = vmatpush1.msra.mxu0 0.0
    %1819 = vmatprep.subr.mxu0 0.0
    %1820 = vmatpush1.msra.mxu0 0.0
    %1821 = vmatprep.subr.mxu0 0.0
    %1822 = vmatpush1.msra.mxu0 0.0
    %1823 = vmatprep.subr.mxu0 0.0
    %1824 = vmatpush1.msra.mxu0 0.0
    %1825 = vmatprep.mubr.f32.mxu0 0.0
    %1826 = vmatmul.mubr.f32.gmra.mrb[0].mxu0 %v1619
    %v1827 = vpop.f32.mrb[0].mxu0
    %v1828 = vadd.f32 %v432, %v1827
    %v1829 = vpop.f32.mrb[0].mxu0
    %1830 = vdwg.mxu0
    %v1832 = vrot.slane %v1688, 4
    %v1834 = vadd.f32 %v593, %v1832
    %v1835 = vxor.u32 %v1834, 2147483648
    %v1836 = vmul.f32 %v1835, 1.442695
    %v1837 = vpow.pop %v1836
    %v1838 = vadd.f32 %v1837, 1.0
    %v1839 = vrcp.pop %v1838
    %v1840 = vmul.f32 1.0, %v1839
    %v1842 = vrot.slane %v1758, 4
    %1843 = vrot.lane.b32.xlu0 %v1842, 32
    %v1844 = vpop.permute.xlu0 %1843
    %v1846 = vadd.f32 %v593, %v1844
    %v1847 = vxor.u32 %v1846, 2147483648
    %v1848 = vmul.f32 %v1847, 1.442695
    %v1849 = vpow.pop %v1848
    %v1850 = vadd.f32 %v1849, 1.0
    %v1851 = vrcp.pop %v1850
    %v1852 = vmul.f32 1.0, %v1851
    %v1854 = vrot.slane %v1828, 4
    %v1856 = vmul.f32 %v1840, %v1854
    %1858 = vrot.lane.b32.xlu0 %v1856, 64
    %v1859 = vpop.permute.xlu0 %1858
    %v1861 = vadd.f32 %v593, %v1859
    %v1862 = vtanh.pop %v1861
    %v1863 = vsub.f32 1.0, %v1852
    %1865 = vrot.lane.b32.xlu0 %v1862, 96
    %v1866 = vpop.permute.xlu0 %1865
    %v1868 = vmul.f32 %v1863, %v1866
    %v1869 = vrot.slane %v1614, 7
    %v1871 = vmul.f32 %v1852, %v1869
    %v1872 = vadd.f32 %v1868, %v1871
    %v1873 = vsel %vm503, %v841, %v1098
    %v1874 = vsel %vm505, %v1873, %v1356
    %v1875 = vsel %vm507, %v1874, %v1614
    %v1876 = vsel %vm509, %v1875, %v1872
    %s1877 = sld [smem:[#allocation7]]
    %s1878 = scalar_lea.vmem [#allocation17], %s1877
    %v1879 = vld [vmem:[%s1878] sm:$0x1]
    %s1880 = sld [smem:[#allocation7 + $0x1]]
    %s1881 = scalar_lea.vmem [#allocation17], %s1880
    %v1882 = vld [vmem:[%s1881] sm:$0x1]
    %s1883 = sld [smem:[#allocation7 + $0x2]]
    %s1884 = scalar_lea.vmem [#allocation17], %s1883
    %v1885 = vld [vmem:[%s1884] sm:$0x1]
    %s1886 = sld [smem:[#allocation7 + $0x3]]
    %s1887 = scalar_lea.vmem [#allocation17], %s1886
    %v1888 = vld [vmem:[%s1887] sm:$0x1]
    %s1889 = sld [smem:[#allocation7 + $0x4]]
    %s1890 = scalar_lea.vmem [#allocation17], %s1889
    %v1891 = vld [vmem:[%s1890] sm:$0x1]
    %v1893 = vrot.slane %v1882, 7
    %v1896 = vrot.slane %v1885, 6
    %v1899 = vrot.slane %v1888, 5
    %v1902 = vrot.slane %v1891, 4
    %v1904 = vsel %vm503, %v1879, %v1893
    %v1905 = vsel %vm505, %v1904, %v1896
    %v1906 = vsel %vm507, %v1905, %v1899
    %v1907 = vsel %vm509, %v1906, %v1902
    %v1908 = vld [vmem:[%s25] sm:$0xff]
    %v1909 = vld [vmem:[%s25 + $0x8] sm:$0xff]
    %v1910 = vld [vmem:[%s25 + $0x10] sm:$0xff]
    %v1911 = vld [vmem:[%s25 + $0x18] sm:$0xff]
    %v1912 = vld [vmem:[#allocation18] sm:$0x1]
    %v1914 = vlaneseq
    %v1915 = vshrl.u32 %v1914, 7
    %v1916 = vsub.s32 0, %v1915
    %v1917 = vrot.slane %v1912, %v1916
    %v1920 = vsel %vm522, %v1907, 0
    %1922 = vmatprep.subr.mxu0 0.0
    %1923 = vmatpush1.msra.mxu0 %v1908
    %1924 = vmatprep.subr.mxu0 0.0
    %1925 = vmatpush1.msra.mxu0 %v1909
    %1926 = vmatprep.subr.mxu0 0.0
    %1927 = vmatpush1.msra.mxu0 %v1910
    %1928 = vmatprep.subr.mxu0 0.0
    %1929 = vmatpush1.msra.mxu0 %v1911
    %1930 = vmatprep.subr.mxu0 0.0
    %1931 = vmatpush1.msra.mxu0 0.0
    %1932 = vmatprep.subr.mxu0 0.0
    %1933 = vmatpush1.msra.mxu0 0.0
    %1934 = vmatprep.subr.mxu0 0.0
    %1935 = vmatpush1.msra.mxu0 0.0
    %1936 = vmatprep.subr.mxu0 0.0
    %1937 = vmatpush1.msra.mxu0 0.0
    %1938 = vmatprep.subr.mxu0 0.0
    %1939 = vmatpush1.msra.mxu0 0.0
    %1940 = vmatprep.subr.mxu0 0.0
    %1941 = vmatpush1.msra.mxu0 0.0
    %1942 = vmatprep.subr.mxu0 0.0
    %1943 = vmatpush1.msra.mxu0 0.0
    %1944 = vmatprep.subr.mxu0 0.0
    %1945 = vmatpush1.msra.mxu0 0.0
    %1946 = vmatprep.subr.mxu0 0.0
    %1947 = vmatpush1.msra.mxu0 0.0
    %1948 = vmatprep.subr.mxu0 0.0
    %1949 = vmatpush1.msra.mxu0 0.0
    %1950 = vmatprep.subr.mxu0 0.0
    %1951 = vmatpush1.msra.mxu0 0.0
    %1952 = vmatprep.subr.mxu0 0.0
    %1953 = vmatpush1.msra.mxu0 0.0
    %1954 = vmatprep.subr.mxu0 0.0
    %1955 = vmatpush1.msra.mxu0 0.0
    %1956 = vmatprep.subr.mxu0 0.0
    %1957 = vmatpush1.msra.mxu0 0.0
    %1958 = vmatprep.subr.mxu0 0.0
    %1959 = vmatpush1.msra.mxu0 0.0
    %1960 = vmatprep.subr.mxu0 0.0
    %1961 = vmatpush1.msra.mxu0 0.0
    %1962 = vmatprep.subr.mxu0 0.0
    %1963 = vmatpush1.msra.mxu0 0.0
    %1964 = vmatprep.subr.mxu0 0.0
    %1965 = vmatpush1.msra.mxu0 0.0
    %1966 = vmatprep.subr.mxu0 0.0
    %1967 = vmatpush1.msra.mxu0 0.0
    %1968 = vmatprep.subr.mxu0 0.0
    %1969 = vmatpush1.msra.mxu0 0.0
    %1970 = vmatprep.subr.mxu0 0.0
    %1971 = vmatpush1.msra.mxu0 0.0
    %1972 = vmatprep.subr.mxu0 0.0
    %1973 = vmatpush1.msra.mxu0 0.0
    %1974 = vmatprep.subr.mxu0 0.0
    %1975 = vmatpush1.msra.mxu0 0.0
    %1976 = vmatprep.subr.mxu0 0.0
    %1977 = vmatpush1.msra.mxu0 0.0
    %1978 = vmatprep.subr.mxu0 0.0
    %1979 = vmatpush1.msra.mxu0 0.0
    %1980 = vmatprep.subr.mxu0 0.0
    %1981 = vmatpush1.msra.mxu0 0.0
    %1982 = vmatprep.subr.mxu0 0.0
    %1983 = vmatpush1.msra.mxu0 0.0
    %1984 = vmatprep.subr.mxu0 0.0
    %1985 = vmatpush1.msra.mxu0 0.0
    %1986 = vmatprep.mubr.f32.mxu0 0.0
    %1987 = vmatmul.mubr.f32.gmra.mrb[0].mxu0 %v1920
    %v1988 = vpop.f32.mrb[0].mxu0
    %v1989 = vadd.f32 %v1917, %v1988
    %v1990 = vpop.f32.mrb[0].mxu0
    %1991 = vdwg.mxu0
    %v1992 = vld [vmem:[%s31] sm:$0xff]
    %v1993 = vld [vmem:[%s31 + $0x8] sm:$0xff]
    %v1994 = vld [vmem:[%s31 + $0x10] sm:$0xff]
    %v1995 = vld [vmem:[%s31 + $0x18] sm:$0xff]
    %v1996 = vld [vmem:[#allocation21] sm:$0x1]
    %v1998 = vlaneseq
    %v1999 = vshrl.u32 %v1998, 7
    %v2000 = vsub.s32 0, %v1999
    %v2001 = vrot.slane %v1996, %v2000
    %2003 = vmatprep.subr.mxu0 0.0
    %2004 = vmatpush1.msra.mxu0 %v1992
    %2005 = vmatprep.subr.mxu0 0.0
    %2006 = vmatpush1.msra.mxu0 %v1993
    %2007 = vmatprep.subr.mxu0 0.0
    %2008 = vmatpush1.msra.mxu0 %v1994
    %2009 = vmatprep.subr.mxu0 0.0
    %2010 = vmatpush1.msra.mxu0 %v1995
    %2011 = vmatprep.subr.mxu0 0.0
    %2012 = vmatpush1.msra.mxu0 0.0
    %2013 = vmatprep.subr.mxu0 0.0
    %2014 = vmatpush1.msra.mxu0 0.0
    %2015 = vmatprep.subr.mxu0 0.0
    %2016 = vmatpush1.msra.mxu0 0.0
    %2017 = vmatprep.subr.mxu0 0.0
    %2018 = vmatpush1.msra.mxu0 0.0
    %2019 = vmatprep.subr.mxu0 0.0
    %2020 = vmatpush1.msra.mxu0 0.0
    %2021 = vmatprep.subr.mxu0 0.0
    %2022 = vmatpush1.msra.mxu0 0.0
    %2023 = vmatprep.subr.mxu0 0.0
    %2024 = vmatpush1.msra.mxu0 0.0
    %2025 = vmatprep.subr.mxu0 0.0
    %2026 = vmatpush1.msra.mxu0 0.0
    %2027 = vmatprep.subr.mxu0 0.0
    %2028 = vmatpush1.msra.mxu0 0.0
    %2029 = vmatprep.subr.mxu0 0.0
    %2030 = vmatpush1.msra.mxu0 0.0
    %2031 = vmatprep.subr.mxu0 0.0
    %2032 = vmatpush1.msra.mxu0 0.0
    %2033 = vmatprep.subr.mxu0 0.0
    %2034 = vmatpush1.msra.mxu0 0.0
    %2035 = vmatprep.subr.mxu0 0.0
    %2036 = vmatpush1.msra.mxu0 0.0
    %2037 = vmatprep.subr.mxu0 0.0
    %2038 = vmatpush1.msra.mxu0 0.0
    %2039 = vmatprep.subr.mxu0 0.0
    %2040 = vmatpush1.msra.mxu0 0.0
    %2041 = vmatprep.subr.mxu0 0.0
    %2042 = vmatpush1.msra.mxu0 0.0
    %2043 = vmatprep.subr.mxu0 0.0
    %2044 = vmatpush1.msra.mxu0 0.0
    %2045 = vmatprep.subr.mxu0 0.0
    %2046 = vmatpush1.msra.mxu0 0.0
    %2047 = vmatprep.subr.mxu0 0.0
    %2048 = vmatpush1.msra.mxu0 0.0
    %2049 = vmatprep.subr.mxu0 0.0
    %2050 = vmatpush1.msra.mxu0 0.0
    %2051 = vmatprep.subr.mxu0 0.0
    %2052 = vmatpush1.msra.mxu0 0.0
    %2053 = vmatprep.subr.mxu0 0.0
    %2054 = vmatpush1.msra.mxu0 0.0
    %2055 = vmatprep.subr.mxu0 0.0
    %2056 = vmatpush1.msra.mxu0 0.0
    %2057 = vmatprep.subr.mxu0 0.0
    %2058 = vmatpush1.msra.mxu0 0.0
    %2059 = vmatprep.subr.mxu0 0.0
    %2060 = vmatpush1.msra.mxu0 0.0
    %2061 = vmatprep.subr.mxu0 0.0
    %2062 = vmatpush1.msra.mxu0 0.0
    %2063 = vmatprep.subr.mxu0 0.0
    %2064 = vmatpush1.msra.mxu0 0.0
    %2065 = vmatprep.subr.mxu0 0.0
    %2066 = vmatpush1.msra.mxu0 0.0
    %2067 = vmatprep.mubr.f32.mxu0 0.0
    %2068 = vmatmul.mubr.f32.gmra.mrb[0].mxu0 %v1920
    %v2069 = vpop.f32.mrb[0].mxu0
    %v2070 = vadd.f32 %v2001, %v2069
    %v2071 = vpop.f32.mrb[0].mxu0
    %2072 = vdwg.mxu0
    %v2074 = vrot.slane %v1872, 4
    %2075 = vrot.lane.b32.xlu0 %v2074, 96
    %v2076 = vpop.permute.xlu0 %2075
    %v2077 = vsel %vm522, %v2076, 0
    %2079 = vmatprep.subr.mxu0 0.0
    %2080 = vmatpush1.msra.mxu0 %v433
    %2081 = vmatprep.subr.mxu0 0.0
    %2082 = vmatpush1.msra.mxu0 %v434
    %2083 = vmatprep.subr.mxu0 0.0
    %2084 = vmatpush1.msra.mxu0 %v435
    %2085 = vmatprep.subr.mxu0 0.0
    %2086 = vmatpush1.msra.mxu0 %v436
    %2087 = vmatprep.subr.mxu0 0.0
    %2088 = vmatpush1.msra.mxu0 0.0
    %2089 = vmatprep.subr.mxu0 0.0
    %2090 = vmatpush1.msra.mxu0 0.0
    %2091 = vmatprep.subr.mxu0 0.0
    %2092 = vmatpush1.msra.mxu0 0.0
    %2093 = vmatprep.subr.mxu0 0.0
    %2094 = vmatpush1.msra.mxu0 0.0
    %2095 = vmatprep.subr.mxu0 0.0
    %2096 = vmatpush1.msra.mxu0 0.0
    %2097 = vmatprep.subr.mxu0 0.0
    %2098 = vmatpush1.msra.mxu0 0.0
    %2099 = vmatprep.subr.mxu0 0.0
    %2100 = vmatpush1.msra.mxu0 0.0
    %2101 = vmatprep.subr.mxu0 0.0
    %2102 = vmatpush1.msra.mxu0 0.0
    %2103 = vmatprep.subr.mxu0 0.0
    %2104 = vmatpush1.msra.mxu0 0.0
    %2105 = vmatprep.subr.mxu0 0.0
    %2106 = vmatpush1.msra.mxu0 0.0
    %2107 = vmatprep.subr.mxu0 0.0
    %2108 = vmatpush1.msra.mxu0 0.0
    %2109 = vmatprep.subr.mxu0 0.0
    %2110 = vmatpush1.msra.mxu0 0.0
    %2111 = vmatprep.subr.mxu0 0.0
    %2112 = vmatpush1.msra.mxu0 0.0
    %2113 = vmatprep.subr.mxu0 0.0
    %2114 = vmatpush1.msra.mxu0 0.0
    %2115 = vmatprep.subr.mxu0 0.0
    %2116 = vmatpush1.msra.mxu0 0.0
    %2117 = vmatprep.subr.mxu0 0.0
    %2118 = vmatpush1.msra.mxu0 0.0
    %2119 = vmatprep.subr.mxu0 0.0
    %2120 = vmatpush1.msra.mxu0 0.0
    %2121 = vmatprep.subr.mxu0 0.0
    %2122 = vmatpush1.msra.mxu0 0.0
    %2123 = vmatprep.subr.mxu0 0.0
    %2124 = vmatpush1.msra.mxu0 0.0
    %2125 = vmatprep.subr.mxu0 0.0
    %2126 = vmatpush1.msra.mxu0 0.0
    %2127 = vmatprep.subr.mxu0 0.0
    %2128 = vmatpush1.msra.mxu0 0.0
    %2129 = vmatprep.subr.mxu0 0.0
    %2130 = vmatpush1.msra.mxu0 0.0
    %2131 = vmatprep.subr.mxu0 0.0
    %2132 = vmatpush1.msra.mxu0 0.0
    %2133 = vmatprep.subr.mxu0 0.0
    %2134 = vmatpush1.msra.mxu0 0.0
    %2135 = vmatprep.subr.mxu0 0.0
    %2136 = vmatpush1.msra.mxu0 0.0
    %2137 = vmatprep.subr.mxu0 0.0
    %2138 = vmatpush1.msra.mxu0 0.0
    %2139 = vmatprep.subr.mxu0 0.0
    %2140 = vmatpush1.msra.mxu0 0.0
    %2141 = vmatprep.subr.mxu0 0.0
    %2142 = vmatpush1.msra.mxu0 0.0
    %2143 = vmatprep.mubr.f32.mxu0 0.0
    %2144 = vmatmul.mubr.f32.gmra.mrb[0].mxu0 %v2077
    %v2145 = vpop.f32.mrb[0].mxu0
    %v2146 = vadd.f32 0.0, %v2145
    %v2147 = vpop.f32.mrb[0].mxu0
    %2148 = vdwg.mxu0
    %v2149 = vadd.f32 %v1989, %v2146
    %vm2150 = vcmask 32768
    %v2151 = vsel %vm2150, %v2149, -inf
    %2152 = vmax.xlane.f32.xlu0 %v2151
    %v2153 = vpop.xlane.xlu0 %2152
    %v2154 = vsub.f32 %v2149, %v2153
    %v2155 = vmul.f32 %v2154, 1.442695
    %v2156 = vpow.pop %v2155
    %v2157 = vsel %vm2150, %v2156, 0.0
    %2158 = vadd.xlane.f32.xlu0 %v2157
    %v2159 = vpop.xlane.xlu0 %2158
    %v2160 = vrcp.pop %v2159
    %v2161 = vmul.f32 %v2156, %v2160
    %2163 = vrot.lane.b32.xlu0 %v1876, 96
    %v2164 = vpop.permute.xlu0 %2163
    %vm2165 = vcmask 39936
    %v2167 = vsel %vm2165, %v2161, 0
    %vm2169 = vcmask 1044480
    %v2170 = vsel %vm2169, %v2164, 0
    %2172 = vmatprep.subr.mxu0 0.0
    %2173 = vmatpush1.msra.mxu0 %v2170
    %2174 = vmatprep.subr.mxu0 0.0
    %2175 = vmatpush1.msra.mxu0 0.0
    %2176 = vmatprep.subr.mxu0 0.0
    %2177 = vmatpush1.msra.mxu0 0.0
    %2178 = vmatprep.subr.mxu0 0.0
    %2179 = vmatpush1.msra.mxu0 0.0
    %2180 = vmatprep.subr.mxu0 0.0
    %2181 = vmatpush1.msra.mxu0 0.0
    %2182 = vmatprep.subr.mxu0 0.0
    %2183 = vmatpush1.msra.mxu0 0.0
    %2184 = vmatprep.subr.mxu0 0.0
    %2185 = vmatpush1.msra.mxu0 0.0
    %2186 = vmatprep.subr.mxu0 0.0
    %2187 = vmatpush1.msra.mxu0 0.0
    %2188 = vmatprep.subr.mxu0 0.0
    %2189 = vmatpush1.msra.mxu0 0.0
    %2190 = vmatprep.subr.mxu0 0.0
    %2191 = vmatpush1.msra.mxu0 0.0
    %2192 = vmatprep.subr.mxu0 0.0
    %2193 = vmatpush1.msra.mxu0 0.0
    %2194 = vmatprep.subr.mxu0 0.0
    %2195 = vmatpush1.msra.mxu0 0.0
    %2196 = vmatprep.subr.mxu0 0.0
    %2197 = vmatpush1.msra.mxu0 0.0
    %2198 = vmatprep.subr.mxu0 0.0
    %2199 = vmatpush1.msra.mxu0 0.0
    %2200 = vmatprep.subr.mxu0 0.0
    %2201 = vmatpush1.msra.mxu0 0.0
    %2202 = vmatprep.subr.mxu0 0.0
    %2203 = vmatpush1.msra.mxu0 0.0
    %2204 = vmatprep.subr.mxu0 0.0
    %2205 = vmatpush1.msra.mxu0 0.0
    %2206 = vmatprep.subr.mxu0 0.0
    %2207 = vmatpush1.msra.mxu0 0.0
    %2208 = vmatprep.subr.mxu0 0.0
    %2209 = vmatpush1.msra.mxu0 0.0
    %2210 = vmatprep.subr.mxu0 0.0
    %2211 = vmatpush1.msra.mxu0 0.0
    %2212 = vmatprep.subr.mxu0 0.0
    %2213 = vmatpush1.msra.mxu0 0.0
    %2214 = vmatprep.subr.mxu0 0.0
    %2215 = vmatpush1.msra.mxu0 0.0
    %2216 = vmatprep.subr.mxu0 0.0
    %2217 = vmatpush1.msra.mxu0 0.0
    %2218 = vmatprep.subr.mxu0 0.0
    %2219 = vmatpush1.msra.mxu0 0.0
    %2220 = vmatprep.subr.mxu0 0.0
    %2221 = vmatpush1.msra.mxu0 0.0
    %2222 = vmatprep.subr.mxu0 0.0
    %2223 = vmatpush1.msra.mxu0 0.0
    %2224 = vmatprep.subr.mxu0 0.0
    %2225 = vmatpush1.msra.mxu0 0.0
    %2226 = vmatprep.subr.mxu0 0.0
    %2227 = vmatpush1.msra.mxu0 0.0
    %2228 = vmatprep.subr.mxu0 0.0
    %2229 = vmatpush1.msra.mxu0 0.0
    %2230 = vmatprep.subr.mxu0 0.0
    %2231 = vmatpush1.msra.mxu0 0.0
    %2232 = vmatprep.subr.mxu0 0.0
    %2233 = vmatpush1.msra.mxu0 0.0
    %2234 = vmatprep.subr.mxu0 0.0
    %2235 = vmatpush1.msra.mxu0 0.0
    %2236 = vmatprep.mubr.f32.mxu0 0.0
    %2237 = vmatmul.mubr.f32.gmra.mrb[0].mxu0 %v2167
    %v2238 = vpop.f32.mrb[0].mxu0
    %v2239 = vadd.f32 0.0, %v2238
    %v2240 = vpop.f32.mrb[0].mxu0
    %2241 = vdwg.mxu0
    %v2243 = vsel %vm522, %v2239, 0
    %2245 = vmatprep.subr.mxu0 0.0
    %2246 = vmatpush1.msra.mxu0 %v437
    %2247 = vmatprep.subr.mxu0 0.0
    %2248 = vmatpush1.msra.mxu0 %v438
    %2249 = vmatprep.subr.mxu0 0.0
    %2250 = vmatpush1.msra.mxu0 %v439
    %2251 = vmatprep.subr.mxu0 0.0
    %2252 = vmatpush1.msra.mxu0 %v440
    %2253 = vmatprep.subr.mxu0 0.0
    %2254 = vmatpush1.msra.mxu0 0.0
    %2255 = vmatprep.subr.mxu0 0.0
    %2256 = vmatpush1.msra.mxu0 0.0
    %2257 = vmatprep.subr.mxu0 0.0
    %2258 = vmatpush1.msra.mxu0 0.0
    %2259 = vmatprep.subr.mxu0 0.0
    %2260 = vmatpush1.msra.mxu0 0.0
    %2261 = vmatprep.subr.mxu0 0.0
    %2262 = vmatpush1.msra.mxu0 0.0
    %2263 = vmatprep.subr.mxu0 0.0
    %2264 = vmatpush1.msra.mxu0 0.0
    %2265 = vmatprep.subr.mxu0 0.0
    %2266 = vmatpush1.msra.mxu0 0.0
    %2267 = vmatprep.subr.mxu0 0.0
    %2268 = vmatpush1.msra.mxu0 0.0
    %2269 = vmatprep.subr.mxu0 0.0
    %2270 = vmatpush1.msra.mxu0 0.0
    %2271 = vmatprep.subr.mxu0 0.0
    %2272 = vmatpush1.msra.mxu0 0.0
    %2273 = vmatprep.subr.mxu0 0.0
    %2274 = vmatpush1.msra.mxu0 0.0
    %2275 = vmatprep.subr.mxu0 0.0
    %2276 = vmatpush1.msra.mxu0 0.0
    %2277 = vmatprep.subr.mxu0 0.0
    %2278 = vmatpush1.msra.mxu0 0.0
    %2279 = vmatprep.subr.mxu0 0.0
    %2280 = vmatpush1.msra.mxu0 0.0
    %2281 = vmatprep.subr.mxu0 0.0
    %2282 = vmatpush1.msra.mxu0 0.0
    %2283 = vmatprep.subr.mxu0 0.0
    %2284 = vmatpush1.msra.mxu0 0.0
    %2285 = vmatprep.subr.mxu0 0.0
    %2286 = vmatpush1.msra.mxu0 0.0
    %2287 = vmatprep.subr.mxu0 0.0
    %2288 = vmatpush1.msra.mxu0 0.0
    %2289 = vmatprep.subr.mxu0 0.0
    %2290 = vmatpush1.msra.mxu0 0.0
    %2291 = vmatprep.subr.mxu0 0.0
    %2292 = vmatpush1.msra.mxu0 0.0
    %2293 = vmatprep.subr.mxu0 0.0
    %2294 = vmatpush1.msra.mxu0 0.0
    %2295 = vmatprep.subr.mxu0 0.0
    %2296 = vmatpush1.msra.mxu0 0.0
    %2297 = vmatprep.subr.mxu0 0.0
    %2298 = vmatpush1.msra.mxu0 0.0
    %2299 = vmatprep.subr.mxu0 0.0
    %2300 = vmatpush1.msra.mxu0 0.0
    %2301 = vmatprep.subr.mxu0 0.0
    %2302 = vmatpush1.msra.mxu0 0.0
    %2303 = vmatprep.subr.mxu0 0.0
    %2304 = vmatpush1.msra.mxu0 0.0
    %2305 = vmatprep.subr.mxu0 0.0
    %2306 = vmatpush1.msra.mxu0 0.0
    %2307 = vmatprep.subr.mxu0 0.0
    %2308 = vmatpush1.msra.mxu0 0.0
    %2309 = vmatprep.mubr.f32.mxu0 0.0
    %2310 = vmatmul.mubr.f32.gmra.mrb[0].mxu0 %v2243
    %v2311 = vpop.f32.mrb[0].mxu0
    %v2312 = vadd.f32 0.0, %v2311
    %v2313 = vpop.f32.mrb[0].mxu0
    %2314 = vdwg.mxu0
    %v2315 = vadd.f32 %v2070, %v2312
    %v2316 = vmax.f32 %v2315, 0.0
    %v2318 = vsel %vm522, %v2316, 0
    %2320 = vmatprep.subr.mxu0 0.0
    %2321 = vmatpush1.msra.mxu0 %v441
    %2322 = vmatprep.subr.mxu0 0.0
    %2323 = vmatpush1.msra.mxu0 %v442
    %2324 = vmatprep.subr.mxu0 0.0
    %2325 = vmatpush1.msra.mxu0 %v443
    %2326 = vmatprep.subr.mxu0 0.0
    %2327 = vmatpush1.msra.mxu0 %v444
    %2328 = vmatprep.subr.mxu0 0.0
    %2329 = vmatpush1.msra.mxu0 0.0
    %2330 = vmatprep.subr.mxu0 0.0
    %2331 = vmatpush1.msra.mxu0 0.0
    %2332 = vmatprep.subr.mxu0 0.0
    %2333 = vmatpush1.msra.mxu0 0.0
    %2334 = vmatprep.subr.mxu0 0.0
    %2335 = vmatpush1.msra.mxu0 0.0
    %2336 = vmatprep.subr.mxu0 0.0
    %2337 = vmatpush1.msra.mxu0 0.0
    %2338 = vmatprep.subr.mxu0 0.0
    %2339 = vmatpush1.msra.mxu0 0.0
    %2340 = vmatprep.subr.mxu0 0.0
    %2341 = vmatpush1.msra.mxu0 0.0
    %2342 = vmatprep.subr.mxu0 0.0
    %2343 = vmatpush1.msra.mxu0 0.0
    %2344 = vmatprep.subr.mxu0 0.0
    %2345 = vmatpush1.msra.mxu0 0.0
    %2346 = vmatprep.subr.mxu0 0.0
    %2347 = vmatpush1.msra.mxu0 0.0
    %2348 = vmatprep.subr.mxu0 0.0
    %2349 = vmatpush1.msra.mxu0 0.0
    %2350 = vmatprep.subr.mxu0 0.0
    %2351 = vmatpush1.msra.mxu0 0.0
    %2352 = vmatprep.subr.mxu0 0.0
    %2353 = vmatpush1.msra.mxu0 0.0
    %2354 = vmatprep.subr.mxu0 0.0
    %2355 = vmatpush1.msra.mxu0 0.0
    %2356 = vmatprep.subr.mxu0 0.0
    %2357 = vmatpush1.msra.mxu0 0.0
    %2358 = vmatprep.subr.mxu0 0.0
    %2359 = vmatpush1.msra.mxu0 0.0
    %2360 = vmatprep.subr.mxu0 0.0
    %2361 = vmatpush1.msra.mxu0 0.0
    %2362 = vmatprep.subr.mxu0 0.0
    %2363 = vmatpush1.msra.mxu0 0.0
    %2364 = vmatprep.subr.mxu0 0.0
    %2365 = vmatpush1.msra.mxu0 0.0
    %2366 = vmatprep.subr.mxu0 0.0
    %2367 = vmatpush1.msra.mxu0 0.0
    %2368 = vmatprep.subr.mxu0 0.0
    %2369 = vmatpush1.msra.mxu0 0.0
    %2370 = vmatprep.subr.mxu0 0.0
    %2371 = vmatpush1.msra.mxu0 0.0
    %2372 = vmatprep.subr.mxu0 0.0
    %2373 = vmatpush1.msra.mxu0 0.0
    %2374 = vmatprep.subr.mxu0 0.0
    %2375 = vmatpush1.msra.mxu0 0.0
    %2376 = vmatprep.subr.mxu0 0.0
    %2377 = vmatpush1.msra.mxu0 0.0
    %2378 = vmatprep.subr.mxu0 0.0
    %2379 = vmatpush1.msra.mxu0 0.0
    %2380 = vmatprep.subr.mxu0 0.0
    %2381 = vmatpush1.msra.mxu0 0.0
    %2382 = vmatprep.subr.mxu0 0.0
    %2383 = vmatpush1.msra.mxu0 0.0
    %2384 = vmatprep.mubr.f32.mxu0 0.0
    %2385 = vmatmul.mubr.f32.gmra.mrb[0].mxu0 %v2318
    %v2386 = vpop.f32.mrb[0].mxu0
    %v2387 = vadd.f32 %v453, %v2386
    %v2388 = vpop.f32.mrb[0].mxu0
    %2389 = vdwg.mxu0
    %2390 = vmatprep.subr.mxu0 0.0
    %2391 = vmatpush1.msra.mxu0 %v445
    %2392 = vmatprep.subr.mxu0 0.0
    %2393 = vmatpush1.msra.mxu0 %v446
    %2394 = vmatprep.subr.mxu0 0.0
    %2395 = vmatpush1.msra.mxu0 %v447
    %2396 = vmatprep.subr.mxu0 0.0
    %2397 = vmatpush1.msra.mxu0 %v448
    %2398 = vmatprep.subr.mxu0 0.0
    %2399 = vmatpush1.msra.mxu0 0.0
    %2400 = vmatprep.subr.mxu0 0.0
    %2401 = vmatpush1.msra.mxu0 0.0
    %2402 = vmatprep.subr.mxu0 0.0
    %2403 = vmatpush1.msra.mxu0 0.0
    %2404 = vmatprep.subr.mxu0 0.0
    %2405 = vmatpush1.msra.mxu0 0.0
    %2406 = vmatprep.subr.mxu0 0.0
    %2407 = vmatpush1.msra.mxu0 0.0
    %2408 = vmatprep.subr.mxu0 0.0
    %2409 = vmatpush1.msra.mxu0 0.0
    %2410 = vmatprep.subr.mxu0 0.0
    %2411 = vmatpush1.msra.mxu0 0.0
    %2412 = vmatprep.subr.mxu0 0.0
    %2413 = vmatpush1.msra.mxu0 0.0
    %2414 = vmatprep.subr.mxu0 0.0
    %2415 = vmatpush1.msra.mxu0 0.0
    %2416 = vmatprep.subr.mxu0 0.0
    %2417 = vmatpush1.msra.mxu0 0.0
    %2418 = vmatprep.subr.mxu0 0.0
    %2419 = vmatpush1.msra.mxu0 0.0
    %2420 = vmatprep.subr.mxu0 0.0
    %2421 = vmatpush1.msra.mxu0 0.0
    %2422 = vmatprep.subr.mxu0 0.0
    %2423 = vmatpush1.msra.mxu0 0.0
    %2424 = vmatprep.subr.mxu0 0.0
    %2425 = vmatpush1.msra.mxu0 0.0
    %2426 = vmatprep.subr.mxu0 0.0
    %2427 = vmatpush1.msra.mxu0 0.0
    %2428 = vmatprep.subr.mxu0 0.0
    %2429 = vmatpush1.msra.mxu0 0.0
    %2430 = vmatprep.subr.mxu0 0.0
    %2431 = vmatpush1.msra.mxu0 0.0
    %2432 = vmatprep.subr.mxu0 0.0
    %2433 = vmatpush1.msra.mxu0 0.0
    %2434 = vmatprep.subr.mxu0 0.0
    %2435 = vmatpush1.msra.mxu0 0.0
    %2436 = vmatprep.subr.mxu0 0.0
    %2437 = vmatpush1.msra.mxu0 0.0
    %2438 = vmatprep.subr.mxu0 0.0
    %2439 = vmatpush1.msra.mxu0 0.0
    %2440 = vmatprep.subr.mxu0 0.0
    %2441 = vmatpush1.msra.mxu0 0.0
    %2442 = vmatprep.subr.mxu0 0.0
    %2443 = vmatpush1.msra.mxu0 0.0
    %2444 = vmatprep.subr.mxu0 0.0
    %2445 = vmatpush1.msra.mxu0 0.0
    %2446 = vmatprep.subr.mxu0 0.0
    %2447 = vmatpush1.msra.mxu0 0.0
    %2448 = vmatprep.subr.mxu0 0.0
    %2449 = vmatpush1.msra.mxu0 0.0
    %2450 = vmatprep.subr.mxu0 0.0
    %2451 = vmatpush1.msra.mxu0 0.0
    %2452 = vmatprep.subr.mxu0 0.0
    %2453 = vmatpush1.msra.mxu0 0.0
    %2454 = vmatprep.mubr.f32.mxu0 0.0
    %2455 = vmatmul.mubr.f32.gmra.mrb[0].mxu0 %v2318
    %v2456 = vpop.f32.mrb[0].mxu0
    %v2457 = vadd.f32 %v454, %v2456
    %v2458 = vpop.f32.mrb[0].mxu0
    %2459 = vdwg.mxu0
    %2460 = vmatprep.subr.mxu0 0.0
    %2461 = vmatpush1.msra.mxu0 %v449
    %2462 = vmatprep.subr.mxu0 0.0
    %2463 = vmatpush1.msra.mxu0 %v450
    %2464 = vmatprep.subr.mxu0 0.0
    %2465 = vmatpush1.msra.mxu0 %v451
    %2466 = vmatprep.subr.mxu0 0.0
    %2467 = vmatpush1.msra.mxu0 %v452
    %2468 = vmatprep.subr.mxu0 0.0
    %2469 = vmatpush1.msra.mxu0 0.0
    %2470 = vmatprep.subr.mxu0 0.0
    %2471 = vmatpush1.msra.mxu0 0.0
    %2472 = vmatprep.subr.mxu0 0.0
    %2473 = vmatpush1.msra.mxu0 0.0
    %2474 = vmatprep.subr.mxu0 0.0
    %2475 = vmatpush1.msra.mxu0 0.0
    %2476 = vmatprep.subr.mxu0 0.0
    %2477 = vmatpush1.msra.mxu0 0.0
    %2478 = vmatprep.subr.mxu0 0.0
    %2479 = vmatpush1.msra.mxu0 0.0
    %2480 = vmatprep.subr.mxu0 0.0
    %2481 = vmatpush1.msra.mxu0 0.0
    %2482 = vmatprep.subr.mxu0 0.0
    %2483 = vmatpush1.msra.mxu0 0.0
    %2484 = vmatprep.subr.mxu0 0.0
    %2485 = vmatpush1.msra.mxu0 0.0
    %2486 = vmatprep.subr.mxu0 0.0
    %2487 = vmatpush1.msra.mxu0 0.0
    %2488 = vmatprep.subr.mxu0 0.0
    %2489 = vmatpush1.msra.mxu0 0.0
    %2490 = vmatprep.subr.mxu0 0.0
    %2491 = vmatpush1.msra.mxu0 0.0
    %2492 = vmatprep.subr.mxu0 0.0
    %2493 = vmatpush1.msra.mxu0 0.0
    %2494 = vmatprep.subr.mxu0 0.0
    %2495 = vmatpush1.msra.mxu0 0.0
    %2496 = vmatprep.subr.mxu0 0.0
    %2497 = vmatpush1.msra.mxu0 0.0
    %2498 = vmatprep.subr.mxu0 0.0
    %2499 = vmatpush1.msra.mxu0 0.0
    %2500 = vmatprep.subr.mxu0 0.0
    %2501 = vmatpush1.msra.mxu0 0.0
    %2502 = vmatprep.subr.mxu0 0.0
    %2503 = vmatpush1.msra.mxu0 0.0
    %2504 = vmatprep.subr.mxu0 0.0
    %2505 = vmatpush1.msra.mxu0 0.0
    %2506 = vmatprep.subr.mxu0 0.0
    %2507 = vmatpush1.msra.mxu0 0.0
    %2508 = vmatprep.subr.mxu0 0.0
    %2509 = vmatpush1.msra.mxu0 0.0
    %2510 = vmatprep.subr.mxu0 0.0
    %2511 = vmatpush1.msra.mxu0 0.0
    %2512 = vmatprep.subr.mxu0 0.0
    %2513 = vmatpush1.msra.mxu0 0.0
    %2514 = vmatprep.subr.mxu0 0.0
    %2515 = vmatpush1.msra.mxu0 0.0
    %2516 = vmatprep.subr.mxu0 0.0
    %2517 = vmatpush1.msra.mxu0 0.0
    %2518 = vmatprep.subr.mxu0 0.0
    %2519 = vmatpush1.msra.mxu0 0.0
    %2520 = vmatprep.subr.mxu0 0.0
    %2521 = vmatpush1.msra.mxu0 0.0
    %2522 = vmatprep.subr.mxu0 0.0
    %2523 = vmatpush1.msra.mxu0 0.0
    %2524 = vmatprep.mubr.f32.mxu0 0.0
    %2525 = vmatmul.mubr.f32.gmra.mrb[0].mxu0 %v2318
    %v2526 = vpop.f32.mrb[0].mxu0
    %v2527 = vadd.f32 %v455, %v2526
    %v2528 = vpop.f32.mrb[0].mxu0
    %2529 = vdwg.mxu0
    %2530 = vmatprep.subr.mxu0 0.0
    %2531 = vmatpush1.msra.mxu0 %v456
    %2532 = vmatprep.subr.mxu0 0.0
    %2533 = vmatpush1.msra.mxu0 %v457
    %2534 = vmatprep.subr.mxu0 0.0
    %2535 = vmatpush1.msra.mxu0 %v458
    %2536 = vmatprep.subr.mxu0 0.0
    %2537 = vmatpush1.msra.mxu0 %v459
    %2538 = vmatprep.subr.mxu0 0.0
    %2539 = vmatpush1.msra.mxu0 0.0
    %2540 = vmatprep.subr.mxu0 0.0
    %2541 = vmatpush1.msra.mxu0 0.0
    %2542 = vmatprep.subr.mxu0 0.0
    %2543 = vmatpush1.msra.mxu0 0.0
    %2544 = vmatprep.subr.mxu0 0.0
    %2545 = vmatpush1.msra.mxu0 0.0
    %2546 = vmatprep.subr.mxu0 0.0
    %2547 = vmatpush1.msra.mxu0 0.0
    %2548 = vmatprep.subr.mxu0 0.0
    %2549 = vmatpush1.msra.mxu0 0.0
    %2550 = vmatprep.subr.mxu0 0.0
    %2551 = vmatpush1.msra.mxu0 0.0
    %2552 = vmatprep.subr.mxu0 0.0
    %2553 = vmatpush1.msra.mxu0 0.0
    %2554 = vmatprep.subr.mxu0 0.0
    %2555 = vmatpush1.msra.mxu0 0.0
    %2556 = vmatprep.subr.mxu0 0.0
    %2557 = vmatpush1.msra.mxu0 0.0
    %2558 = vmatprep.subr.mxu0 0.0
    %2559 = vmatpush1.msra.mxu0 0.0
    %2560 = vmatprep.subr.mxu0 0.0
    %2561 = vmatpush1.msra.mxu0 0.0
    %2562 = vmatprep.subr.mxu0 0.0
    %2563 = vmatpush1.msra.mxu0 0.0
    %2564 = vmatprep.subr.mxu0 0.0
    %2565 = vmatpush1.msra.mxu0 0.0
    %2566 = vmatprep.subr.mxu0 0.0
    %2567 = vmatpush1.msra.mxu0 0.0
    %2568 = vmatprep.subr.mxu0 0.0
    %2569 = vmatpush1.msra.mxu0 0.0
    %2570 = vmatprep.subr.mxu0 0.0
    %2571 = vmatpush1.msra.mxu0 0.0
    %2572 = vmatprep.subr.mxu0 0.0
    %2573 = vmatpush1.msra.mxu0 0.0
    %2574 = vmatprep.subr.mxu0 0.0
    %2575 = vmatpush1.msra.mxu0 0.0
    %2576 = vmatprep.subr.mxu0 0.0
    %2577 = vmatpush1.msra.mxu0 0.0
    %2578 = vmatprep.subr.mxu0 0.0
    %2579 = vmatpush1.msra.mxu0 0.0
    %2580 = vmatprep.subr.mxu0 0.0
    %2581 = vmatpush1.msra.mxu0 0.0
    %2582 = vmatprep.subr.mxu0 0.0
    %2583 = vmatpush1.msra.mxu0 0.0
    %2584 = vmatprep.subr.mxu0 0.0
    %2585 = vmatpush1.msra.mxu0 0.0
    %2586 = vmatprep.subr.mxu0 0.0
    %2587 = vmatpush1.msra.mxu0 0.0
    %2588 = vmatprep.subr.mxu0 0.0
    %2589 = vmatpush1.msra.mxu0 0.0
    %2590 = vmatprep.subr.mxu0 0.0
    %2591 = vmatpush1.msra.mxu0 0.0
    %2592 = vmatprep.subr.mxu0 0.0
    %2593 = vmatpush1.msra.mxu0 0.0
    %2594 = vmatprep.mubr.f32.mxu0 0.0
    %2595 = vmatmul.mubr.f32.gmra.mrb[0].mxu0 %v2077
    %v2596 = vpop.f32.mrb[0].mxu0
    %v2597 = vadd.f32 %v468, %v2596
    %v2598 = vpop.f32.mrb[0].mxu0
    %2599 = vdwg.mxu0
    %2600 = vmatprep.subr.mxu0 0.0
    %2601 = vmatpush1.msra.mxu0 %v460
    %2602 = vmatprep.subr.mxu0 0.0
    %2603 = vmatpush1.msra.mxu0 %v461
    %2604 = vmatprep.subr.mxu0 0.0
    %2605 = vmatpush1.msra.mxu0 %v462
    %2606 = vmatprep.subr.mxu0 0.0
    %2607 = vmatpush1.msra.mxu0 %v463
    %2608 = vmatprep.subr.mxu0 0.0
    %2609 = vmatpush1.msra.mxu0 0.0
    %2610 = vmatprep.subr.mxu0 0.0
    %2611 = vmatpush1.msra.mxu0 0.0
    %2612 = vmatprep.subr.mxu0 0.0
    %2613 = vmatpush1.msra.mxu0 0.0
    %2614 = vmatprep.subr.mxu0 0.0
    %2615 = vmatpush1.msra.mxu0 0.0
    %2616 = vmatprep.subr.mxu0 0.0
    %2617 = vmatpush1.msra.mxu0 0.0
    %2618 = vmatprep.subr.mxu0 0.0
    %2619 = vmatpush1.msra.mxu0 0.0
    %2620 = vmatprep.subr.mxu0 0.0
    %2621 = vmatpush1.msra.mxu0 0.0
    %2622 = vmatprep.subr.mxu0 0.0
    %2623 = vmatpush1.msra.mxu0 0.0
    %2624 = vmatprep.subr.mxu0 0.0
    %2625 = vmatpush1.msra.mxu0 0.0
    %2626 = vmatprep.subr.mxu0 0.0
    %2627 = vmatpush1.msra.mxu0 0.0
    %2628 = vmatprep.subr.mxu0 0.0
    %2629 = vmatpush1.msra.mxu0 0.0
    %2630 = vmatprep.subr.mxu0 0.0
    %2631 = vmatpush1.msra.mxu0 0.0
    %2632 = vmatprep.subr.mxu0 0.0
    %2633 = vmatpush1.msra.mxu0 0.0
    %2634 = vmatprep.subr.mxu0 0.0
    %2635 = vmatpush1.msra.mxu0 0.0
    %2636 = vmatprep.subr.mxu0 0.0
    %2637 = vmatpush1.msra.mxu0 0.0
    %2638 = vmatprep.subr.mxu0 0.0
    %2639 = vmatpush1.msra.mxu0 0.0
    %2640 = vmatprep.subr.mxu0 0.0
    %2641 = vmatpush1.msra.mxu0 0.0
    %2642 = vmatprep.subr.mxu0 0.0
    %2643 = vmatpush1.msra.mxu0 0.0
    %2644 = vmatprep.subr.mxu0 0.0
    %2645 = vmatpush1.msra.mxu0 0.0
    %2646 = vmatprep.subr.mxu0 0.0
    %2647 = vmatpush1.msra.mxu0 0.0
    %2648 = vmatprep.subr.mxu0 0.0
    %2649 = vmatpush1.msra.mxu0 0.0
    %2650 = vmatprep.subr.mxu0 0.0
    %2651 = vmatpush1.msra.mxu0 0.0
    %2652 = vmatprep.subr.mxu0 0.0
    %2653 = vmatpush1.msra.mxu0 0.0
    %2654 = vmatprep.subr.mxu0 0.0
    %2655 = vmatpush1.msra.mxu0 0.0
    %2656 = vmatprep.subr.mxu0 0.0
    %2657 = vmatpush1.msra.mxu0 0.0
    %2658 = vmatprep.subr.mxu0 0.0
    %2659 = vmatpush1.msra.mxu0 0.0
    %2660 = vmatprep.subr.mxu0 0.0
    %2661 = vmatpush1.msra.mxu0 0.0
    %2662 = vmatprep.subr.mxu0 0.0
    %2663 = vmatpush1.msra.mxu0 0.0
    %2664 = vmatprep.mubr.f32.mxu0 0.0
    %2665 = vmatmul.mubr.f32.gmra.mrb[0].mxu0 %v2077
    %v2666 = vpop.f32.mrb[0].mxu0
    %v2667 = vadd.f32 %v469, %v2666
    %v2668 = vpop.f32.mrb[0].mxu0
    %2669 = vdwg.mxu0
    %2670 = vmatprep.subr.mxu0 0.0
    %2671 = vmatpush1.msra.mxu0 %v464
    %2672 = vmatprep.subr.mxu0 0.0
    %2673 = vmatpush1.msra.mxu0 %v465
    %2674 = vmatprep.subr.mxu0 0.0
    %2675 = vmatpush1.msra.mxu0 %v466
    %2676 = vmatprep.subr.mxu0 0.0
    %2677 = vmatpush1.msra.mxu0 %v467
    %2678 = vmatprep.subr.mxu0 0.0
    %2679 = vmatpush1.msra.mxu0 0.0
    %2680 = vmatprep.subr.mxu0 0.0
    %2681 = vmatpush1.msra.mxu0 0.0
    %2682 = vmatprep.subr.mxu0 0.0
    %2683 = vmatpush1.msra.mxu0 0.0
    %2684 = vmatprep.subr.mxu0 0.0
    %2685 = vmatpush1.msra.mxu0 0.0
    %2686 = vmatprep.subr.mxu0 0.0
    %2687 = vmatpush1.msra.mxu0 0.0
    %2688 = vmatprep.subr.mxu0 0.0
    %2689 = vmatpush1.msra.mxu0 0.0
    %2690 = vmatprep.subr.mxu0 0.0
    %2691 = vmatpush1.msra.mxu0 0.0
    %2692 = vmatprep.subr.mxu0 0.0
    %2693 = vmatpush1.msra.mxu0 0.0
    %2694 = vmatprep.subr.mxu0 0.0
    %2695 = vmatpush1.msra.mxu0 0.0
    %2696 = vmatprep.subr.mxu0 0.0
    %2697 = vmatpush1.msra.mxu0 0.0
    %2698 = vmatprep.subr.mxu0 0.0
    %2699 = vmatpush1.msra.mxu0 0.0
    %2700 = vmatprep.subr.mxu0 0.0
    %2701 = vmatpush1.msra.mxu0 0.0
    %2702 = vmatprep.subr.mxu0 0.0
    %2703 = vmatpush1.msra.mxu0 0.0
    %2704 = vmatprep.subr.mxu0 0.0
    %2705 = vmatpush1.msra.mxu0 0.0
    %2706 = vmatprep.subr.mxu0 0.0
    %2707 = vmatpush1.msra.mxu0 0.0
    %2708 = vmatprep.subr.mxu0 0.0
    %2709 = vmatpush1.msra.mxu0 0.0
    %2710 = vmatprep.subr.mxu0 0.0
    %2711 = vmatpush1.msra.mxu0 0.0
    %2712 = vmatprep.subr.mxu0 0.0
    %2713 = vmatpush1.msra.mxu0 0.0
    %2714 = vmatprep.subr.mxu0 0.0
    %2715 = vmatpush1.msra.mxu0 0.0
    %2716 = vmatprep.subr.mxu0 0.0
    %2717 = vmatpush1.msra.mxu0 0.0
    %2718 = vmatprep.subr.mxu0 0.0
    %2719 = vmatpush1.msra.mxu0 0.0
    %2720 = vmatprep.subr.mxu0 0.0
    %2721 = vmatpush1.msra.mxu0 0.0
    %2722 = vmatprep.subr.mxu0 0.0
    %2723 = vmatpush1.msra.mxu0 0.0
    %2724 = vmatprep.subr.mxu0 0.0
    %2725 = vmatpush1.msra.mxu0 0.0
    %2726 = vmatprep.subr.mxu0 0.0
    %2727 = vmatpush1.msra.mxu0 0.0
    %2728 = vmatprep.subr.mxu0 0.0
    %2729 = vmatpush1.msra.mxu0 0.0
    %2730 = vmatprep.subr.mxu0 0.0
    %2731 = vmatpush1.msra.mxu0 0.0
    %2732 = vmatprep.subr.mxu0 0.0
    %2733 = vmatpush1.msra.mxu0 0.0
    %2734 = vmatprep.mubr.f32.mxu0 0.0
    %2735 = vmatmul.mubr.f32.gmra.mrb[0].mxu0 %v2077
    %v2736 = vpop.f32.mrb[0].mxu0
    %v2737 = vadd.f32 %v470, %v2736
    %v2738 = vpop.f32.mrb[0].mxu0
    %2739 = vdwg.mxu0
    %v2740 = vadd.f32 %v2387, %v2597
    %v2741 = vxor.u32 %v2740, 2147483648
    %v2742 = vmul.f32 %v2741, 1.442695
    %v2743 = vpow.pop %v2742
    %v2744 = vadd.f32 %v2743, 1.0
    %v2745 = vrcp.pop %v2744
    %v2746 = vmul.f32 1.0, %v2745
    %v2747 = vadd.f32 %v2457, %v2667
    %v2748 = vxor.u32 %v2747, 2147483648
    %v2749 = vmul.f32 %v2748, 1.442695
    %v2750 = vpow.pop %v2749
    %v2751 = vadd.f32 %v2750, 1.0
    %v2752 = vrcp.pop %v2751
    %v2753 = vmul.f32 1.0, %v2752
    %v2754 = vmul.f32 %v2746, %v2737
    %v2755 = vadd.f32 %v2527, %v2754
    %v2756 = vtanh.pop %v2755
    %v2757 = vsub.f32 1.0, %v2753
    %v2758 = vmul.f32 %v2757, %v2756
    %v2760 = vmul.f32 %v2753, %v2076
    %v2761 = vadd.f32 %v2758, %v2760
    %v2763 = vsel %vm522, %v2761, 0
    %2765 = vmatprep.subr.mxu0 0.0
    %2766 = vmatpush1.msra.mxu0 %v471
    %2767 = vmatprep.subr.mxu0 0.0
    %2768 = vmatpush1.msra.mxu0 %v472
    %2769 = vmatprep.subr.mxu0 0.0
    %2770 = vmatpush1.msra.mxu0 %v473
    %2771 = vmatprep.subr.mxu0 0.0
    %2772 = vmatpush1.msra.mxu0 %v474
    %2773 = vmatprep.subr.mxu0 0.0
    %2774 = vmatpush1.msra.mxu0 0.0
    %2775 = vmatprep.subr.mxu0 0.0
    %2776 = vmatpush1.msra.mxu0 0.0
    %2777 = vmatprep.subr.mxu0 0.0
    %2778 = vmatpush1.msra.mxu0 0.0
    %2779 = vmatprep.subr.mxu0 0.0
    %2780 = vmatpush1.msra.mxu0 0.0
    %2781 = vmatprep.subr.mxu0 0.0
    %2782 = vmatpush1.msra.mxu0 0.0
    %2783 = vmatprep.subr.mxu0 0.0
    %2784 = vmatpush1.msra.mxu0 0.0
    %2785 = vmatprep.subr.mxu0 0.0
    %2786 = vmatpush1.msra.mxu0 0.0
    %2787 = vmatprep.subr.mxu0 0.0
    %2788 = vmatpush1.msra.mxu0 0.0
    %2789 = vmatprep.subr.mxu0 0.0
    %2790 = vmatpush1.msra.mxu0 0.0
    %2791 = vmatprep.subr.mxu0 0.0
    %2792 = vmatpush1.msra.mxu0 0.0
    %2793 = vmatprep.subr.mxu0 0.0
    %2794 = vmatpush1.msra.mxu0 0.0
    %2795 = vmatprep.subr.mxu0 0.0
    %2796 = vmatpush1.msra.mxu0 0.0
    %2797 = vmatprep.subr.mxu0 0.0
    %2798 = vmatpush1.msra.mxu0 0.0
    %2799 = vmatprep.subr.mxu0 0.0
    %2800 = vmatpush1.msra.mxu0 0.0
    %2801 = vmatprep.subr.mxu0 0.0
    %2802 = vmatpush1.msra.mxu0 0.0
    %2803 = vmatprep.subr.mxu0 0.0
    %2804 = vmatpush1.msra.mxu0 0.0
    %2805 = vmatprep.subr.mxu0 0.0
    %2806 = vmatpush1.msra.mxu0 0.0
    %2807 = vmatprep.subr.mxu0 0.0
    %2808 = vmatpush1.msra.mxu0 0.0
    %2809 = vmatprep.subr.mxu0 0.0
    %2810 = vmatpush1.msra.mxu0 0.0
    %2811 = vmatprep.subr.mxu0 0.0
    %2812 = vmatpush1.msra.mxu0 0.0
    %2813 = vmatprep.subr.mxu0 0.0
    %2814 = vmatpush1.msra.mxu0 0.0
    %2815 = vmatprep.subr.mxu0 0.0
    %2816 = vmatpush1.msra.mxu0 0.0
    %2817 = vmatprep.subr.mxu0 0.0
    %2818 = vmatpush1.msra.mxu0 0.0
    %2819 = vmatprep.subr.mxu0 0.0
    %2820 = vmatpush1.msra.mxu0 0.0
    %2821 = vmatprep.subr.mxu0 0.0
    %2822 = vmatpush1.msra.mxu0 0.0
    %2823 = vmatprep.subr.mxu0 0.0
    %2824 = vmatpush1.msra.mxu0 0.0
    %2825 = vmatprep.subr.mxu0 0.0
    %2826 = vmatpush1.msra.mxu0 0.0
    %2827 = vmatprep.subr.mxu0 0.0
    %2828 = vmatpush1.msra.mxu0 0.0
    %2829 = vmatprep.mubr.f32.mxu0 0.0
    %2830 = vmatmul.mubr.f32.gmra.mrb[0].mxu0 %v2763
    %v2831 = vpop.f32.mrb[0].mxu0
    %v2832 = vadd.f32 %v475, %v2831
    %v2833 = vpop.f32.mrb[0].mxu0
    %2834 = vdwg.mxu0
    %v2835 = vsel %vm503, %v2832, -inf
    %2836 = vmax.xlane.f32.xlu0 %v2835
    %v2837 = vpop.xlane.xlu0 %2836
    %v2838 = vsub.f32 %v2832, %v2837
    %v2839 = vmul.f32 %v2838, 1.442695
    %v2840 = vpow.pop %v2839
    %v2841 = vsel %vm503, %v2840, 0.0
    %2842 = vadd.xlane.f32.xlu0 %v2841
    %v2843 = vpop.xlane.xlu0 %2842
    %v2844 = vlog2.pop %v2843
    %v2845 = vmul.f32 %v2844, 0.6931472
    %v2846 = vadd.f32 %v2845, %v2837
    %v2847 = vsub.f32 %v2832, %v2846
    %2848 = vst [vmem:[#allocation39] sm:$0x1] %v2847
    %2849 = vmatprep.subr.mxu0 0.0
    %2850 = vmatpush1.msra.mxu0 %v433
    %2851 = vmatprep.subr.mxu0 0.0
    %2852 = vmatpush1.msra.mxu0 %v434
    %2853 = vmatprep.subr.mxu0 0.0
    %2854 = vmatpush1.msra.mxu0 %v435
    %2855 = vmatprep.subr.mxu0 0.0
    %2856 = vmatpush1.msra.mxu0 %v436
    %2857 = vmatprep.subr.mxu0 0.0
    %2858 = vmatpush1.msra.mxu0 0.0
    %2859 = vmatprep.subr.mxu0 0.0
    %2860 = vmatpush1.msra.mxu0 0.0
    %2861 = vmatprep.subr.mxu0 0.0
    %2862 = vmatpush1.msra.mxu0 0.0
    %2863 = vmatprep.subr.mxu0 0.0
    %2864 = vmatpush1.msra.mxu0 0.0
    %2865 = vmatprep.subr.mxu0 0.0
    %2866 = vmatpush1.msra.mxu0 0.0
    %2867 = vmatprep.subr.mxu0 0.0
    %2868 = vmatpush1.msra.mxu0 0.0
    %2869 = vmatprep.subr.mxu0 0.0
    %2870 = vmatpush1.msra.mxu0 0.0
    %2871 = vmatprep.subr.mxu0 0.0
    %2872 = vmatpush1.msra.mxu0 0.0
    %2873 = vmatprep.subr.mxu0 0.0
    %2874 = vmatpush1.msra.mxu0 0.0
    %2875 = vmatprep.subr.mxu0 0.0
    %2876 = vmatpush1.msra.mxu0 0.0
    %2877 = vmatprep.subr.mxu0 0.0
    %2878 = vmatpush1.msra.mxu0 0.0
    %2879 = vmatprep.subr.mxu0 0.0
    %2880 = vmatpush1.msra.mxu0 0.0
    %2881 = vmatprep.subr.mxu0 0.0
    %2882 = vmatpush1.msra.mxu0 0.0
    %2883 = vmatprep.subr.mxu0 0.0
    %2884 = vmatpush1.msra.mxu0 0.0
    %2885 = vmatprep.subr.mxu0 0.0
    %2886 = vmatpush1.msra.mxu0 0.0
    %2887 = vmatprep.subr.mxu0 0.0
    %2888 = vmatpush1.msra.mxu0 0.0
    %2889 = vmatprep.subr.mxu0 0.0
    %2890 = vmatpush1.msra.mxu0 0.0
    %2891 = vmatprep.subr.mxu0 0.0
    %2892 = vmatpush1.msra.mxu0 0.0
    %2893 = vmatprep.subr.mxu0 0.0
    %2894 = vmatpush1.msra.mxu0 0.0
    %2895 = vmatprep.subr.mxu0 0.0
    %2896 = vmatpush1.msra.mxu0 0.0
    %2897 = vmatprep.subr.mxu0 0.0
    %2898 = vmatpush1.msra.mxu0 0.0
    %2899 = vmatprep.subr.mxu0 0.0
    %2900 = vmatpush1.msra.mxu0 0.0
    %2901 = vmatprep.subr.mxu0 0.0
    %2902 = vmatpush1.msra.mxu0 0.0
    %2903 = vmatprep.subr.mxu0 0.0
    %2904 = vmatpush1.msra.mxu0 0.0
    %2905 = vmatprep.subr.mxu0 0.0
    %2906 = vmatpush1.msra.mxu0 0.0
    %2907 = vmatprep.subr.mxu0 0.0
    %2908 = vmatpush1.msra.mxu0 0.0
    %2909 = vmatprep.subr.mxu0 0.0
    %2910 = vmatpush1.msra.mxu0 0.0
    %2911 = vmatprep.subr.mxu0 0.0
    %2912 = vmatpush1.msra.mxu0 0.0
    %2913 = vmatprep.mubr.f32.mxu0 0.0
    %2914 = vmatmul.mubr.f32.gmra.mrb[0].mxu0 %v2763
    %v2915 = vpop.f32.mrb[0].mxu0
    %v2916 = vadd.f32 0.0, %v2915
    %v2917 = vpop.f32.mrb[0].mxu0
    %2918 = vdwg.mxu0
    %v2920 = vrot.slane %v2916, 7
    %v2922 = vadd.f32 %v1989, %v2920
    %vm2923 = vcmask 33793
    %v2924 = vsel %vm2923, %v2922, -inf
    %2925 = vmax.xlane.f32.xlu0 %v2924
    %v2926 = vpop.xlane.xlu0 %2925
    %v2927 = vsub.f32 %v2922, %v2926
    %v2928 = vmul.f32 %v2927, 1.442695
    %v2929 = vpow.pop %v2928
    %v2930 = vsel %vm2923, %v2929, 0.0
    %2931 = vadd.xlane.f32.xlu0 %v2930
    %v2932 = vpop.xlane.xlu0 %2931
    %v2933 = vrcp.pop %v2932
    %v2934 = vmul.f32 %v2929, %v2933
    %v2936 = vrot.slane %v2934, 1
    %v2937 = vsel %vm2165, %v2936, 0
    %2939 = vmatprep.subr.mxu0 0.0
    %2940 = vmatpush1.msra.mxu0 %v2170
    %2941 = vmatprep.subr.mxu0 0.0
    %2942 = vmatpush1.msra.mxu0 0.0
    %2943 = vmatprep.subr.mxu0 0.0
    %2944 = vmatpush1.msra.mxu0 0.0
    %2945 = vmatprep.subr.mxu0 0.0
    %2946 = vmatpush1.msra.mxu0 0.0
    %2947 = vmatprep.subr.mxu0 0.0
    %2948 = vmatpush1.msra.mxu0 0.0
    %2949 = vmatprep.subr.mxu0 0.0
    %2950 = vmatpush1.msra.mxu0 0.0
    %2951 = vmatprep.subr.mxu0 0.0
    %2952 = vmatpush1.msra.mxu0 0.0
    %2953 = vmatprep.subr.mxu0 0.0
    %2954 = vmatpush1.msra.mxu0 0.0
    %2955 = vmatprep.subr.mxu0 0.0
    %2956 = vmatpush1.msra.mxu0 0.0
    %2957 = vmatprep.subr.mxu0 0.0
    %2958 = vmatpush1.msra.mxu0 0.0
    %2959 = vmatprep.subr.mxu0 0.0
    %2960 = vmatpush1.msra.mxu0 0.0
    %2961 = vmatprep.subr.mxu0 0.0
    %2962 = vmatpush1.msra.mxu0 0.0
    %2963 = vmatprep.subr.mxu0 0.0
    %2964 = vmatpush1.msra.mxu0 0.0
    %2965 = vmatprep.subr.mxu0 0.0
    %2966 = vmatpush1.msra.mxu0 0.0
    %2967 = vmatprep.subr.mxu0 0.0
    %2968 = vmatpush1.msra.mxu0 0.0
    %2969 = vmatprep.subr.mxu0 0.0
    %2970 = vmatpush1.msra.mxu0 0.0
    %2971 = vmatprep.subr.mxu0 0.0
    %2972 = vmatpush1.msra.mxu0 0.0
    %2973 = vmatprep.subr.mxu0 0.0
    %2974 = vmatpush1.msra.mxu0 0.0
    %2975 = vmatprep.subr.mxu0 0.0
    %2976 = vmatpush1.msra.mxu0 0.0
    %2977 = vmatprep.subr.mxu0 0.0
    %2978 = vmatpush1.msra.mxu0 0.0
    %2979 = vmatprep.subr.mxu0 0.0
    %2980 = vmatpush1.msra.mxu0 0.0
    %2981 = vmatprep.subr.mxu0 0.0
    %2982 = vmatpush1.msra.mxu0 0.0
    %2983 = vmatprep.subr.mxu0 0.0
    %2984 = vmatpush1.msra.mxu0 0.0
    %2985 = vmatprep.subr.mxu0 0.0
    %2986 = vmatpush1.msra.mxu0 0.0
    %2987 = vmatprep.subr.mxu0 0.0
    %2988 = vmatpush1.msra.mxu0 0.0
    %2989 = vmatprep.subr.mxu0 0.0
    %2990 = vmatpush1.msra.mxu0 0.0
    %2991 = vmatprep.subr.mxu0 0.0
    %2992 = vmatpush1.msra.mxu0 0.0
    %2993 = vmatprep.subr.mxu0 0.0
    %2994 = vmatpush1.msra.mxu0 0.0
    %2995 = vmatprep.subr.mxu0 0.0
    %2996 = vmatpush1.msra.mxu0 0.0
    %2997 = vmatprep.subr.mxu0 0.0
    %2998 = vmatpush1.msra.mxu0 0.0
    %2999 = vmatprep.subr.mxu0 0.0
    %3000 = vmatpush1.msra.mxu0 0.0
    %3001 = vmatprep.subr.mxu0 0.0
    %3002 = vmatpush1.msra.mxu0 0.0
    %3003 = vmatprep.mubr.f32.mxu0 0.0
    %3004 = vmatmul.mubr.f32.gmra.mrb[0].mxu0 %v2937
    %v3005 = vpop.f32.mrb[0].mxu0
    %v3006 = vadd.f32 0.0, %v3005
    %v3007 = vpop.f32.mrb[0].mxu0
    %3008 = vdwg.mxu0
    %v3010 = vsel %vm522, %v3006, 0
    %3012 = vmatprep.subr.mxu0 0.0
    %3013 = vmatpush1.msra.mxu0 %v437
    %3014 = vmatprep.subr.mxu0 0.0
    %3015 = vmatpush1.msra.mxu0 %v438
    %3016 = vmatprep.subr.mxu0 0.0
    %3017 = vmatpush1.msra.mxu0 %v439
    %3018 = vmatprep.subr.mxu0 0.0
    %3019 = vmatpush1.msra.mxu0 %v440
    %3020 = vmatprep.subr.mxu0 0.0
    %3021 = vmatpush1.msra.mxu0 0.0
    %3022 = vmatprep.subr.mxu0 0.0
    %3023 = vmatpush1.msra.mxu0 0.0
    %3024 = vmatprep.subr.mxu0 0.0
    %3025 = vmatpush1.msra.mxu0 0.0
    %3026 = vmatprep.subr.mxu0 0.0
    %3027 = vmatpush1.msra.mxu0 0.0
    %3028 = vmatprep.subr.mxu0 0.0
    %3029 = vmatpush1.msra.mxu0 0.0
    %3030 = vmatprep.subr.mxu0 0.0
    %3031 = vmatpush1.msra.mxu0 0.0
    %3032 = vmatprep.subr.mxu0 0.0
    %3033 = vmatpush1.msra.mxu0 0.0
    %3034 = vmatprep.subr.mxu0 0.0
    %3035 = vmatpush1.msra.mxu0 0.0
    %3036 = vmatprep.subr.mxu0 0.0
    %3037 = vmatpush1.msra.mxu0 0.0
    %3038 = vmatprep.subr.mxu0 0.0
    %3039 = vmatpush1.msra.mxu0 0.0
    %3040 = vmatprep.subr.mxu0 0.0
    %3041 = vmatpush1.msra.mxu0 0.0
    %3042 = vmatprep.subr.mxu0 0.0
    %3043 = vmatpush1.msra.mxu0 0.0
    %3044 = vmatprep.subr.mxu0 0.0
    %3045 = vmatpush1.msra.mxu0 0.0
    %3046 = vmatprep.subr.mxu0 0.0
    %3047 = vmatpush1.msra.mxu0 0.0
    %3048 = vmatprep.subr.mxu0 0.0
    %3049 = vmatpush1.msra.mxu0 0.0
    %3050 = vmatprep.subr.mxu0 0.0
    %3051 = vmatpush1.msra.mxu0 0.0
    %3052 = vmatprep.subr.mxu0 0.0
    %3053 = vmatpush1.msra.mxu0 0.0
    %3054 = vmatprep.subr.mxu0 0.0
    %3055 = vmatpush1.msra.mxu0 0.0
    %3056 = vmatprep.subr.mxu0 0.0
    %3057 = vmatpush1.msra.mxu0 0.0
    %3058 = vmatprep.subr.mxu0 0.0
    %3059 = vmatpush1.msra.mxu0 0.0
    %3060 = vmatprep.subr.mxu0 0.0
    %3061 = vmatpush1.msra.mxu0 0.0
    %3062 = vmatprep.subr.mxu0 0.0
    %3063 = vmatpush1.msra.mxu0 0.0
    %3064 = vmatprep.subr.mxu0 0.0
    %3065 = vmatpush1.msra.mxu0 0.0
    %3066 = vmatprep.subr.mxu0 0.0
    %3067 = vmatpush1.msra.mxu0 0.0
    %3068 = vmatprep.subr.mxu0 0.0
    %3069 = vmatpush1.msra.mxu0 0.0
    %3070 = vmatprep.subr.mxu0 0.0
    %3071 = vmatpush1.msra.mxu0 0.0
    %3072 = vmatprep.subr.mxu0 0.0
    %3073 = vmatpush1.msra.mxu0 0.0
    %3074 = vmatprep.subr.mxu0 0.0
    %3075 = vmatpush1.msra.mxu0 0.0
    %3076 = vmatprep.mubr.f32.mxu0 0.0
    %3077 = vmatmul.mubr.f32.gmra.mrb[0].mxu0 %v3010
    %v3078 = vpop.f32.mrb[0].mxu0
    %v3079 = vadd.f32 0.0, %v3078
    %v3080 = vpop.f32.mrb[0].mxu0
    %3081 = vdwg.mxu0
    %v3083 = vrot.slane %v3079, 7
    %v3085 = vadd.f32 %v2070, %v3083
    %v3086 = vmax.f32 %v3085, 0.0
    %v3088 = vrot.slane %v3086, 1
    %v3089 = vsel %vm522, %v3088, 0
    %3091 = vmatprep.subr.mxu0 0.0
    %3092 = vmatpush1.msra.mxu0 %v441
    %3093 = vmatprep.subr.mxu0 0.0
    %3094 = vmatpush1.msra.mxu0 %v442
    %3095 = vmatprep.subr.mxu0 0.0
    %3096 = vmatpush1.msra.mxu0 %v443
    %3097 = vmatprep.subr.mxu0 0.0
    %3098 = vmatpush1.msra.mxu0 %v444
    %3099 = vmatprep.subr.mxu0 0.0
    %3100 = vmatpush1.msra.mxu0 0.0
    %3101 = vmatprep.subr.mxu0 0.0
    %3102 = vmatpush1.msra.mxu0 0.0
    %3103 = vmatprep.subr.mxu0 0.0
    %3104 = vmatpush1.msra.mxu0 0.0
    %3105 = vmatprep.subr.mxu0 0.0
    %3106 = vmatpush1.msra.mxu0 0.0
    %3107 = vmatprep.subr.mxu0 0.0
    %3108 = vmatpush1.msra.mxu0 0.0
    %3109 = vmatprep.subr.mxu0 0.0
    %3110 = vmatpush1.msra.mxu0 0.0
    %3111 = vmatprep.subr.mxu0 0.0
    %3112 = vmatpush1.msra.mxu0 0.0
    %3113 = vmatprep.subr.mxu0 0.0
    %3114 = vmatpush1.msra.mxu0 0.0
    %3115 = vmatprep.subr.mxu0 0.0
    %3116 = vmatpush1.msra.mxu0 0.0
    %3117 = vmatprep.subr.mxu0 0.0
    %3118 = vmatpush1.msra.mxu0 0.0
    %3119 = vmatprep.subr.mxu0 0.0
    %3120 = vmatpush1.msra.mxu0 0.0
    %3121 = vmatprep.subr.mxu0 0.0
    %3122 = vmatpush1.msra.mxu0 0.0
    %3123 = vmatprep.subr.mxu0 0.0
    %3124 = vmatpush1.msra.mxu0 0.0
    %3125 = vmatprep.subr.mxu0 0.0
    %3126 = vmatpush1.msra.mxu0 0.0
    %3127 = vmatprep.subr.mxu0 0.0
    %3128 = vmatpush1.msra.mxu0 0.0
    %3129 = vmatprep.subr.mxu0 0.0
    %3130 = vmatpush1.msra.mxu0 0.0
    %3131 = vmatprep.subr.mxu0 0.0
    %3132 = vmatpush1.msra.mxu0 0.0
    %3133 = vmatprep.subr.mxu0 0.0
    %3134 = vmatpush1.msra.mxu0 0.0
    %3135 = vmatprep.subr.mxu0 0.0
    %3136 = vmatpush1.msra.mxu0 0.0
    %3137 = vmatprep.subr.mxu0 0.0
    %3138 = vmatpush1.msra.mxu0 0.0
    %3139 = vmatprep.subr.mxu0 0.0
    %3140 = vmatpush1.msra.mxu0 0.0
    %3141 = vmatprep.subr.mxu0 0.0
    %3142 = vmatpush1.msra.mxu0 0.0
    %3143 = vmatprep.subr.mxu0 0.0
    %3144 = vmatpush1.msra.mxu0 0.0
    %3145 = vmatprep.subr.mxu0 0.0
    %3146 = vmatpush1.msra.mxu0 0.0
    %3147 = vmatprep.subr.mxu0 0.0
    %3148 = vmatpush1.msra.mxu0 0.0
    %3149 = vmatprep.subr.mxu0 0.0
    %3150 = vmatpush1.msra.mxu0 0.0
    %3151 = vmatprep.subr.mxu0 0.0
    %3152 = vmatpush1.msra.mxu0 0.0
    %3153 = vmatprep.subr.mxu0 0.0
    %3154 = vmatpush1.msra.mxu0 0.0
    %3155 = vmatprep.mubr.f32.mxu0 0.0
    %3156 = vmatmul.mubr.f32.gmra.mrb[0].mxu0 %v3089
    %v3157 = vpop.f32.mrb[0].mxu0
    %v3158 = vadd.f32 %v453, %v3157
    %v3159 = vpop.f32.mrb[0].mxu0
    %3160 = vdwg.mxu0
    %3161 = vmatprep.subr.mxu0 0.0
    %3162 = vmatpush1.msra.mxu0 %v445
    %3163 = vmatprep.subr.mxu0 0.0
    %3164 = vmatpush1.msra.mxu0 %v446
    %3165 = vmatprep.subr.mxu0 0.0
    %3166 = vmatpush1.msra.mxu0 %v447
    %3167 = vmatprep.subr.mxu0 0.0
    %3168 = vmatpush1.msra.mxu0 %v448
    %3169 = vmatprep.subr.mxu0 0.0
    %3170 = vmatpush1.msra.mxu0 0.0
    %3171 = vmatprep.subr.mxu0 0.0
    %3172 = vmatpush1.msra.mxu0 0.0
    %3173 = vmatprep.subr.mxu0 0.0
    %3174 = vmatpush1.msra.mxu0 0.0
    %3175 = vmatprep.subr.mxu0 0.0
    %3176 = vmatpush1.msra.mxu0 0.0
    %3177 = vmatprep.subr.mxu0 0.0
    %3178 = vmatpush1.msra.mxu0 0.0
    %3179 = vmatprep.subr.mxu0 0.0
    %3180 = vmatpush1.msra.mxu0 0.0
    %3181 = vmatprep.subr.mxu0 0.0
    %3182 = vmatpush1.msra.mxu0 0.0
    %3183 = vmatprep.subr.mxu0 0.0
    %3184 = vmatpush1.msra.mxu0 0.0
    %3185 = vmatprep.subr.mxu0 0.0
    %3186 = vmatpush1.msra.mxu0 0.0
    %3187 = vmatprep.subr.mxu0 0.0
    %3188 = vmatpush1.msra.mxu0 0.0
    %3189 = vmatprep.subr.mxu0 0.0
    %3190 = vmatpush1.msra.mxu0 0.0
    %3191 = vmatprep.subr.mxu0 0.0
    %3192 = vmatpush1.msra.mxu0 0.0
    %3193 = vmatprep.subr.mxu0 0.0
    %3194 = vmatpush1.msra.mxu0 0.0
    %3195 = vmatprep.subr.mxu0 0.0
    %3196 = vmatpush1.msra.mxu0 0.0
    %3197 = vmatprep.subr.mxu0 0.0
    %3198 = vmatpush1.msra.mxu0 0.0
    %3199 = vmatprep.subr.mxu0 0.0
    %3200 = vmatpush1.msra.mxu0 0.0
    %3201 = vmatprep.subr.mxu0 0.0
    %3202 = vmatpush1.msra.mxu0 0.0
    %3203 = vmatprep.subr.mxu0 0.0
    %3204 = vmatpush1.msra.mxu0 0.0
    %3205 = vmatprep.subr.mxu0 0.0
    %3206 = vmatpush1.msra.mxu0 0.0
    %3207 = vmatprep.subr.mxu0 0.0
    %3208 = vmatpush1.msra.mxu0 0.0
    %3209 = vmatprep.subr.mxu0 0.0
    %3210 = vmatpush1.msra.mxu0 0.0
    %3211 = vmatprep.subr.mxu0 0.0
    %3212 = vmatpush1.msra.mxu0 0.0
    %3213 = vmatprep.subr.mxu0 0.0
    %3214 = vmatpush1.msra.mxu0 0.0
    %3215 = vmatprep.subr.mxu0 0.0
    %3216 = vmatpush1.msra.mxu0 0.0
    %3217 = vmatprep.subr.mxu0 0.0
    %3218 = vmatpush1.msra.mxu0 0.0
    %3219 = vmatprep.subr.mxu0 0.0
    %3220 = vmatpush1.msra.mxu0 0.0
    %3221 = vmatprep.subr.mxu0 0.0
    %3222 = vmatpush1.msra.mxu0 0.0
    %3223 = vmatprep.subr.mxu0 0.0
    %3224 = vmatpush1.msra.mxu0 0.0
    %3225 = vmatprep.mubr.f32.mxu0 0.0
    %3226 = vmatmul.mubr.f32.gmra.mrb[0].mxu0 %v3089
    %v3227 = vpop.f32.mrb[0].mxu0
    %v3228 = vadd.f32 %v454, %v3227
    %v3229 = vpop.f32.mrb[0].mxu0
    %3230 = vdwg.mxu0
    %3231 = vmatprep.subr.mxu0 0.0
    %3232 = vmatpush1.msra.mxu0 %v449
    %3233 = vmatprep.subr.mxu0 0.0
    %3234 = vmatpush1.msra.mxu0 %v450
    %3235 = vmatprep.subr.mxu0 0.0
    %3236 = vmatpush1.msra.mxu0 %v451
    %3237 = vmatprep.subr.mxu0 0.0
    %3238 = vmatpush1.msra.mxu0 %v452
    %3239 = vmatprep.subr.mxu0 0.0
    %3240 = vmatpush1.msra.mxu0 0.0
    %3241 = vmatprep.subr.mxu0 0.0
    %3242 = vmatpush1.msra.mxu0 0.0
    %3243 = vmatprep.subr.mxu0 0.0
    %3244 = vmatpush1.msra.mxu0 0.0
    %3245 = vmatprep.subr.mxu0 0.0
    %3246 = vmatpush1.msra.mxu0 0.0
    %3247 = vmatprep.subr.mxu0 0.0
    %3248 = vmatpush1.msra.mxu0 0.0
    %3249 = vmatprep.subr.mxu0 0.0
    %3250 = vmatpush1.msra.mxu0 0.0
    %3251 = vmatprep.subr.mxu0 0.0
    %3252 = vmatpush1.msra.mxu0 0.0
    %3253 = vmatprep.subr.mxu0 0.0
    %3254 = vmatpush1.msra.mxu0 0.0
    %3255 = vmatprep.subr.mxu0 0.0
    %3256 = vmatpush1.msra.mxu0 0.0
    %3257 = vmatprep.subr.mxu0 0.0
    %3258 = vmatpush1.msra.mxu0 0.0
    %3259 = vmatprep.subr.mxu0 0.0
    %3260 = vmatpush1.msra.mxu0 0.0
    %3261 = vmatprep.subr.mxu0 0.0
    %3262 = vmatpush1.msra.mxu0 0.0
    %3263 = vmatprep.subr.mxu0 0.0
    %3264 = vmatpush1.msra.mxu0 0.0
    %3265 = vmatprep.subr.mxu0 0.0
    %3266 = vmatpush1.msra.mxu0 0.0
    %3267 = vmatprep.subr.mxu0 0.0
    %3268 = vmatpush1.msra.mxu0 0.0
    %3269 = vmatprep.subr.mxu0 0.0
    %3270 = vmatpush1.msra.mxu0 0.0
    %3271 = vmatprep.subr.mxu0 0.0
    %3272 = vmatpush1.msra.mxu0 0.0
    %3273 = vmatprep.subr.mxu0 0.0
    %3274 = vmatpush1.msra.mxu0 0.0
    %3275 = vmatprep.subr.mxu0 0.0
    %3276 = vmatpush1.msra.mxu0 0.0
    %3277 = vmatprep.subr.mxu0 0.0
    %3278 = vmatpush1.msra.mxu0 0.0
    %3279 = vmatprep.subr.mxu0 0.0
    %3280 = vmatpush1.msra.mxu0 0.0
    %3281 = vmatprep.subr.mxu0 0.0
    %3282 = vmatpush1.msra.mxu0 0.0
    %3283 = vmatprep.subr.mxu0 0.0
    %3284 = vmatpush1.msra.mxu0 0.0
    %3285 = vmatprep.subr.mxu0 0.0
    %3286 = vmatpush1.msra.mxu0 0.0
    %3287 = vmatprep.subr.mxu0 0.0
    %3288 = vmatpush1.msra.mxu0 0.0
    %3289 = vmatprep.subr.mxu0 0.0
    %3290 = vmatpush1.msra.mxu0 0.0
    %3291 = vmatprep.subr.mxu0 0.0
    %3292 = vmatpush1.msra.mxu0 0.0
    %3293 = vmatprep.subr.mxu0 0.0
    %3294 = vmatpush1.msra.mxu0 0.0
    %3295 = vmatprep.mubr.f32.mxu0 0.0
    %3296 = vmatmul.mubr.f32.gmra.mrb[0].mxu0 %v3089
    %v3297 = vpop.f32.mrb[0].mxu0
    %v3298 = vadd.f32 %v455, %v3297
    %v3299 = vpop.f32.mrb[0].mxu0
    %3300 = vdwg.mxu0
    %3301 = vmatprep.subr.mxu0 0.0
    %3302 = vmatpush1.msra.mxu0 %v456
    %3303 = vmatprep.subr.mxu0 0.0
    %3304 = vmatpush1.msra.mxu0 %v457
    %3305 = vmatprep.subr.mxu0 0.0
    %3306 = vmatpush1.msra.mxu0 %v458
    %3307 = vmatprep.subr.mxu0 0.0
    %3308 = vmatpush1.msra.mxu0 %v459
    %3309 = vmatprep.subr.mxu0 0.0
    %3310 = vmatpush1.msra.mxu0 0.0
    %3311 = vmatprep.subr.mxu0 0.0
    %3312 = vmatpush1.msra.mxu0 0.0
    %3313 = vmatprep.subr.mxu0 0.0
    %3314 = vmatpush1.msra.mxu0 0.0
    %3315 = vmatprep.subr.mxu0 0.0
    %3316 = vmatpush1.msra.mxu0 0.0
    %3317 = vmatprep.subr.mxu0 0.0
    %3318 = vmatpush1.msra.mxu0 0.0
    %3319 = vmatprep.subr.mxu0 0.0
    %3320 = vmatpush1.msra.mxu0 0.0
    %3321 = vmatprep.subr.mxu0 0.0
    %3322 = vmatpush1.msra.mxu0 0.0
    %3323 = vmatprep.subr.mxu0 0.0
    %3324 = vmatpush1.msra.mxu0 0.0
    %3325 = vmatprep.subr.mxu0 0.0
    %3326 = vmatpush1.msra.mxu0 0.0
    %3327 = vmatprep.subr.mxu0 0.0
    %3328 = vmatpush1.msra.mxu0 0.0
    %3329 = vmatprep.subr.mxu0 0.0
    %3330 = vmatpush1.msra.mxu0 0.0
    %3331 = vmatprep.subr.mxu0 0.0
    %3332 = vmatpush1.msra.mxu0 0.0
    %3333 = vmatprep.subr.mxu0 0.0
    %3334 = vmatpush1.msra.mxu0 0.0
    %3335 = vmatprep.subr.mxu0 0.0
    %3336 = vmatpush1.msra.mxu0 0.0
    %3337 = vmatprep.subr.mxu0 0.0
    %3338 = vmatpush1.msra.mxu0 0.0
    %3339 = vmatprep.subr.mxu0 0.0
    %3340 = vmatpush1.msra.mxu0 0.0
    %3341 = vmatprep.subr.mxu0 0.0
    %3342 = vmatpush1.msra.mxu0 0.0
    %3343 = vmatprep.subr.mxu0 0.0
    %3344 = vmatpush1.msra.mxu0 0.0
    %3345 = vmatprep.subr.mxu0 0.0
    %3346 = vmatpush1.msra.mxu0 0.0
    %3347 = vmatprep.subr.mxu0 0.0
    %3348 = vmatpush1.msra.mxu0 0.0
    %3349 = vmatprep.subr.mxu0 0.0
    %3350 = vmatpush1.msra.mxu0 0.0
    %3351 = vmatprep.subr.mxu0 0.0
    %3352 = vmatpush1.msra.mxu0 0.0
    %3353 = vmatprep.subr.mxu0 0.0
    %3354 = vmatpush1.msra.mxu0 0.0
    %3355 = vmatprep.subr.mxu0 0.0
    %3356 = vmatpush1.msra.mxu0 0.0
    %3357 = vmatprep.subr.mxu0 0.0
    %3358 = vmatpush1.msra.mxu0 0.0
    %3359 = vmatprep.subr.mxu0 0.0
    %3360 = vmatpush1.msra.mxu0 0.0
    %3361 = vmatprep.subr.mxu0 0.0
    %3362 = vmatpush1.msra.mxu0 0.0
    %3363 = vmatprep.subr.mxu0 0.0
    %3364 = vmatpush1.msra.mxu0 0.0
    %3365 = vmatprep.mubr.f32.mxu0 0.0
    %3366 = vmatmul.mubr.f32.gmra.mrb[0].mxu0 %v2763
    %v3367 = vpop.f32.mrb[0].mxu0
    %v3368 = vadd.f32 %v468, %v3367
    %v3369 = vpop.f32.mrb[0].mxu0
    %3370 = vdwg.mxu0
    %3371 = vmatprep.subr.mxu0 0.0
    %3372 = vmatpush1.msra.mxu0 %v460
    %3373 = vmatprep.subr.mxu0 0.0
    %3374 = vmatpush1.msra.mxu0 %v461
    %3375 = vmatprep.subr.mxu0 0.0
    %3376 = vmatpush1.msra.mxu0 %v462
    %3377 = vmatprep.subr.mxu0 0.0
    %3378 = vmatpush1.msra.mxu0 %v463
    %3379 = vmatprep.subr.mxu0 0.0
    %3380 = vmatpush1.msra.mxu0 0.0
    %3381 = vmatprep.subr.mxu0 0.0
    %3382 = vmatpush1.msra.mxu0 0.0
    %3383 = vmatprep.subr.mxu0 0.0
    %3384 = vmatpush1.msra.mxu0 0.0
    %3385 = vmatprep.subr.mxu0 0.0
    %3386 = vmatpush1.msra.mxu0 0.0
    %3387 = vmatprep.subr.mxu0 0.0
    %3388 = vmatpush1.msra.mxu0 0.0
    %3389 = vmatprep.subr.mxu0 0.0
    %3390 = vmatpush1.msra.mxu0 0.0
    %3391 = vmatprep.subr.mxu0 0.0
    %3392 = vmatpush1.msra.mxu0 0.0
    %3393 = vmatprep.subr.mxu0 0.0
    %3394 = vmatpush1.msra.mxu0 0.0
    %3395 = vmatprep.subr.mxu0 0.0
    %3396 = vmatpush1.msra.mxu0 0.0
    %3397 = vmatprep.subr.mxu0 0.0
    %3398 = vmatpush1.msra.mxu0 0.0
    %3399 = vmatprep.subr.mxu0 0.0
    %3400 = vmatpush1.msra.mxu0 0.0
    %3401 = vmatprep.subr.mxu0 0.0
    %3402 = vmatpush1.msra.mxu0 0.0
    %3403 = vmatprep.subr.mxu0 0.0
    %3404 = vmatpush1.msra.mxu0 0.0
    %3405 = vmatprep.subr.mxu0 0.0
    %3406 = vmatpush1.msra.mxu0 0.0
    %3407 = vmatprep.subr.mxu0 0.0
    %3408 = vmatpush1.msra.mxu0 0.0
    %3409 = vmatprep.subr.mxu0 0.0
    %3410 = vmatpush1.msra.mxu0 0.0
    %3411 = vmatprep.subr.mxu0 0.0
    %3412 = vmatpush1.msra.mxu0 0.0
    %3413 = vmatprep.subr.mxu0 0.0
    %3414 = vmatpush1.msra.mxu0 0.0
    %3415 = vmatprep.subr.mxu0 0.0
    %3416 = vmatpush1.msra.mxu0 0.0
    %3417 = vmatprep.subr.mxu0 0.0
    %3418 = vmatpush1.msra.mxu0 0.0
    %3419 = vmatprep.subr.mxu0 0.0
    %3420 = vmatpush1.msra.mxu0 0.0
    %3421 = vmatprep.subr.mxu0 0.0
    %3422 = vmatpush1.msra.mxu0 0.0
    %3423 = vmatprep.subr.mxu0 0.0
    %3424 = vmatpush1.msra.mxu0 0.0
    %3425 = vmatprep.subr.mxu0 0.0
    %3426 = vmatpush1.msra.mxu0 0.0
    %3427 = vmatprep.subr.mxu0 0.0
    %3428 = vmatpush1.msra.mxu0 0.0
    %3429 = vmatprep.subr.mxu0 0.0
    %3430 = vmatpush1.msra.mxu0 0.0
    %3431 = vmatprep.subr.mxu0 0.0
    %3432 = vmatpush1.msra.mxu0 0.0
    %3433 = vmatprep.subr.mxu0 0.0
    %3434 = vmatpush1.msra.mxu0 0.0
    %3435 = vmatprep.mubr.f32.mxu0 0.0
    %3436 = vmatmul.mubr.f32.gmra.mrb[0].mxu0 %v2763
    %v3437 = vpop.f32.mrb[0].mxu0
    %v3438 = vadd.f32 %v469, %v3437
    %v3439 = vpop.f32.mrb[0].mxu0
    %3440 = vdwg.mxu0
    %3441 = vmatprep.subr.mxu0 0.0
    %3442 = vmatpush1.msra.mxu0 %v464
    %3443 = vmatprep.subr.mxu0 0.0
    %3444 = vmatpush1.msra.mxu0 %v465
    %3445 = vmatprep.subr.mxu0 0.0
    %3446 = vmatpush1.msra.mxu0 %v466
    %3447 = vmatprep.subr.mxu0 0.0
    %3448 = vmatpush1.msra.mxu0 %v467
    %3449 = vmatprep.subr.mxu0 0.0
    %3450 = vmatpush1.msra.mxu0 0.0
    %3451 = vmatprep.subr.mxu0 0.0
    %3452 = vmatpush1.msra.mxu0 0.0
    %3453 = vmatprep.subr.mxu0 0.0
    %3454 = vmatpush1.msra.mxu0 0.0
    %3455 = vmatprep.subr.mxu0 0.0
    %3456 = vmatpush1.msra.mxu0 0.0
    %3457 = vmatprep.subr.mxu0 0.0
    %3458 = vmatpush1.msra.mxu0 0.0
    %3459 = vmatprep.subr.mxu0 0.0
    %3460 = vmatpush1.msra.mxu0 0.0
    %3461 = vmatprep.subr.mxu0 0.0
    %3462 = vmatpush1.msra.mxu0 0.0
    %3463 = vmatprep.subr.mxu0 0.0
    %3464 = vmatpush1.msra.mxu0 0.0
    %3465 = vmatprep.subr.mxu0 0.0
    %3466 = vmatpush1.msra.mxu0 0.0
    %3467 = vmatprep.subr.mxu0 0.0
    %3468 = vmatpush1.msra.mxu0 0.0
    %3469 = vmatprep.subr.mxu0 0.0
    %3470 = vmatpush1.msra.mxu0 0.0
    %3471 = vmatprep.subr.mxu0 0.0
    %3472 = vmatpush1.msra.mxu0 0.0
    %3473 = vmatprep.subr.mxu0 0.0
    %3474 = vmatpush1.msra.mxu0 0.0
    %3475 = vmatprep.subr.mxu0 0.0
    %3476 = vmatpush1.msra.mxu0 0.0
    %3477 = vmatprep.subr.mxu0 0.0
    %3478 = vmatpush1.msra.mxu0 0.0
    %3479 = vmatprep.subr.mxu0 0.0
    %3480 = vmatpush1.msra.mxu0 0.0
    %3481 = vmatprep.subr.mxu0 0.0
    %3482 = vmatpush1.msra.mxu0 0.0
    %3483 = vmatprep.subr.mxu0 0.0
    %3484 = vmatpush1.msra.mxu0 0.0
    %3485 = vmatprep.subr.mxu0 0.0
    %3486 = vmatpush1.msra.mxu0 0.0
    %3487 = vmatprep.subr.mxu0 0.0
    %3488 = vmatpush1.msra.mxu0 0.0
    %3489 = vmatprep.subr.mxu0 0.0
    %3490 = vmatpush1.msra.mxu0 0.0
    %3491 = vmatprep.subr.mxu0 0.0
    %3492 = vmatpush1.msra.mxu0 0.0
    %3493 = vmatprep.subr.mxu0 0.0
    %3494 = vmatpush1.msra.mxu0 0.0
    %3495 = vmatprep.subr.mxu0 0.0
    %3496 = vmatpush1.msra.mxu0 0.0
    %3497 = vmatprep.subr.mxu0 0.0
    %3498 = vmatpush1.msra.mxu0 0.0
    %3499 = vmatprep.subr.mxu0 0.0
    %3500 = vmatpush1.msra.mxu0 0.0
    %3501 = vmatprep.subr.mxu0 0.0
    %3502 = vmatpush1.msra.mxu0 0.0
    %3503 = vmatprep.subr.mxu0 0.0
    %3504 = vmatpush1.msra.mxu0 0.0
    %3505 = vmatprep.mubr.f32.mxu0 0.0
    %3506 = vmatmul.mubr.f32.gmra.mrb[0].mxu0 %v2763
    %v3507 = vpop.f32.mrb[0].mxu0
    %v3508 = vadd.f32 %v470, %v3507
    %v3509 = vpop.f32.mrb[0].mxu0
    %3510 = vdwg.mxu0
    %v3511 = vadd.f32 %v3158, %v3368
    %v3512 = vxor.u32 %v3511, 2147483648
    %v3513 = vmul.f32 %v3512, 1.442695
    %v3514 = vpow.pop %v3513
    %v3515 = vadd.f32 %v3514, 1.0
    %v3516 = vrcp.pop %v3515
    %v3517 = vmul.f32 1.0, %v3516
    %v3518 = vadd.f32 %v3228, %v3438
    %v3519 = vxor.u32 %v3518, 2147483648
    %v3520 = vmul.f32 %v3519, 1.442695
    %v3521 = vpow.pop %v3520
    %v3522 = vadd.f32 %v3521, 1.0
    %v3523 = vrcp.pop %v3522
    %v3524 = vmul.f32 1.0, %v3523
    %v3525 = vmul.f32 %v3517, %v3508
    %v3526 = vadd.f32 %v3298, %v3525
    %v3527 = vtanh.pop %v3526
    %v3528 = vsub.f32 1.0, %v3524
    %v3529 = vmul.f32 %v3528, %v3527
    %v3530 = vmul.f32 %v3524, %v2761
    %v3531 = vadd.f32 %v3529, %v3530
    %v3533 = vsel %vm522, %v3531, 0
    %3535 = vmatprep.subr.mxu0 0.0
    %3536 = vmatpush1.msra.mxu0 %v471
    %3537 = vmatprep.subr.mxu0 0.0
    %3538 = vmatpush1.msra.mxu0 %v472
    %3539 = vmatprep.subr.mxu0 0.0
    %3540 = vmatpush1.msra.mxu0 %v473
    %3541 = vmatprep.subr.mxu0 0.0
    %3542 = vmatpush1.msra.mxu0 %v474
    %3543 = vmatprep.subr.mxu0 0.0
    %3544 = vmatpush1.msra.mxu0 0.0
    %3545 = vmatprep.subr.mxu0 0.0
    %3546 = vmatpush1.msra.mxu0 0.0
    %3547 = vmatprep.subr.mxu0 0.0
    %3548 = vmatpush1.msra.mxu0 0.0
    %3549 = vmatprep.subr.mxu0 0.0
    %3550 = vmatpush1.msra.mxu0 0.0
    %3551 = vmatprep.subr.mxu0 0.0
    %3552 = vmatpush1.msra.mxu0 0.0
    %3553 = vmatprep.subr.mxu0 0.0
    %3554 = vmatpush1.msra.mxu0 0.0
    %3555 = vmatprep.subr.mxu0 0.0
    %3556 = vmatpush1.msra.mxu0 0.0
    %3557 = vmatprep.subr.mxu0 0.0
    %3558 = vmatpush1.msra.mxu0 0.0
    %3559 = vmatprep.subr.mxu0 0.0
    %3560 = vmatpush1.msra.mxu0 0.0
    %3561 = vmatprep.subr.mxu0 0.0
    %3562 = vmatpush1.msra.mxu0 0.0
    %3563 = vmatprep.subr.mxu0 0.0
    %3564 = vmatpush1.msra.mxu0 0.0
    %3565 = vmatprep.subr.mxu0 0.0
    %3566 = vmatpush1.msra.mxu0 0.0
    %3567 = vmatprep.subr.mxu0 0.0
    %3568 = vmatpush1.msra.mxu0 0.0
    %3569 = vmatprep.subr.mxu0 0.0
    %3570 = vmatpush1.msra.mxu0 0.0
    %3571 = vmatprep.subr.mxu0 0.0
    %3572 = vmatpush1.msra.mxu0 0.0
    %3573 = vmatprep.subr.mxu0 0.0
    %3574 = vmatpush1.msra.mxu0 0.0
    %3575 = vmatprep.subr.mxu0 0.0
    %3576 = vmatpush1.msra.mxu0 0.0
    %3577 = vmatprep.subr.mxu0 0.0
    %3578 = vmatpush1.msra.mxu0 0.0
    %3579 = vmatprep.subr.mxu0 0.0
    %3580 = vmatpush1.msra.mxu0 0.0
    %3581 = vmatprep.subr.mxu0 0.0
    %3582 = vmatpush1.msra.mxu0 0.0
    %3583 = vmatprep.subr.mxu0 0.0
    %3584 = vmatpush1.msra.mxu0 0.0
    %3585 = vmatprep.subr.mxu0 0.0
    %3586 = vmatpush1.msra.mxu0 0.0
    %3587 = vmatprep.subr.mxu0 0.0
    %3588 = vmatpush1.msra.mxu0 0.0
    %3589 = vmatprep.subr.mxu0 0.0
    %3590 = vmatpush1.msra.mxu0 0.0
    %3591 = vmatprep.subr.mxu0 0.0
    %3592 = vmatpush1.msra.mxu0 0.0
    %3593 = vmatprep.subr.mxu0 0.0
    %3594 = vmatpush1.msra.mxu0 0.0
    %3595 = vmatprep.subr.mxu0 0.0
    %3596 = vmatpush1.msra.mxu0 0.0
    %3597 = vmatprep.subr.mxu0 0.0
    %3598 = vmatpush1.msra.mxu0 0.0
    %3599 = vmatprep.mubr.f32.mxu0 0.0
    %3600 = vmatmul.mubr.f32.gmra.mrb[0].mxu0 %v3533
    %v3601 = vpop.f32.mrb[0].mxu0
    %v3602 = vadd.f32 %v475, %v3601
    %v3603 = vpop.f32.mrb[0].mxu0
    %3604 = vdwg.mxu0
    %v3605 = vsel %vm503, %v3602, -inf
    %3606 = vmax.xlane.f32.xlu0 %v3605
    %v3607 = vpop.xlane.xlu0 %3606
    %v3608 = vsub.f32 %v3602, %v3607
    %v3609 = vmul.f32 %v3608, 1.442695
    %v3610 = vpow.pop %v3609
    %v3611 = vsel %vm503, %v3610, 0.0
    %3612 = vadd.xlane.f32.xlu0 %v3611
    %v3613 = vpop.xlane.xlu0 %3612
    %v3614 = vlog2.pop %v3613
    %v3615 = vmul.f32 %v3614, 0.6931472
    %v3616 = vadd.f32 %v3615, %v3607
    %v3617 = vsub.f32 %v3602, %v3616
    %3618 = vst [vmem:[#allocation39 + $0x1] sm:$0x1] %v3617
    %3619 = vmatprep.subr.mxu0 0.0
    %3620 = vmatpush1.msra.mxu0 %v433
    %3621 = vmatprep.subr.mxu0 0.0
    %3622 = vmatpush1.msra.mxu0 %v434
    %3623 = vmatprep.subr.mxu0 0.0
    %3624 = vmatpush1.msra.mxu0 %v435
    %3625 = vmatprep.subr.mxu0 0.0
    %3626 = vmatpush1.msra.mxu0 %v436
    %3627 = vmatprep.subr.mxu0 0.0
    %3628 = vmatpush1.msra.mxu0 0.0
    %3629 = vmatprep.subr.mxu0 0.0
    %3630 = vmatpush1.msra.mxu0 0.0
    %3631 = vmatprep.subr.mxu0 0.0
    %3632 = vmatpush1.msra.mxu0 0.0
    %3633 = vmatprep.subr.mxu0 0.0
    %3634 = vmatpush1.msra.mxu0 0.0
    %3635 = vmatprep.subr.mxu0 0.0
    %3636 = vmatpush1.msra.mxu0 0.0
    %3637 = vmatprep.subr.mxu0 0.0
    %3638 = vmatpush1.msra.mxu0 0.0
    %3639 = vmatprep.subr.mxu0 0.0
    %3640 = vmatpush1.msra.mxu0 0.0
    %3641 = vmatprep.subr.mxu0 0.0
    %3642 = vmatpush1.msra.mxu0 0.0
    %3643 = vmatprep.subr.mxu0 0.0
    %3644 = vmatpush1.msra.mxu0 0.0
    %3645 = vmatprep.subr.mxu0 0.0
    %3646 = vmatpush1.msra.mxu0 0.0
    %3647 = vmatprep.subr.mxu0 0.0
    %3648 = vmatpush1.msra.mxu0 0.0
    %3649 = vmatprep.subr.mxu0 0.0
    %3650 = vmatpush1.msra.mxu0 0.0
    %3651 = vmatprep.subr.mxu0 0.0
    %3652 = vmatpush1.msra.mxu0 0.0
    %3653 = vmatprep.subr.mxu0 0.0
    %3654 = vmatpush1.msra.mxu0 0.0
    %3655 = vmatprep.subr.mxu0 0.0
    %3656 = vmatpush1.msra.mxu0 0.0
    %3657 = vmatprep.subr.mxu0 0.0
    %3658 = vmatpush1.msra.mxu0 0.0
    %3659 = vmatprep.subr.mxu0 0.0
    %3660 = vmatpush1.msra.mxu0 0.0
    %3661 = vmatprep.subr.mxu0 0.0
    %3662 = vmatpush1.msra.mxu0 0.0
    %3663 = vmatprep.subr.mxu0 0.0
    %3664 = vmatpush1.msra.mxu0 0.0
    %3665 = vmatprep.subr.mxu0 0.0
    %3666 = vmatpush1.msra.mxu0 0.0
    %3667 = vmatprep.subr.mxu0 0.0
    %3668 = vmatpush1.msra.mxu0 0.0
    %3669 = vmatprep.subr.mxu0 0.0
    %3670 = vmatpush1.msra.mxu0 0.0
    %3671 = vmatprep.subr.mxu0 0.0
    %3672 = vmatpush1.msra.mxu0 0.0
    %3673 = vmatprep.subr.mxu0 0.0
    %3674 = vmatpush1.msra.mxu0 0.0
    %3675 = vmatprep.subr.mxu0 0.0
    %3676 = vmatpush1.msra.mxu0 0.0
    %3677 = vmatprep.subr.mxu0 0.0
    %3678 = vmatpush1.msra.mxu0 0.0
    %3679 = vmatprep.subr.mxu0 0.0
    %3680 = vmatpush1.msra.mxu0 0.0
    %3681 = vmatprep.subr.mxu0 0.0
    %3682 = vmatpush1.msra.mxu0 0.0
    %3683 = vmatprep.mubr.f32.mxu0 0.0
    %3684 = vmatmul.mubr.f32.gmra.mrb[0].mxu0 %v3533
    %v3685 = vpop.f32.mrb[0].mxu0
    %v3686 = vadd.f32 0.0, %v3685
    %v3687 = vpop.f32.mrb[0].mxu0
    %3688 = vdwg.mxu0
    %v3690 = vrot.slane %v3686, 6
    %v3692 = vadd.f32 %v1989, %v3690
    %vm3693 = vcmask 34818
    %v3694 = vsel %vm3693, %v3692, -inf
    %3695 = vmax.xlane.f32.xlu0 %v3694
    %v3696 = vpop.xlane.xlu0 %3695
    %v3697 = vsub.f32 %v3692, %v3696
    %v3698 = vmul.f32 %v3697, 1.442695
    %v3699 = vpow.pop %v3698
    %v3700 = vsel %vm3693, %v3699, 0.0
    %3701 = vadd.xlane.f32.xlu0 %v3700
    %v3702 = vpop.xlane.xlu0 %3701
    %v3703 = vrcp.pop %v3702
    %v3704 = vmul.f32 %v3699, %v3703
    %v3706 = vrot.slane %v3704, 2
    %v3707 = vsel %vm2165, %v3706, 0
    %3709 = vmatprep.subr.mxu0 0.0
    %3710 = vmatpush1.msra.mxu0 %v2170
    %3711 = vmatprep.subr.mxu0 0.0
    %3712 = vmatpush1.msra.mxu0 0.0
    %3713 = vmatprep.subr.mxu0 0.0
    %3714 = vmatpush1.msra.mxu0 0.0
    %3715 = vmatprep.subr.mxu0 0.0
    %3716 = vmatpush1.msra.mxu0 0.0
    %3717 = vmatprep.subr.mxu0 0.0
    %3718 = vmatpush1.msra.mxu0 0.0
    %3719 = vmatprep.subr.mxu0 0.0
    %3720 = vmatpush1.msra.mxu0 0.0
    %3721 = vmatprep.subr.mxu0 0.0
    %3722 = vmatpush1.msra.mxu0 0.0
    %3723 = vmatprep.subr.mxu0 0.0
    %3724 = vmatpush1.msra.mxu0 0.0
    %3725 = vmatprep.subr.mxu0 0.0
    %3726 = vmatpush1.msra.mxu0 0.0
    %3727 = vmatprep.subr.mxu0 0.0
    %3728 = vmatpush1.msra.mxu0 0.0
    %3729 = vmatprep.subr.mxu0 0.0
    %3730 = vmatpush1.msra.mxu0 0.0
    %3731 = vmatprep.subr.mxu0 0.0
    %3732 = vmatpush1.msra.mxu0 0.0
    %3733 = vmatprep.subr.mxu0 0.0
    %3734 = vmatpush1.msra.mxu0 0.0
    %3735 = vmatprep.subr.mxu0 0.0
    %3736 = vmatpush1.msra.mxu0 0.0
    %3737 = vmatprep.subr.mxu0 0.0
    %3738 = vmatpush1.msra.mxu0 0.0
    %3739 = vmatprep.subr.mxu0 0.0
    %3740 = vmatpush1.msra.mxu0 0.0
    %3741 = vmatprep.subr.mxu0 0.0
    %3742 = vmatpush1.msra.mxu0 0.0
    %3743 = vmatprep.subr.mxu0 0.0
    %3744 = vmatpush1.msra.mxu0 0.0
    %3745 = vmatprep.subr.mxu0 0.0
    %3746 = vmatpush1.msra.mxu0 0.0
    %3747 = vmatprep.subr.mxu0 0.0
    %3748 = vmatpush1.msra.mxu0 0.0
    %3749 = vmatprep.subr.mxu0 0.0
    %3750 = vmatpush1.msra.mxu0 0.0
    %3751 = vmatprep.subr.mxu0 0.0
    %3752 = vmatpush1.msra.mxu0 0.0
    %3753 = vmatprep.subr.mxu0 0.0
    %3754 = vmatpush1.msra.mxu0 0.0
    %3755 = vmatprep.subr.mxu0 0.0
    %3756 = vmatpush1.msra.mxu0 0.0
    %3757 = vmatprep.subr.mxu0 0.0
    %3758 = vmatpush1.msra.mxu0 0.0
    %3759 = vmatprep.subr.mxu0 0.0
    %3760 = vmatpush1.msra.mxu0 0.0
    %3761 = vmatprep.subr.mxu0 0.0
    %3762 = vmatpush1.msra.mxu0 0.0
    %3763 = vmatprep.subr.mxu0 0.0
    %3764 = vmatpush1.msra.mxu0 0.0
    %3765 = vmatprep.subr.mxu0 0.0
    %3766 = vmatpush1.msra.mxu0 0.0
    %3767 = vmatprep.subr.mxu0 0.0
    %3768 = vmatpush1.msra.mxu0 0.0
    %3769 = vmatprep.subr.mxu0 0.0
    %3770 = vmatpush1.msra.mxu0 0.0
    %3771 = vmatprep.subr.mxu0 0.0
    %3772 = vmatpush1.msra.mxu0 0.0
    %3773 = vmatprep.mubr.f32.mxu0 0.0
    %3774 = vmatmul.mubr.f32.gmra.mrb[0].mxu0 %v3707
    %v3775 = vpop.f32.mrb[0].mxu0
    %v3776 = vadd.f32 0.0, %v3775
    %v3777 = vpop.f32.mrb[0].mxu0
    %3778 = vdwg.mxu0
    %v3780 = vsel %vm522, %v3776, 0
    %3782 = vmatprep.subr.mxu0 0.0
    %3783 = vmatpush1.msra.mxu0 %v437
    %3784 = vmatprep.subr.mxu0 0.0
    %3785 = vmatpush1.msra.mxu0 %v438
    %3786 = vmatprep.subr.mxu0 0.0
    %3787 = vmatpush1.msra.mxu0 %v439
    %3788 = vmatprep.subr.mxu0 0.0
    %3789 = vmatpush1.msra.mxu0 %v440
    %3790 = vmatprep.subr.mxu0 0.0
    %3791 = vmatpush1.msra.mxu0 0.0
    %3792 = vmatprep.subr.mxu0 0.0
    %3793 = vmatpush1.msra.mxu0 0.0
    %3794 = vmatprep.subr.mxu0 0.0
    %3795 = vmatpush1.msra.mxu0 0.0
    %3796 = vmatprep.subr.mxu0 0.0
    %3797 = vmatpush1.msra.mxu0 0.0
    %3798 = vmatprep.subr.mxu0 0.0
    %3799 = vmatpush1.msra.mxu0 0.0
    %3800 = vmatprep.subr.mxu0 0.0
    %3801 = vmatpush1.msra.mxu0 0.0
    %3802 = vmatprep.subr.mxu0 0.0
    %3803 = vmatpush1.msra.mxu0 0.0
    %3804 = vmatprep.subr.mxu0 0.0
    %3805 = vmatpush1.msra.mxu0 0.0
    %3806 = vmatprep.subr.mxu0 0.0
    %3807 = vmatpush1.msra.mxu0 0.0
    %3808 = vmatprep.subr.mxu0 0.0
    %3809 = vmatpush1.msra.mxu0 0.0
    %3810 = vmatprep.subr.mxu0 0.0
    %3811 = vmatpush1.msra.mxu0 0.0
    %3812 = vmatprep.subr.mxu0 0.0
    %3813 = vmatpush1.msra.mxu0 0.0
    %3814 = vmatprep.subr.mxu0 0.0
    %3815 = vmatpush1.msra.mxu0 0.0
    %3816 = vmatprep.subr.mxu0 0.0
    %3817 = vmatpush1.msra.mxu0 0.0
    %3818 = vmatprep.subr.mxu0 0.0
    %3819 = vmatpush1.msra.mxu0 0.0
    %3820 = vmatprep.subr.mxu0 0.0
    %3821 = vmatpush1.msra.mxu0 0.0
    %3822 = vmatprep.subr.mxu0 0.0
    %3823 = vmatpush1.msra.mxu0 0.0
    %3824 = vmatprep.subr.mxu0 0.0
    %3825 = vmatpush1.msra.mxu0 0.0
    %3826 = vmatprep.subr.mxu0 0.0
    %3827 = vmatpush1.msra.mxu0 0.0
    %3828 = vmatprep.subr.mxu0 0.0
    %3829 = vmatpush1.msra.mxu0 0.0
    %3830 = vmatprep.subr.mxu0 0.0
    %3831 = vmatpush1.msra.mxu0 0.0
    %3832 = vmatprep.subr.mxu0 0.0
    %3833 = vmatpush1.msra.mxu0 0.0
    %3834 = vmatprep.subr.mxu0 0.0
    %3835 = vmatpush1.msra.mxu0 0.0
    %3836 = vmatprep.subr.mxu0 0.0
    %3837 = vmatpush1.msra.mxu0 0.0
    %3838 = vmatprep.subr.mxu0 0.0
    %3839 = vmatpush1.msra.mxu0 0.0
    %3840 = vmatprep.subr.mxu0 0.0
    %3841 = vmatpush1.msra.mxu0 0.0
    %3842 = vmatprep.subr.mxu0 0.0
    %3843 = vmatpush1.msra.mxu0 0.0
    %3844 = vmatprep.subr.mxu0 0.0
    %3845 = vmatpush1.msra.mxu0 0.0
    %3846 = vmatprep.mubr.f32.mxu0 0.0
    %3847 = vmatmul.mubr.f32.gmra.mrb[0].mxu0 %v3780
    %v3848 = vpop.f32.mrb[0].mxu0
    %v3849 = vadd.f32 0.0, %v3848
    %v3850 = vpop.f32.mrb[0].mxu0
    %3851 = vdwg.mxu0
    %v3853 = vrot.slane %v3849, 6
    %v3855 = vadd.f32 %v2070, %v3853
    %v3856 = vmax.f32 %v3855, 0.0
    %v3858 = vrot.slane %v3856, 2
    %v3859 = vsel %vm522, %v3858, 0
    %3861 = vmatprep.subr.mxu0 0.0
    %3862 = vmatpush1.msra.mxu0 %v441
    %3863 = vmatprep.subr.mxu0 0.0
    %3864 = vmatpush1.msra.mxu0 %v442
    %3865 = vmatprep.subr.mxu0 0.0
    %3866 = vmatpush1.msra.mxu0 %v443
    %3867 = vmatprep.subr.mxu0 0.0
    %3868 = vmatpush1.msra.mxu0 %v444
    %3869 = vmatprep.subr.mxu0 0.0
    %3870 = vmatpush1.msra.mxu0 0.0
    %3871 = vmatprep.subr.mxu0 0.0
    %3872 = vmatpush1.msra.mxu0 0.0
    %3873 = vmatprep.subr.mxu0 0.0
    %3874 = vmatpush1.msra.mxu0 0.0
    %3875 = vmatprep.subr.mxu0 0.0
    %3876 = vmatpush1.msra.mxu0 0.0
    %3877 = vmatprep.subr.mxu0 0.0
    %3878 = vmatpush1.msra.mxu0 0.0
    %3879 = vmatprep.subr.mxu0 0.0
    %3880 = vmatpush1.msra.mxu0 0.0
    %3881 = vmatprep.subr.mxu0 0.0
    %3882 = vmatpush1.msra.mxu0 0.0
    %3883 = vmatprep.subr.mxu0 0.0
    %3884 = vmatpush1.msra.mxu0 0.0
    %3885 = vmatprep.subr.mxu0 0.0
    %3886 = vmatpush1.msra.mxu0 0.0
    %3887 = vmatprep.subr.mxu0 0.0
    %3888 = vmatpush1.msra.mxu0 0.0
    %3889 = vmatprep.subr.mxu0 0.0
    %3890 = vmatpush1.msra.mxu0 0.0
    %3891 = vmatprep.subr.mxu0 0.0
    %3892 = vmatpush1.msra.mxu0 0.0
    %3893 = vmatprep.subr.mxu0 0.0
    %3894 = vmatpush1.msra.mxu0 0.0
    %3895 = vmatprep.subr.mxu0 0.0
    %3896 = vmatpush1.msra.mxu0 0.0
    %3897 = vmatprep.subr.mxu0 0.0
    %3898 = vmatpush1.msra.mxu0 0.0
    %3899 = vmatprep.subr.mxu0 0.0
    %3900 = vmatpush1.msra.mxu0 0.0
    %3901 = vmatprep.subr.mxu0 0.0
    %3902 = vmatpush1.msra.mxu0 0.0
    %3903 = vmatprep.subr.mxu0 0.0
    %3904 = vmatpush1.msra.mxu0 0.0
    %3905 = vmatprep.subr.mxu0 0.0
    %3906 = vmatpush1.msra.mxu0 0.0
    %3907 = vmatprep.subr.mxu0 0.0
    %3908 = vmatpush1.msra.mxu0 0.0
    %3909 = vmatprep.subr.mxu0 0.0
    %3910 = vmatpush1.msra.mxu0 0.0
    %3911 = vmatprep.subr.mxu0 0.0
    %3912 = vmatpush1.msra.mxu0 0.0
    %3913 = vmatprep.subr.mxu0 0.0
    %3914 = vmatpush1.msra.mxu0 0.0
    %3915 = vmatprep.subr.mxu0 0.0
    %3916 = vmatpush1.msra.mxu0 0.0
    %3917 = vmatprep.subr.mxu0 0.0
    %3918 = vmatpush1.msra.mxu0 0.0
    %3919 = vmatprep.subr.mxu0 0.0
    %3920 = vmatpush1.msra.mxu0 0.0
    %3921 = vmatprep.subr.mxu0 0.0
    %3922 = vmatpush1.msra.mxu0 0.0
    %3923 = vmatprep.subr.mxu0 0.0
    %3924 = vmatpush1.msra.mxu0 0.0
    %3925 = vmatprep.mubr.f32.mxu0 0.0
    %3926 = vmatmul.mubr.f32.gmra.mrb[0].mxu0 %v3859
    %v3927 = vpop.f32.mrb[0].mxu0
    %v3928 = vadd.f32 %v453, %v3927
    %v3929 = vpop.f32.mrb[0].mxu0
    %3930 = vdwg.mxu0
    %3931 = vmatprep.subr.mxu0 0.0
    %3932 = vmatpush1.msra.mxu0 %v445
    %3933 = vmatprep.subr.mxu0 0.0
    %3934 = vmatpush1.msra.mxu0 %v446
    %3935 = vmatprep.subr.mxu0 0.0
    %3936 = vmatpush1.msra.mxu0 %v447
    %3937 = vmatprep.subr.mxu0 0.0
    %3938 = vmatpush1.msra.mxu0 %v448
    %3939 = vmatprep.subr.mxu0 0.0
    %3940 = vmatpush1.msra.mxu0 0.0
    %3941 = vmatprep.subr.mxu0 0.0
    %3942 = vmatpush1.msra.mxu0 0.0
    %3943 = vmatprep.subr.mxu0 0.0
    %3944 = vmatpush1.msra.mxu0 0.0
    %3945 = vmatprep.subr.mxu0 0.0
    %3946 = vmatpush1.msra.mxu0 0.0
    %3947 = vmatprep.subr.mxu0 0.0
    %3948 = vmatpush1.msra.mxu0 0.0
    %3949 = vmatprep.subr.mxu0 0.0
    %3950 = vmatpush1.msra.mxu0 0.0
    %3951 = vmatprep.subr.mxu0 0.0
    %3952 = vmatpush1.msra.mxu0 0.0
    %3953 = vmatprep.subr.mxu0 0.0
    %3954 = vmatpush1.msra.mxu0 0.0
    %3955 = vmatprep.subr.mxu0 0.0
    %3956 = vmatpush1.msra.mxu0 0.0
    %3957 = vmatprep.subr.mxu0 0.0
    %3958 = vmatpush1.msra.mxu0 0.0
    %3959 = vmatprep.subr.mxu0 0.0
    %3960 = vmatpush1.msra.mxu0 0.0
    %3961 = vmatprep.subr.mxu0 0.0
    %3962 = vmatpush1.msra.mxu0 0.0
    %3963 = vmatprep.subr.mxu0 0.0
    %3964 = vmatpush1.msra.mxu0 0.0
    %3965 = vmatprep.subr.mxu0 0.0
    %3966 = vmatpush1.msra.mxu0 0.0
    %3967 = vmatprep.subr.mxu0 0.0
    %3968 = vmatpush1.msra.mxu0 0.0
    %3969 = vmatprep.subr.mxu0 0.0
    %3970 = vmatpush1.msra.mxu0 0.0
    %3971 = vmatprep.subr.mxu0 0.0
    %3972 = vmatpush1.msra.mxu0 0.0
    %3973 = vmatprep.subr.mxu0 0.0
    %3974 = vmatpush1.msra.mxu0 0.0
    %3975 = vmatprep.subr.mxu0 0.0
    %3976 = vmatpush1.msra.mxu0 0.0
    %3977 = vmatprep.subr.mxu0 0.0
    %3978 = vmatpush1.msra.mxu0 0.0
    %3979 = vmatprep.subr.mxu0 0.0
    %3980 = vmatpush1.msra.mxu0 0.0
    %3981 = vmatprep.subr.mxu0 0.0
    %3982 = vmatpush1.msra.mxu0 0.0
    %3983 = vmatprep.subr.mxu0 0.0
    %3984 = vmatpush1.msra.mxu0 0.0
    %3985 = vmatprep.subr.mxu0 0.0
    %3986 = vmatpush1.msra.mxu0 0.0
    %3987 = vmatprep.subr.mxu0 0.0
    %3988 = vmatpush1.msra.mxu0 0.0
    %3989 = vmatprep.subr.mxu0 0.0
    %3990 = vmatpush1.msra.mxu0 0.0
    %3991 = vmatprep.subr.mxu0 0.0
    %3992 = vmatpush1.msra.mxu0 0.0
    %3993 = vmatprep.subr.mxu0 0.0
    %3994 = vmatpush1.msra.mxu0 0.0
    %3995 = vmatprep.mubr.f32.mxu0 0.0
    %3996 = vmatmul.mubr.f32.gmra.mrb[0].mxu0 %v3859
    %v3997 = vpop.f32.mrb[0].mxu0
    %v3998 = vadd.f32 %v454, %v3997
    %v3999 = vpop.f32.mrb[0].mxu0
    %4000 = vdwg.mxu0
    %4001 = vmatprep.subr.mxu0 0.0
    %4002 = vmatpush1.msra.mxu0 %v449
    %4003 = vmatprep.subr.mxu0 0.0
    %4004 = vmatpush1.msra.mxu0 %v450
    %4005 = vmatprep.subr.mxu0 0.0
    %4006 = vmatpush1.msra.mxu0 %v451
    %4007 = vmatprep.subr.mxu0 0.0
    %4008 = vmatpush1.msra.mxu0 %v452
    %4009 = vmatprep.subr.mxu0 0.0
    %4010 = vmatpush1.msra.mxu0 0.0
    %4011 = vmatprep.subr.mxu0 0.0
    %4012 = vmatpush1.msra.mxu0 0.0
    %4013 = vmatprep.subr.mxu0 0.0
    %4014 = vmatpush1.msra.mxu0 0.0
    %4015 = vmatprep.subr.mxu0 0.0
    %4016 = vmatpush1.msra.mxu0 0.0
    %4017 = vmatprep.subr.mxu0 0.0
    %4018 = vmatpush1.msra.mxu0 0.0
    %4019 = vmatprep.subr.mxu0 0.0
    %4020 = vmatpush1.msra.mxu0 0.0
    %4021 = vmatprep.subr.mxu0 0.0
    %4022 = vmatpush1.msra.mxu0 0.0
    %4023 = vmatprep.subr.mxu0 0.0
    %4024 = vmatpush1.msra.mxu0 0.0
    %4025 = vmatprep.subr.mxu0 0.0
    %4026 = vmatpush1.msra.mxu0 0.0
    %4027 = vmatprep.subr.mxu0 0.0
    %4028 = vmatpush1.msra.mxu0 0.0
    %4029 = vmatprep.subr.mxu0 0.0
    %4030 = vmatpush1.msra.mxu0 0.0
    %4031 = vmatprep.subr.mxu0 0.0
    %4032 = vmatpush1.msra.mxu0 0.0
    %4033 = vmatprep.subr.mxu0 0.0
    %4034 = vmatpush1.msra.mxu0 0.0
    %4035 = vmatprep.subr.mxu0 0.0
    %4036 = vmatpush1.msra.mxu0 0.0
    %4037 = vmatprep.subr.mxu0 0.0
    %4038 = vmatpush1.msra.mxu0 0.0
    %4039 = vmatprep.subr.mxu0 0.0
    %4040 = vmatpush1.msra.mxu0 0.0
    %4041 = vmatprep.subr.mxu0 0.0
    %4042 = vmatpush1.msra.mxu0 0.0
    %4043 = vmatprep.subr.mxu0 0.0
    %4044 = vmatpush1.msra.mxu0 0.0
    %4045 = vmatprep.subr.mxu0 0.0
    %4046 = vmatpush1.msra.mxu0 0.0
    %4047 = vmatprep.subr.mxu0 0.0
    %4048 = vmatpush1.msra.mxu0 0.0
    %4049 = vmatprep.subr.mxu0 0.0
    %4050 = vmatpush1.msra.mxu0 0.0
    %4051 = vmatprep.subr.mxu0 0.0
    %4052 = vmatpush1.msra.mxu0 0.0
    %4053 = vmatprep.subr.mxu0 0.0
    %4054 = vmatpush1.msra.mxu0 0.0
    %4055 = vmatprep.subr.mxu0 0.0
    %4056 = vmatpush1.msra.mxu0 0.0
    %4057 = vmatprep.subr.mxu0 0.0
    %4058 = vmatpush1.msra.mxu0 0.0
    %4059 = vmatprep.subr.mxu0 0.0
    %4060 = vmatpush1.msra.mxu0 0.0
    %4061 = vmatprep.subr.mxu0 0.0
    %4062 = vmatpush1.msra.mxu0 0.0
    %4063 = vmatprep.subr.mxu0 0.0
    %4064 = vmatpush1.msra.mxu0 0.0
    %4065 = vmatprep.mubr.f32.mxu0 0.0
    %4066 = vmatmul.mubr.f32.gmra.mrb[0].mxu0 %v3859
    %v4067 = vpop.f32.mrb[0].mxu0
    %v4068 = vadd.f32 %v455, %v4067
    %v4069 = vpop.f32.mrb[0].mxu0
    %4070 = vdwg.mxu0
    %4071 = vmatprep.subr.mxu0 0.0
    %4072 = vmatpush1.msra.mxu0 %v456
    %4073 = vmatprep.subr.mxu0 0.0
    %4074 = vmatpush1.msra.mxu0 %v457
    %4075 = vmatprep.subr.mxu0 0.0
    %4076 = vmatpush1.msra.mxu0 %v458
    %4077 = vmatprep.subr.mxu0 0.0
    %4078 = vmatpush1.msra.mxu0 %v459
    %4079 = vmatprep.subr.mxu0 0.0
    %4080 = vmatpush1.msra.mxu0 0.0
    %4081 = vmatprep.subr.mxu0 0.0
    %4082 = vmatpush1.msra.mxu0 0.0
    %4083 = vmatprep.subr.mxu0 0.0
    %4084 = vmatpush1.msra.mxu0 0.0
    %4085 = vmatprep.subr.mxu0 0.0
    %4086 = vmatpush1.msra.mxu0 0.0
    %4087 = vmatprep.subr.mxu0 0.0
    %4088 = vmatpush1.msra.mxu0 0.0
    %4089 = vmatprep.subr.mxu0 0.0
    %4090 = vmatpush1.msra.mxu0 0.0
    %4091 = vmatprep.subr.mxu0 0.0
    %4092 = vmatpush1.msra.mxu0 0.0
    %4093 = vmatprep.subr.mxu0 0.0
    %4094 = vmatpush1.msra.mxu0 0.0
    %4095 = vmatprep.subr.mxu0 0.0
    %4096 = vmatpush1.msra.mxu0 0.0
    %4097 = vmatprep.subr.mxu0 0.0
    %4098 = vmatpush1.msra.mxu0 0.0
    %4099 = vmatprep.subr.mxu0 0.0
    %4100 = vmatpush1.msra.mxu0 0.0
    %4101 = vmatprep.subr.mxu0 0.0
    %4102 = vmatpush1.msra.mxu0 0.0
    %4103 = vmatprep.subr.mxu0 0.0
    %4104 = vmatpush1.msra.mxu0 0.0
    %4105 = vmatprep.subr.mxu0 0.0
    %4106 = vmatpush1.msra.mxu0 0.0
    %4107 = vmatprep.subr.mxu0 0.0
    %4108 = vmatpush1.msra.mxu0 0.0
    %4109 = vmatprep.subr.mxu0 0.0
    %4110 = vmatpush1.msra.mxu0 0.0
    %4111 = vmatprep.subr.mxu0 0.0
    %4112 = vmatpush1.msra.mxu0 0.0
    %4113 = vmatprep.subr.mxu0 0.0
    %4114 = vmatpush1.msra.mxu0 0.0
    %4115 = vmatprep.subr.mxu0 0.0
    %4116 = vmatpush1.msra.mxu0 0.0
    %4117 = vmatprep.subr.mxu0 0.0
    %4118 = vmatpush1.msra.mxu0 0.0
    %4119 = vmatprep.subr.mxu0 0.0
    %4120 = vmatpush1.msra.mxu0 0.0
    %4121 = vmatprep.subr.mxu0 0.0
    %4122 = vmatpush1.msra.mxu0 0.0
    %4123 = vmatprep.subr.mxu0 0.0
    %4124 = vmatpush1.msra.mxu0 0.0
    %4125 = vmatprep.subr.mxu0 0.0
    %4126 = vmatpush1.msra.mxu0 0.0
    %4127 = vmatprep.subr.mxu0 0.0
    %4128 = vmatpush1.msra.mxu0 0.0
    %4129 = vmatprep.subr.mxu0 0.0
    %4130 = vmatpush1.msra.mxu0 0.0
    %4131 = vmatprep.subr.mxu0 0.0
    %4132 = vmatpush1.msra.mxu0 0.0
    %4133 = vmatprep.subr.mxu0 0.0
    %4134 = vmatpush1.msra.mxu0 0.0
    %4135 = vmatprep.mubr.f32.mxu0 0.0
    %4136 = vmatmul.mubr.f32.gmra.mrb[0].mxu0 %v3533
    %v4137 = vpop.f32.mrb[0].mxu0
    %v4138 = vadd.f32 %v468, %v4137
    %v4139 = vpop.f32.mrb[0].mxu0
    %4140 = vdwg.mxu0
    %4141 = vmatprep.subr.mxu0 0.0
    %4142 = vmatpush1.msra.mxu0 %v460
    %4143 = vmatprep.subr.mxu0 0.0
    %4144 = vmatpush1.msra.mxu0 %v461
    %4145 = vmatprep.subr.mxu0 0.0
    %4146 = vmatpush1.msra.mxu0 %v462
    %4147 = vmatprep.subr.mxu0 0.0
    %4148 = vmatpush1.msra.mxu0 %v463
    %4149 = vmatprep.subr.mxu0 0.0
    %4150 = vmatpush1.msra.mxu0 0.0
    %4151 = vmatprep.subr.mxu0 0.0
    %4152 = vmatpush1.msra.mxu0 0.0
    %4153 = vmatprep.subr.mxu0 0.0
    %4154 = vmatpush1.msra.mxu0 0.0
    %4155 = vmatprep.subr.mxu0 0.0
    %4156 = vmatpush1.msra.mxu0 0.0
    %4157 = vmatprep.subr.mxu0 0.0
    %4158 = vmatpush1.msra.mxu0 0.0
    %4159 = vmatprep.subr.mxu0 0.0
    %4160 = vmatpush1.msra.mxu0 0.0
    %4161 = vmatprep.subr.mxu0 0.0
    %4162 = vmatpush1.msra.mxu0 0.0
    %4163 = vmatprep.subr.mxu0 0.0
    %4164 = vmatpush1.msra.mxu0 0.0
    %4165 = vmatprep.subr.mxu0 0.0
    %4166 = vmatpush1.msra.mxu0 0.0
    %4167 = vmatprep.subr.mxu0 0.0
    %4168 = vmatpush1.msra.mxu0 0.0
    %4169 = vmatprep.subr.mxu0 0.0
    %4170 = vmatpush1.msra.mxu0 0.0
    %4171 = vmatprep.subr.mxu0 0.0
    %4172 = vmatpush1.msra.mxu0 0.0
    %4173 = vmatprep.subr.mxu0 0.0
    %4174 = vmatpush1.msra.mxu0 0.0
    %4175 = vmatprep.subr.mxu0 0.0
    %4176 = vmatpush1.msra.mxu0 0.0
    %4177 = vmatprep.subr.mxu0 0.0
    %4178 = vmatpush1.msra.mxu0 0.0
    %4179 = vmatprep.subr.mxu0 0.0
    %4180 = vmatpush1.msra.mxu0 0.0
    %4181 = vmatprep.subr.mxu0 0.0
    %4182 = vmatpush1.msra.mxu0 0.0
    %4183 = vmatprep.subr.mxu0 0.0
    %4184 = vmatpush1.msra.mxu0 0.0
    %4185 = vmatprep.subr.mxu0 0.0
    %4186 = vmatpush1.msra.mxu0 0.0
    %4187 = vmatprep.subr.mxu0 0.0
    %4188 = vmatpush1.msra.mxu0 0.0
    %4189 = vmatprep.subr.mxu0 0.0
    %4190 = vmatpush1.msra.mxu0 0.0
    %4191 = vmatprep.subr.mxu0 0.0
    %4192 = vmatpush1.msra.mxu0 0.0
    %4193 = vmatprep.subr.mxu0 0.0
    %4194 = vmatpush1.msra.mxu0 0.0
    %4195 = vmatprep.subr.mxu0 0.0
    %4196 = vmatpush1.msra.mxu0 0.0
    %4197 = vmatprep.subr.mxu0 0.0
    %4198 = vmatpush1.msra.mxu0 0.0
    %4199 = vmatprep.subr.mxu0 0.0
    %4200 = vmatpush1.msra.mxu0 0.0
    %4201 = vmatprep.subr.mxu0 0.0
    %4202 = vmatpush1.msra.mxu0 0.0
    %4203 = vmatprep.subr.mxu0 0.0
    %4204 = vmatpush1.msra.mxu0 0.0
    %4205 = vmatprep.mubr.f32.mxu0 0.0
    %4206 = vmatmul.mubr.f32.gmra.mrb[0].mxu0 %v3533
    %v4207 = vpop.f32.mrb[0].mxu0
    %v4208 = vadd.f32 %v469, %v4207
    %v4209 = vpop.f32.mrb[0].mxu0
    %4210 = vdwg.mxu0
    %4211 = vmatprep.subr.mxu0 0.0
    %4212 = vmatpush1.msra.mxu0 %v464
    %4213 = vmatprep.subr.mxu0 0.0
    %4214 = vmatpush1.msra.mxu0 %v465
    %4215 = vmatprep.subr.mxu0 0.0
    %4216 = vmatpush1.msra.mxu0 %v466
    %4217 = vmatprep.subr.mxu0 0.0
    %4218 = vmatpush1.msra.mxu0 %v467
    %4219 = vmatprep.subr.mxu0 0.0
    %4220 = vmatpush1.msra.mxu0 0.0
    %4221 = vmatprep.subr.mxu0 0.0
    %4222 = vmatpush1.msra.mxu0 0.0
    %4223 = vmatprep.subr.mxu0 0.0
    %4224 = vmatpush1.msra.mxu0 0.0
    %4225 = vmatprep.subr.mxu0 0.0
    %4226 = vmatpush1.msra.mxu0 0.0
    %4227 = vmatprep.subr.mxu0 0.0
    %4228 = vmatpush1.msra.mxu0 0.0
    %4229 = vmatprep.subr.mxu0 0.0
    %4230 = vmatpush1.msra.mxu0 0.0
    %4231 = vmatprep.subr.mxu0 0.0
    %4232 = vmatpush1.msra.mxu0 0.0
    %4233 = vmatprep.subr.mxu0 0.0
    %4234 = vmatpush1.msra.mxu0 0.0
    %4235 = vmatprep.subr.mxu0 0.0
    %4236 = vmatpush1.msra.mxu0 0.0
    %4237 = vmatprep.subr.mxu0 0.0
    %4238 = vmatpush1.msra.mxu0 0.0
    %4239 = vmatprep.subr.mxu0 0.0
    %4240 = vmatpush1.msra.mxu0 0.0
    %4241 = vmatprep.subr.mxu0 0.0
    %4242 = vmatpush1.msra.mxu0 0.0
    %4243 = vmatprep.subr.mxu0 0.0
    %4244 = vmatpush1.msra.mxu0 0.0
    %4245 = vmatprep.subr.mxu0 0.0
    %4246 = vmatpush1.msra.mxu0 0.0
    %4247 = vmatprep.subr.mxu0 0.0
    %4248 = vmatpush1.msra.mxu0 0.0
    %4249 = vmatprep.subr.mxu0 0.0
    %4250 = vmatpush1.msra.mxu0 0.0
    %4251 = vmatprep.subr.mxu0 0.0
    %4252 = vmatpush1.msra.mxu0 0.0
    %4253 = vmatprep.subr.mxu0 0.0
    %4254 = vmatpush1.msra.mxu0 0.0
    %4255 = vmatprep.subr.mxu0 0.0
    %4256 = vmatpush1.msra.mxu0 0.0
    %4257 = vmatprep.subr.mxu0 0.0
    %4258 = vmatpush1.msra.mxu0 0.0
    %4259 = vmatprep.subr.mxu0 0.0
    %4260 = vmatpush1.msra.mxu0 0.0
    %4261 = vmatprep.subr.mxu0 0.0
    %4262 = vmatpush1.msra.mxu0 0.0
    %4263 = vmatprep.subr.mxu0 0.0
    %4264 = vmatpush1.msra.mxu0 0.0
    %4265 = vmatprep.subr.mxu0 0.0
    %4266 = vmatpush1.msra.mxu0 0.0
    %4267 = vmatprep.subr.mxu0 0.0
    %4268 = vmatpush1.msra.mxu0 0.0
    %4269 = vmatprep.subr.mxu0 0.0
    %4270 = vmatpush1.msra.mxu0 0.0
    %4271 = vmatprep.subr.mxu0 0.0
    %4272 = vmatpush1.msra.mxu0 0.0
    %4273 = vmatprep.subr.mxu0 0.0
    %4274 = vmatpush1.msra.mxu0 0.0
    %4275 = vmatprep.mubr.f32.mxu0 0.0
    %4276 = vmatmul.mubr.f32.gmra.mrb[0].mxu0 %v3533
    %v4277 = vpop.f32.mrb[0].mxu0
    %v4278 = vadd.f32 %v470, %v4277
    %v4279 = vpop.f32.mrb[0].mxu0
    %4280 = vdwg.mxu0
    %v4281 = vadd.f32 %v3928, %v4138
    %v4282 = vxor.u32 %v4281, 2147483648
    %v4283 = vmul.f32 %v4282, 1.442695
    %v4284 = vpow.pop %v4283
    %v4285 = vadd.f32 %v4284, 1.0
    %v4286 = vrcp.pop %v4285
    %v4287 = vmul.f32 1.0, %v4286
    %v4288 = vadd.f32 %v3998, %v4208
    %v4289 = vxor.u32 %v4288, 2147483648
    %v4290 = vmul.f32 %v4289, 1.442695
    %v4291 = vpow.pop %v4290
    %v4292 = vadd.f32 %v4291, 1.0
    %v4293 = vrcp.pop %v4292
    %v4294 = vmul.f32 1.0, %v4293
    %v4295 = vmul.f32 %v4287, %v4278
    %v4296 = vadd.f32 %v4068, %v4295
    %v4297 = vtanh.pop %v4296
    %v4298 = vsub.f32 1.0, %v4294
    %v4299 = vmul.f32 %v4298, %v4297
    %v4300 = vmul.f32 %v4294, %v3531
    %v4301 = vadd.f32 %v4299, %v4300
    %v4303 = vsel %vm522, %v4301, 0
    %4305 = vmatprep.subr.mxu0 0.0
    %4306 = vmatpush1.msra.mxu0 %v471
    %4307 = vmatprep.subr.mxu0 0.0
    %4308 = vmatpush1.msra.mxu0 %v472
    %4309 = vmatprep.subr.mxu0 0.0
    %4310 = vmatpush1.msra.mxu0 %v473
    %4311 = vmatprep.subr.mxu0 0.0
    %4312 = vmatpush1.msra.mxu0 %v474
    %4313 = vmatprep.subr.mxu0 0.0
    %4314 = vmatpush1.msra.mxu0 0.0
    %4315 = vmatprep.subr.mxu0 0.0
    %4316 = vmatpush1.msra.mxu0 0.0
    %4317 = vmatprep.subr.mxu0 0.0
    %4318 = vmatpush1.msra.mxu0 0.0
    %4319 = vmatprep.subr.mxu0 0.0
    %4320 = vmatpush1.msra.mxu0 0.0
    %4321 = vmatprep.subr.mxu0 0.0
    %4322 = vmatpush1.msra.mxu0 0.0
    %4323 = vmatprep.subr.mxu0 0.0
    %4324 = vmatpush1.msra.mxu0 0.0
    %4325 = vmatprep.subr.mxu0 0.0
    %4326 = vmatpush1.msra.mxu0 0.0
    %4327 = vmatprep.subr.mxu0 0.0
    %4328 = vmatpush1.msra.mxu0 0.0
    %4329 = vmatprep.subr.mxu0 0.0
    %4330 = vmatpush1.msra.mxu0 0.0
    %4331 = vmatprep.subr.mxu0 0.0
    %4332 = vmatpush1.msra.mxu0 0.0
    %4333 = vmatprep.subr.mxu0 0.0
    %4334 = vmatpush1.msra.mxu0 0.0
    %4335 = vmatprep.subr.mxu0 0.0
    %4336 = vmatpush1.msra.mxu0 0.0
    %4337 = vmatprep.subr.mxu0 0.0
    %4338 = vmatpush1.msra.mxu0 0.0
    %4339 = vmatprep.subr.mxu0 0.0
    %4340 = vmatpush1.msra.mxu0 0.0
    %4341 = vmatprep.subr.mxu0 0.0
    %4342 = vmatpush1.msra.mxu0 0.0
    %4343 = vmatprep.subr.mxu0 0.0
    %4344 = vmatpush1.msra.mxu0 0.0
    %4345 = vmatprep.subr.mxu0 0.0
    %4346 = vmatpush1.msra.mxu0 0.0
    %4347 = vmatprep.subr.mxu0 0.0
    %4348 = vmatpush1.msra.mxu0 0.0
    %4349 = vmatprep.subr.mxu0 0.0
    %4350 = vmatpush1.msra.mxu0 0.0
    %4351 = vmatprep.subr.mxu0 0.0
    %4352 = vmatpush1.msra.mxu0 0.0
    %4353 = vmatprep.subr.mxu0 0.0
    %4354 = vmatpush1.msra.mxu0 0.0
    %4355 = vmatprep.subr.mxu0 0.0
    %4356 = vmatpush1.msra.mxu0 0.0
    %4357 = vmatprep.subr.mxu0 0.0
    %4358 = vmatpush1.msra.mxu0 0.0
    %4359 = vmatprep.subr.mxu0 0.0
    %4360 = vmatpush1.msra.mxu0 0.0
    %4361 = vmatprep.subr.mxu0 0.0
    %4362 = vmatpush1.msra.mxu0 0.0
    %4363 = vmatprep.subr.mxu0 0.0
    %4364 = vmatpush1.msra.mxu0 0.0
    %4365 = vmatprep.subr.mxu0 0.0
    %4366 = vmatpush1.msra.mxu0 0.0
    %4367 = vmatprep.subr.mxu0 0.0
    %4368 = vmatpush1.msra.mxu0 0.0
    %4369 = vmatprep.mubr.f32.mxu0 0.0
    %4370 = vmatmul.mubr.f32.gmra.mrb[0].mxu0 %v4303
    %v4371 = vpop.f32.mrb[0].mxu0
    %v4372 = vadd.f32 %v475, %v4371
    %v4373 = vpop.f32.mrb[0].mxu0
    %4374 = vdwg.mxu0
    %v4375 = vsel %vm503, %v4372, -inf
    %4376 = vmax.xlane.f32.xlu0 %v4375
    %v4377 = vpop.xlane.xlu0 %4376
    %v4378 = vsub.f32 %v4372, %v4377
    %v4379 = vmul.f32 %v4378, 1.442695
    %v4380 = vpow.pop %v4379
    %v4381 = vsel %vm503, %v4380, 0.0
    %4382 = vadd.xlane.f32.xlu0 %v4381
    %v4383 = vpop.xlane.xlu0 %4382
    %v4384 = vlog2.pop %v4383
    %v4385 = vmul.f32 %v4384, 0.6931472
    %v4386 = vadd.f32 %v4385, %v4377
    %v4387 = vsub.f32 %v4372, %v4386
    %4388 = vst [vmem:[#allocation39 + $0x2] sm:$0x1] %v4387
    %4389 = vmatprep.subr.mxu0 0.0
    %4390 = vmatpush1.msra.mxu0 %v433
    %4391 = vmatprep.subr.mxu0 0.0
    %4392 = vmatpush1.msra.mxu0 %v434
    %4393 = vmatprep.subr.mxu0 0.0
    %4394 = vmatpush1.msra.mxu0 %v435
    %4395 = vmatprep.subr.mxu0 0.0
    %4396 = vmatpush1.msra.mxu0 %v436
    %4397 = vmatprep.subr.mxu0 0.0
    %4398 = vmatpush1.msra.mxu0 0.0
    %4399 = vmatprep.subr.mxu0 0.0
    %4400 = vmatpush1.msra.mxu0 0.0
    %4401 = vmatprep.subr.mxu0 0.0
    %4402 = vmatpush1.msra.mxu0 0.0
    %4403 = vmatprep.subr.mxu0 0.0
    %4404 = vmatpush1.msra.mxu0 0.0
    %4405 = vmatprep.subr.mxu0 0.0
    %4406 = vmatpush1.msra.mxu0 0.0
    %4407 = vmatprep.subr.mxu0 0.0
    %4408 = vmatpush1.msra.mxu0 0.0
    %4409 = vmatprep.subr.mxu0 0.0
    %4410 = vmatpush1.msra.mxu0 0.0
    %4411 = vmatprep.subr.mxu0 0.0
    %4412 = vmatpush1.msra.mxu0 0.0
    %4413 = vmatprep.subr.mxu0 0.0
    %4414 = vmatpush1.msra.mxu0 0.0
    %4415 = vmatprep.subr.mxu0 0.0
    %4416 = vmatpush1.msra.mxu0 0.0
    %4417 = vmatprep.subr.mxu0 0.0
    %4418 = vmatpush1.msra.mxu0 0.0
    %4419 = vmatprep.subr.mxu0 0.0
    %4420 = vmatpush1.msra.mxu0 0.0
    %4421 = vmatprep.subr.mxu0 0.0
    %4422 = vmatpush1.msra.mxu0 0.0
    %4423 = vmatprep.subr.mxu0 0.0
    %4424 = vmatpush1.msra.mxu0 0.0
    %4425 = vmatprep.subr.mxu0 0.0
    %4426 = vmatpush1.msra.mxu0 0.0
    %4427 = vmatprep.subr.mxu0 0.0
    %4428 = vmatpush1.msra.mxu0 0.0
    %4429 = vmatprep.subr.mxu0 0.0
    %4430 = vmatpush1.msra.mxu0 0.0
    %4431 = vmatprep.subr.mxu0 0.0
    %4432 = vmatpush1.msra.mxu0 0.0
    %4433 = vmatprep.subr.mxu0 0.0
    %4434 = vmatpush1.msra.mxu0 0.0
    %4435 = vmatprep.subr.mxu0 0.0
    %4436 = vmatpush1.msra.mxu0 0.0
    %4437 = vmatprep.subr.mxu0 0.0
    %4438 = vmatpush1.msra.mxu0 0.0
    %4439 = vmatprep.subr.mxu0 0.0
    %4440 = vmatpush1.msra.mxu0 0.0
    %4441 = vmatprep.subr.mxu0 0.0
    %4442 = vmatpush1.msra.mxu0 0.0
    %4443 = vmatprep.subr.mxu0 0.0
    %4444 = vmatpush1.msra.mxu0 0.0
    %4445 = vmatprep.subr.mxu0 0.0
    %4446 = vmatpush1.msra.mxu0 0.0
    %4447 = vmatprep.subr.mxu0 0.0
    %4448 = vmatpush1.msra.mxu0 0.0
    %4449 = vmatprep.subr.mxu0 0.0
    %4450 = vmatpush1.msra.mxu0 0.0
    %4451 = vmatprep.subr.mxu0 0.0
    %4452 = vmatpush1.msra.mxu0 0.0
    %4453 = vmatprep.mubr.f32.mxu0 0.0
    %4454 = vmatmul.mubr.f32.gmra.mrb[0].mxu0 %v4303
    %v4455 = vpop.f32.mrb[0].mxu0
    %v4456 = vadd.f32 0.0, %v4455
    %v4457 = vpop.f32.mrb[0].mxu0
    %4458 = vdwg.mxu0
    %v4460 = vrot.slane %v4456, 5
    %v4462 = vadd.f32 %v1989, %v4460
    %vm4463 = vcmask 35843
    %v4464 = vsel %vm4463, %v4462, -inf
    %4465 = vmax.xlane.f32.xlu0 %v4464
    %v4466 = vpop.xlane.xlu0 %4465
    %v4467 = vsub.f32 %v4462, %v4466
    %v4468 = vmul.f32 %v4467, 1.442695
    %v4469 = vpow.pop %v4468
    %v4470 = vsel %vm4463, %v4469, 0.0
    %4471 = vadd.xlane.f32.xlu0 %v4470
    %v4472 = vpop.xlane.xlu0 %4471
    %v4473 = vrcp.pop %v4472
    %v4474 = vmul.f32 %v4469, %v4473
    %v4476 = vrot.slane %v4474, 3
    %v4477 = vsel %vm2165, %v4476, 0
    %4479 = vmatprep.subr.mxu0 0.0
    %4480 = vmatpush1.msra.mxu0 %v2170
    %4481 = vmatprep.subr.mxu0 0.0
    %4482 = vmatpush1.msra.mxu0 0.0
    %4483 = vmatprep.subr.mxu0 0.0
    %4484 = vmatpush1.msra.mxu0 0.0
    %4485 = vmatprep.subr.mxu0 0.0
    %4486 = vmatpush1.msra.mxu0 0.0
    %4487 = vmatprep.subr.mxu0 0.0
    %4488 = vmatpush1.msra.mxu0 0.0
    %4489 = vmatprep.subr.mxu0 0.0
    %4490 = vmatpush1.msra.mxu0 0.0
    %4491 = vmatprep.subr.mxu0 0.0
    %4492 = vmatpush1.msra.mxu0 0.0
    %4493 = vmatprep.subr.mxu0 0.0
    %4494 = vmatpush1.msra.mxu0 0.0
    %4495 = vmatprep.subr.mxu0 0.0
    %4496 = vmatpush1.msra.mxu0 0.0
    %4497 = vmatprep.subr.mxu0 0.0
    %4498 = vmatpush1.msra.mxu0 0.0
    %4499 = vmatprep.subr.mxu0 0.0
    %4500 = vmatpush1.msra.mxu0 0.0
    %4501 = vmatprep.subr.mxu0 0.0
    %4502 = vmatpush1.msra.mxu0 0.0
    %4503 = vmatprep.subr.mxu0 0.0
    %4504 = vmatpush1.msra.mxu0 0.0
    %4505 = vmatprep.subr.mxu0 0.0
    %4506 = vmatpush1.msra.mxu0 0.0
    %4507 = vmatprep.subr.mxu0 0.0
    %4508 = vmatpush1.msra.mxu0 0.0
    %4509 = vmatprep.subr.mxu0 0.0
    %4510 = vmatpush1.msra.mxu0 0.0
    %4511 = vmatprep.subr.mxu0 0.0
    %4512 = vmatpush1.msra.mxu0 0.0
    %4513 = vmatprep.subr.mxu0 0.0
    %4514 = vmatpush1.msra.mxu0 0.0
    %4515 = vmatprep.subr.mxu0 0.0
    %4516 = vmatpush1.msra.mxu0 0.0
    %4517 = vmatprep.subr.mxu0 0.0
    %4518 = vmatpush1.msra.mxu0 0.0
    %4519 = vmatprep.subr.mxu0 0.0
    %4520 = vmatpush1.msra.mxu0 0.0
    %4521 = vmatprep.subr.mxu0 0.0
    %4522 = vmatpush1.msra.mxu0 0.0
    %4523 = vmatprep.subr.mxu0 0.0
    %4524 = vmatpush1.msra.mxu0 0.0
    %4525 = vmatprep.subr.mxu0 0.0
    %4526 = vmatpush1.msra.mxu0 0.0
    %4527 = vmatprep.subr.mxu0 0.0
    %4528 = vmatpush1.msra.mxu0 0.0
    %4529 = vmatprep.subr.mxu0 0.0
    %4530 = vmatpush1.msra.mxu0 0.0
    %4531 = vmatprep.subr.mxu0 0.0
    %4532 = vmatpush1.msra.mxu0 0.0
    %4533 = vmatprep.subr.mxu0 0.0
    %4534 = vmatpush1.msra.mxu0 0.0
    %4535 = vmatprep.subr.mxu0 0.0
    %4536 = vmatpush1.msra.mxu0 0.0
    %4537 = vmatprep.subr.mxu0 0.0
    %4538 = vmatpush1.msra.mxu0 0.0
    %4539 = vmatprep.subr.mxu0 0.0
    %4540 = vmatpush1.msra.mxu0 0.0
    %4541 = vmatprep.subr.mxu0 0.0
    %4542 = vmatpush1.msra.mxu0 0.0
    %4543 = vmatprep.mubr.f32.mxu0 0.0
    %4544 = vmatmul.mubr.f32.gmra.mrb[0].mxu0 %v4477
    %v4545 = vpop.f32.mrb[0].mxu0
    %v4546 = vadd.f32 0.0, %v4545
    %v4547 = vpop.f32.mrb[0].mxu0
    %4548 = vdwg.mxu0
    %v4550 = vsel %vm522, %v4546, 0
    %4552 = vmatprep.subr.mxu0 0.0
    %4553 = vmatpush1.msra.mxu0 %v437
    %4554 = vmatprep.subr.mxu0 0.0
    %4555 = vmatpush1.msra.mxu0 %v438
    %4556 = vmatprep.subr.mxu0 0.0
    %4557 = vmatpush1.msra.mxu0 %v439
    %4558 = vmatprep.subr.mxu0 0.0
    %4559 = vmatpush1.msra.mxu0 %v440
    %4560 = vmatprep.subr.mxu0 0.0
    %4561 = vmatpush1.msra.mxu0 0.0
    %4562 = vmatprep.subr.mxu0 0.0
    %4563 = vmatpush1.msra.mxu0 0.0
    %4564 = vmatprep.subr.mxu0 0.0
    %4565 = vmatpush1.msra.mxu0 0.0
    %4566 = vmatprep.subr.mxu0 0.0
    %4567 = vmatpush1.msra.mxu0 0.0
    %4568 = vmatprep.subr.mxu0 0.0
    %4569 = vmatpush1.msra.mxu0 0.0
    %4570 = vmatprep.subr.mxu0 0.0
    %4571 = vmatpush1.msra.mxu0 0.0
    %4572 = vmatprep.subr.mxu0 0.0
    %4573 = vmatpush1.msra.mxu0 0.0
    %4574 = vmatprep.subr.mxu0 0.0
    %4575 = vmatpush1.msra.mxu0 0.0
    %4576 = vmatprep.subr.mxu0 0.0
    %4577 = vmatpush1.msra.mxu0 0.0
    %4578 = vmatprep.subr.mxu0 0.0
    %4579 = vmatpush1.msra.mxu0 0.0
    %4580 = vmatprep.subr.mxu0 0.0
    %4581 = vmatpush1.msra.mxu0 0.0
    %4582 = vmatprep.subr.mxu0 0.0
    %4583 = vmatpush1.msra.mxu0 0.0
    %4584 = vmatprep.subr.mxu0 0.0
    %4585 = vmatpush1.msra.mxu0 0.0
    %4586 = vmatprep.subr.mxu0 0.0
    %4587 = vmatpush1.msra.mxu0 0.0
    %4588 = vmatprep.subr.mxu0 0.0
    %4589 = vmatpush1.msra.mxu0 0.0
    %4590 = vmatprep.subr.mxu0 0.0
    %4591 = vmatpush1.msra.mxu0 0.0
    %4592 = vmatprep.subr.mxu0 0.0
    %4593 = vmatpush1.msra.mxu0 0.0
    %4594 = vmatprep.subr.mxu0 0.0
    %4595 = vmatpush1.msra.mxu0 0.0
    %4596 = vmatprep.subr.mxu0 0.0
    %4597 = vmatpush1.msra.mxu0 0.0
    %4598 = vmatprep.subr.mxu0 0.0
    %4599 = vmatpush1.msra.mxu0 0.0
    %4600 = vmatprep.subr.mxu0 0.0
    %4601 = vmatpush1.msra.mxu0 0.0
    %4602 = vmatprep.subr.mxu0 0.0
    %4603 = vmatpush1.msra.mxu0 0.0
    %4604 = vmatprep.subr.mxu0 0.0
    %4605 = vmatpush1.msra.mxu0 0.0
    %4606 = vmatprep.subr.mxu0 0.0
    %4607 = vmatpush1.msra.mxu0 0.0
    %4608 = vmatprep.subr.mxu0 0.0
    %4609 = vmatpush1.msra.mxu0 0.0
    %4610 = vmatprep.subr.mxu0 0.0
    %4611 = vmatpush1.msra.mxu0 0.0
    %4612 = vmatprep.subr.mxu0 0.0
    %4613 = vmatpush1.msra.mxu0 0.0
    %4614 = vmatprep.subr.mxu0 0.0
    %4615 = vmatpush1.msra.mxu0 0.0
    %4616 = vmatprep.mubr.f32.mxu0 0.0
    %4617 = vmatmul.mubr.f32.gmra.mrb[0].mxu0 %v4550
    %v4618 = vpop.f32.mrb[0].mxu0
    %v4619 = vadd.f32 0.0, %v4618
    %v4620 = vpop.f32.mrb[0].mxu0
    %4621 = vdwg.mxu0
    %v4623 = vrot.slane %v4619, 5
    %v4625 = vadd.f32 %v2070, %v4623
    %v4626 = vmax.f32 %v4625, 0.0
    %v4628 = vrot.slane %v4626, 3
    %v4629 = vsel %vm522, %v4628, 0
    %4631 = vmatprep.subr.mxu0 0.0
    %4632 = vmatpush1.msra.mxu0 %v441
    %4633 = vmatprep.subr.mxu0 0.0
    %4634 = vmatpush1.msra.mxu0 %v442
    %4635 = vmatprep.subr.mxu0 0.0
    %4636 = vmatpush1.msra.mxu0 %v443
    %4637 = vmatprep.subr.mxu0 0.0
    %4638 = vmatpush1.msra.mxu0 %v444
    %4639 = vmatprep.subr.mxu0 0.0
    %4640 = vmatpush1.msra.mxu0 0.0
    %4641 = vmatprep.subr.mxu0 0.0
    %4642 = vmatpush1.msra.mxu0 0.0
    %4643 = vmatprep.subr.mxu0 0.0
    %4644 = vmatpush1.msra.mxu0 0.0
    %4645 = vmatprep.subr.mxu0 0.0
    %4646 = vmatpush1.msra.mxu0 0.0
    %4647 = vmatprep.subr.mxu0 0.0
    %4648 = vmatpush1.msra.mxu0 0.0
    %4649 = vmatprep.subr.mxu0 0.0
    %4650 = vmatpush1.msra.mxu0 0.0
    %4651 = vmatprep.subr.mxu0 0.0
    %4652 = vmatpush1.msra.mxu0 0.0
    %4653 = vmatprep.subr.mxu0 0.0
    %4654 = vmatpush1.msra.mxu0 0.0
    %4655 = vmatprep.subr.mxu0 0.0
    %4656 = vmatpush1.msra.mxu0 0.0
    %4657 = vmatprep.subr.mxu0 0.0
    %4658 = vmatpush1.msra.mxu0 0.0
    %4659 = vmatprep.subr.mxu0 0.0
    %4660 = vmatpush1.msra.mxu0 0.0
    %4661 = vmatprep.subr.mxu0 0.0
    %4662 = vmatpush1.msra.mxu0 0.0
    %4663 = vmatprep.subr.mxu0 0.0
    %4664 = vmatpush1.msra.mxu0 0.0
    %4665 = vmatprep.subr.mxu0 0.0
    %4666 = vmatpush1.msra.mxu0 0.0
    %4667 = vmatprep.subr.mxu0 0.0
    %4668 = vmatpush1.msra.mxu0 0.0
    %4669 = vmatprep.subr.mxu0 0.0
    %4670 = vmatpush1.msra.mxu0 0.0
    %4671 = vmatprep.subr.mxu0 0.0
    %4672 = vmatpush1.msra.mxu0 0.0
    %4673 = vmatprep.subr.mxu0 0.0
    %4674 = vmatpush1.msra.mxu0 0.0
    %4675 = vmatprep.subr.mxu0 0.0
    %4676 = vmatpush1.msra.mxu0 0.0
    %4677 = vmatprep.subr.mxu0 0.0
    %4678 = vmatpush1.msra.mxu0 0.0
    %4679 = vmatprep.subr.mxu0 0.0
    %4680 = vmatpush1.msra.mxu0 0.0
    %4681 = vmatprep.subr.mxu0 0.0
    %4682 = vmatpush1.msra.mxu0 0.0
    %4683 = vmatprep.subr.mxu0 0.0
    %4684 = vmatpush1.msra.mxu0 0.0
    %4685 = vmatprep.subr.mxu0 0.0
    %4686 = vmatpush1.msra.mxu0 0.0
    %4687 = vmatprep.subr.mxu0 0.0
    %4688 = vmatpush1.msra.mxu0 0.0
    %4689 = vmatprep.subr.mxu0 0.0
    %4690 = vmatpush1.msra.mxu0 0.0
    %4691 = vmatprep.subr.mxu0 0.0
    %4692 = vmatpush1.msra.mxu0 0.0
    %4693 = vmatprep.subr.mxu0 0.0
    %4694 = vmatpush1.msra.mxu0 0.0
    %4695 = vmatprep.mubr.f32.mxu0 0.0
    %4696 = vmatmul.mubr.f32.gmra.mrb[0].mxu0 %v4629
    %v4697 = vpop.f32.mrb[0].mxu0
    %v4698 = vadd.f32 %v453, %v4697
    %v4699 = vpop.f32.mrb[0].mxu0
    %4700 = vdwg.mxu0
    %4701 = vmatprep.subr.mxu0 0.0
    %4702 = vmatpush1.msra.mxu0 %v445
    %4703 = vmatprep.subr.mxu0 0.0
    %4704 = vmatpush1.msra.mxu0 %v446
    %4705 = vmatprep.subr.mxu0 0.0
    %4706 = vmatpush1.msra.mxu0 %v447
    %4707 = vmatprep.subr.mxu0 0.0
    %4708 = vmatpush1.msra.mxu0 %v448
    %4709 = vmatprep.subr.mxu0 0.0
    %4710 = vmatpush1.msra.mxu0 0.0
    %4711 = vmatprep.subr.mxu0 0.0
    %4712 = vmatpush1.msra.mxu0 0.0
    %4713 = vmatprep.subr.mxu0 0.0
    %4714 = vmatpush1.msra.mxu0 0.0
    %4715 = vmatprep.subr.mxu0 0.0
    %4716 = vmatpush1.msra.mxu0 0.0
    %4717 = vmatprep.subr.mxu0 0.0
    %4718 = vmatpush1.msra.mxu0 0.0
    %4719 = vmatprep.subr.mxu0 0.0
    %4720 = vmatpush1.msra.mxu0 0.0
    %4721 = vmatprep.subr.mxu0 0.0
    %4722 = vmatpush1.msra.mxu0 0.0
    %4723 = vmatprep.subr.mxu0 0.0
    %4724 = vmatpush1.msra.mxu0 0.0
    %4725 = vmatprep.subr.mxu0 0.0
    %4726 = vmatpush1.msra.mxu0 0.0
    %4727 = vmatprep.subr.mxu0 0.0
    %4728 = vmatpush1.msra.mxu0 0.0
    %4729 = vmatprep.subr.mxu0 0.0
    %4730 = vmatpush1.msra.mxu0 0.0
    %4731 = vmatprep.subr.mxu0 0.0
    %4732 = vmatpush1.msra.mxu0 0.0
    %4733 = vmatprep.subr.mxu0 0.0
    %4734 = vmatpush1.msra.mxu0 0.0
    %4735 = vmatprep.subr.mxu0 0.0
    %4736 = vmatpush1.msra.mxu0 0.0
    %4737 = vmatprep.subr.mxu0 0.0
    %4738 = vmatpush1.msra.mxu0 0.0
    %4739 = vmatprep.subr.mxu0 0.0
    %4740 = vmatpush1.msra.mxu0 0.0
    %4741 = vmatprep.subr.mxu0 0.0
    %4742 = vmatpush1.msra.mxu0 0.0
    %4743 = vmatprep.subr.mxu0 0.0
    %4744 = vmatpush1.msra.mxu0 0.0
    %4745 = vmatprep.subr.mxu0 0.0
    %4746 = vmatpush1.msra.mxu0 0.0
    %4747 = vmatprep.subr.mxu0 0.0
    %4748 = vmatpush1.msra.mxu0 0.0
    %4749 = vmatprep.subr.mxu0 0.0
    %4750 = vmatpush1.msra.mxu0 0.0
    %4751 = vmatprep.subr.mxu0 0.0
    %4752 = vmatpush1.msra.mxu0 0.0
    %4753 = vmatprep.subr.mxu0 0.0
    %4754 = vmatpush1.msra.mxu0 0.0
    %4755 = vmatprep.subr.mxu0 0.0
    %4756 = vmatpush1.msra.mxu0 0.0
    %4757 = vmatprep.subr.mxu0 0.0
    %4758 = vmatpush1.msra.mxu0 0.0
    %4759 = vmatprep.subr.mxu0 0.0
    %4760 = vmatpush1.msra.mxu0 0.0
    %4761 = vmatprep.subr.mxu0 0.0
    %4762 = vmatpush1.msra.mxu0 0.0
    %4763 = vmatprep.subr.mxu0 0.0
    %4764 = vmatpush1.msra.mxu0 0.0
    %4765 = vmatprep.mubr.f32.mxu0 0.0
    %4766 = vmatmul.mubr.f32.gmra.mrb[0].mxu0 %v4629
    %v4767 = vpop.f32.mrb[0].mxu0
    %v4768 = vadd.f32 %v454, %v4767
    %v4769 = vpop.f32.mrb[0].mxu0
    %4770 = vdwg.mxu0
    %4771 = vmatprep.subr.mxu0 0.0
    %4772 = vmatpush1.msra.mxu0 %v449
    %4773 = vmatprep.subr.mxu0 0.0
    %4774 = vmatpush1.msra.mxu0 %v450
    %4775 = vmatprep.subr.mxu0 0.0
    %4776 = vmatpush1.msra.mxu0 %v451
    %4777 = vmatprep.subr.mxu0 0.0
    %4778 = vmatpush1.msra.mxu0 %v452
    %4779 = vmatprep.subr.mxu0 0.0
    %4780 = vmatpush1.msra.mxu0 0.0
    %4781 = vmatprep.subr.mxu0 0.0
    %4782 = vmatpush1.msra.mxu0 0.0
    %4783 = vmatprep.subr.mxu0 0.0
    %4784 = vmatpush1.msra.mxu0 0.0
    %4785 = vmatprep.subr.mxu0 0.0
    %4786 = vmatpush1.msra.mxu0 0.0
    %4787 = vmatprep.subr.mxu0 0.0
    %4788 = vmatpush1.msra.mxu0 0.0
    %4789 = vmatprep.subr.mxu0 0.0
    %4790 = vmatpush1.msra.mxu0 0.0
    %4791 = vmatprep.subr.mxu0 0.0
    %4792 = vmatpush1.msra.mxu0 0.0
    %4793 = vmatprep.subr.mxu0 0.0
    %4794 = vmatpush1.msra.mxu0 0.0
    %4795 = vmatprep.subr.mxu0 0.0
    %4796 = vmatpush1.msra.mxu0 0.0
    %4797 = vmatprep.subr.mxu0 0.0
    %4798 = vmatpush1.msra.mxu0 0.0
    %4799 = vmatprep.subr.mxu0 0.0
    %4800 = vmatpush1.msra.mxu0 0.0
    %4801 = vmatprep.subr.mxu0 0.0
    %4802 = vmatpush1.msra.mxu0 0.0
    %4803 = vmatprep.subr.mxu0 0.0
    %4804 = vmatpush1.msra.mxu0 0.0
    %4805 = vmatprep.subr.mxu0 0.0
    %4806 = vmatpush1.msra.mxu0 0.0
    %4807 = vmatprep.subr.mxu0 0.0
    %4808 = vmatpush1.msra.mxu0 0.0
    %4809 = vmatprep.subr.mxu0 0.0
    %4810 = vmatpush1.msra.mxu0 0.0
    %4811 = vmatprep.subr.mxu0 0.0
    %4812 = vmatpush1.msra.mxu0 0.0
    %4813 = vmatprep.subr.mxu0 0.0
    %4814 = vmatpush1.msra.mxu0 0.0
    %4815 = vmatprep.subr.mxu0 0.0
    %4816 = vmatpush1.msra.mxu0 0.0
    %4817 = vmatprep.subr.mxu0 0.0
    %4818 = vmatpush1.msra.mxu0 0.0
    %4819 = vmatprep.subr.mxu0 0.0
    %4820 = vmatpush1.msra.mxu0 0.0
    %4821 = vmatprep.subr.mxu0 0.0
    %4822 = vmatpush1.msra.mxu0 0.0
    %4823 = vmatprep.subr.mxu0 0.0
    %4824 = vmatpush1.msra.mxu0 0.0
    %4825 = vmatprep.subr.mxu0 0.0
    %4826 = vmatpush1.msra.mxu0 0.0
    %4827 = vmatprep.subr.mxu0 0.0
    %4828 = vmatpush1.msra.mxu0 0.0
    %4829 = vmatprep.subr.mxu0 0.0
    %4830 = vmatpush1.msra.mxu0 0.0
    %4831 = vmatprep.subr.mxu0 0.0
    %4832 = vmatpush1.msra.mxu0 0.0
    %4833 = vmatprep.subr.mxu0 0.0
    %4834 = vmatpush1.msra.mxu0 0.0
    %4835 = vmatprep.mubr.f32.mxu0 0.0
    %4836 = vmatmul.mubr.f32.gmra.mrb[0].mxu0 %v4629
    %v4837 = vpop.f32.mrb[0].mxu0
    %v4838 = vadd.f32 %v455, %v4837
    %v4839 = vpop.f32.mrb[0].mxu0
    %4840 = vdwg.mxu0
    %4841 = vmatprep.subr.mxu0 0.0
    %4842 = vmatpush1.msra.mxu0 %v456
    %4843 = vmatprep.subr.mxu0 0.0
    %4844 = vmatpush1.msra.mxu0 %v457
    %4845 = vmatprep.subr.mxu0 0.0
    %4846 = vmatpush1.msra.mxu0 %v458
    %4847 = vmatprep.subr.mxu0 0.0
    %4848 = vmatpush1.msra.mxu0 %v459
    %4849 = vmatprep.subr.mxu0 0.0
    %4850 = vmatpush1.msra.mxu0 0.0
    %4851 = vmatprep.subr.mxu0 0.0
    %4852 = vmatpush1.msra.mxu0 0.0
    %4853 = vmatprep.subr.mxu0 0.0
    %4854 = vmatpush1.msra.mxu0 0.0
    %4855 = vmatprep.subr.mxu0 0.0
    %4856 = vmatpush1.msra.mxu0 0.0
    %4857 = vmatprep.subr.mxu0 0.0
    %4858 = vmatpush1.msra.mxu0 0.0
    %4859 = vmatprep.subr.mxu0 0.0
    %4860 = vmatpush1.msra.mxu0 0.0
    %4861 = vmatprep.subr.mxu0 0.0
    %4862 = vmatpush1.msra.mxu0 0.0
    %4863 = vmatprep.subr.mxu0 0.0
    %4864 = vmatpush1.msra.mxu0 0.0
    %4865 = vmatprep.subr.mxu0 0.0
    %4866 = vmatpush1.msra.mxu0 0.0
    %4867 = vmatprep.subr.mxu0 0.0
    %4868 = vmatpush1.msra.mxu0 0.0
    %4869 = vmatprep.subr.mxu0 0.0
    %4870 = vmatpush1.msra.mxu0 0.0
    %4871 = vmatprep.subr.mxu0 0.0
    %4872 = vmatpush1.msra.mxu0 0.0
    %4873 = vmatprep.subr.mxu0 0.0
    %4874 = vmatpush1.msra.mxu0 0.0
    %4875 = vmatprep.subr.mxu0 0.0
    %4876 = vmatpush1.msra.mxu0 0.0
    %4877 = vmatprep.subr.mxu0 0.0
    %4878 = vmatpush1.msra.mxu0 0.0
    %4879 = vmatprep.subr.mxu0 0.0
    %4880 = vmatpush1.msra.mxu0 0.0
    %4881 = vmatprep.subr.mxu0 0.0
    %4882 = vmatpush1.msra.mxu0 0.0
    %4883 = vmatprep.subr.mxu0 0.0
    %4884 = vmatpush1.msra.mxu0 0.0
    %4885 = vmatprep.subr.mxu0 0.0
    %4886 = vmatpush1.msra.mxu0 0.0
    %4887 = vmatprep.subr.mxu0 0.0
    %4888 = vmatpush1.msra.mxu0 0.0
    %4889 = vmatprep.subr.mxu0 0.0
    %4890 = vmatpush1.msra.mxu0 0.0
    %4891 = vmatprep.subr.mxu0 0.0
    %4892 = vmatpush1.msra.mxu0 0.0
    %4893 = vmatprep.subr.mxu0 0.0
    %4894 = vmatpush1.msra.mxu0 0.0
    %4895 = vmatprep.subr.mxu0 0.0
    %4896 = vmatpush1.msra.mxu0 0.0
    %4897 = vmatprep.subr.mxu0 0.0
    %4898 = vmatpush1.msra.mxu0 0.0
    %4899 = vmatprep.subr.mxu0 0.0
    %4900 = vmatpush1.msra.mxu0 0.0
    %4901 = vmatprep.subr.mxu0 0.0
    %4902 = vmatpush1.msra.mxu0 0.0
    %4903 = vmatprep.subr.mxu0 0.0
    %4904 = vmatpush1.msra.mxu0 0.0
    %4905 = vmatprep.mubr.f32.mxu0 0.0
    %4906 = vmatmul.mubr.f32.gmra.mrb[0].mxu0 %v4303
    %v4907 = vpop.f32.mrb[0].mxu0
    %v4908 = vadd.f32 %v468, %v4907
    %v4909 = vpop.f32.mrb[0].mxu0
    %4910 = vdwg.mxu0
    %4911 = vmatprep.subr.mxu0 0.0
    %4912 = vmatpush1.msra.mxu0 %v460
    %4913 = vmatprep.subr.mxu0 0.0
    %4914 = vmatpush1.msra.mxu0 %v461
    %4915 = vmatprep.subr.mxu0 0.0
    %4916 = vmatpush1.msra.mxu0 %v462
    %4917 = vmatprep.subr.mxu0 0.0
    %4918 = vmatpush1.msra.mxu0 %v463
    %4919 = vmatprep.subr.mxu0 0.0
    %4920 = vmatpush1.msra.mxu0 0.0
    %4921 = vmatprep.subr.mxu0 0.0
    %4922 = vmatpush1.msra.mxu0 0.0
    %4923 = vmatprep.subr.mxu0 0.0
    %4924 = vmatpush1.msra.mxu0 0.0
    %4925 = vmatprep.subr.mxu0 0.0
    %4926 = vmatpush1.msra.mxu0 0.0
    %4927 = vmatprep.subr.mxu0 0.0
    %4928 = vmatpush1.msra.mxu0 0.0
    %4929 = vmatprep.subr.mxu0 0.0
    %4930 = vmatpush1.msra.mxu0 0.0
    %4931 = vmatprep.subr.mxu0 0.0
    %4932 = vmatpush1.msra.mxu0 0.0
    %4933 = vmatprep.subr.mxu0 0.0
    %4934 = vmatpush1.msra.mxu0 0.0
    %4935 = vmatprep.subr.mxu0 0.0
    %4936 = vmatpush1.msra.mxu0 0.0
    %4937 = vmatprep.subr.mxu0 0.0
    %4938 = vmatpush1.msra.mxu0 0.0
    %4939 = vmatprep.subr.mxu0 0.0
    %4940 = vmatpush1.msra.mxu0 0.0
    %4941 = vmatprep.subr.mxu0 0.0
    %4942 = vmatpush1.msra.mxu0 0.0
    %4943 = vmatprep.subr.mxu0 0.0
    %4944 = vmatpush1.msra.mxu0 0.0
    %4945 = vmatprep.subr.mxu0 0.0
    %4946 = vmatpush1.msra.mxu0 0.0
    %4947 = vmatprep.subr.mxu0 0.0
    %4948 = vmatpush1.msra.mxu0 0.0
    %4949 = vmatprep.subr.mxu0 0.0
    %4950 = vmatpush1.msra.mxu0 0.0
    %4951 = vmatprep.subr.mxu0 0.0
    %4952 = vmatpush1.msra.mxu0 0.0
    %4953 = vmatprep.subr.mxu0 0.0
    %4954 = vmatpush1.msra.mxu0 0.0
    %4955 = vmatprep.subr.mxu0 0.0
    %4956 = vmatpush1.msra.mxu0 0.0
    %4957 = vmatprep.subr.mxu0 0.0
    %4958 = vmatpush1.msra.mxu0 0.0
    %4959 = vmatprep.subr.mxu0 0.0
    %4960 = vmatpush1.msra.mxu0 0.0
    %4961 = vmatprep.subr.mxu0 0.0
    %4962 = vmatpush1.msra.mxu0 0.0
    %4963 = vmatprep.subr.mxu0 0.0
    %4964 = vmatpush1.msra.mxu0 0.0
    %4965 = vmatprep.subr.mxu0 0.0
    %4966 = vmatpush1.msra.mxu0 0.0
    %4967 = vmatprep.subr.mxu0 0.0
    %4968 = vmatpush1.msra.mxu0 0.0
    %4969 = vmatprep.subr.mxu0 0.0
    %4970 = vmatpush1.msra.mxu0 0.0
    %4971 = vmatprep.subr.mxu0 0.0
    %4972 = vmatpush1.msra.mxu0 0.0
    %4973 = vmatprep.subr.mxu0 0.0
    %4974 = vmatpush1.msra.mxu0 0.0
    %4975 = vmatprep.mubr.f32.mxu0 0.0
    %4976 = vmatmul.mubr.f32.gmra.mrb[0].mxu0 %v4303
    %v4977 = vpop.f32.mrb[0].mxu0
    %v4978 = vadd.f32 %v469, %v4977
    %v4979 = vpop.f32.mrb[0].mxu0
    %4980 = vdwg.mxu0
    %4981 = vmatprep.subr.mxu0 0.0
    %4982 = vmatpush1.msra.mxu0 %v464
    %4983 = vmatprep.subr.mxu0 0.0
    %4984 = vmatpush1.msra.mxu0 %v465
    %4985 = vmatprep.subr.mxu0 0.0
    %4986 = vmatpush1.msra.mxu0 %v466
    %4987 = vmatprep.subr.mxu0 0.0
    %4988 = vmatpush1.msra.mxu0 %v467
    %4989 = vmatprep.subr.mxu0 0.0
    %4990 = vmatpush1.msra.mxu0 0.0
    %4991 = vmatprep.subr.mxu0 0.0
    %4992 = vmatpush1.msra.mxu0 0.0
    %4993 = vmatprep.subr.mxu0 0.0
    %4994 = vmatpush1.msra.mxu0 0.0
    %4995 = vmatprep.subr.mxu0 0.0
    %4996 = vmatpush1.msra.mxu0 0.0
    %4997 = vmatprep.subr.mxu0 0.0
    %4998 = vmatpush1.msra.mxu0 0.0
    %4999 = vmatprep.subr.mxu0 0.0
    %5000 = vmatpush1.msra.mxu0 0.0
    %5001 = vmatprep.subr.mxu0 0.0
    %5002 = vmatpush1.msra.mxu0 0.0
    %5003 = vmatprep.subr.mxu0 0.0
    %5004 = vmatpush1.msra.mxu0 0.0
    %5005 = vmatprep.subr.mxu0 0.0
    %5006 = vmatpush1.msra.mxu0 0.0
    %5007 = vmatprep.subr.mxu0 0.0
    %5008 = vmatpush1.msra.mxu0 0.0
    %5009 = vmatprep.subr.mxu0 0.0
    %5010 = vmatpush1.msra.mxu0 0.0
    %5011 = vmatprep.subr.mxu0 0.0
    %5012 = vmatpush1.msra.mxu0 0.0
    %5013 = vmatprep.subr.mxu0 0.0
    %5014 = vmatpush1.msra.mxu0 0.0
    %5015 = vmatprep.subr.mxu0 0.0
    %5016 = vmatpush1.msra.mxu0 0.0
    %5017 = vmatprep.subr.mxu0 0.0
    %5018 = vmatpush1.msra.mxu0 0.0
    %5019 = vmatprep.subr.mxu0 0.0
    %5020 = vmatpush1.msra.mxu0 0.0
    %5021 = vmatprep.subr.mxu0 0.0
    %5022 = vmatpush1.msra.mxu0 0.0
    %5023 = vmatprep.subr.mxu0 0.0
    %5024 = vmatpush1.msra.mxu0 0.0
    %5025 = vmatprep.subr.mxu0 0.0
    %5026 = vmatpush1.msra.mxu0 0.0
    %5027 = vmatprep.subr.mxu0 0.0
    %5028 = vmatpush1.msra.mxu0 0.0
    %5029 = vmatprep.subr.mxu0 0.0
    %5030 = vmatpush1.msra.mxu0 0.0
    %5031 = vmatprep.subr.mxu0 0.0
    %5032 = vmatpush1.msra.mxu0 0.0
    %5033 = vmatprep.subr.mxu0 0.0
    %5034 = vmatpush1.msra.mxu0 0.0
    %5035 = vmatprep.subr.mxu0 0.0
    %5036 = vmatpush1.msra.mxu0 0.0
    %5037 = vmatprep.subr.mxu0 0.0
    %5038 = vmatpush1.msra.mxu0 0.0
    %5039 = vmatprep.subr.mxu0 0.0
    %5040 = vmatpush1.msra.mxu0 0.0
    %5041 = vmatprep.subr.mxu0 0.0
    %5042 = vmatpush1.msra.mxu0 0.0
    %5043 = vmatprep.subr.mxu0 0.0
    %5044 = vmatpush1.msra.mxu0 0.0
    %5045 = vmatprep.mubr.f32.mxu0 0.0
    %5046 = vmatmul.mubr.f32.gmra.mrb[0].mxu0 %v4303
    %v5047 = vpop.f32.mrb[0].mxu0
    %v5048 = vadd.f32 %v470, %v5047
    %v5049 = vpop.f32.mrb[0].mxu0
    %5050 = vdwg.mxu0
    %v5051 = vadd.f32 %v4698, %v4908
    %v5052 = vxor.u32 %v5051, 2147483648
    %v5053 = vmul.f32 %v5052, 1.442695
    %v5054 = vpow.pop %v5053
    %v5055 = vadd.f32 %v5054, 1.0
    %v5056 = vrcp.pop %v5055
    %v5057 = vmul.f32 1.0, %v5056
    %v5058 = vadd.f32 %v4768, %v4978
    %v5059 = vxor.u32 %v5058, 2147483648
    %v5060 = vmul.f32 %v5059, 1.442695
    %v5061 = vpow.pop %v5060
    %v5062 = vadd.f32 %v5061, 1.0
    %v5063 = vrcp.pop %v5062
    %v5064 = vmul.f32 1.0, %v5063
    %v5065 = vmul.f32 %v5057, %v5048
    %v5066 = vadd.f32 %v4838, %v5065
    %v5067 = vtanh.pop %v5066
    %v5068 = vsub.f32 1.0, %v5064
    %v5069 = vmul.f32 %v5068, %v5067
    %v5070 = vmul.f32 %v5064, %v4301
    %v5071 = vadd.f32 %v5069, %v5070
    %v5073 = vsel %vm522, %v5071, 0
    %5075 = vmatprep.subr.mxu0 0.0
    %5076 = vmatpush1.msra.mxu0 %v471
    %5077 = vmatprep.subr.mxu0 0.0
    %5078 = vmatpush1.msra.mxu0 %v472
    %5079 = vmatprep.subr.mxu0 0.0
    %5080 = vmatpush1.msra.mxu0 %v473
    %5081 = vmatprep.subr.mxu0 0.0
    %5082 = vmatpush1.msra.mxu0 %v474
    %5083 = vmatprep.subr.mxu0 0.0
    %5084 = vmatpush1.msra.mxu0 0.0
    %5085 = vmatprep.subr.mxu0 0.0
    %5086 = vmatpush1.msra.mxu0 0.0
    %5087 = vmatprep.subr.mxu0 0.0
    %5088 = vmatpush1.msra.mxu0 0.0
    %5089 = vmatprep.subr.mxu0 0.0
    %5090 = vmatpush1.msra.mxu0 0.0
    %5091 = vmatprep.subr.mxu0 0.0
    %5092 = vmatpush1.msra.mxu0 0.0
    %5093 = vmatprep.subr.mxu0 0.0
    %5094 = vmatpush1.msra.mxu0 0.0
    %5095 = vmatprep.subr.mxu0 0.0
    %5096 = vmatpush1.msra.mxu0 0.0
    %5097 = vmatprep.subr.mxu0 0.0
    %5098 = vmatpush1.msra.mxu0 0.0
    %5099 = vmatprep.subr.mxu0 0.0
    %5100 = vmatpush1.msra.mxu0 0.0
    %5101 = vmatprep.subr.mxu0 0.0
    %5102 = vmatpush1.msra.mxu0 0.0
    %5103 = vmatprep.subr.mxu0 0.0
    %5104 = vmatpush1.msra.mxu0 0.0
    %5105 = vmatprep.subr.mxu0 0.0
    %5106 = vmatpush1.msra.mxu0 0.0
    %5107 = vmatprep.subr.mxu0 0.0
    %5108 = vmatpush1.msra.mxu0 0.0
    %5109 = vmatprep.subr.mxu0 0.0
    %5110 = vmatpush1.msra.mxu0 0.0
    %5111 = vmatprep.subr.mxu0 0.0
    %5112 = vmatpush1.msra.mxu0 0.0
    %5113 = vmatprep.subr.mxu0 0.0
    %5114 = vmatpush1.msra.mxu0 0.0
    %5115 = vmatprep.subr.mxu0 0.0
    %5116 = vmatpush1.msra.mxu0 0.0
    %5117 = vmatprep.subr.mxu0 0.0
    %5118 = vmatpush1.msra.mxu0 0.0
    %5119 = vmatprep.subr.mxu0 0.0
    %5120 = vmatpush1.msra.mxu0 0.0
    %5121 = vmatprep.subr.mxu0 0.0
    %5122 = vmatpush1.msra.mxu0 0.0
    %5123 = vmatprep.subr.mxu0 0.0
    %5124 = vmatpush1.msra.mxu0 0.0
    %5125 = vmatprep.subr.mxu0 0.0
    %5126 = vmatpush1.msra.mxu0 0.0
    %5127 = vmatprep.subr.mxu0 0.0
    %5128 = vmatpush1.msra.mxu0 0.0
    %5129 = vmatprep.subr.mxu0 0.0
    %5130 = vmatpush1.msra.mxu0 0.0
    %5131 = vmatprep.subr.mxu0 0.0
    %5132 = vmatpush1.msra.mxu0 0.0
    %5133 = vmatprep.subr.mxu0 0.0
    %5134 = vmatpush1.msra.mxu0 0.0
    %5135 = vmatprep.subr.mxu0 0.0
    %5136 = vmatpush1.msra.mxu0 0.0
    %5137 = vmatprep.subr.mxu0 0.0
    %5138 = vmatpush1.msra.mxu0 0.0
    %5139 = vmatprep.mubr.f32.mxu0 0.0
    %5140 = vmatmul.mubr.f32.gmra.mrb[0].mxu0 %v5073
    %v5141 = vpop.f32.mrb[0].mxu0
    %v5142 = vadd.f32 %v475, %v5141
    %v5143 = vpop.f32.mrb[0].mxu0
    %5144 = vdwg.mxu0
    %v5145 = vsel %vm503, %v5142, -inf
    %5146 = vmax.xlane.f32.xlu0 %v5145
    %v5147 = vpop.xlane.xlu0 %5146
    %v5148 = vsub.f32 %v5142, %v5147
    %v5149 = vmul.f32 %v5148, 1.442695
    %v5150 = vpow.pop %v5149
    %v5151 = vsel %vm503, %v5150, 0.0
    %5152 = vadd.xlane.f32.xlu0 %v5151
    %v5153 = vpop.xlane.xlu0 %5152
    %v5154 = vlog2.pop %v5153
    %v5155 = vmul.f32 %v5154, 0.6931472
    %v5156 = vadd.f32 %v5155, %v5147
    %v5157 = vsub.f32 %v5142, %v5156
    %5158 = vst [vmem:[#allocation39 + $0x3] sm:$0x1] %v5157
    %5159 = vmatprep.subr.mxu0 0.0
    %5160 = vmatpush1.msra.mxu0 %v433
    %5161 = vmatprep.subr.mxu0 0.0
    %5162 = vmatpush1.msra.mxu0 %v434
    %5163 = vmatprep.subr.mxu0 0.0
    %5164 = vmatpush1.msra.mxu0 %v435
    %5165 = vmatprep.subr.mxu0 0.0
    %5166 = vmatpush1.msra.mxu0 %v436
    %5167 = vmatprep.subr.mxu0 0.0
    %5168 = vmatpush1.msra.mxu0 0.0
    %5169 = vmatprep.subr.mxu0 0.0
    %5170 = vmatpush1.msra.mxu0 0.0
    %5171 = vmatprep.subr.mxu0 0.0
    %5172 = vmatpush1.msra.mxu0 0.0
    %5173 = vmatprep.subr.mxu0 0.0
    %5174 = vmatpush1.msra.mxu0 0.0
    %5175 = vmatprep.subr.mxu0 0.0
    %5176 = vmatpush1.msra.mxu0 0.0
    %5177 = vmatprep.subr.mxu0 0.0
    %5178 = vmatpush1.msra.mxu0 0.0
    %5179 = vmatprep.subr.mxu0 0.0
    %5180 = vmatpush1.msra.mxu0 0.0
    %5181 = vmatprep.subr.mxu0 0.0
    %5182 = vmatpush1.msra.mxu0 0.0
    %5183 = vmatprep.subr.mxu0 0.0
    %5184 = vmatpush1.msra.mxu0 0.0
    %5185 = vmatprep.subr.mxu0 0.0
    %5186 = vmatpush1.msra.mxu0 0.0
    %5187 = vmatprep.subr.mxu0 0.0
    %5188 = vmatpush1.msra.mxu0 0.0
    %5189 = vmatprep.subr.mxu0 0.0
    %5190 = vmatpush1.msra.mxu0 0.0
    %5191 = vmatprep.subr.mxu0 0.0
    %5192 = vmatpush1.msra.mxu0 0.0
    %5193 = vmatprep.subr.mxu0 0.0
    %5194 = vmatpush1.msra.mxu0 0.0
    %5195 = vmatprep.subr.mxu0 0.0
    %5196 = vmatpush1.msra.mxu0 0.0
    %5197 = vmatprep.subr.mxu0 0.0
    %5198 = vmatpush1.msra.mxu0 0.0
    %5199 = vmatprep.subr.mxu0 0.0
    %5200 = vmatpush1.msra.mxu0 0.0
    %5201 = vmatprep.subr.mxu0 0.0
    %5202 = vmatpush1.msra.mxu0 0.0
    %5203 = vmatprep.subr.mxu0 0.0
    %5204 = vmatpush1.msra.mxu0 0.0
    %5205 = vmatprep.subr.mxu0 0.0
    %5206 = vmatpush1.msra.mxu0 0.0
    %5207 = vmatprep.subr.mxu0 0.0
    %5208 = vmatpush1.msra.mxu0 0.0
    %5209 = vmatprep.subr.mxu0 0.0
    %5210 = vmatpush1.msra.mxu0 0.0
    %5211 = vmatprep.subr.mxu0 0.0
    %5212 = vmatpush1.msra.mxu0 0.0
    %5213 = vmatprep.subr.mxu0 0.0
    %5214 = vmatpush1.msra.mxu0 0.0
    %5215 = vmatprep.subr.mxu0 0.0
    %5216 = vmatpush1.msra.mxu0 0.0
    %5217 = vmatprep.subr.mxu0 0.0
    %5218 = vmatpush1.msra.mxu0 0.0
    %5219 = vmatprep.subr.mxu0 0.0
    %5220 = vmatpush1.msra.mxu0 0.0
    %5221 = vmatprep.subr.mxu0 0.0
    %5222 = vmatpush1.msra.mxu0 0.0
    %5223 = vmatprep.mubr.f32.mxu0 0.0
    %5224 = vmatmul.mubr.f32.gmra.mrb[0].mxu0 %v5073
    %v5225 = vpop.f32.mrb[0].mxu0
    %v5226 = vadd.f32 0.0, %v5225
    %v5227 = vpop.f32.mrb[0].mxu0
    %5228 = vdwg.mxu0
    %v5230 = vrot.slane %v5226, 4
    %v5232 = vadd.f32 %v1989, %v5230
    %vm5233 = vcmask 36868
    %v5234 = vsel %vm5233, %v5232, -inf
    %5235 = vmax.xlane.f32.xlu0 %v5234
    %v5236 = vpop.xlane.xlu0 %5235
    %v5237 = vsub.f32 %v5232, %v5236
    %v5238 = vmul.f32 %v5237, 1.442695
    %v5239 = vpow.pop %v5238
    %v5240 = vsel %vm5233, %v5239, 0.0
    %5241 = vadd.xlane.f32.xlu0 %v5240
    %v5242 = vpop.xlane.xlu0 %5241
    %v5243 = vrcp.pop %v5242
    %v5244 = vmul.f32 %v5239, %v5243
    %v5246 = vrot.slane %v5244, 4
    %v5247 = vsel %vm2165, %v5246, 0
    %5249 = vmatprep.subr.mxu0 0.0
    %5250 = vmatpush1.msra.mxu0 %v2170
    %5251 = vmatprep.subr.mxu0 0.0
    %5252 = vmatpush1.msra.mxu0 0.0
    %5253 = vmatprep.subr.mxu0 0.0
    %5254 = vmatpush1.msra.mxu0 0.0
    %5255 = vmatprep.subr.mxu0 0.0
    %5256 = vmatpush1.msra.mxu0 0.0
    %5257 = vmatprep.subr.mxu0 0.0
    %5258 = vmatpush1.msra.mxu0 0.0
    %5259 = vmatprep.subr.mxu0 0.0
    %5260 = vmatpush1.msra.mxu0 0.0
    %5261 = vmatprep.subr.mxu0 0.0
    %5262 = vmatpush1.msra.mxu0 0.0
    %5263 = vmatprep.subr.mxu0 0.0
    %5264 = vmatpush1.msra.mxu0 0.0
    %5265 = vmatprep.subr.mxu0 0.0
    %5266 = vmatpush1.msra.mxu0 0.0
    %5267 = vmatprep.subr.mxu0 0.0
    %5268 = vmatpush1.msra.mxu0 0.0
    %5269 = vmatprep.subr.mxu0 0.0
    %5270 = vmatpush1.msra.mxu0 0.0
    %5271 = vmatprep.subr.mxu0 0.0
    %5272 = vmatpush1.msra.mxu0 0.0
    %5273 = vmatprep.subr.mxu0 0.0
    %5274 = vmatpush1.msra.mxu0 0.0
    %5275 = vmatprep.subr.mxu0 0.0
    %5276 = vmatpush1.msra.mxu0 0.0
    %5277 = vmatprep.subr.mxu0 0.0
    %5278 = vmatpush1.msra.mxu0 0.0
    %5279 = vmatprep.subr.mxu0 0.0
    %5280 = vmatpush1.msra.mxu0 0.0
    %5281 = vmatprep.subr.mxu0 0.0
    %5282 = vmatpush1.msra.mxu0 0.0
    %5283 = vmatprep.subr.mxu0 0.0
    %5284 = vmatpush1.msra.mxu0 0.0
    %5285 = vmatprep.subr.mxu0 0.0
    %5286 = vmatpush1.msra.mxu0 0.0
    %5287 = vmatprep.subr.mxu0 0.0
    %5288 = vmatpush1.msra.mxu0 0.0
    %5289 = vmatprep.subr.mxu0 0.0
    %5290 = vmatpush1.msra.mxu0 0.0
    %5291 = vmatprep.subr.mxu0 0.0
    %5292 = vmatpush1.msra.mxu0 0.0
    %5293 = vmatprep.subr.mxu0 0.0
    %5294 = vmatpush1.msra.mxu0 0.0
    %5295 = vmatprep.subr.mxu0 0.0
    %5296 = vmatpush1.msra.mxu0 0.0
    %5297 = vmatprep.subr.mxu0 0.0
    %5298 = vmatpush1.msra.mxu0 0.0
    %5299 = vmatprep.subr.mxu0 0.0
    %5300 = vmatpush1.msra.mxu0 0.0
    %5301 = vmatprep.subr.mxu0 0.0
    %5302 = vmatpush1.msra.mxu0 0.0
    %5303 = vmatprep.subr.mxu0 0.0
    %5304 = vmatpush1.msra.mxu0 0.0
    %5305 = vmatprep.subr.mxu0 0.0
    %5306 = vmatpush1.msra.mxu0 0.0
    %5307 = vmatprep.subr.mxu0 0.0
    %5308 = vmatpush1.msra.mxu0 0.0
    %5309 = vmatprep.subr.mxu0 0.0
    %5310 = vmatpush1.msra.mxu0 0.0
    %5311 = vmatprep.subr.mxu0 0.0
    %5312 = vmatpush1.msra.mxu0 0.0
    %5313 = vmatprep.mubr.f32.mxu0 0.0
    %5314 = vmatmul.mubr.f32.gmra.mrb[0].mxu0 %v5247
    %v5315 = vpop.f32.mrb[0].mxu0
    %v5316 = vadd.f32 0.0, %v5315
    %v5317 = vpop.f32.mrb[0].mxu0
    %5318 = vdwg.mxu0
    %v5320 = vsel %vm522, %v5316, 0
    %5322 = vmatprep.subr.mxu0 0.0
    %5323 = vmatpush1.msra.mxu0 %v437
    %5324 = vmatprep.subr.mxu0 0.0
    %5325 = vmatpush1.msra.mxu0 %v438
    %5326 = vmatprep.subr.mxu0 0.0
    %5327 = vmatpush1.msra.mxu0 %v439
    %5328 = vmatprep.subr.mxu0 0.0
    %5329 = vmatpush1.msra.mxu0 %v440
    %5330 = vmatprep.subr.mxu0 0.0
    %5331 = vmatpush1.msra.mxu0 0.0
    %5332 = vmatprep.subr.mxu0 0.0
    %5333 = vmatpush1.msra.mxu0 0.0
    %5334 = vmatprep.subr.mxu0 0.0
    %5335 = vmatpush1.msra.mxu0 0.0
    %5336 = vmatprep.subr.mxu0 0.0
    %5337 = vmatpush1.msra.mxu0 0.0
    %5338 = vmatprep.subr.mxu0 0.0
    %5339 = vmatpush1.msra.mxu0 0.0
    %5340 = vmatprep.subr.mxu0 0.0
    %5341 = vmatpush1.msra.mxu0 0.0
    %5342 = vmatprep.subr.mxu0 0.0
    %5343 = vmatpush1.msra.mxu0 0.0
    %5344 = vmatprep.subr.mxu0 0.0
    %5345 = vmatpush1.msra.mxu0 0.0
    %5346 = vmatprep.subr.mxu0 0.0
    %5347 = vmatpush1.msra.mxu0 0.0
    %5348 = vmatprep.subr.mxu0 0.0
    %5349 = vmatpush1.msra.mxu0 0.0
    %5350 = vmatprep.subr.mxu0 0.0
    %5351 = vmatpush1.msra.mxu0 0.0
    %5352 = vmatprep.subr.mxu0 0.0
    %5353 = vmatpush1.msra.mxu0 0.0
    %5354 = vmatprep.subr.mxu0 0.0
    %5355 = vmatpush1.msra.mxu0 0.0
    %5356 = vmatprep.subr.mxu0 0.0
    %5357 = vmatpush1.msra.mxu0 0.0
    %5358 = vmatprep.subr.mxu0 0.0
    %5359 = vmatpush1.msra.mxu0 0.0
    %5360 = vmatprep.subr.mxu0 0.0
    %5361 = vmatpush1.msra.mxu0 0.0
    %5362 = vmatprep.subr.mxu0 0.0
    %5363 = vmatpush1.msra.mxu0 0.0
    %5364 = vmatprep.subr.mxu0 0.0
    %5365 = vmatpush1.msra.mxu0 0.0
    %5366 = vmatprep.subr.mxu0 0.0
    %5367 = vmatpush1.msra.mxu0 0.0
    %5368 = vmatprep.subr.mxu0 0.0
    %5369 = vmatpush1.msra.mxu0 0.0
    %5370 = vmatprep.subr.mxu0 0.0
    %5371 = vmatpush1.msra.mxu0 0.0
    %5372 = vmatprep.subr.mxu0 0.0
    %5373 = vmatpush1.msra.mxu0 0.0
    %5374 = vmatprep.subr.mxu0 0.0
    %5375 = vmatpush1.msra.mxu0 0.0
    %5376 = vmatprep.subr.mxu0 0.0
    %5377 = vmatpush1.msra.mxu0 0.0
    %5378 = vmatprep.subr.mxu0 0.0
    %5379 = vmatpush1.msra.mxu0 0.0
    %5380 = vmatprep.subr.mxu0 0.0
    %5381 = vmatpush1.msra.mxu0 0.0
    %5382 = vmatprep.subr.mxu0 0.0
    %5383 = vmatpush1.msra.mxu0 0.0
    %5384 = vmatprep.subr.mxu0 0.0
    %5385 = vmatpush1.msra.mxu0 0.0
    %5386 = vmatprep.mubr.f32.mxu0 0.0
    %5387 = vmatmul.mubr.f32.gmra.mrb[0].mxu0 %v5320
    %v5388 = vpop.f32.mrb[0].mxu0
    %v5389 = vadd.f32 0.0, %v5388
    %v5390 = vpop.f32.mrb[0].mxu0
    %5391 = vdwg.mxu0
    %v5393 = vrot.slane %v5389, 4
    %v5395 = vadd.f32 %v2070, %v5393
    %v5396 = vmax.f32 %v5395, 0.0
    %v5398 = vrot.slane %v5396, 4
    %v5399 = vsel %vm522, %v5398, 0
    %5401 = vmatprep.subr.mxu0 0.0
    %5402 = vmatpush1.msra.mxu0 %v441
    %5403 = vmatprep.subr.mxu0 0.0
    %5404 = vmatpush1.msra.mxu0 %v442
    %5405 = vmatprep.subr.mxu0 0.0
    %5406 = vmatpush1.msra.mxu0 %v443
    %5407 = vmatprep.subr.mxu0 0.0
    %5408 = vmatpush1.msra.mxu0 %v444
    %5409 = vmatprep.subr.mxu0 0.0
    %5410 = vmatpush1.msra.mxu0 0.0
    %5411 = vmatprep.subr.mxu0 0.0
    %5412 = vmatpush1.msra.mxu0 0.0
    %5413 = vmatprep.subr.mxu0 0.0
    %5414 = vmatpush1.msra.mxu0 0.0
    %5415 = vmatprep.subr.mxu0 0.0
    %5416 = vmatpush1.msra.mxu0 0.0
    %5417 = vmatprep.subr.mxu0 0.0
    %5418 = vmatpush1.msra.mxu0 0.0
    %5419 = vmatprep.subr.mxu0 0.0
    %5420 = vmatpush1.msra.mxu0 0.0
    %5421 = vmatprep.subr.mxu0 0.0
    %5422 = vmatpush1.msra.mxu0 0.0
    %5423 = vmatprep.subr.mxu0 0.0
    %5424 = vmatpush1.msra.mxu0 0.0
    %5425 = vmatprep.subr.mxu0 0.0
    %5426 = vmatpush1.msra.mxu0 0.0
    %5427 = vmatprep.subr.mxu0 0.0
    %5428 = vmatpush1.msra.mxu0 0.0
    %5429 = vmatprep.subr.mxu0 0.0
    %5430 = vmatpush1.msra.mxu0 0.0
    %5431 = vmatprep.subr.mxu0 0.0
    %5432 = vmatpush1.msra.mxu0 0.0
    %5433 = vmatprep.subr.mxu0 0.0
    %5434 = vmatpush1.msra.mxu0 0.0
    %5435 = vmatprep.subr.mxu0 0.0
    %5436 = vmatpush1.msra.mxu0 0.0
    %5437 = vmatprep.subr.mxu0 0.0
    %5438 = vmatpush1.msra.mxu0 0.0
    %5439 = vmatprep.subr.mxu0 0.0
    %5440 = vmatpush1.msra.mxu0 0.0
    %5441 = vmatprep.subr.mxu0 0.0
    %5442 = vmatpush1.msra.mxu0 0.0
    %5443 = vmatprep.subr.mxu0 0.0
    %5444 = vmatpush1.msra.mxu0 0.0
    %5445 = vmatprep.subr.mxu0 0.0
    %5446 = vmatpush1.msra.mxu0 0.0
    %5447 = vmatprep.subr.mxu0 0.0
    %5448 = vmatpush1.msra.mxu0 0.0
    %5449 = vmatprep.subr.mxu0 0.0
    %5450 = vmatpush1.msra.mxu0 0.0
    %5451 = vmatprep.subr.mxu0 0.0
    %5452 = vmatpush1.msra.mxu0 0.0
    %5453 = vmatprep.subr.mxu0 0.0
    %5454 = vmatpush1.msra.mxu0 0.0
    %5455 = vmatprep.subr.mxu0 0.0
    %5456 = vmatpush1.msra.mxu0 0.0
    %5457 = vmatprep.subr.mxu0 0.0
    %5458 = vmatpush1.msra.mxu0 0.0
    %5459 = vmatprep.subr.mxu0 0.0
    %5460 = vmatpush1.msra.mxu0 0.0
    %5461 = vmatprep.subr.mxu0 0.0
    %5462 = vmatpush1.msra.mxu0 0.0
    %5463 = vmatprep.subr.mxu0 0.0
    %5464 = vmatpush1.msra.mxu0 0.0
    %5465 = vmatprep.mubr.f32.mxu0 0.0
    %5466 = vmatmul.mubr.f32.gmra.mrb[0].mxu0 %v5399
    %v5467 = vpop.f32.mrb[0].mxu0
    %v5468 = vadd.f32 %v453, %v5467
    %v5469 = vpop.f32.mrb[0].mxu0
    %5470 = vdwg.mxu0
    %5471 = vmatprep.subr.mxu0 0.0
    %5472 = vmatpush1.msra.mxu0 %v445
    %5473 = vmatprep.subr.mxu0 0.0
    %5474 = vmatpush1.msra.mxu0 %v446
    %5475 = vmatprep.subr.mxu0 0.0
    %5476 = vmatpush1.msra.mxu0 %v447
    %5477 = vmatprep.subr.mxu0 0.0
    %5478 = vmatpush1.msra.mxu0 %v448
    %5479 = vmatprep.subr.mxu0 0.0
    %5480 = vmatpush1.msra.mxu0 0.0
    %5481 = vmatprep.subr.mxu0 0.0
    %5482 = vmatpush1.msra.mxu0 0.0
    %5483 = vmatprep.subr.mxu0 0.0
    %5484 = vmatpush1.msra.mxu0 0.0
    %5485 = vmatprep.subr.mxu0 0.0
    %5486 = vmatpush1.msra.mxu0 0.0
    %5487 = vmatprep.subr.mxu0 0.0
    %5488 = vmatpush1.msra.mxu0 0.0
    %5489 = vmatprep.subr.mxu0 0.0
    %5490 = vmatpush1.msra.mxu0 0.0
    %5491 = vmatprep.subr.mxu0 0.0
    %5492 = vmatpush1.msra.mxu0 0.0
    %5493 = vmatprep.subr.mxu0 0.0
    %5494 = vmatpush1.msra.mxu0 0.0
    %5495 = vmatprep.subr.mxu0 0.0
    %5496 = vmatpush1.msra.mxu0 0.0
    %5497 = vmatprep.subr.mxu0 0.0
    %5498 = vmatpush1.msra.mxu0 0.0
    %5499 = vmatprep.subr.mxu0 0.0
    %5500 = vmatpush1.msra.mxu0 0.0
    %5501 = vmatprep.subr.mxu0 0.0
    %5502 = vmatpush1.msra.mxu0 0.0
    %5503 = vmatprep.subr.mxu0 0.0
    %5504 = vmatpush1.msra.mxu0 0.0
    %5505 = vmatprep.subr.mxu0 0.0
    %5506 = vmatpush1.msra.mxu0 0.0
    %5507 = vmatprep.subr.mxu0 0.0
    %5508 = vmatpush1.msra.mxu0 0.0
    %5509 = vmatprep.subr.mxu0 0.0
    %5510 = vmatpush1.msra.mxu0 0.0
    %5511 = vmatprep.subr.mxu0 0.0
    %5512 = vmatpush1.msra.mxu0 0.0
    %5513 = vmatprep.subr.mxu0 0.0
    %5514 = vmatpush1.msra.mxu0 0.0
    %5515 = vmatprep.subr.mxu0 0.0
    %5516 = vmatpush1.msra.mxu0 0.0
    %5517 = vmatprep.subr.mxu0 0.0
    %5518 = vmatpush1.msra.mxu0 0.0
    %5519 = vmatprep.subr.mxu0 0.0
    %5520 = vmatpush1.msra.mxu0 0.0
    %5521 = vmatprep.subr.mxu0 0.0
    %5522 = vmatpush1.msra.mxu0 0.0
    %5523 = vmatprep.subr.mxu0 0.0
    %5524 = vmatpush1.msra.mxu0 0.0
    %5525 = vmatprep.subr.mxu0 0.0
    %5526 = vmatpush1.msra.mxu0 0.0
    %5527 = vmatprep.subr.mxu0 0.0
    %5528 = vmatpush1.msra.mxu0 0.0
    %5529 = vmatprep.subr.mxu0 0.0
    %5530 = vmatpush1.msra.mxu0 0.0
    %5531 = vmatprep.subr.mxu0 0.0
    %5532 = vmatpush1.msra.mxu0 0.0
    %5533 = vmatprep.subr.mxu0 0.0
    %5534 = vmatpush1.msra.mxu0 0.0
    %5535 = vmatprep.mubr.f32.mxu0 0.0
    %5536 = vmatmul.mubr.f32.gmra.mrb[0].mxu0 %v5399
    %v5537 = vpop.f32.mrb[0].mxu0
    %v5538 = vadd.f32 %v454, %v5537
    %v5539 = vpop.f32.mrb[0].mxu0
    %5540 = vdwg.mxu0
    %5541 = vmatprep.subr.mxu0 0.0
    %5542 = vmatpush1.msra.mxu0 %v449
    %5543 = vmatprep.subr.mxu0 0.0
    %5544 = vmatpush1.msra.mxu0 %v450
    %5545 = vmatprep.subr.mxu0 0.0
    %5546 = vmatpush1.msra.mxu0 %v451
    %5547 = vmatprep.subr.mxu0 0.0
    %5548 = vmatpush1.msra.mxu0 %v452
    %5549 = vmatprep.subr.mxu0 0.0
    %5550 = vmatpush1.msra.mxu0 0.0
    %5551 = vmatprep.subr.mxu0 0.0
    %5552 = vmatpush1.msra.mxu0 0.0
    %5553 = vmatprep.subr.mxu0 0.0
    %5554 = vmatpush1.msra.mxu0 0.0
    %5555 = vmatprep.subr.mxu0 0.0
    %5556 = vmatpush1.msra.mxu0 0.0
    %5557 = vmatprep.subr.mxu0 0.0
    %5558 = vmatpush1.msra.mxu0 0.0
    %5559 = vmatprep.subr.mxu0 0.0
    %5560 = vmatpush1.msra.mxu0 0.0
    %5561 = vmatprep.subr.mxu0 0.0
    %5562 = vmatpush1.msra.mxu0 0.0
    %5563 = vmatprep.subr.mxu0 0.0
    %5564 = vmatpush1.msra.mxu0 0.0
    %5565 = vmatprep.subr.mxu0 0.0
    %5566 = vmatpush1.msra.mxu0 0.0
    %5567 = vmatprep.subr.mxu0 0.0
    %5568 = vmatpush1.msra.mxu0 0.0
    %5569 = vmatprep.subr.mxu0 0.0
    %5570 = vmatpush1.msra.mxu0 0.0
    %5571 = vmatprep.subr.mxu0 0.0
    %5572 = vmatpush1.msra.mxu0 0.0
    %5573 = vmatprep.subr.mxu0 0.0
    %5574 = vmatpush1.msra.mxu0 0.0
    %5575 = vmatprep.subr.mxu0 0.0
    %5576 = vmatpush1.msra.mxu0 0.0
    %5577 = vmatprep.subr.mxu0 0.0
    %5578 = vmatpush1.msra.mxu0 0.0
    %5579 = vmatprep.subr.mxu0 0.0
    %5580 = vmatpush1.msra.mxu0 0.0
    %5581 = vmatprep.subr.mxu0 0.0
    %5582 = vmatpush1.msra.mxu0 0.0
    %5583 = vmatprep.subr.mxu0 0.0
    %5584 = vmatpush1.msra.mxu0 0.0
    %5585 = vmatprep.subr.mxu0 0.0
    %5586 = vmatpush1.msra.mxu0 0.0
    %5587 = vmatprep.subr.mxu0 0.0
    %5588 = vmatpush1.msra.mxu0 0.0
    %5589 = vmatprep.subr.mxu0 0.0
    %5590 = vmatpush1.msra.mxu0 0.0
    %5591 = vmatprep.subr.mxu0 0.0
    %5592 = vmatpush1.msra.mxu0 0.0
    %5593 = vmatprep.subr.mxu0 0.0
    %5594 = vmatpush1.msra.mxu0 0.0
    %5595 = vmatprep.subr.mxu0 0.0
    %5596 = vmatpush1.msra.mxu0 0.0
    %5597 = vmatprep.subr.mxu0 0.0
    %5598 = vmatpush1.msra.mxu0 0.0
    %5599 = vmatprep.subr.mxu0 0.0
    %5600 = vmatpush1.msra.mxu0 0.0
    %5601 = vmatprep.subr.mxu0 0.0
    %5602 = vmatpush1.msra.mxu0 0.0
    %5603 = vmatprep.subr.mxu0 0.0
    %5604 = vmatpush1.msra.mxu0 0.0
    %5605 = vmatprep.mubr.f32.mxu0 0.0
    %5606 = vmatmul.mubr.f32.gmra.mrb[0].mxu0 %v5399
    %v5607 = vpop.f32.mrb[0].mxu0
    %v5608 = vadd.f32 %v455, %v5607
    %v5609 = vpop.f32.mrb[0].mxu0
    %5610 = vdwg.mxu0
    %5611 = vmatprep.subr.mxu0 0.0
    %5612 = vmatpush1.msra.mxu0 %v456
    %5613 = vmatprep.subr.mxu0 0.0
    %5614 = vmatpush1.msra.mxu0 %v457
    %5615 = vmatprep.subr.mxu0 0.0
    %5616 = vmatpush1.msra.mxu0 %v458
    %5617 = vmatprep.subr.mxu0 0.0
    %5618 = vmatpush1.msra.mxu0 %v459
    %5619 = vmatprep.subr.mxu0 0.0
    %5620 = vmatpush1.msra.mxu0 0.0
    %5621 = vmatprep.subr.mxu0 0.0
    %5622 = vmatpush1.msra.mxu0 0.0
    %5623 = vmatprep.subr.mxu0 0.0
    %5624 = vmatpush1.msra.mxu0 0.0
    %5625 = vmatprep.subr.mxu0 0.0
    %5626 = vmatpush1.msra.mxu0 0.0
    %5627 = vmatprep.subr.mxu0 0.0
    %5628 = vmatpush1.msra.mxu0 0.0
    %5629 = vmatprep.subr.mxu0 0.0
    %5630 = vmatpush1.msra.mxu0 0.0
    %5631 = vmatprep.subr.mxu0 0.0
    %5632 = vmatpush1.msra.mxu0 0.0
    %5633 = vmatprep.subr.mxu0 0.0
    %5634 = vmatpush1.msra.mxu0 0.0
    %5635 = vmatprep.subr.mxu0 0.0
    %5636 = vmatpush1.msra.mxu0 0.0
    %5637 = vmatprep.subr.mxu0 0.0
    %5638 = vmatpush1.msra.mxu0 0.0
    %5639 = vmatprep.subr.mxu0 0.0
    %5640 = vmatpush1.msra.mxu0 0.0
    %5641 = vmatprep.subr.mxu0 0.0
    %5642 = vmatpush1.msra.mxu0 0.0
    %5643 = vmatprep.subr.mxu0 0.0
    %5644 = vmatpush1.msra.mxu0 0.0
    %5645 = vmatprep.subr.mxu0 0.0
    %5646 = vmatpush1.msra.mxu0 0.0
    %5647 = vmatprep.subr.mxu0 0.0
    %5648 = vmatpush1.msra.mxu0 0.0
    %5649 = vmatprep.subr.mxu0 0.0
    %5650 = vmatpush1.msra.mxu0 0.0
    %5651 = vmatprep.subr.mxu0 0.0
    %5652 = vmatpush1.msra.mxu0 0.0
    %5653 = vmatprep.subr.mxu0 0.0
    %5654 = vmatpush1.msra.mxu0 0.0
    %5655 = vmatprep.subr.mxu0 0.0
    %5656 = vmatpush1.msra.mxu0 0.0
    %5657 = vmatprep.subr.mxu0 0.0
    %5658 = vmatpush1.msra.mxu0 0.0
    %5659 = vmatprep.subr.mxu0 0.0
    %5660 = vmatpush1.msra.mxu0 0.0
    %5661 = vmatprep.subr.mxu0 0.0
    %5662 = vmatpush1.msra.mxu0 0.0
    %5663 = vmatprep.subr.mxu0 0.0
    %5664 = vmatpush1.msra.mxu0 0.0
    %5665 = vmatprep.subr.mxu0 0.0
    %5666 = vmatpush1.msra.mxu0 0.0
    %5667 = vmatprep.subr.mxu0 0.0
    %5668 = vmatpush1.msra.mxu0 0.0
    %5669 = vmatprep.subr.mxu0 0.0
    %5670 = vmatpush1.msra.mxu0 0.0
    %5671 = vmatprep.subr.mxu0 0.0
    %5672 = vmatpush1.msra.mxu0 0.0
    %5673 = vmatprep.subr.mxu0 0.0
    %5674 = vmatpush1.msra.mxu0 0.0
    %5675 = vmatprep.mubr.f32.mxu0 0.0
    %5676 = vmatmul.mubr.f32.gmra.mrb[0].mxu0 %v5073
    %v5677 = vpop.f32.mrb[0].mxu0
    %v5678 = vadd.f32 %v468, %v5677
    %v5679 = vpop.f32.mrb[0].mxu0
    %5680 = vdwg.mxu0
    %5681 = vmatprep.subr.mxu0 0.0
    %5682 = vmatpush1.msra.mxu0 %v460
    %5683 = vmatprep.subr.mxu0 0.0
    %5684 = vmatpush1.msra.mxu0 %v461
    %5685 = vmatprep.subr.mxu0 0.0
    %5686 = vmatpush1.msra.mxu0 %v462
    %5687 = vmatprep.subr.mxu0 0.0
    %5688 = vmatpush1.msra.mxu0 %v463
    %5689 = vmatprep.subr.mxu0 0.0
    %5690 = vmatpush1.msra.mxu0 0.0
    %5691 = vmatprep.subr.mxu0 0.0
    %5692 = vmatpush1.msra.mxu0 0.0
    %5693 = vmatprep.subr.mxu0 0.0
    %5694 = vmatpush1.msra.mxu0 0.0
    %5695 = vmatprep.subr.mxu0 0.0
    %5696 = vmatpush1.msra.mxu0 0.0
    %5697 = vmatprep.subr.mxu0 0.0
    %5698 = vmatpush1.msra.mxu0 0.0
    %5699 = vmatprep.subr.mxu0 0.0
    %5700 = vmatpush1.msra.mxu0 0.0
    %5701 = vmatprep.subr.mxu0 0.0
    %5702 = vmatpush1.msra.mxu0 0.0
    %5703 = vmatprep.subr.mxu0 0.0
    %5704 = vmatpush1.msra.mxu0 0.0
    %5705 = vmatprep.subr.mxu0 0.0
    %5706 = vmatpush1.msra.mxu0 0.0
    %5707 = vmatprep.subr.mxu0 0.0
    %5708 = vmatpush1.msra.mxu0 0.0
    %5709 = vmatprep.subr.mxu0 0.0
    %5710 = vmatpush1.msra.mxu0 0.0
    %5711 = vmatprep.subr.mxu0 0.0
    %5712 = vmatpush1.msra.mxu0 0.0
    %5713 = vmatprep.subr.mxu0 0.0
    %5714 = vmatpush1.msra.mxu0 0.0
    %5715 = vmatprep.subr.mxu0 0.0
    %5716 = vmatpush1.msra.mxu0 0.0
    %5717 = vmatprep.subr.mxu0 0.0
    %5718 = vmatpush1.msra.mxu0 0.0
    %5719 = vmatprep.subr.mxu0 0.0
    %5720 = vmatpush1.msra.mxu0 0.0
    %5721 = vmatprep.subr.mxu0 0.0
    %5722 = vmatpush1.msra.mxu0 0.0
    %5723 = vmatprep.subr.mxu0 0.0
    %5724 = vmatpush1.msra.mxu0 0.0
    %5725 = vmatprep.subr.mxu0 0.0
    %5726 = vmatpush1.msra.mxu0 0.0
    %5727 = vmatprep.subr.mxu0 0.0
    %5728 = vmatpush1.msra.mxu0 0.0
    %5729 = vmatprep.subr.mxu0 0.0
    %5730 = vmatpush1.msra.mxu0 0.0
    %5731 = vmatprep.subr.mxu0 0.0
    %5732 = vmatpush1.msra.mxu0 0.0
    %5733 = vmatprep.subr.mxu0 0.0
    %5734 = vmatpush1.msra.mxu0 0.0
    %5735 = vmatprep.subr.mxu0 0.0
    %5736 = vmatpush1.msra.mxu0 0.0
    %5737 = vmatprep.subr.mxu0 0.0
    %5738 = vmatpush1.msra.mxu0 0.0
    %5739 = vmatprep.subr.mxu0 0.0
    %5740 = vmatpush1.msra.mxu0 0.0
    %5741 = vmatprep.subr.mxu0 0.0
    %5742 = vmatpush1.msra.mxu0 0.0
    %5743 = vmatprep.subr.mxu0 0.0
    %5744 = vmatpush1.msra.mxu0 0.0
    %5745 = vmatprep.mubr.f32.mxu0 0.0
    %5746 = vmatmul.mubr.f32.gmra.mrb[0].mxu0 %v5073
    %v5747 = vpop.f32.mrb[0].mxu0
    %v5748 = vadd.f32 %v469, %v5747
    %v5749 = vpop.f32.mrb[0].mxu0
    %5750 = vdwg.mxu0
    %5751 = vmatprep.subr.mxu0 0.0
    %5752 = vmatpush1.msra.mxu0 %v464
    %5753 = vmatprep.subr.mxu0 0.0
    %5754 = vmatpush1.msra.mxu0 %v465
    %5755 = vmatprep.subr.mxu0 0.0
    %5756 = vmatpush1.msra.mxu0 %v466
    %5757 = vmatprep.subr.mxu0 0.0
    %5758 = vmatpush1.msra.mxu0 %v467
    %5759 = vmatprep.subr.mxu0 0.0
    %5760 = vmatpush1.msra.mxu0 0.0
    %5761 = vmatprep.subr.mxu0 0.0
    %5762 = vmatpush1.msra.mxu0 0.0
    %5763 = vmatprep.subr.mxu0 0.0
    %5764 = vmatpush1.msra.mxu0 0.0
    %5765 = vmatprep.subr.mxu0 0.0
    %5766 = vmatpush1.msra.mxu0 0.0
    %5767 = vmatprep.subr.mxu0 0.0
    %5768 = vmatpush1.msra.mxu0 0.0
    %5769 = vmatprep.subr.mxu0 0.0
    %5770 = vmatpush1.msra.mxu0 0.0
    %5771 = vmatprep.subr.mxu0 0.0
    %5772 = vmatpush1.msra.mxu0 0.0
    %5773 = vmatprep.subr.mxu0 0.0
    %5774 = vmatpush1.msra.mxu0 0.0
    %5775 = vmatprep.subr.mxu0 0.0
    %5776 = vmatpush1.msra.mxu0 0.0
    %5777 = vmatprep.subr.mxu0 0.0
    %5778 = vmatpush1.msra.mxu0 0.0
    %5779 = vmatprep.subr.mxu0 0.0
    %5780 = vmatpush1.msra.mxu0 0.0
    %5781 = vmatprep.subr.mxu0 0.0
    %5782 = vmatpush1.msra.mxu0 0.0
    %5783 = vmatprep.subr.mxu0 0.0
    %5784 = vmatpush1.msra.mxu0 0.0
    %5785 = vmatprep.subr.mxu0 0.0
    %5786 = vmatpush1.msra.mxu0 0.0
    %5787 = vmatprep.subr.mxu0 0.0
    %5788 = vmatpush1.msra.mxu0 0.0
    %5789 = vmatprep.subr.mxu0 0.0
    %5790 = vmatpush1.msra.mxu0 0.0
    %5791 = vmatprep.subr.mxu0 0.0
    %5792 = vmatpush1.msra.mxu0 0.0
    %5793 = vmatprep.subr.mxu0 0.0
    %5794 = vmatpush1.msra.mxu0 0.0
    %5795 = vmatprep.subr.mxu0 0.0
    %5796 = vmatpush1.msra.mxu0 0.0
    %5797 = vmatprep.subr.mxu0 0.0
    %5798 = vmatpush1.msra.mxu0 0.0
    %5799 = vmatprep.subr.mxu0 0.0
    %5800 = vmatpush1.msra.mxu0 0.0
    %5801 = vmatprep.subr.mxu0 0.0
    %5802 = vmatpush1.msra.mxu0 0.0
    %5803 = vmatprep.subr.mxu0 0.0
    %5804 = vmatpush1.msra.mxu0 0.0
    %5805 = vmatprep.subr.mxu0 0.0
    %5806 = vmatpush1.msra.mxu0 0.0
    %5807 = vmatprep.subr.mxu0 0.0
    %5808 = vmatpush1.msra.mxu0 0.0
    %5809 = vmatprep.subr.mxu0 0.0
    %5810 = vmatpush1.msra.mxu0 0.0
    %5811 = vmatprep.subr.mxu0 0.0
    %5812 = vmatpush1.msra.mxu0 0.0
    %5813 = vmatprep.subr.mxu0 0.0
    %5814 = vmatpush1.msra.mxu0 0.0
    %5815 = vmatprep.mubr.f32.mxu0 0.0
    %5816 = vmatmul.mubr.f32.gmra.mrb[0].mxu0 %v5073
    %v5817 = vpop.f32.mrb[0].mxu0
    %v5818 = vadd.f32 %v470, %v5817
    %v5819 = vpop.f32.mrb[0].mxu0
    %5820 = vdwg.mxu0
    %v5821 = vadd.f32 %v5468, %v5678
    %v5822 = vxor.u32 %v5821, 2147483648
    %v5823 = vmul.f32 %v5822, 1.442695
    %v5824 = vpow.pop %v5823
    %v5825 = vadd.f32 %v5824, 1.0
    %v5826 = vrcp.pop %v5825
    %v5827 = vmul.f32 1.0, %v5826
    %v5828 = vadd.f32 %v5538, %v5748
    %v5829 = vxor.u32 %v5828, 2147483648
    %v5830 = vmul.f32 %v5829, 1.442695
    %v5831 = vpow.pop %v5830
    %v5832 = vadd.f32 %v5831, 1.0
    %v5833 = vrcp.pop %v5832
    %v5834 = vmul.f32 1.0, %v5833
    %v5835 = vmul.f32 %v5827, %v5818
    %v5836 = vadd.f32 %v5608, %v5835
    %v5837 = vtanh.pop %v5836
    %v5838 = vsub.f32 1.0, %v5834
    %v5839 = vmul.f32 %v5838, %v5837
    %v5840 = vmul.f32 %v5834, %v5071
    %v5841 = vadd.f32 %v5839, %v5840
    %v5843 = vsel %vm522, %v5841, 0
    %5845 = vmatprep.subr.mxu0 0.0
    %5846 = vmatpush1.msra.mxu0 %v471
    %5847 = vmatprep.subr.mxu0 0.0
    %5848 = vmatpush1.msra.mxu0 %v472
    %5849 = vmatprep.subr.mxu0 0.0
    %5850 = vmatpush1.msra.mxu0 %v473
    %5851 = vmatprep.subr.mxu0 0.0
    %5852 = vmatpush1.msra.mxu0 %v474
    %5853 = vmatprep.subr.mxu0 0.0
    %5854 = vmatpush1.msra.mxu0 0.0
    %5855 = vmatprep.subr.mxu0 0.0
    %5856 = vmatpush1.msra.mxu0 0.0
    %5857 = vmatprep.subr.mxu0 0.0
    %5858 = vmatpush1.msra.mxu0 0.0
    %5859 = vmatprep.subr.mxu0 0.0
    %5860 = vmatpush1.msra.mxu0 0.0
    %5861 = vmatprep.subr.mxu0 0.0
    %5862 = vmatpush1.msra.mxu0 0.0
    %5863 = vmatprep.subr.mxu0 0.0
    %5864 = vmatpush1.msra.mxu0 0.0
    %5865 = vmatprep.subr.mxu0 0.0
    %5866 = vmatpush1.msra.mxu0 0.0
    %5867 = vmatprep.subr.mxu0 0.0
    %5868 = vmatpush1.msra.mxu0 0.0
    %5869 = vmatprep.subr.mxu0 0.0
    %5870 = vmatpush1.msra.mxu0 0.0
    %5871 = vmatprep.subr.mxu0 0.0
    %5872 = vmatpush1.msra.mxu0 0.0
    %5873 = vmatprep.subr.mxu0 0.0
    %5874 = vmatpush1.msra.mxu0 0.0
    %5875 = vmatprep.subr.mxu0 0.0
    %5876 = vmatpush1.msra.mxu0 0.0
    %5877 = vmatprep.subr.mxu0 0.0
    %5878 = vmatpush1.msra.mxu0 0.0
    %5879 = vmatprep.subr.mxu0 0.0
    %5880 = vmatpush1.msra.mxu0 0.0
    %5881 = vmatprep.subr.mxu0 0.0
    %5882 = vmatpush1.msra.mxu0 0.0
    %5883 = vmatprep.subr.mxu0 0.0
    %5884 = vmatpush1.msra.mxu0 0.0
    %5885 = vmatprep.subr.mxu0 0.0
    %5886 = vmatpush1.msra.mxu0 0.0
    %5887 = vmatprep.subr.mxu0 0.0
    %5888 = vmatpush1.msra.mxu0 0.0
    %5889 = vmatprep.subr.mxu0 0.0
    %5890 = vmatpush1.msra.mxu0 0.0
    %5891 = vmatprep.subr.mxu0 0.0
    %5892 = vmatpush1.msra.mxu0 0.0
    %5893 = vmatprep.subr.mxu0 0.0
    %5894 = vmatpush1.msra.mxu0 0.0
    %5895 = vmatprep.subr.mxu0 0.0
    %5896 = vmatpush1.msra.mxu0 0.0
    %5897 = vmatprep.subr.mxu0 0.0
    %5898 = vmatpush1.msra.mxu0 0.0
    %5899 = vmatprep.subr.mxu0 0.0
    %5900 = vmatpush1.msra.mxu0 0.0
    %5901 = vmatprep.subr.mxu0 0.0
    %5902 = vmatpush1.msra.mxu0 0.0
    %5903 = vmatprep.subr.mxu0 0.0
    %5904 = vmatpush1.msra.mxu0 0.0
    %5905 = vmatprep.subr.mxu0 0.0
    %5906 = vmatpush1.msra.mxu0 0.0
    %5907 = vmatprep.subr.mxu0 0.0
    %5908 = vmatpush1.msra.mxu0 0.0
    %5909 = vmatprep.mubr.f32.mxu0 0.0
    %5910 = vmatmul.mubr.f32.gmra.mrb[0].mxu0 %v5843
    %v5911 = vpop.f32.mrb[0].mxu0
    %v5912 = vadd.f32 %v475, %v5911
    %v5913 = vpop.f32.mrb[0].mxu0
    %5914 = vdwg.mxu0
    %v5915 = vsel %vm503, %v5912, -inf
    %5916 = vmax.xlane.f32.xlu0 %v5915
    %v5917 = vpop.xlane.xlu0 %5916
    %v5918 = vsub.f32 %v5912, %v5917
    %v5919 = vmul.f32 %v5918, 1.442695
    %v5920 = vpow.pop %v5919
    %v5921 = vsel %vm503, %v5920, 0.0
    %5922 = vadd.xlane.f32.xlu0 %v5921
    %v5923 = vpop.xlane.xlu0 %5922
    %v5924 = vlog2.pop %v5923
    %v5925 = vmul.f32 %v5924, 0.6931472
    %v5926 = vadd.f32 %v5925, %v5917
    %v5927 = vsub.f32 %v5912, %v5926
    %5928 = vst [vmem:[#allocation39 + $0x4] sm:$0x1] %v5927
    // Predicated region
    $region222: #{tpu_custom_call.1} parent=1 // pred_check
      _
    $region223: #{tpu_custom_call.1} parent=1 // pred_check_branch
      %5930 = sbr.rel (0) target = $region225
    $region224: #{tpu_custom_call.1} parent=1 // pred_region
      %s5932 = ssub.s32 128, 128
      %5933 = vsyncadd [#allocation4], %s5932
      %s5935 = sshll.u32 [#allocation39], 4
      %s5936 = int_to_ptr.vmem [resolvable:$true] %s5935
      %5938 = dma.vmem_to_hbm [thread:$0]  %s5936, 128, %s65, [#allocation4]
    $region225: #{tpu_custom_call.1} parent=1 // pred_fallthru
      _
    // Predicated region
    $region226: #{tpu_custom_call.1} parent=1 // pred_check
      _
    $region227: #{tpu_custom_call.1} parent=1 // pred_check_branch
      %5940 = sbr.rel (0) target = $region229
    $region228: #{tpu_custom_call.1} parent=1 // pred_region
      %5941 = dma.done [#allocation4], 128
    $region229: #{tpu_custom_call.1} parent=1 // pred_fallthru
      _
    %5942 = vsyncpa [#allocation3], 1
    %5943 = vsyncpa [#allocation10], 1
    %5944 = vsyncpa [#allocation13], 1
    %5945 = vsyncpa [#allocation16], 1
    %5946 = vsyncpa [#allocation19], 1
    %5947 = vsyncpa [#allocation22], 1
    %5948 = vsyncpa [#allocation25], 1
    %5949 = vsyncpa [#allocation28], 1
    %5950 = vsyncpa [#allocation31], 1
    %5951 = vsyncpa [#allocation34], 1
    %5952 = vsyncpa [#allocation37], 1
    %5953 = vsyncpa [#allocation4], 1
    %5954 = vsyncpa [#allocation5], 1
    %5955 = vsyncpa [#allocation6], 1

</llo_original>
